<compile_context>
chip_gen: v5e
topology: v5e:2x2
jax: 0.10.0
libtpu: 0.0.40
codegen_flags: <defaults>
</compile_context>

<pallas_src>
import functools

import jax
import jax.numpy as jnp
from jax import lax
from jax.experimental import pallas as pl
from jax.experimental.pallas import tpu as pltpu

HIDDEN_RADIX = 23   # fixed-point radix of the int32 hidden state (== hidden_radix in the module)
FORGET_RADIX = 10   # fixed-point radix used to quantize the forget gates for reversible decay
MAX_FORGET = 0.875


def _make_revencoder_kernel(nlayers, h_size, slice_dim, max_forget, tchunk, batch):
    """Fused kernel: one grid step == TCHUNK timesteps; all nlayers RevGRU cells unrolled inside."""
    H = h_size
    hh = h_size // 2
    h_scale = 1.0 / float(1 << HIDDEN_RADIX)

    def fixed_decay(hid_int, z):
        # Reversible fixed-point multiply hid * z with z quantized to FORGET_RADIX bits.
        # Split hid = q*2^F + r to avoid int32 overflow of hid * z_fix.
        z_fix = (z * float(1 << FORGET_RADIX)).astype(jnp.int32)
        q = jnp.right_shift(hid_int, FORGET_RADIX)           # arithmetic shift (floor div)
        r = hid_int - q * (1 << FORGET_RADIX)                # in [0, 2^F)
        prod_lo = r * z_fix
        scaled = q * z_fix + jnp.right_shift(prod_lo, FORGET_RADIX)
        rem = jnp.bitwise_and(prod_lo, (1 << FORGET_RADIX) - 1)   # bits -> InformationBuffer
        return scaled, rem

    def kernel(xp0_ref, hid0_ref, wx_ref, bx_ref, wzr1h_ref, wg1h_ref,
               wzr2h_ref, wg2h_ref,
               last_h_ref, pre_ref, rem_ref, bits_ref):
        c = pl.program_id(0)

        @pl.when(c == 0)
        def _():
            last_h_ref[...] = hid0_ref[...]
            bits_ref[...] = jnp.zeros_like(bits_ref)

        # Carried recurrent state lives in registers for the whole chunk.
        hid = [last_h_ref[l] for l in range(nlayers)]

        # Hoisted constant mask: columns of last-layer h1 that are saved exactly (first
        # slice_dim) contribute no buffer bits.
        if slice_dim > 0:
            col = lax.broadcasted_iota(jnp.int32, (batch, hh), 1)
            keep_mask = (col >= slice_dim).astype(jnp.float32)
        else:
            keep_mask = None

        bits_vec = jnp.zeros((batch, hh), jnp.float32)

        # Static unroll over the time chunk (tchunk is small).
        # TODO(synk): switch to lax.fori_loop(unroll=True) with pl.ds indexing for large TCHUNK.
        for lt in range(tchunk):
            # saved_hiddens entry: last layer's hidden BEFORE its update at this timestep.
            pre_ref[lt] = hid[nlayers - 1]

            x = None   # layer-0 input projection comes precomputed via xp0_ref
            for l in range(nlayers):
                h_int = hid[l]                           # (B, H) int32 fixed-point hidden
                h1_int = h_int[:, :hh]
                h2_int = h_int[:, hh:]
                h2 = h2_int.astype(jnp.float32) * h_scale

                if l == 0:
                    xp = xp0_ref[lt]                     # (B, 3H) precomputed x-projection
                else:
                    xp = (jnp.dot(x, wx_ref[l - 1], preferred_element_type=jnp.float32)
                          + bx_ref[l - 1])
                # Column order [zr1 | zr2 | g1 | g2] (split points on H boundaries).
                xp_zr1 = xp[:, 0:H]
                xp_zr2 = xp[:, H:2 * H]
                xp_g1 = xp[:, 2 * H:2 * H + hh]
                xp_g2 = xp[:, 2 * H + hh:3 * H]

                # ---- update first half h1 from (input, h2) : ih2_to_zr1 / irh2_to_g1 ----
                zr1 = jax.nn.sigmoid(
                    xp_zr1 + jnp.dot(h2, wzr1h_ref[l], preferred_element_type=jnp.float32))
                z1 = max_forget * zr1[:, :hh] + (1.0 - max_forget)
                r1 = zr1[:, hh:]
                g1 = jnp.tanh(
                    xp_g1 + jnp.dot(r1 * h2, wg1h_ref[l], preferred_element_type=jnp.float32))
                h1_scaled, rem1 = fixed_decay(h1_int, z1)
                h1_new = h1_scaled + ((1.0 - z1) * g1 * float(1 << HIDDEN_RADIX)).astype(jnp.int32)
                h1 = h1_new.astype(jnp.float32) * h_scale

                # ---- update second half h2 from (input, new h1) : ih1_to_zr2 / irh1_to_g2 ----
                zr2 = jax.nn.sigmoid(
                    xp_zr2 + jnp.dot(h1, wzr2h_ref[l], preferred_element_type=jnp.float32))
                z2 = max_forget * zr2[:, :hh] + (1.0 - max_forget)
                r2 = zr2[:, hh:]
                g2 = jnp.tanh(
                    xp_g2 + jnp.dot(r2 * h1, wg2h_ref[l], preferred_element_type=jnp.float32))
                h2_scaled, rem2 = fixed_decay(h2_int, z2)
                h2_new = h2_scaled + ((1.0 - z2) * g2 * float(1 << HIDDEN_RADIX)).astype(jnp.int32)

                # One lane-dense row per layer (no masked half-row stores); state stays in regs.
                h_new = jnp.concatenate([h1_new, h2_new], axis=1)
                hid[l] = h_new
                rem_ref[lt, l] = jnp.concatenate([rem1, rem2], axis=1)

                # optimal_bits accumulation (elementwise only; one reduction per chunk below).
                z1b = -jnp.log2(z1)
                if l == nlayers - 1 and keep_mask is not None:
                    z1b = z1b * keep_mask
                bits_vec = bits_vec + z1b + (-jnp.log2(z2))

                if l != nlayers - 1:
                    # Next layer's input = output_hidden (lockdroph identity), from registers.
                    x = h_new.astype(jnp.float32) * h_scale

        # Write back the carried state and the chunk's bit count once per chunk.
        for l in range(nlayers):
            last_h_ref[l] = hid[l]
        bits_ref[...] = bits_ref[...] + jnp.sum(bits_vec, keepdims=True)

    return kernel


@functools.partial(jax.jit,
                   static_argnames=("nlayers", "slice_dim", "max_forget", "tchunk"))
def _rev_encoder_core(input_seq, embedding, hid0, wx, bx, wzr1h, wg1h, wzr2h, wg2h,
                      *, nlayers, slice_dim, max_forget, tchunk):
    """Embedding lookup + hoisted layer-0 projection + the fused time/layer Pallas kernel."""
    emb_seq = embedding[input_seq].astype(jnp.float32)      # (seq, B, H); lockdropi identity
    seq_len, batch, H = emb_seq.shape
    hh = H // 2

    # Layer-0 x-projection hoisted out of the recurrence: one sequence-level matmul.
    xp0 = (jnp.dot(emb_seq.reshape(seq_len * batch, H), wx[0],
                   precision=lax.Precision.HIGHEST)
           + bx[0]).reshape(seq_len, batch, 3 * H)

    if nlayers > 1:
        wx_rest, bx_rest = wx[1:], bx[1:]
    else:                                   # dummy (never read when nlayers == 1)
        wx_rest, bx_rest = wx[:1], bx[:1]
    n_rest = wx_rest.shape[0]

    kernel = _make_revencoder_kernel(nlayers, H, slice_dim, max_forget, tchunk, batch)
    c3 = lambda c: (0, 0, 0)

    grid_spec = pltpu.PrefetchScalarGridSpec(
        num_scalar_prefetch=0,
        grid=(seq_len // tchunk,),
        in_specs=[
            pl.BlockSpec((tchunk, batch, 3 * H), lambda c: (c, 0, 0)),   # xp0 (pipelined)
            pl.BlockSpec((nlayers, batch, H), c3),                       # initial hidden (resident)
            pl.BlockSpec((n_rest, H, 3 * H), c3),                        # fused x-weights l>0
            pl.BlockSpec((n_rest, 1, 3 * H), c3),                        # fused biases   l>0
            pl.BlockSpec((nlayers, hh, H), c3),                          # wzr1h (resident)
            pl.BlockSpec((nlayers, hh, hh), c3),                         # wg1h  (resident)
            pl.BlockSpec((nlayers, hh, H), c3),                          # wzr2h (resident)
            pl.BlockSpec((nlayers, hh, hh), c3),                         # wg2h  (resident)
        ],
        out_specs=[
            pl.BlockSpec((nlayers, batch, H), c3),                       # final hiddens / carry
            pl.BlockSpec((tchunk, batch, H), lambda c: (c, 0, 0)),       # pre-update last-layer h
            pl.BlockSpec((tchunk, nlayers, batch, H),
                         lambda c: (c, 0, 0, 0)),                        # buffered remainders
            pl.BlockSpec((1, 1), lambda c: (0, 0)),                      # optimal_bits accumulator
        ],
    )
    out_shape = (
        jax.ShapeDtypeStruct((nlayers, batch, H), jnp.int32),
        jax.ShapeDtypeStruct((seq_len, batch, H), jnp.int32),
        jax.ShapeDtypeStruct((seq_len, nlayers, batch, H), jnp.int32),
        jax.ShapeDtypeStruct((1, 1), jnp.float32),
    )

    # Explicit scoped-VMEM budget: resident weights/state + double-buffered pipelined blocks.
    itemsize = 4
    resident = (nlayers * batch * H            # hid0
                + n_rest * H * 3 * H           # wx_rest
                + n_rest * 3 * H               # bx_rest
                + 2 * nlayers * hh * H         # wzr1h, wzr2h
                + 2 * nlayers * hh * hh        # wg1h, wg2h
                + nlayers * batch * H) * itemsize        # last_h carry
    pipelined = (tchunk * batch * 3 * H        # xp0 block
                 + tchunk * batch * H          # pre block
                 + tchunk * nlayers * batch * H) * itemsize   # rem block
    vmem_limit = min(64 << 20, 2 * (resident + 2 * pipelined) + (8 << 20))

    return pl.pallas_call(
        kernel,
        out_shape=out_shape,
        grid_spec=grid_spec,
        compiler_params=pltpu.CompilerParams(
            dimension_semantics=("arbitrary",),
            vmem_limit_bytes=int(vmem_limit),
        ),
    )(xp0, hid0, wx_rest, bx_rest, wzr1h, wg1h, wzr2h, wg2h)


def init_revgru_params(key, h_size):
    """Deterministic init of one RevGRU layer.  Weight layout is (in_features, out_features)."""
    hh = h_size // 2
    bound = 1.0 / ((h_size + hh) ** 0.5)   # PyTorch Linear default over the concatenated input
    shapes = [
        (h_size, h_size), (hh, h_size), (1, h_size),   # ih2_to_zr1 : [x ; h2] -> (z1, r1)
        (h_size, hh),     (hh, hh),     (1, hh),       # irh2_to_g1 : [x ; r1*h2] -> g1
        (h_size, h_size), (hh, h_size), (1, h_size),   # ih1_to_zr2 : [x ; h1] -> (z2, r2)
        (h_size, hh),     (hh, hh),     (1, hh),       # irh1_to_g2 : [x ; r2*h1] -> g2
    ]
    keys = jax.random.split(key, len(shapes))
    return tuple(jax.random.uniform(k, s, jnp.float32, -bound, bound)
                 for k, s in zip(keys, shapes))


def stack_layer_params(layer_params):
    """Host-side: fuse the four x-projections per layer (column order [zr1|zr2|g1|g2]) and
    stack everything over layers."""
    wx_l, bx_l, wzr1h_l, wg1h_l, wzr2h_l, wg2h_l = [], [], [], [], [], []
    for p in layer_params:
        (wzr1x, wzr1h, bzr1, wg1x, wg1h, bg1,
         wzr2x, wzr2h, bzr2, wg2x, wg2h, bg2) = p
        wx_l.append(jnp.concatenate([wzr1x, wzr2x, wg1x, wg2x], axis=1))   # (H, 3H)
        bx_l.append(jnp.concatenate([bzr1, bzr2, bg1, bg2], axis=1))       # (1, 3H)
        wzr1h_l.append(wzr1h)
        wg1h_l.append(wg1h)
        wzr2h_l.append(wzr2h)
        wg2h_l.append(wg2h)
    return tuple(jnp.stack(a) for a in (wx_l, bx_l, wzr1h_l, wg1h_l, wzr2h_l, wg2h_l))


def _pick_tchunk(seq_len, max_chunk=8):
    """Largest divisor of seq_len that is <= max_chunk (timesteps per grid iteration)."""
    t = min(max_chunk, seq_len)
    while seq_len % t:
        t -= 1
    return max(t, 1)


def rev_encoder_forward(input_seq, embedding, layer_params, *, h_size, nlayers,
                        slice_dim, max_forget=MAX_FORGET, lengths=None, hiddens=None):
    """Mirror of RevEncoder.forward (rnn_type='revgru')."""
    seq_len, batch = input_seq.shape
    hh = h_size // 2
    if hiddens is None:
        hid0 = jnp.zeros((nlayers, batch, h_size), jnp.int32)
    else:
        hid0 = jnp.stack(hiddens).astype(jnp.int32)
    max_length = seq_len if lengths is None else int(lengths.max())
    # TODO(synk): lengths/mask path of RevGRU not implemented (test uses lengths=None).

    wx, bx, wzr1h, wg1h, wzr2h, wg2h = stack_layer_params(layer_params)
    tchunk = _pick_tchunk(seq_len)
    last_h, pre_hid, rem, bits = _rev_encoder_core(
        input_seq, embedding, hid0, wx, bx, wzr1h, wg1h, wzr2h, wg2h,
        nlayers=nlayers, slice_dim=slice_dim, max_forget=float(max_forget), tchunk=tchunk)

    hiddens_out = [last_h[l] for l in range(nlayers)]
    saved_hiddens = [pre_hid[t, :, :slice_dim] for t in range(seq_len)]
    saved_hiddens.append(last_h[nlayers - 1][:, :slice_dim])

    # dropouti == dropouth == wdrop == 0 -> RevLockedDropout / RevWeightDrop are identities.
    # TODO(synk): InformationBuffer's adaptive bit-packing not reproduced; we collect the raw
    # per-step remainder words the cell would push.
    main_buf, slice_buf = [], []
    buffers = [((slice_buf if l == nlayers - 1 else main_buf), main_buf)
               for l in range(nlayers)]
    for t in range(seq_len):
        for l in range(nlayers):
            if l == nlayers - 1:
                slice_buf.append(rem[t, l, :, slice_dim:hh])   # h1 beyond exactly-saved slice
                main_buf.append(rem[t, l, :, hh:])             # h2
            else:
                main_buf.append(rem[t, l])                     # h1 and h2 both into main buffer

    output_dict = {
        "optimal_bits": bits[0, 0],
        "normal_bits": sum(32 * seq_len * batch * h_size for _ in range(nlayers)),
        "last_h": hiddens_out,
    }
    # TODO(synk): bit_usage() of the adaptive-precision buffer approximated as FORGET_RADIX bits/elem.
    used = FORGET_RADIX * (sum(int(x.size) for x in main_buf) + sum(int(x.size) for x in slice_buf))
    output_dict["used_bits"] = used + 32 * slice_dim * batch * max_length
    return hiddens_out, saved_hiddens, buffers, main_buf, output_dict


if __name__ == "__main__":
    key = jax.random.PRNGKey(0)
    vocab_size, h_size, nlayers, slice_dim = 50, 32, 2, 4   # slice_dim <= h_size//2
    seq_len, batch = 8, 2

    k_emb, k_tok, k_p = jax.random.split(key, 3)
    embedding = 0.1 * jax.random.normal(k_emb, (vocab_size, h_size), jnp.float32)
    layer_params = [init_revgru_params(k, h_size) for k in jax.random.split(k_p, nlayers)]
    input_seq = jax.random.randint(k_tok, (seq_len, batch), 0, vocab_size)  # (seq, batch) ids

    hiddens, saved_hiddens, buffers, main_buf, output_dict = rev_encoder_forward(
        input_seq, embedding, layer_params,
        h_size=h_size, nlayers=nlayers, slice_dim=slice_dim)

    jax.block_until_ready(hiddens)
    jax.block_until_ready(saved_hiddens)
    jax.block_until_ready(output_dict["optimal_bits"])
    print("KERNEL_OK")
</pallas_src>

<mosaic_0001>
module attributes {stable_mosaic.version = 11 : i64} {
  func.func @kernel(%arg0: i32, %arg1: memref<8x2x96xf32, #tpu.memory_space<vmem>>, %arg2: memref<2x2x32xi32, #tpu.memory_space<vmem>>, %arg3: memref<1x32x96xf32, #tpu.memory_space<vmem>>, %arg4: memref<1x1x96xf32, #tpu.memory_space<vmem>>, %arg5: memref<2x16x32xf32, #tpu.memory_space<vmem>>, %arg6: memref<2x16x16xf32, #tpu.memory_space<vmem>>, %arg7: memref<2x16x32xf32, #tpu.memory_space<vmem>>, %arg8: memref<2x16x16xf32, #tpu.memory_space<vmem>>, %arg9: memref<2x2x32xi32, #tpu.memory_space<vmem>>, %arg10: memref<8x2x32xi32, #tpu.memory_space<vmem>>, %arg11: memref<8x2x2x32xi32, #tpu.memory_space<vmem>>, %arg12: memref<1x1xf32, #tpu.memory_space<vmem>>) attributes {dimension_semantics = [#tpu.dimension_semantics<arbitrary>], iteration_bounds = array<i64: 1>, scalar_prefetch = 0 : i64, scratch_operands = 0 : i64, tpu.core_type = #tpu.core_type<tc>, window_params = [{transform_indices = @transform_0, window_bounds = array<i64: 8, 2, 96>}, {pipeline_mode = #tpu.pipeline_mode<synchronous>, transform_indices = @transform_1, window_bounds = array<i64: 2, 2, 32>}, {pipeline_mode = #tpu.pipeline_mode<synchronous>, transform_indices = @transform_2, window_bounds = array<i64: 1, 32, 96>}, {pipeline_mode = #tpu.pipeline_mode<synchronous>, transform_indices = @transform_3, window_bounds = array<i64: 1, 1, 96>}, {pipeline_mode = #tpu.pipeline_mode<synchronous>, transform_indices = @transform_4, window_bounds = array<i64: 2, 16, 32>}, {pipeline_mode = #tpu.pipeline_mode<synchronous>, transform_indices = @transform_5, window_bounds = array<i64: 2, 16, 16>}, {pipeline_mode = #tpu.pipeline_mode<synchronous>, transform_indices = @transform_6, window_bounds = array<i64: 2, 16, 32>}, {pipeline_mode = #tpu.pipeline_mode<synchronous>, transform_indices = @transform_7, window_bounds = array<i64: 2, 16, 16>}, {pipeline_mode = #tpu.pipeline_mode<synchronous>, transform_indices = @transform_8, window_bounds = array<i64: 2, 2, 32>}, {transform_indices = @transform_9, window_bounds = array<i64: 8, 2, 32>}, {transform_indices = @transform_10, window_bounds = array<i64: 8, 2, 2, 32>}, {pipeline_mode = #tpu.pipeline_mode<synchronous>, transform_indices = @transform_11, window_bounds = array<i64: 1, 1>}]} {
    %c0_i32 = arith.constant 0 : i32
    %0 = arith.cmpi eq, %arg0, %c0_i32 : i32
    %1 = arith.extui %0 : i1 to i32
    %c0_i32_0 = arith.constant 0 : i32
    %2 = arith.cmpi ne, %1, %c0_i32_0 : i32
    scf.if %2 {
      %c0_855 = arith.constant 0 : index
      %c0_856 = arith.constant 0 : index
      %c0_857 = arith.constant 0 : index
      %2027 = vector.load %arg2[%c0_855, %c0_856, %c0_857] : memref<2x2x32xi32, #tpu.memory_space<vmem>>, vector<2x2x32xi32>
      %c0_858 = arith.constant 0 : index
      %c0_859 = arith.constant 0 : index
      %c0_860 = arith.constant 0 : index
      %2028 = vector.load %arg9[%c0_858, %c0_859, %c0_860] : memref<2x2x32xi32, #tpu.memory_space<vmem>>, vector<2x2x32xi32>
      tpu.vector_store %arg9[%c0_858, %c0_859, %c0_860], %2027 {strides = array<i32>} : memref<2x2x32xi32, #tpu.memory_space<vmem>>, vector<2x2x32xi32>,
      %cst_861 = arith.constant 0.000000e+00 : f32
      %2029 = vector.broadcast %cst_861 : f32 to vector<1x1xf32>
      %c0_862 = arith.constant 0 : index
      %c0_863 = arith.constant 0 : index
      %2030 = vector.load %arg12[%c0_862, %c0_863] : memref<1x1xf32, #tpu.memory_space<vmem>>, vector<1x1xf32>
      tpu.vector_store %arg12[%c0_862, %c0_863], %2029 {strides = array<i32>} : memref<1x1xf32, #tpu.memory_space<vmem>>, vector<1x1xf32>,
    } else {
    }
    %c0 = arith.constant 0 : index
    %c0_1 = arith.constant 0 : index
    %c0_2 = arith.constant 0 : index
    %3 = vector.load %arg9[%c0, %c0_1, %c0_2] : memref<2x2x32xi32, #tpu.memory_space<vmem>>, vector<1x2x32xi32>
    %4 = vector.shape_cast %3 : vector<1x2x32xi32> to vector<2x32xi32>
    %c1 = arith.constant 1 : index
    %c0_3 = arith.constant 0 : index
    %c0_4 = arith.constant 0 : index
    %5 = vector.load %arg9[%c1, %c0_3, %c0_4] : memref<2x2x32xi32, #tpu.memory_space<vmem>>, vector<1x2x32xi32>
    %6 = vector.shape_cast %5 : vector<1x2x32xi32> to vector<2x32xi32>
    %7 = tpu.iota {dimensions = array<i32: 1>} : vector<2x16xi32>
    %c4_i32 = arith.constant 4 : i32
    %8 = vector.broadcast %c4_i32 : i32 to vector<2x16xi32>
    %9 = arith.cmpi sge, %7, %8 : vector<2x16xi32>
    %10 = arith.extui %9 : vector<2x16xi1> to vector<2x16xi32>
    %11 = arith.sitofp %10 : vector<2x16xi32> to vector<2x16xf32>
    %cst = arith.constant 0.000000e+00 : f32
    %12 = vector.broadcast %cst : f32 to vector<2x16xf32>
    %c0_5 = arith.constant 0 : index
    %c0_6 = arith.constant 0 : index
    %c0_7 = arith.constant 0 : index
    %13 = vector.load %arg10[%c0_5, %c0_6, %c0_7] : memref<8x2x32xi32, #tpu.memory_space<vmem>>, vector<1x2x32xi32>
    %14 = vector.shape_cast %13 : vector<1x2x32xi32> to vector<2x32xi32>
    %15 = vector.shape_cast %6 : vector<2x32xi32> to vector<1x2x32xi32>
    tpu.vector_store %arg10[%c0_5, %c0_6, %c0_7], %15 {strides = array<i32>} : memref<8x2x32xi32, #tpu.memory_space<vmem>>, vector<1x2x32xi32>,
    %16 = vector.extract_strided_slice %4 {offsets = [0, 0], sizes = [2, 16], strides = [1, 1]} : vector<2x32xi32> to vector<2x16xi32>
    %17 = vector.extract_strided_slice %4 {offsets = [0, 16], sizes = [2, 16], strides = [1, 1]} : vector<2x32xi32> to vector<2x16xi32>
    %18 = arith.sitofp %17 : vector<2x16xi32> to vector<2x16xf32>
    %cst_8 = arith.constant 1.1920929E-7 : f32
    %19 = vector.broadcast %cst_8 : f32 to vector<2x16xf32>
    %20 = arith.mulf %18, %19 : vector<2x16xf32>
    %c0_9 = arith.constant 0 : index
    %c0_10 = arith.constant 0 : index
    %c0_11 = arith.constant 0 : index
    %21 = vector.load %arg1[%c0_9, %c0_10, %c0_11] : memref<8x2x96xf32, #tpu.memory_space<vmem>>, vector<1x2x96xf32>
    %22 = vector.shape_cast %21 : vector<1x2x96xf32> to vector<2x96xf32>
    %23 = vector.extract_strided_slice %22 {offsets = [0, 0], sizes = [2, 32], strides = [1, 1]} : vector<2x96xf32> to vector<2x32xf32>
    %24 = vector.extract_strided_slice %22 {offsets = [0, 32], sizes = [2, 32], strides = [1, 1]} : vector<2x96xf32> to vector<2x32xf32>
    %25 = vector.extract_strided_slice %22 {offsets = [0, 64], sizes = [2, 16], strides = [1, 1]} : vector<2x96xf32> to vector<2x16xf32>
    %26 = vector.extract_strided_slice %22 {offsets = [0, 80], sizes = [2, 16], strides = [1, 1]} : vector<2x96xf32> to vector<2x16xf32>
    %c0_12 = arith.constant 0 : index
    %c0_13 = arith.constant 0 : index
    %c0_14 = arith.constant 0 : index
    %27 = vector.load %arg5[%c0_12, %c0_13, %c0_14] : memref<2x16x32xf32, #tpu.memory_space<vmem>>, vector<1x16x32xf32>
    %28 = vector.shape_cast %27 : vector<1x16x32xf32> to vector<16x32xf32>
    %cst_15 = arith.constant dense<0.000000e+00> : vector<2x32xf32>
    %29 = tpu.matmul %20, %28, %cst_15 {dimension_numbers = #tpu.dot_dimension_numbers<[1], [0], [0], [1], [0, 0, 1, 1], [], []>} : vector<2x16xf32>, vector<16x32xf32>, vector<2x32xf32> -> vector<2x32xf32>
    %30 = arith.addf %23, %29 : vector<2x32xf32>
    %31 = arith.negf %30 : vector<2x32xf32>
    %32 = math.exp %31 : vector<2x32xf32>
    %cst_16 = arith.constant 1.000000e+00 : f32
    %33 = vector.broadcast %cst_16 : f32 to vector<2x32xf32>
    %34 = arith.addf %33, %32 : vector<2x32xf32>
    %35 = arith.divf %33, %34 : vector<2x32xf32>
    %36 = vector.extract_strided_slice %35 {offsets = [0, 0], sizes = [2, 16], strides = [1, 1]} : vector<2x32xf32> to vector<2x16xf32>
    %cst_17 = arith.constant 8.750000e-01 : f32
    %37 = vector.broadcast %cst_17 : f32 to vector<2x16xf32>
    %38 = arith.mulf %37, %36 : vector<2x16xf32>
    %cst_18 = arith.constant 1.250000e-01 : f32
    %39 = vector.broadcast %cst_18 : f32 to vector<2x16xf32>
    %40 = arith.addf %38, %39 : vector<2x16xf32>
    %41 = vector.extract_strided_slice %35 {offsets = [0, 16], sizes = [2, 16], strides = [1, 1]} : vector<2x32xf32> to vector<2x16xf32>
    %42 = arith.mulf %41, %20 : vector<2x16xf32>
    %c0_19 = arith.constant 0 : index
    %c0_20 = arith.constant 0 : index
    %c0_21 = arith.constant 0 : index
    %43 = vector.load %arg6[%c0_19, %c0_20, %c0_21] : memref<2x16x16xf32, #tpu.memory_space<vmem>>, vector<1x16x16xf32>
    %44 = vector.shape_cast %43 : vector<1x16x16xf32> to vector<16x16xf32>
    %cst_22 = arith.constant dense<0.000000e+00> : vector<2x16xf32>
    %45 = tpu.matmul %42, %44, %cst_22 {dimension_numbers = #tpu.dot_dimension_numbers<[1], [0], [0], [1], [0, 0, 1, 1], [], []>} : vector<2x16xf32>, vector<16x16xf32>, vector<2x16xf32> -> vector<2x16xf32>
    %46 = arith.addf %25, %45 : vector<2x16xf32>
    %47 = math.tanh %46 : vector<2x16xf32>
    %cst_23 = arith.constant 1.024000e+03 : f32
    %48 = vector.broadcast %cst_23 : f32 to vector<2x16xf32>
    %49 = arith.mulf %40, %48 : vector<2x16xf32>
    %50 = arith.fptosi %49 : vector<2x16xf32> to vector<2x16xi32>
    %c10_i32 = arith.constant 10 : i32
    %51 = vector.broadcast %c10_i32 : i32 to vector<2x16xi32>
    %52 = arith.shrsi %16, %51 : vector<2x16xi32>
    %c1024_i32 = arith.constant 1024 : i32
    %53 = vector.broadcast %c1024_i32 : i32 to vector<2x16xi32>
    %54 = arith.muli %52, %53 : vector<2x16xi32>
    %55 = arith.subi %16, %54 : vector<2x16xi32>
    %56 = arith.muli %55, %50 : vector<2x16xi32>
    %57 = arith.muli %52, %50 : vector<2x16xi32>
    %c10_i32_24 = arith.constant 10 : i32
    %58 = vector.broadcast %c10_i32_24 : i32 to vector<2x16xi32>
    %59 = arith.shrsi %56, %58 : vector<2x16xi32>
    %60 = arith.addi %57, %59 : vector<2x16xi32>
    %c1023_i32 = arith.constant 1023 : i32
    %61 = vector.broadcast %c1023_i32 : i32 to vector<2x16xi32>
    %62 = arith.andi %56, %61 : vector<2x16xi32>
    %cst_25 = arith.constant 1.000000e+00 : f32
    %63 = vector.broadcast %cst_25 : f32 to vector<2x16xf32>
    %64 = arith.subf %63, %40 : vector<2x16xf32>
    %65 = arith.mulf %64, %47 : vector<2x16xf32>
    %cst_26 = arith.constant 0x4B000000 : f32
    %66 = vector.broadcast %cst_26 : f32 to vector<2x16xf32>
    %67 = arith.mulf %65, %66 : vector<2x16xf32>
    %68 = arith.fptosi %67 : vector<2x16xf32> to vector<2x16xi32>
    %69 = arith.addi %60, %68 : vector<2x16xi32>
    %70 = arith.sitofp %69 : vector<2x16xi32> to vector<2x16xf32>
    %cst_27 = arith.constant 1.1920929E-7 : f32
    %71 = vector.broadcast %cst_27 : f32 to vector<2x16xf32>
    %72 = arith.mulf %70, %71 : vector<2x16xf32>
    %c0_28 = arith.constant 0 : index
    %c0_29 = arith.constant 0 : index
    %c0_30 = arith.constant 0 : index
    %73 = vector.load %arg7[%c0_28, %c0_29, %c0_30] : memref<2x16x32xf32, #tpu.memory_space<vmem>>, vector<1x16x32xf32>
    %74 = vector.shape_cast %73 : vector<1x16x32xf32> to vector<16x32xf32>
    %cst_31 = arith.constant dense<0.000000e+00> : vector<2x32xf32>
    %75 = tpu.matmul %72, %74, %cst_31 {dimension_numbers = #tpu.dot_dimension_numbers<[1], [0], [0], [1], [0, 0, 1, 1], [], []>} : vector<2x16xf32>, vector<16x32xf32>, vector<2x32xf32> -> vector<2x32xf32>
    %76 = arith.addf %24, %75 : vector<2x32xf32>
    %77 = arith.negf %76 : vector<2x32xf32>
    %78 = math.exp %77 : vector<2x32xf32>
    %cst_32 = arith.constant 1.000000e+00 : f32
    %79 = vector.broadcast %cst_32 : f32 to vector<2x32xf32>
    %80 = arith.addf %79, %78 : vector<2x32xf32>
    %81 = arith.divf %79, %80 : vector<2x32xf32>
    %82 = vector.extract_strided_slice %81 {offsets = [0, 0], sizes = [2, 16], strides = [1, 1]} : vector<2x32xf32> to vector<2x16xf32>
    %cst_33 = arith.constant 8.750000e-01 : f32
    %83 = vector.broadcast %cst_33 : f32 to vector<2x16xf32>
    %84 = arith.mulf %83, %82 : vector<2x16xf32>
    %cst_34 = arith.constant 1.250000e-01 : f32
    %85 = vector.broadcast %cst_34 : f32 to vector<2x16xf32>
    %86 = arith.addf %84, %85 : vector<2x16xf32>
    %87 = vector.extract_strided_slice %81 {offsets = [0, 16], sizes = [2, 16], strides = [1, 1]} : vector<2x32xf32> to vector<2x16xf32>
    %88 = arith.mulf %87, %72 : vector<2x16xf32>
    %c0_35 = arith.constant 0 : index
    %c0_36 = arith.constant 0 : index
    %c0_37 = arith.constant 0 : index
    %89 = vector.load %arg8[%c0_35, %c0_36, %c0_37] : memref<2x16x16xf32, #tpu.memory_space<vmem>>, vector<1x16x16xf32>
    %90 = vector.shape_cast %89 : vector<1x16x16xf32> to vector<16x16xf32>
    %cst_38 = arith.constant dense<0.000000e+00> : vector<2x16xf32>
    %91 = tpu.matmul %88, %90, %cst_38 {dimension_numbers = #tpu.dot_dimension_numbers<[1], [0], [0], [1], [0, 0, 1, 1], [], []>} : vector<2x16xf32>, vector<16x16xf32>, vector<2x16xf32> -> vector<2x16xf32>
    %92 = arith.addf %26, %91 : vector<2x16xf32>
    %93 = math.tanh %92 : vector<2x16xf32>
    %cst_39 = arith.constant 1.024000e+03 : f32
    %94 = vector.broadcast %cst_39 : f32 to vector<2x16xf32>
    %95 = arith.mulf %86, %94 : vector<2x16xf32>
    %96 = arith.fptosi %95 : vector<2x16xf32> to vector<2x16xi32>
    %c10_i32_40 = arith.constant 10 : i32
    %97 = vector.broadcast %c10_i32_40 : i32 to vector<2x16xi32>
    %98 = arith.shrsi %17, %97 : vector<2x16xi32>
    %c1024_i32_41 = arith.constant 1024 : i32
    %99 = vector.broadcast %c1024_i32_41 : i32 to vector<2x16xi32>
    %100 = arith.muli %98, %99 : vector<2x16xi32>
    %101 = arith.subi %17, %100 : vector<2x16xi32>
    %102 = arith.muli %101, %96 : vector<2x16xi32>
    %103 = arith.muli %98, %96 : vector<2x16xi32>
    %c10_i32_42 = arith.constant 10 : i32
    %104 = vector.broadcast %c10_i32_42 : i32 to vector<2x16xi32>
    %105 = arith.shrsi %102, %104 : vector<2x16xi32>
    %106 = arith.addi %103, %105 : vector<2x16xi32>
    %c1023_i32_43 = arith.constant 1023 : i32
    %107 = vector.broadcast %c1023_i32_43 : i32 to vector<2x16xi32>
    %108 = arith.andi %102, %107 : vector<2x16xi32>
    %cst_44 = arith.constant 1.000000e+00 : f32
    %109 = vector.broadcast %cst_44 : f32 to vector<2x16xf32>
    %110 = arith.subf %109, %86 : vector<2x16xf32>
    %111 = arith.mulf %110, %93 : vector<2x16xf32>
    %cst_45 = arith.constant 0x4B000000 : f32
    %112 = vector.broadcast %cst_45 : f32 to vector<2x16xf32>
    %113 = arith.mulf %111, %112 : vector<2x16xf32>
    %114 = arith.fptosi %113 : vector<2x16xf32> to vector<2x16xi32>
    %115 = arith.addi %106, %114 : vector<2x16xi32>
    %116 = tpu.concatenate %69, %115 in 1 : vector<2x16xi32>, vector<2x16xi32> -> vector<2x32xi32>
    %117 = tpu.concatenate %62, %108 in 1 : vector<2x16xi32>, vector<2x16xi32> -> vector<2x32xi32>
    %c0_46 = arith.constant 0 : index
    %c0_47 = arith.constant 0 : index
    %c0_48 = arith.constant 0 : index
    %c0_49 = arith.constant 0 : index
    %118 = vector.load %arg11[%c0_46, %c0_47, %c0_48, %c0_49] : memref<8x2x2x32xi32, #tpu.memory_space<vmem>>, vector<1x1x2x32xi32>
    %119 = vector.shape_cast %118 : vector<1x1x2x32xi32> to vector<2x32xi32>
    %120 = vector.shape_cast %117 : vector<2x32xi32> to vector<1x1x2x32xi32>
    tpu.vector_store %arg11[%c0_46, %c0_47, %c0_48, %c0_49], %120 {strides = array<i32>} : memref<8x2x2x32xi32, #tpu.memory_space<vmem>>, vector<1x1x2x32xi32>,
    %121 = math.log %40 : vector<2x16xf32>
    %cst_50 = arith.constant 2.000000e+00 : f32
    %122 = math.log %cst_50 : f32
    %123 = vector.broadcast %122 : f32 to vector<2x16xf32>
    %124 = arith.divf %121, %123 : vector<2x16xf32>
    %cst_51 = arith.constant 0.000000e+00 : f32
    %125 = vector.broadcast %cst_51 : f32 to vector<2x16xf32>
    %126 = arith.subf %125, %124 : vector<2x16xf32>
    %127 = arith.addf %12, %126 : vector<2x16xf32>
    %128 = math.log %86 : vector<2x16xf32>
    %cst_52 = arith.constant 2.000000e+00 : f32
    %129 = math.log %cst_52 : f32
    %130 = vector.broadcast %129 : f32 to vector<2x16xf32>
    %131 = arith.divf %128, %130 : vector<2x16xf32>
    %cst_53 = arith.constant 0.000000e+00 : f32
    %132 = vector.broadcast %cst_53 : f32 to vector<2x16xf32>
    %133 = arith.subf %132, %131 : vector<2x16xf32>
    %134 = arith.addf %127, %133 : vector<2x16xf32>
    %135 = arith.sitofp %116 : vector<2x32xi32> to vector<2x32xf32>
    %cst_54 = arith.constant 1.1920929E-7 : f32
    %136 = vector.broadcast %cst_54 : f32 to vector<2x32xf32>
    %137 = arith.mulf %135, %136 : vector<2x32xf32>
    %138 = vector.extract_strided_slice %6 {offsets = [0, 0], sizes = [2, 16], strides = [1, 1]} : vector<2x32xi32> to vector<2x16xi32>
    %139 = vector.extract_strided_slice %6 {offsets = [0, 16], sizes = [2, 16], strides = [1, 1]} : vector<2x32xi32> to vector<2x16xi32>
    %140 = arith.sitofp %139 : vector<2x16xi32> to vector<2x16xf32>
    %cst_55 = arith.constant 1.1920929E-7 : f32
    %141 = vector.broadcast %cst_55 : f32 to vector<2x16xf32>
    %142 = arith.mulf %140, %141 : vector<2x16xf32>
    %c0_56 = arith.constant 0 : index
    %c0_57 = arith.constant 0 : index
    %c0_58 = arith.constant 0 : index
    %143 = vector.load %arg3[%c0_56, %c0_57, %c0_58] : memref<1x32x96xf32, #tpu.memory_space<vmem>>, vector<1x32x96xf32>
    %144 = vector.shape_cast %143 : vector<1x32x96xf32> to vector<32x96xf32>
    %cst_59 = arith.constant dense<0.000000e+00> : vector<2x96xf32>
    %145 = tpu.matmul %137, %144, %cst_59 {dimension_numbers = #tpu.dot_dimension_numbers<[1], [0], [0], [1], [0, 0, 1, 1], [], []>} : vector<2x32xf32>, vector<32x96xf32>, vector<2x96xf32> -> vector<2x96xf32>
    %c0_60 = arith.constant 0 : index
    %c0_61 = arith.constant 0 : index
    %c0_62 = arith.constant 0 : index
    %146 = vector.load %arg4[%c0_60, %c0_61, %c0_62] : memref<1x1x96xf32, #tpu.memory_space<vmem>>, vector<1x1x96xf32>
    %147 = vector.shape_cast %146 : vector<1x1x96xf32> to vector<1x96xf32>
    %148 = vector.broadcast %147 : vector<1x96xf32> to vector<2x96xf32>
    %149 = arith.addf %145, %148 : vector<2x96xf32>
    %150 = vector.extract_strided_slice %149 {offsets = [0, 0], sizes = [2, 32], strides = [1, 1]} : vector<2x96xf32> to vector<2x32xf32>
    %151 = vector.extract_strided_slice %149 {offsets = [0, 32], sizes = [2, 32], strides = [1, 1]} : vector<2x96xf32> to vector<2x32xf32>
    %152 = vector.extract_strided_slice %149 {offsets = [0, 64], sizes = [2, 16], strides = [1, 1]} : vector<2x96xf32> to vector<2x16xf32>
    %153 = vector.extract_strided_slice %149 {offsets = [0, 80], sizes = [2, 16], strides = [1, 1]} : vector<2x96xf32> to vector<2x16xf32>
    %c1_63 = arith.constant 1 : index
    %c0_64 = arith.constant 0 : index
    %c0_65 = arith.constant 0 : index
    %154 = vector.load %arg5[%c1_63, %c0_64, %c0_65] : memref<2x16x32xf32, #tpu.memory_space<vmem>>, vector<1x16x32xf32>
    %155 = vector.shape_cast %154 : vector<1x16x32xf32> to vector<16x32xf32>
    %cst_66 = arith.constant dense<0.000000e+00> : vector<2x32xf32>
    %156 = tpu.matmul %142, %155, %cst_66 {dimension_numbers = #tpu.dot_dimension_numbers<[1], [0], [0], [1], [0, 0, 1, 1], [], []>} : vector<2x16xf32>, vector<16x32xf32>, vector<2x32xf32> -> vector<2x32xf32>
    %157 = arith.addf %150, %156 : vector<2x32xf32>
    %158 = arith.negf %157 : vector<2x32xf32>
    %159 = math.exp %158 : vector<2x32xf32>
    %cst_67 = arith.constant 1.000000e+00 : f32
    %160 = vector.broadcast %cst_67 : f32 to vector<2x32xf32>
    %161 = arith.addf %160, %159 : vector<2x32xf32>
    %162 = arith.divf %160, %161 : vector<2x32xf32>
    %163 = vector.extract_strided_slice %162 {offsets = [0, 0], sizes = [2, 16], strides = [1, 1]} : vector<2x32xf32> to vector<2x16xf32>
    %cst_68 = arith.constant 8.750000e-01 : f32
    %164 = vector.broadcast %cst_68 : f32 to vector<2x16xf32>
    %165 = arith.mulf %164, %163 : vector<2x16xf32>
    %cst_69 = arith.constant 1.250000e-01 : f32
    %166 = vector.broadcast %cst_69 : f32 to vector<2x16xf32>
    %167 = arith.addf %165, %166 : vector<2x16xf32>
    %168 = vector.extract_strided_slice %162 {offsets = [0, 16], sizes = [2, 16], strides = [1, 1]} : vector<2x32xf32> to vector<2x16xf32>
    %169 = arith.mulf %168, %142 : vector<2x16xf32>
    %c1_70 = arith.constant 1 : index
    %c0_71 = arith.constant 0 : index
    %c0_72 = arith.constant 0 : index
    %170 = vector.load %arg6[%c1_70, %c0_71, %c0_72] : memref<2x16x16xf32, #tpu.memory_space<vmem>>, vector<1x16x16xf32>
    %171 = vector.shape_cast %170 : vector<1x16x16xf32> to vector<16x16xf32>
    %cst_73 = arith.constant dense<0.000000e+00> : vector<2x16xf32>
    %172 = tpu.matmul %169, %171, %cst_73 {dimension_numbers = #tpu.dot_dimension_numbers<[1], [0], [0], [1], [0, 0, 1, 1], [], []>} : vector<2x16xf32>, vector<16x16xf32>, vector<2x16xf32> -> vector<2x16xf32>
    %173 = arith.addf %152, %172 : vector<2x16xf32>
    %174 = math.tanh %173 : vector<2x16xf32>
    %cst_74 = arith.constant 1.024000e+03 : f32
    %175 = vector.broadcast %cst_74 : f32 to vector<2x16xf32>
    %176 = arith.mulf %167, %175 : vector<2x16xf32>
    %177 = arith.fptosi %176 : vector<2x16xf32> to vector<2x16xi32>
    %c10_i32_75 = arith.constant 10 : i32
    %178 = vector.broadcast %c10_i32_75 : i32 to vector<2x16xi32>
    %179 = arith.shrsi %138, %178 : vector<2x16xi32>
    %c1024_i32_76 = arith.constant 1024 : i32
    %180 = vector.broadcast %c1024_i32_76 : i32 to vector<2x16xi32>
    %181 = arith.muli %179, %180 : vector<2x16xi32>
    %182 = arith.subi %138, %181 : vector<2x16xi32>
    %183 = arith.muli %182, %177 : vector<2x16xi32>
    %184 = arith.muli %179, %177 : vector<2x16xi32>
    %c10_i32_77 = arith.constant 10 : i32
    %185 = vector.broadcast %c10_i32_77 : i32 to vector<2x16xi32>
    %186 = arith.shrsi %183, %185 : vector<2x16xi32>
    %187 = arith.addi %184, %186 : vector<2x16xi32>
    %c1023_i32_78 = arith.constant 1023 : i32
    %188 = vector.broadcast %c1023_i32_78 : i32 to vector<2x16xi32>
    %189 = arith.andi %183, %188 : vector<2x16xi32>
    %cst_79 = arith.constant 1.000000e+00 : f32
    %190 = vector.broadcast %cst_79 : f32 to vector<2x16xf32>
    %191 = arith.subf %190, %167 : vector<2x16xf32>
    %192 = arith.mulf %191, %174 : vector<2x16xf32>
    %cst_80 = arith.constant 0x4B000000 : f32
    %193 = vector.broadcast %cst_80 : f32 to vector<2x16xf32>
    %194 = arith.mulf %192, %193 : vector<2x16xf32>
    %195 = arith.fptosi %194 : vector<2x16xf32> to vector<2x16xi32>
    %196 = arith.addi %187, %195 : vector<2x16xi32>
    %197 = arith.sitofp %196 : vector<2x16xi32> to vector<2x16xf32>
    %cst_81 = arith.constant 1.1920929E-7 : f32
    %198 = vector.broadcast %cst_81 : f32 to vector<2x16xf32>
    %199 = arith.mulf %197, %198 : vector<2x16xf32>
    %c1_82 = arith.constant 1 : index
    %c0_83 = arith.constant 0 : index
    %c0_84 = arith.constant 0 : index
    %200 = vector.load %arg7[%c1_82, %c0_83, %c0_84] : memref<2x16x32xf32, #tpu.memory_space<vmem>>, vector<1x16x32xf32>
    %201 = vector.shape_cast %200 : vector<1x16x32xf32> to vector<16x32xf32>
    %cst_85 = arith.constant dense<0.000000e+00> : vector<2x32xf32>
    %202 = tpu.matmul %199, %201, %cst_85 {dimension_numbers = #tpu.dot_dimension_numbers<[1], [0], [0], [1], [0, 0, 1, 1], [], []>} : vector<2x16xf32>, vector<16x32xf32>, vector<2x32xf32> -> vector<2x32xf32>
    %203 = arith.addf %151, %202 : vector<2x32xf32>
    %204 = arith.negf %203 : vector<2x32xf32>
    %205 = math.exp %204 : vector<2x32xf32>
    %cst_86 = arith.constant 1.000000e+00 : f32
    %206 = vector.broadcast %cst_86 : f32 to vector<2x32xf32>
    %207 = arith.addf %206, %205 : vector<2x32xf32>
    %208 = arith.divf %206, %207 : vector<2x32xf32>
    %209 = vector.extract_strided_slice %208 {offsets = [0, 0], sizes = [2, 16], strides = [1, 1]} : vector<2x32xf32> to vector<2x16xf32>
    %cst_87 = arith.constant 8.750000e-01 : f32
    %210 = vector.broadcast %cst_87 : f32 to vector<2x16xf32>
    %211 = arith.mulf %210, %209 : vector<2x16xf32>
    %cst_88 = arith.constant 1.250000e-01 : f32
    %212 = vector.broadcast %cst_88 : f32 to vector<2x16xf32>
    %213 = arith.addf %211, %212 : vector<2x16xf32>
    %214 = vector.extract_strided_slice %208 {offsets = [0, 16], sizes = [2, 16], strides = [1, 1]} : vector<2x32xf32> to vector<2x16xf32>
    %215 = arith.mulf %214, %199 : vector<2x16xf32>
    %c1_89 = arith.constant 1 : index
    %c0_90 = arith.constant 0 : index
    %c0_91 = arith.constant 0 : index
    %216 = vector.load %arg8[%c1_89, %c0_90, %c0_91] : memref<2x16x16xf32, #tpu.memory_space<vmem>>, vector<1x16x16xf32>
    %217 = vector.shape_cast %216 : vector<1x16x16xf32> to vector<16x16xf32>
    %cst_92 = arith.constant dense<0.000000e+00> : vector<2x16xf32>
    %218 = tpu.matmul %215, %217, %cst_92 {dimension_numbers = #tpu.dot_dimension_numbers<[1], [0], [0], [1], [0, 0, 1, 1], [], []>} : vector<2x16xf32>, vector<16x16xf32>, vector<2x16xf32> -> vector<2x16xf32>
    %219 = arith.addf %153, %218 : vector<2x16xf32>
    %220 = math.tanh %219 : vector<2x16xf32>
    %cst_93 = arith.constant 1.024000e+03 : f32
    %221 = vector.broadcast %cst_93 : f32 to vector<2x16xf32>
    %222 = arith.mulf %213, %221 : vector<2x16xf32>
    %223 = arith.fptosi %222 : vector<2x16xf32> to vector<2x16xi32>
    %c10_i32_94 = arith.constant 10 : i32
    %224 = vector.broadcast %c10_i32_94 : i32 to vector<2x16xi32>
    %225 = arith.shrsi %139, %224 : vector<2x16xi32>
    %c1024_i32_95 = arith.constant 1024 : i32
    %226 = vector.broadcast %c1024_i32_95 : i32 to vector<2x16xi32>
    %227 = arith.muli %225, %226 : vector<2x16xi32>
    %228 = arith.subi %139, %227 : vector<2x16xi32>
    %229 = arith.muli %228, %223 : vector<2x16xi32>
    %230 = arith.muli %225, %223 : vector<2x16xi32>
    %c10_i32_96 = arith.constant 10 : i32
    %231 = vector.broadcast %c10_i32_96 : i32 to vector<2x16xi32>
    %232 = arith.shrsi %229, %231 : vector<2x16xi32>
    %233 = arith.addi %230, %232 : vector<2x16xi32>
    %c1023_i32_97 = arith.constant 1023 : i32
    %234 = vector.broadcast %c1023_i32_97 : i32 to vector<2x16xi32>
    %235 = arith.andi %229, %234 : vector<2x16xi32>
    %cst_98 = arith.constant 1.000000e+00 : f32
    %236 = vector.broadcast %cst_98 : f32 to vector<2x16xf32>
    %237 = arith.subf %236, %213 : vector<2x16xf32>
    %238 = arith.mulf %237, %220 : vector<2x16xf32>
    %cst_99 = arith.constant 0x4B000000 : f32
    %239 = vector.broadcast %cst_99 : f32 to vector<2x16xf32>
    %240 = arith.mulf %238, %239 : vector<2x16xf32>
    %241 = arith.fptosi %240 : vector<2x16xf32> to vector<2x16xi32>
    %242 = arith.addi %233, %241 : vector<2x16xi32>
    %243 = tpu.concatenate %196, %242 in 1 : vector<2x16xi32>, vector<2x16xi32> -> vector<2x32xi32>
    %244 = tpu.concatenate %189, %235 in 1 : vector<2x16xi32>, vector<2x16xi32> -> vector<2x32xi32>
    %c0_100 = arith.constant 0 : index
    %c1_101 = arith.constant 1 : index
    %c0_102 = arith.constant 0 : index
    %c0_103 = arith.constant 0 : index
    %245 = vector.load %arg11[%c0_100, %c1_101, %c0_102, %c0_103] : memref<8x2x2x32xi32, #tpu.memory_space<vmem>>, vector<1x1x2x32xi32>
    %246 = vector.shape_cast %245 : vector<1x1x2x32xi32> to vector<2x32xi32>
    %247 = vector.shape_cast %244 : vector<2x32xi32> to vector<1x1x2x32xi32>
    tpu.vector_store %arg11[%c0_100, %c1_101, %c0_102, %c0_103], %247 {strides = array<i32>} : memref<8x2x2x32xi32, #tpu.memory_space<vmem>>, vector<1x1x2x32xi32>,
    %248 = math.log %167 : vector<2x16xf32>
    %cst_104 = arith.constant 2.000000e+00 : f32
    %249 = math.log %cst_104 : f32
    %250 = vector.broadcast %249 : f32 to vector<2x16xf32>
    %251 = arith.divf %248, %250 : vector<2x16xf32>
    %cst_105 = arith.constant 0.000000e+00 : f32
    %252 = vector.broadcast %cst_105 : f32 to vector<2x16xf32>
    %253 = arith.subf %252, %251 : vector<2x16xf32>
    %254 = arith.mulf %253, %11 : vector<2x16xf32>
    %255 = arith.addf %134, %254 : vector<2x16xf32>
    %256 = math.log %213 : vector<2x16xf32>
    %cst_106 = arith.constant 2.000000e+00 : f32
    %257 = math.log %cst_106 : f32
    %258 = vector.broadcast %257 : f32 to vector<2x16xf32>
    %259 = arith.divf %256, %258 : vector<2x16xf32>
    %cst_107 = arith.constant 0.000000e+00 : f32
    %260 = vector.broadcast %cst_107 : f32 to vector<2x16xf32>
    %261 = arith.subf %260, %259 : vector<2x16xf32>
    %262 = arith.addf %255, %261 : vector<2x16xf32>
    %c1_108 = arith.constant 1 : index
    %c0_109 = arith.constant 0 : index
    %c0_110 = arith.constant 0 : index
    %263 = vector.load %arg10[%c1_108, %c0_109, %c0_110] : memref<8x2x32xi32, #tpu.memory_space<vmem>>, vector<1x2x32xi32>
    %264 = vector.shape_cast %263 : vector<1x2x32xi32> to vector<2x32xi32>
    %265 = vector.shape_cast %243 : vector<2x32xi32> to vector<1x2x32xi32>
    tpu.vector_store %arg10[%c1_108, %c0_109, %c0_110], %265 {strides = array<i32>} : memref<8x2x32xi32, #tpu.memory_space<vmem>>, vector<1x2x32xi32>,
    %266 = vector.extract_strided_slice %116 {offsets = [0, 0], sizes = [2, 16], strides = [1, 1]} : vector<2x32xi32> to vector<2x16xi32>
    %267 = vector.extract_strided_slice %116 {offsets = [0, 16], sizes = [2, 16], strides = [1, 1]} : vector<2x32xi32> to vector<2x16xi32>
    %268 = arith.sitofp %267 : vector<2x16xi32> to vector<2x16xf32>
    %cst_111 = arith.constant 1.1920929E-7 : f32
    %269 = vector.broadcast %cst_111 : f32 to vector<2x16xf32>
    %270 = arith.mulf %268, %269 : vector<2x16xf32>
    %c1_112 = arith.constant 1 : index
    %c0_113 = arith.constant 0 : index
    %c0_114 = arith.constant 0 : index
    %271 = vector.load %arg1[%c1_112, %c0_113, %c0_114] : memref<8x2x96xf32, #tpu.memory_space<vmem>>, vector<1x2x96xf32>
    %272 = vector.shape_cast %271 : vector<1x2x96xf32> to vector<2x96xf32>
    %273 = vector.extract_strided_slice %272 {offsets = [0, 0], sizes = [2, 32], strides = [1, 1]} : vector<2x96xf32> to vector<2x32xf32>
    %274 = vector.extract_strided_slice %272 {offsets = [0, 32], sizes = [2, 32], strides = [1, 1]} : vector<2x96xf32> to vector<2x32xf32>
    %275 = vector.extract_strided_slice %272 {offsets = [0, 64], sizes = [2, 16], strides = [1, 1]} : vector<2x96xf32> to vector<2x16xf32>
    %276 = vector.extract_strided_slice %272 {offsets = [0, 80], sizes = [2, 16], strides = [1, 1]} : vector<2x96xf32> to vector<2x16xf32>
    %c0_115 = arith.constant 0 : index
    %c0_116 = arith.constant 0 : index
    %c0_117 = arith.constant 0 : index
    %277 = vector.load %arg5[%c0_115, %c0_116, %c0_117] : memref<2x16x32xf32, #tpu.memory_space<vmem>>, vector<1x16x32xf32>
    %278 = vector.shape_cast %277 : vector<1x16x32xf32> to vector<16x32xf32>
    %cst_118 = arith.constant dense<0.000000e+00> : vector<2x32xf32>
    %279 = tpu.matmul %270, %278, %cst_118 {dimension_numbers = #tpu.dot_dimension_numbers<[1], [0], [0], [1], [0, 0, 1, 1], [], []>} : vector<2x16xf32>, vector<16x32xf32>, vector<2x32xf32> -> vector<2x32xf32>
    %280 = arith.addf %273, %279 : vector<2x32xf32>
    %281 = arith.negf %280 : vector<2x32xf32>
    %282 = math.exp %281 : vector<2x32xf32>
    %cst_119 = arith.constant 1.000000e+00 : f32
    %283 = vector.broadcast %cst_119 : f32 to vector<2x32xf32>
    %284 = arith.addf %283, %282 : vector<2x32xf32>
    %285 = arith.divf %283, %284 : vector<2x32xf32>
    %286 = vector.extract_strided_slice %285 {offsets = [0, 0], sizes = [2, 16], strides = [1, 1]} : vector<2x32xf32> to vector<2x16xf32>
    %cst_120 = arith.constant 8.750000e-01 : f32
    %287 = vector.broadcast %cst_120 : f32 to vector<2x16xf32>
    %288 = arith.mulf %287, %286 : vector<2x16xf32>
    %cst_121 = arith.constant 1.250000e-01 : f32
    %289 = vector.broadcast %cst_121 : f32 to vector<2x16xf32>
    %290 = arith.addf %288, %289 : vector<2x16xf32>
    %291 = vector.extract_strided_slice %285 {offsets = [0, 16], sizes = [2, 16], strides = [1, 1]} : vector<2x32xf32> to vector<2x16xf32>
    %292 = arith.mulf %291, %270 : vector<2x16xf32>
    %c0_122 = arith.constant 0 : index
    %c0_123 = arith.constant 0 : index
    %c0_124 = arith.constant 0 : index
    %293 = vector.load %arg6[%c0_122, %c0_123, %c0_124] : memref<2x16x16xf32, #tpu.memory_space<vmem>>, vector<1x16x16xf32>
    %294 = vector.shape_cast %293 : vector<1x16x16xf32> to vector<16x16xf32>
    %cst_125 = arith.constant dense<0.000000e+00> : vector<2x16xf32>
    %295 = tpu.matmul %292, %294, %cst_125 {dimension_numbers = #tpu.dot_dimension_numbers<[1], [0], [0], [1], [0, 0, 1, 1], [], []>} : vector<2x16xf32>, vector<16x16xf32>, vector<2x16xf32> -> vector<2x16xf32>
    %296 = arith.addf %275, %295 : vector<2x16xf32>
    %297 = math.tanh %296 : vector<2x16xf32>
    %cst_126 = arith.constant 1.024000e+03 : f32
    %298 = vector.broadcast %cst_126 : f32 to vector<2x16xf32>
    %299 = arith.mulf %290, %298 : vector<2x16xf32>
    %300 = arith.fptosi %299 : vector<2x16xf32> to vector<2x16xi32>
    %c10_i32_127 = arith.constant 10 : i32
    %301 = vector.broadcast %c10_i32_127 : i32 to vector<2x16xi32>
    %302 = arith.shrsi %266, %301 : vector<2x16xi32>
    %c1024_i32_128 = arith.constant 1024 : i32
    %303 = vector.broadcast %c1024_i32_128 : i32 to vector<2x16xi32>
    %304 = arith.muli %302, %303 : vector<2x16xi32>
    %305 = arith.subi %266, %304 : vector<2x16xi32>
    %306 = arith.muli %305, %300 : vector<2x16xi32>
    %307 = arith.muli %302, %300 : vector<2x16xi32>
    %c10_i32_129 = arith.constant 10 : i32
    %308 = vector.broadcast %c10_i32_129 : i32 to vector<2x16xi32>
    %309 = arith.shrsi %306, %308 : vector<2x16xi32>
    %310 = arith.addi %307, %309 : vector<2x16xi32>
    %c1023_i32_130 = arith.constant 1023 : i32
    %311 = vector.broadcast %c1023_i32_130 : i32 to vector<2x16xi32>
    %312 = arith.andi %306, %311 : vector<2x16xi32>
    %cst_131 = arith.constant 1.000000e+00 : f32
    %313 = vector.broadcast %cst_131 : f32 to vector<2x16xf32>
    %314 = arith.subf %313, %290 : vector<2x16xf32>
    %315 = arith.mulf %314, %297 : vector<2x16xf32>
    %cst_132 = arith.constant 0x4B000000 : f32
    %316 = vector.broadcast %cst_132 : f32 to vector<2x16xf32>
    %317 = arith.mulf %315, %316 : vector<2x16xf32>
    %318 = arith.fptosi %317 : vector<2x16xf32> to vector<2x16xi32>
    %319 = arith.addi %310, %318 : vector<2x16xi32>
    %320 = arith.sitofp %319 : vector<2x16xi32> to vector<2x16xf32>
    %cst_133 = arith.constant 1.1920929E-7 : f32
    %321 = vector.broadcast %cst_133 : f32 to vector<2x16xf32>
    %322 = arith.mulf %320, %321 : vector<2x16xf32>
    %c0_134 = arith.constant 0 : index
    %c0_135 = arith.constant 0 : index
    %c0_136 = arith.constant 0 : index
    %323 = vector.load %arg7[%c0_134, %c0_135, %c0_136] : memref<2x16x32xf32, #tpu.memory_space<vmem>>, vector<1x16x32xf32>
    %324 = vector.shape_cast %323 : vector<1x16x32xf32> to vector<16x32xf32>
    %cst_137 = arith.constant dense<0.000000e+00> : vector<2x32xf32>
    %325 = tpu.matmul %322, %324, %cst_137 {dimension_numbers = #tpu.dot_dimension_numbers<[1], [0], [0], [1], [0, 0, 1, 1], [], []>} : vector<2x16xf32>, vector<16x32xf32>, vector<2x32xf32> -> vector<2x32xf32>
    %326 = arith.addf %274, %325 : vector<2x32xf32>
    %327 = arith.negf %326 : vector<2x32xf32>
    %328 = math.exp %327 : vector<2x32xf32>
    %cst_138 = arith.constant 1.000000e+00 : f32
    %329 = vector.broadcast %cst_138 : f32 to vector<2x32xf32>
    %330 = arith.addf %329, %328 : vector<2x32xf32>
    %331 = arith.divf %329, %330 : vector<2x32xf32>
    %332 = vector.extract_strided_slice %331 {offsets = [0, 0], sizes = [2, 16], strides = [1, 1]} : vector<2x32xf32> to vector<2x16xf32>
    %cst_139 = arith.constant 8.750000e-01 : f32
    %333 = vector.broadcast %cst_139 : f32 to vector<2x16xf32>
    %334 = arith.mulf %333, %332 : vector<2x16xf32>
    %cst_140 = arith.constant 1.250000e-01 : f32
    %335 = vector.broadcast %cst_140 : f32 to vector<2x16xf32>
    %336 = arith.addf %334, %335 : vector<2x16xf32>
    %337 = vector.extract_strided_slice %331 {offsets = [0, 16], sizes = [2, 16], strides = [1, 1]} : vector<2x32xf32> to vector<2x16xf32>
    %338 = arith.mulf %337, %322 : vector<2x16xf32>
    %c0_141 = arith.constant 0 : index
    %c0_142 = arith.constant 0 : index
    %c0_143 = arith.constant 0 : index
    %339 = vector.load %arg8[%c0_141, %c0_142, %c0_143] : memref<2x16x16xf32, #tpu.memory_space<vmem>>, vector<1x16x16xf32>
    %340 = vector.shape_cast %339 : vector<1x16x16xf32> to vector<16x16xf32>
    %cst_144 = arith.constant dense<0.000000e+00> : vector<2x16xf32>
    %341 = tpu.matmul %338, %340, %cst_144 {dimension_numbers = #tpu.dot_dimension_numbers<[1], [0], [0], [1], [0, 0, 1, 1], [], []>} : vector<2x16xf32>, vector<16x16xf32>, vector<2x16xf32> -> vector<2x16xf32>
    %342 = arith.addf %276, %341 : vector<2x16xf32>
    %343 = math.tanh %342 : vector<2x16xf32>
    %cst_145 = arith.constant 1.024000e+03 : f32
    %344 = vector.broadcast %cst_145 : f32 to vector<2x16xf32>
    %345 = arith.mulf %336, %344 : vector<2x16xf32>
    %346 = arith.fptosi %345 : vector<2x16xf32> to vector<2x16xi32>
    %c10_i32_146 = arith.constant 10 : i32
    %347 = vector.broadcast %c10_i32_146 : i32 to vector<2x16xi32>
    %348 = arith.shrsi %267, %347 : vector<2x16xi32>
    %c1024_i32_147 = arith.constant 1024 : i32
    %349 = vector.broadcast %c1024_i32_147 : i32 to vector<2x16xi32>
    %350 = arith.muli %348, %349 : vector<2x16xi32>
    %351 = arith.subi %267, %350 : vector<2x16xi32>
    %352 = arith.muli %351, %346 : vector<2x16xi32>
    %353 = arith.muli %348, %346 : vector<2x16xi32>
    %c10_i32_148 = arith.constant 10 : i32
    %354 = vector.broadcast %c10_i32_148 : i32 to vector<2x16xi32>
    %355 = arith.shrsi %352, %354 : vector<2x16xi32>
    %356 = arith.addi %353, %355 : vector<2x16xi32>
    %c1023_i32_149 = arith.constant 1023 : i32
    %357 = vector.broadcast %c1023_i32_149 : i32 to vector<2x16xi32>
    %358 = arith.andi %352, %357 : vector<2x16xi32>
    %cst_150 = arith.constant 1.000000e+00 : f32
    %359 = vector.broadcast %cst_150 : f32 to vector<2x16xf32>
    %360 = arith.subf %359, %336 : vector<2x16xf32>
    %361 = arith.mulf %360, %343 : vector<2x16xf32>
    %cst_151 = arith.constant 0x4B000000 : f32
    %362 = vector.broadcast %cst_151 : f32 to vector<2x16xf32>
    %363 = arith.mulf %361, %362 : vector<2x16xf32>
    %364 = arith.fptosi %363 : vector<2x16xf32> to vector<2x16xi32>
    %365 = arith.addi %356, %364 : vector<2x16xi32>
    %366 = tpu.concatenate %319, %365 in 1 : vector<2x16xi32>, vector<2x16xi32> -> vector<2x32xi32>
    %367 = tpu.concatenate %312, %358 in 1 : vector<2x16xi32>, vector<2x16xi32> -> vector<2x32xi32>
    %c1_152 = arith.constant 1 : index
    %c0_153 = arith.constant 0 : index
    %c0_154 = arith.constant 0 : index
    %c0_155 = arith.constant 0 : index
    %368 = vector.load %arg11[%c1_152, %c0_153, %c0_154, %c0_155] : memref<8x2x2x32xi32, #tpu.memory_space<vmem>>, vector<1x1x2x32xi32>
    %369 = vector.shape_cast %368 : vector<1x1x2x32xi32> to vector<2x32xi32>
    %370 = vector.shape_cast %367 : vector<2x32xi32> to vector<1x1x2x32xi32>
    tpu.vector_store %arg11[%c1_152, %c0_153, %c0_154, %c0_155], %370 {strides = array<i32>} : memref<8x2x2x32xi32, #tpu.memory_space<vmem>>, vector<1x1x2x32xi32>,
    %371 = math.log %290 : vector<2x16xf32>
    %cst_156 = arith.constant 2.000000e+00 : f32
    %372 = math.log %cst_156 : f32
    %373 = vector.broadcast %372 : f32 to vector<2x16xf32>
    %374 = arith.divf %371, %373 : vector<2x16xf32>
    %cst_157 = arith.constant 0.000000e+00 : f32
    %375 = vector.broadcast %cst_157 : f32 to vector<2x16xf32>
    %376 = arith.subf %375, %374 : vector<2x16xf32>
    %377 = arith.addf %262, %376 : vector<2x16xf32>
    %378 = math.log %336 : vector<2x16xf32>
    %cst_158 = arith.constant 2.000000e+00 : f32
    %379 = math.log %cst_158 : f32
    %380 = vector.broadcast %379 : f32 to vector<2x16xf32>
    %381 = arith.divf %378, %380 : vector<2x16xf32>
    %cst_159 = arith.constant 0.000000e+00 : f32
    %382 = vector.broadcast %cst_159 : f32 to vector<2x16xf32>
    %383 = arith.subf %382, %381 : vector<2x16xf32>
    %384 = arith.addf %377, %383 : vector<2x16xf32>
    %385 = arith.sitofp %366 : vector<2x32xi32> to vector<2x32xf32>
    %cst_160 = arith.constant 1.1920929E-7 : f32
    %386 = vector.broadcast %cst_160 : f32 to vector<2x32xf32>
    %387 = arith.mulf %385, %386 : vector<2x32xf32>
    %388 = vector.extract_strided_slice %243 {offsets = [0, 0], sizes = [2, 16], strides = [1, 1]} : vector<2x32xi32> to vector<2x16xi32>
    %389 = vector.extract_strided_slice %243 {offsets = [0, 16], sizes = [2, 16], strides = [1, 1]} : vector<2x32xi32> to vector<2x16xi32>
    %390 = arith.sitofp %389 : vector<2x16xi32> to vector<2x16xf32>
    %cst_161 = arith.constant 1.1920929E-7 : f32
    %391 = vector.broadcast %cst_161 : f32 to vector<2x16xf32>
    %392 = arith.mulf %390, %391 : vector<2x16xf32>
    %c0_162 = arith.constant 0 : index
    %c0_163 = arith.constant 0 : index
    %c0_164 = arith.constant 0 : index
    %393 = vector.load %arg3[%c0_162, %c0_163, %c0_164] : memref<1x32x96xf32, #tpu.memory_space<vmem>>, vector<1x32x96xf32>
    %394 = vector.shape_cast %393 : vector<1x32x96xf32> to vector<32x96xf32>
    %cst_165 = arith.constant dense<0.000000e+00> : vector<2x96xf32>
    %395 = tpu.matmul %387, %394, %cst_165 {dimension_numbers = #tpu.dot_dimension_numbers<[1], [0], [0], [1], [0, 0, 1, 1], [], []>} : vector<2x32xf32>, vector<32x96xf32>, vector<2x96xf32> -> vector<2x96xf32>
    %c0_166 = arith.constant 0 : index
    %c0_167 = arith.constant 0 : index
    %c0_168 = arith.constant 0 : index
    %396 = vector.load %arg4[%c0_166, %c0_167, %c0_168] : memref<1x1x96xf32, #tpu.memory_space<vmem>>, vector<1x1x96xf32>
    %397 = vector.shape_cast %396 : vector<1x1x96xf32> to vector<1x96xf32>
    %398 = vector.broadcast %397 : vector<1x96xf32> to vector<2x96xf32>
    %399 = arith.addf %395, %398 : vector<2x96xf32>
    %400 = vector.extract_strided_slice %399 {offsets = [0, 0], sizes = [2, 32], strides = [1, 1]} : vector<2x96xf32> to vector<2x32xf32>
    %401 = vector.extract_strided_slice %399 {offsets = [0, 32], sizes = [2, 32], strides = [1, 1]} : vector<2x96xf32> to vector<2x32xf32>
    %402 = vector.extract_strided_slice %399 {offsets = [0, 64], sizes = [2, 16], strides = [1, 1]} : vector<2x96xf32> to vector<2x16xf32>
    %403 = vector.extract_strided_slice %399 {offsets = [0, 80], sizes = [2, 16], strides = [1, 1]} : vector<2x96xf32> to vector<2x16xf32>
    %c1_169 = arith.constant 1 : index
    %c0_170 = arith.constant 0 : index
    %c0_171 = arith.constant 0 : index
    %404 = vector.load %arg5[%c1_169, %c0_170, %c0_171] : memref<2x16x32xf32, #tpu.memory_space<vmem>>, vector<1x16x32xf32>
    %405 = vector.shape_cast %404 : vector<1x16x32xf32> to vector<16x32xf32>
    %cst_172 = arith.constant dense<0.000000e+00> : vector<2x32xf32>
    %406 = tpu.matmul %392, %405, %cst_172 {dimension_numbers = #tpu.dot_dimension_numbers<[1], [0], [0], [1], [0, 0, 1, 1], [], []>} : vector<2x16xf32>, vector<16x32xf32>, vector<2x32xf32> -> vector<2x32xf32>
    %407 = arith.addf %400, %406 : vector<2x32xf32>
    %408 = arith.negf %407 : vector<2x32xf32>
    %409 = math.exp %408 : vector<2x32xf32>
    %cst_173 = arith.constant 1.000000e+00 : f32
    %410 = vector.broadcast %cst_173 : f32 to vector<2x32xf32>
    %411 = arith.addf %410, %409 : vector<2x32xf32>
    %412 = arith.divf %410, %411 : vector<2x32xf32>
    %413 = vector.extract_strided_slice %412 {offsets = [0, 0], sizes = [2, 16], strides = [1, 1]} : vector<2x32xf32> to vector<2x16xf32>
    %cst_174 = arith.constant 8.750000e-01 : f32
    %414 = vector.broadcast %cst_174 : f32 to vector<2x16xf32>
    %415 = arith.mulf %414, %413 : vector<2x16xf32>
    %cst_175 = arith.constant 1.250000e-01 : f32
    %416 = vector.broadcast %cst_175 : f32 to vector<2x16xf32>
    %417 = arith.addf %415, %416 : vector<2x16xf32>
    %418 = vector.extract_strided_slice %412 {offsets = [0, 16], sizes = [2, 16], strides = [1, 1]} : vector<2x32xf32> to vector<2x16xf32>
    %419 = arith.mulf %418, %392 : vector<2x16xf32>
    %c1_176 = arith.constant 1 : index
    %c0_177 = arith.constant 0 : index
    %c0_178 = arith.constant 0 : index
    %420 = vector.load %arg6[%c1_176, %c0_177, %c0_178] : memref<2x16x16xf32, #tpu.memory_space<vmem>>, vector<1x16x16xf32>
    %421 = vector.shape_cast %420 : vector<1x16x16xf32> to vector<16x16xf32>
    %cst_179 = arith.constant dense<0.000000e+00> : vector<2x16xf32>
    %422 = tpu.matmul %419, %421, %cst_179 {dimension_numbers = #tpu.dot_dimension_numbers<[1], [0], [0], [1], [0, 0, 1, 1], [], []>} : vector<2x16xf32>, vector<16x16xf32>, vector<2x16xf32> -> vector<2x16xf32>
    %423 = arith.addf %402, %422 : vector<2x16xf32>
    %424 = math.tanh %423 : vector<2x16xf32>
    %cst_180 = arith.constant 1.024000e+03 : f32
    %425 = vector.broadcast %cst_180 : f32 to vector<2x16xf32>
    %426 = arith.mulf %417, %425 : vector<2x16xf32>
    %427 = arith.fptosi %426 : vector<2x16xf32> to vector<2x16xi32>
    %c10_i32_181 = arith.constant 10 : i32
    %428 = vector.broadcast %c10_i32_181 : i32 to vector<2x16xi32>
    %429 = arith.shrsi %388, %428 : vector<2x16xi32>
    %c1024_i32_182 = arith.constant 1024 : i32
    %430 = vector.broadcast %c1024_i32_182 : i32 to vector<2x16xi32>
    %431 = arith.muli %429, %430 : vector<2x16xi32>
    %432 = arith.subi %388, %431 : vector<2x16xi32>
    %433 = arith.muli %432, %427 : vector<2x16xi32>
    %434 = arith.muli %429, %427 : vector<2x16xi32>
    %c10_i32_183 = arith.constant 10 : i32
    %435 = vector.broadcast %c10_i32_183 : i32 to vector<2x16xi32>
    %436 = arith.shrsi %433, %435 : vector<2x16xi32>
    %437 = arith.addi %434, %436 : vector<2x16xi32>
    %c1023_i32_184 = arith.constant 1023 : i32
    %438 = vector.broadcast %c1023_i32_184 : i32 to vector<2x16xi32>
    %439 = arith.andi %433, %438 : vector<2x16xi32>
    %cst_185 = arith.constant 1.000000e+00 : f32
    %440 = vector.broadcast %cst_185 : f32 to vector<2x16xf32>
    %441 = arith.subf %440, %417 : vector<2x16xf32>
    %442 = arith.mulf %441, %424 : vector<2x16xf32>
    %cst_186 = arith.constant 0x4B000000 : f32
    %443 = vector.broadcast %cst_186 : f32 to vector<2x16xf32>
    %444 = arith.mulf %442, %443 : vector<2x16xf32>
    %445 = arith.fptosi %444 : vector<2x16xf32> to vector<2x16xi32>
    %446 = arith.addi %437, %445 : vector<2x16xi32>
    %447 = arith.sitofp %446 : vector<2x16xi32> to vector<2x16xf32>
    %cst_187 = arith.constant 1.1920929E-7 : f32
    %448 = vector.broadcast %cst_187 : f32 to vector<2x16xf32>
    %449 = arith.mulf %447, %448 : vector<2x16xf32>
    %c1_188 = arith.constant 1 : index
    %c0_189 = arith.constant 0 : index
    %c0_190 = arith.constant 0 : index
    %450 = vector.load %arg7[%c1_188, %c0_189, %c0_190] : memref<2x16x32xf32, #tpu.memory_space<vmem>>, vector<1x16x32xf32>
    %451 = vector.shape_cast %450 : vector<1x16x32xf32> to vector<16x32xf32>
    %cst_191 = arith.constant dense<0.000000e+00> : vector<2x32xf32>
    %452 = tpu.matmul %449, %451, %cst_191 {dimension_numbers = #tpu.dot_dimension_numbers<[1], [0], [0], [1], [0, 0, 1, 1], [], []>} : vector<2x16xf32>, vector<16x32xf32>, vector<2x32xf32> -> vector<2x32xf32>
    %453 = arith.addf %401, %452 : vector<2x32xf32>
    %454 = arith.negf %453 : vector<2x32xf32>
    %455 = math.exp %454 : vector<2x32xf32>
    %cst_192 = arith.constant 1.000000e+00 : f32
    %456 = vector.broadcast %cst_192 : f32 to vector<2x32xf32>
    %457 = arith.addf %456, %455 : vector<2x32xf32>
    %458 = arith.divf %456, %457 : vector<2x32xf32>
    %459 = vector.extract_strided_slice %458 {offsets = [0, 0], sizes = [2, 16], strides = [1, 1]} : vector<2x32xf32> to vector<2x16xf32>
    %cst_193 = arith.constant 8.750000e-01 : f32
    %460 = vector.broadcast %cst_193 : f32 to vector<2x16xf32>
    %461 = arith.mulf %460, %459 : vector<2x16xf32>
    %cst_194 = arith.constant 1.250000e-01 : f32
    %462 = vector.broadcast %cst_194 : f32 to vector<2x16xf32>
    %463 = arith.addf %461, %462 : vector<2x16xf32>
    %464 = vector.extract_strided_slice %458 {offsets = [0, 16], sizes = [2, 16], strides = [1, 1]} : vector<2x32xf32> to vector<2x16xf32>
    %465 = arith.mulf %464, %449 : vector<2x16xf32>
    %c1_195 = arith.constant 1 : index
    %c0_196 = arith.constant 0 : index
    %c0_197 = arith.constant 0 : index
    %466 = vector.load %arg8[%c1_195, %c0_196, %c0_197] : memref<2x16x16xf32, #tpu.memory_space<vmem>>, vector<1x16x16xf32>
    %467 = vector.shape_cast %466 : vector<1x16x16xf32> to vector<16x16xf32>
    %cst_198 = arith.constant dense<0.000000e+00> : vector<2x16xf32>
    %468 = tpu.matmul %465, %467, %cst_198 {dimension_numbers = #tpu.dot_dimension_numbers<[1], [0], [0], [1], [0, 0, 1, 1], [], []>} : vector<2x16xf32>, vector<16x16xf32>, vector<2x16xf32> -> vector<2x16xf32>
    %469 = arith.addf %403, %468 : vector<2x16xf32>
    %470 = math.tanh %469 : vector<2x16xf32>
    %cst_199 = arith.constant 1.024000e+03 : f32
    %471 = vector.broadcast %cst_199 : f32 to vector<2x16xf32>
    %472 = arith.mulf %463, %471 : vector<2x16xf32>
    %473 = arith.fptosi %472 : vector<2x16xf32> to vector<2x16xi32>
    %c10_i32_200 = arith.constant 10 : i32
    %474 = vector.broadcast %c10_i32_200 : i32 to vector<2x16xi32>
    %475 = arith.shrsi %389, %474 : vector<2x16xi32>
    %c1024_i32_201 = arith.constant 1024 : i32
    %476 = vector.broadcast %c1024_i32_201 : i32 to vector<2x16xi32>
    %477 = arith.muli %475, %476 : vector<2x16xi32>
    %478 = arith.subi %389, %477 : vector<2x16xi32>
    %479 = arith.muli %478, %473 : vector<2x16xi32>
    %480 = arith.muli %475, %473 : vector<2x16xi32>
    %c10_i32_202 = arith.constant 10 : i32
    %481 = vector.broadcast %c10_i32_202 : i32 to vector<2x16xi32>
    %482 = arith.shrsi %479, %481 : vector<2x16xi32>
    %483 = arith.addi %480, %482 : vector<2x16xi32>
    %c1023_i32_203 = arith.constant 1023 : i32
    %484 = vector.broadcast %c1023_i32_203 : i32 to vector<2x16xi32>
    %485 = arith.andi %479, %484 : vector<2x16xi32>
    %cst_204 = arith.constant 1.000000e+00 : f32
    %486 = vector.broadcast %cst_204 : f32 to vector<2x16xf32>
    %487 = arith.subf %486, %463 : vector<2x16xf32>
    %488 = arith.mulf %487, %470 : vector<2x16xf32>
    %cst_205 = arith.constant 0x4B000000 : f32
    %489 = vector.broadcast %cst_205 : f32 to vector<2x16xf32>
    %490 = arith.mulf %488, %489 : vector<2x16xf32>
    %491 = arith.fptosi %490 : vector<2x16xf32> to vector<2x16xi32>
    %492 = arith.addi %483, %491 : vector<2x16xi32>
    %493 = tpu.concatenate %446, %492 in 1 : vector<2x16xi32>, vector<2x16xi32> -> vector<2x32xi32>
    %494 = tpu.concatenate %439, %485 in 1 : vector<2x16xi32>, vector<2x16xi32> -> vector<2x32xi32>
    %c1_206 = arith.constant 1 : index
    %c1_207 = arith.constant 1 : index
    %c0_208 = arith.constant 0 : index
    %c0_209 = arith.constant 0 : index
    %495 = vector.load %arg11[%c1_206, %c1_207, %c0_208, %c0_209] : memref<8x2x2x32xi32, #tpu.memory_space<vmem>>, vector<1x1x2x32xi32>
    %496 = vector.shape_cast %495 : vector<1x1x2x32xi32> to vector<2x32xi32>
    %497 = vector.shape_cast %494 : vector<2x32xi32> to vector<1x1x2x32xi32>
    tpu.vector_store %arg11[%c1_206, %c1_207, %c0_208, %c0_209], %497 {strides = array<i32>} : memref<8x2x2x32xi32, #tpu.memory_space<vmem>>, vector<1x1x2x32xi32>,
    %498 = math.log %417 : vector<2x16xf32>
    %cst_210 = arith.constant 2.000000e+00 : f32
    %499 = math.log %cst_210 : f32
    %500 = vector.broadcast %499 : f32 to vector<2x16xf32>
    %501 = arith.divf %498, %500 : vector<2x16xf32>
    %cst_211 = arith.constant 0.000000e+00 : f32
    %502 = vector.broadcast %cst_211 : f32 to vector<2x16xf32>
    %503 = arith.subf %502, %501 : vector<2x16xf32>
    %504 = arith.mulf %503, %11 : vector<2x16xf32>
    %505 = arith.addf %384, %504 : vector<2x16xf32>
    %506 = math.log %463 : vector<2x16xf32>
    %cst_212 = arith.constant 2.000000e+00 : f32
    %507 = math.log %cst_212 : f32
    %508 = vector.broadcast %507 : f32 to vector<2x16xf32>
    %509 = arith.divf %506, %508 : vector<2x16xf32>
    %cst_213 = arith.constant 0.000000e+00 : f32
    %510 = vector.broadcast %cst_213 : f32 to vector<2x16xf32>
    %511 = arith.subf %510, %509 : vector<2x16xf32>
    %512 = arith.addf %505, %511 : vector<2x16xf32>
    %c2 = arith.constant 2 : index
    %c0_214 = arith.constant 0 : index
    %c0_215 = arith.constant 0 : index
    %513 = vector.load %arg10[%c2, %c0_214, %c0_215] : memref<8x2x32xi32, #tpu.memory_space<vmem>>, vector<1x2x32xi32>
    %514 = vector.shape_cast %513 : vector<1x2x32xi32> to vector<2x32xi32>
    %515 = vector.shape_cast %493 : vector<2x32xi32> to vector<1x2x32xi32>
    tpu.vector_store %arg10[%c2, %c0_214, %c0_215], %515 {strides = array<i32>} : memref<8x2x32xi32, #tpu.memory_space<vmem>>, vector<1x2x32xi32>,
    %516 = vector.extract_strided_slice %366 {offsets = [0, 0], sizes = [2, 16], strides = [1, 1]} : vector<2x32xi32> to vector<2x16xi32>
    %517 = vector.extract_strided_slice %366 {offsets = [0, 16], sizes = [2, 16], strides = [1, 1]} : vector<2x32xi32> to vector<2x16xi32>
    %518 = arith.sitofp %517 : vector<2x16xi32> to vector<2x16xf32>
    %cst_216 = arith.constant 1.1920929E-7 : f32
    %519 = vector.broadcast %cst_216 : f32 to vector<2x16xf32>
    %520 = arith.mulf %518, %519 : vector<2x16xf32>
    %c2_217 = arith.constant 2 : index
    %c0_218 = arith.constant 0 : index
    %c0_219 = arith.constant 0 : index
    %521 = vector.load %arg1[%c2_217, %c0_218, %c0_219] : memref<8x2x96xf32, #tpu.memory_space<vmem>>, vector<1x2x96xf32>
    %522 = vector.shape_cast %521 : vector<1x2x96xf32> to vector<2x96xf32>
    %523 = vector.extract_strided_slice %522 {offsets = [0, 0], sizes = [2, 32], strides = [1, 1]} : vector<2x96xf32> to vector<2x32xf32>
    %524 = vector.extract_strided_slice %522 {offsets = [0, 32], sizes = [2, 32], strides = [1, 1]} : vector<2x96xf32> to vector<2x32xf32>
    %525 = vector.extract_strided_slice %522 {offsets = [0, 64], sizes = [2, 16], strides = [1, 1]} : vector<2x96xf32> to vector<2x16xf32>
    %526 = vector.extract_strided_slice %522 {offsets = [0, 80], sizes = [2, 16], strides = [1, 1]} : vector<2x96xf32> to vector<2x16xf32>
    %c0_220 = arith.constant 0 : index
    %c0_221 = arith.constant 0 : index
    %c0_222 = arith.constant 0 : index
    %527 = vector.load %arg5[%c0_220, %c0_221, %c0_222] : memref<2x16x32xf32, #tpu.memory_space<vmem>>, vector<1x16x32xf32>
    %528 = vector.shape_cast %527 : vector<1x16x32xf32> to vector<16x32xf32>
    %cst_223 = arith.constant dense<0.000000e+00> : vector<2x32xf32>
    %529 = tpu.matmul %520, %528, %cst_223 {dimension_numbers = #tpu.dot_dimension_numbers<[1], [0], [0], [1], [0, 0, 1, 1], [], []>} : vector<2x16xf32>, vector<16x32xf32>, vector<2x32xf32> -> vector<2x32xf32>
    %530 = arith.addf %523, %529 : vector<2x32xf32>
    %531 = arith.negf %530 : vector<2x32xf32>
    %532 = math.exp %531 : vector<2x32xf32>
    %cst_224 = arith.constant 1.000000e+00 : f32
    %533 = vector.broadcast %cst_224 : f32 to vector<2x32xf32>
    %534 = arith.addf %533, %532 : vector<2x32xf32>
    %535 = arith.divf %533, %534 : vector<2x32xf32>
    %536 = vector.extract_strided_slice %535 {offsets = [0, 0], sizes = [2, 16], strides = [1, 1]} : vector<2x32xf32> to vector<2x16xf32>
    %cst_225 = arith.constant 8.750000e-01 : f32
    %537 = vector.broadcast %cst_225 : f32 to vector<2x16xf32>
    %538 = arith.mulf %537, %536 : vector<2x16xf32>
    %cst_226 = arith.constant 1.250000e-01 : f32
    %539 = vector.broadcast %cst_226 : f32 to vector<2x16xf32>
    %540 = arith.addf %538, %539 : vector<2x16xf32>
    %541 = vector.extract_strided_slice %535 {offsets = [0, 16], sizes = [2, 16], strides = [1, 1]} : vector<2x32xf32> to vector<2x16xf32>
    %542 = arith.mulf %541, %520 : vector<2x16xf32>
    %c0_227 = arith.constant 0 : index
    %c0_228 = arith.constant 0 : index
    %c0_229 = arith.constant 0 : index
    %543 = vector.load %arg6[%c0_227, %c0_228, %c0_229] : memref<2x16x16xf32, #tpu.memory_space<vmem>>, vector<1x16x16xf32>
    %544 = vector.shape_cast %543 : vector<1x16x16xf32> to vector<16x16xf32>
    %cst_230 = arith.constant dense<0.000000e+00> : vector<2x16xf32>
    %545 = tpu.matmul %542, %544, %cst_230 {dimension_numbers = #tpu.dot_dimension_numbers<[1], [0], [0], [1], [0, 0, 1, 1], [], []>} : vector<2x16xf32>, vector<16x16xf32>, vector<2x16xf32> -> vector<2x16xf32>
    %546 = arith.addf %525, %545 : vector<2x16xf32>
    %547 = math.tanh %546 : vector<2x16xf32>
    %cst_231 = arith.constant 1.024000e+03 : f32
    %548 = vector.broadcast %cst_231 : f32 to vector<2x16xf32>
    %549 = arith.mulf %540, %548 : vector<2x16xf32>
    %550 = arith.fptosi %549 : vector<2x16xf32> to vector<2x16xi32>
    %c10_i32_232 = arith.constant 10 : i32
    %551 = vector.broadcast %c10_i32_232 : i32 to vector<2x16xi32>
    %552 = arith.shrsi %516, %551 : vector<2x16xi32>
    %c1024_i32_233 = arith.constant 1024 : i32
    %553 = vector.broadcast %c1024_i32_233 : i32 to vector<2x16xi32>
    %554 = arith.muli %552, %553 : vector<2x16xi32>
    %555 = arith.subi %516, %554 : vector<2x16xi32>
    %556 = arith.muli %555, %550 : vector<2x16xi32>
    %557 = arith.muli %552, %550 : vector<2x16xi32>
    %c10_i32_234 = arith.constant 10 : i32
    %558 = vector.broadcast %c10_i32_234 : i32 to vector<2x16xi32>
    %559 = arith.shrsi %556, %558 : vector<2x16xi32>
    %560 = arith.addi %557, %559 : vector<2x16xi32>
    %c1023_i32_235 = arith.constant 1023 : i32
    %561 = vector.broadcast %c1023_i32_235 : i32 to vector<2x16xi32>
    %562 = arith.andi %556, %561 : vector<2x16xi32>
    %cst_236 = arith.constant 1.000000e+00 : f32
    %563 = vector.broadcast %cst_236 : f32 to vector<2x16xf32>
    %564 = arith.subf %563, %540 : vector<2x16xf32>
    %565 = arith.mulf %564, %547 : vector<2x16xf32>
    %cst_237 = arith.constant 0x4B000000 : f32
    %566 = vector.broadcast %cst_237 : f32 to vector<2x16xf32>
    %567 = arith.mulf %565, %566 : vector<2x16xf32>
    %568 = arith.fptosi %567 : vector<2x16xf32> to vector<2x16xi32>
    %569 = arith.addi %560, %568 : vector<2x16xi32>
    %570 = arith.sitofp %569 : vector<2x16xi32> to vector<2x16xf32>
    %cst_238 = arith.constant 1.1920929E-7 : f32
    %571 = vector.broadcast %cst_238 : f32 to vector<2x16xf32>
    %572 = arith.mulf %570, %571 : vector<2x16xf32>
    %c0_239 = arith.constant 0 : index
    %c0_240 = arith.constant 0 : index
    %c0_241 = arith.constant 0 : index
    %573 = vector.load %arg7[%c0_239, %c0_240, %c0_241] : memref<2x16x32xf32, #tpu.memory_space<vmem>>, vector<1x16x32xf32>
    %574 = vector.shape_cast %573 : vector<1x16x32xf32> to vector<16x32xf32>
    %cst_242 = arith.constant dense<0.000000e+00> : vector<2x32xf32>
    %575 = tpu.matmul %572, %574, %cst_242 {dimension_numbers = #tpu.dot_dimension_numbers<[1], [0], [0], [1], [0, 0, 1, 1], [], []>} : vector<2x16xf32>, vector<16x32xf32>, vector<2x32xf32> -> vector<2x32xf32>
    %576 = arith.addf %524, %575 : vector<2x32xf32>
    %577 = arith.negf %576 : vector<2x32xf32>
    %578 = math.exp %577 : vector<2x32xf32>
    %cst_243 = arith.constant 1.000000e+00 : f32
    %579 = vector.broadcast %cst_243 : f32 to vector<2x32xf32>
    %580 = arith.addf %579, %578 : vector<2x32xf32>
    %581 = arith.divf %579, %580 : vector<2x32xf32>
    %582 = vector.extract_strided_slice %581 {offsets = [0, 0], sizes = [2, 16], strides = [1, 1]} : vector<2x32xf32> to vector<2x16xf32>
    %cst_244 = arith.constant 8.750000e-01 : f32
    %583 = vector.broadcast %cst_244 : f32 to vector<2x16xf32>
    %584 = arith.mulf %583, %582 : vector<2x16xf32>
    %cst_245 = arith.constant 1.250000e-01 : f32
    %585 = vector.broadcast %cst_245 : f32 to vector<2x16xf32>
    %586 = arith.addf %584, %585 : vector<2x16xf32>
    %587 = vector.extract_strided_slice %581 {offsets = [0, 16], sizes = [2, 16], strides = [1, 1]} : vector<2x32xf32> to vector<2x16xf32>
    %588 = arith.mulf %587, %572 : vector<2x16xf32>
    %c0_246 = arith.constant 0 : index
    %c0_247 = arith.constant 0 : index
    %c0_248 = arith.constant 0 : index
    %589 = vector.load %arg8[%c0_246, %c0_247, %c0_248] : memref<2x16x16xf32, #tpu.memory_space<vmem>>, vector<1x16x16xf32>
    %590 = vector.shape_cast %589 : vector<1x16x16xf32> to vector<16x16xf32>
    %cst_249 = arith.constant dense<0.000000e+00> : vector<2x16xf32>
    %591 = tpu.matmul %588, %590, %cst_249 {dimension_numbers = #tpu.dot_dimension_numbers<[1], [0], [0], [1], [0, 0, 1, 1], [], []>} : vector<2x16xf32>, vector<16x16xf32>, vector<2x16xf32> -> vector<2x16xf32>
    %592 = arith.addf %526, %591 : vector<2x16xf32>
    %593 = math.tanh %592 : vector<2x16xf32>
    %cst_250 = arith.constant 1.024000e+03 : f32
    %594 = vector.broadcast %cst_250 : f32 to vector<2x16xf32>
    %595 = arith.mulf %586, %594 : vector<2x16xf32>
    %596 = arith.fptosi %595 : vector<2x16xf32> to vector<2x16xi32>
    %c10_i32_251 = arith.constant 10 : i32
    %597 = vector.broadcast %c10_i32_251 : i32 to vector<2x16xi32>
    %598 = arith.shrsi %517, %597 : vector<2x16xi32>
    %c1024_i32_252 = arith.constant 1024 : i32
    %599 = vector.broadcast %c1024_i32_252 : i32 to vector<2x16xi32>
    %600 = arith.muli %598, %599 : vector<2x16xi32>
    %601 = arith.subi %517, %600 : vector<2x16xi32>
    %602 = arith.muli %601, %596 : vector<2x16xi32>
    %603 = arith.muli %598, %596 : vector<2x16xi32>
    %c10_i32_253 = arith.constant 10 : i32
    %604 = vector.broadcast %c10_i32_253 : i32 to vector<2x16xi32>
    %605 = arith.shrsi %602, %604 : vector<2x16xi32>
    %606 = arith.addi %603, %605 : vector<2x16xi32>
    %c1023_i32_254 = arith.constant 1023 : i32
    %607 = vector.broadcast %c1023_i32_254 : i32 to vector<2x16xi32>
    %608 = arith.andi %602, %607 : vector<2x16xi32>
    %cst_255 = arith.constant 1.000000e+00 : f32
    %609 = vector.broadcast %cst_255 : f32 to vector<2x16xf32>
    %610 = arith.subf %609, %586 : vector<2x16xf32>
    %611 = arith.mulf %610, %593 : vector<2x16xf32>
    %cst_256 = arith.constant 0x4B000000 : f32
    %612 = vector.broadcast %cst_256 : f32 to vector<2x16xf32>
    %613 = arith.mulf %611, %612 : vector<2x16xf32>
    %614 = arith.fptosi %613 : vector<2x16xf32> to vector<2x16xi32>
    %615 = arith.addi %606, %614 : vector<2x16xi32>
    %616 = tpu.concatenate %569, %615 in 1 : vector<2x16xi32>, vector<2x16xi32> -> vector<2x32xi32>
    %617 = tpu.concatenate %562, %608 in 1 : vector<2x16xi32>, vector<2x16xi32> -> vector<2x32xi32>
    %c2_257 = arith.constant 2 : index
    %c0_258 = arith.constant 0 : index
    %c0_259 = arith.constant 0 : index
    %c0_260 = arith.constant 0 : index
    %618 = vector.load %arg11[%c2_257, %c0_258, %c0_259, %c0_260] : memref<8x2x2x32xi32, #tpu.memory_space<vmem>>, vector<1x1x2x32xi32>
    %619 = vector.shape_cast %618 : vector<1x1x2x32xi32> to vector<2x32xi32>
    %620 = vector.shape_cast %617 : vector<2x32xi32> to vector<1x1x2x32xi32>
    tpu.vector_store %arg11[%c2_257, %c0_258, %c0_259, %c0_260], %620 {strides = array<i32>} : memref<8x2x2x32xi32, #tpu.memory_space<vmem>>, vector<1x1x2x32xi32>,
    %621 = math.log %540 : vector<2x16xf32>
    %cst_261 = arith.constant 2.000000e+00 : f32
    %622 = math.log %cst_261 : f32
    %623 = vector.broadcast %622 : f32 to vector<2x16xf32>
    %624 = arith.divf %621, %623 : vector<2x16xf32>
    %cst_262 = arith.constant 0.000000e+00 : f32
    %625 = vector.broadcast %cst_262 : f32 to vector<2x16xf32>
    %626 = arith.subf %625, %624 : vector<2x16xf32>
    %627 = arith.addf %512, %626 : vector<2x16xf32>
    %628 = math.log %586 : vector<2x16xf32>
    %cst_263 = arith.constant 2.000000e+00 : f32
    %629 = math.log %cst_263 : f32
    %630 = vector.broadcast %629 : f32 to vector<2x16xf32>
    %631 = arith.divf %628, %630 : vector<2x16xf32>
    %cst_264 = arith.constant 0.000000e+00 : f32
    %632 = vector.broadcast %cst_264 : f32 to vector<2x16xf32>
    %633 = arith.subf %632, %631 : vector<2x16xf32>
    %634 = arith.addf %627, %633 : vector<2x16xf32>
    %635 = arith.sitofp %616 : vector<2x32xi32> to vector<2x32xf32>
    %cst_265 = arith.constant 1.1920929E-7 : f32
    %636 = vector.broadcast %cst_265 : f32 to vector<2x32xf32>
    %637 = arith.mulf %635, %636 : vector<2x32xf32>
    %638 = vector.extract_strided_slice %493 {offsets = [0, 0], sizes = [2, 16], strides = [1, 1]} : vector<2x32xi32> to vector<2x16xi32>
    %639 = vector.extract_strided_slice %493 {offsets = [0, 16], sizes = [2, 16], strides = [1, 1]} : vector<2x32xi32> to vector<2x16xi32>
    %640 = arith.sitofp %639 : vector<2x16xi32> to vector<2x16xf32>
    %cst_266 = arith.constant 1.1920929E-7 : f32
    %641 = vector.broadcast %cst_266 : f32 to vector<2x16xf32>
    %642 = arith.mulf %640, %641 : vector<2x16xf32>
    %c0_267 = arith.constant 0 : index
    %c0_268 = arith.constant 0 : index
    %c0_269 = arith.constant 0 : index
    %643 = vector.load %arg3[%c0_267, %c0_268, %c0_269] : memref<1x32x96xf32, #tpu.memory_space<vmem>>, vector<1x32x96xf32>
    %644 = vector.shape_cast %643 : vector<1x32x96xf32> to vector<32x96xf32>
    %cst_270 = arith.constant dense<0.000000e+00> : vector<2x96xf32>
    %645 = tpu.matmul %637, %644, %cst_270 {dimension_numbers = #tpu.dot_dimension_numbers<[1], [0], [0], [1], [0, 0, 1, 1], [], []>} : vector<2x32xf32>, vector<32x96xf32>, vector<2x96xf32> -> vector<2x96xf32>
    %c0_271 = arith.constant 0 : index
    %c0_272 = arith.constant 0 : index
    %c0_273 = arith.constant 0 : index
    %646 = vector.load %arg4[%c0_271, %c0_272, %c0_273] : memref<1x1x96xf32, #tpu.memory_space<vmem>>, vector<1x1x96xf32>
    %647 = vector.shape_cast %646 : vector<1x1x96xf32> to vector<1x96xf32>
    %648 = vector.broadcast %647 : vector<1x96xf32> to vector<2x96xf32>
    %649 = arith.addf %645, %648 : vector<2x96xf32>
    %650 = vector.extract_strided_slice %649 {offsets = [0, 0], sizes = [2, 32], strides = [1, 1]} : vector<2x96xf32> to vector<2x32xf32>
    %651 = vector.extract_strided_slice %649 {offsets = [0, 32], sizes = [2, 32], strides = [1, 1]} : vector<2x96xf32> to vector<2x32xf32>
    %652 = vector.extract_strided_slice %649 {offsets = [0, 64], sizes = [2, 16], strides = [1, 1]} : vector<2x96xf32> to vector<2x16xf32>
    %653 = vector.extract_strided_slice %649 {offsets = [0, 80], sizes = [2, 16], strides = [1, 1]} : vector<2x96xf32> to vector<2x16xf32>
    %c1_274 = arith.constant 1 : index
    %c0_275 = arith.constant 0 : index
    %c0_276 = arith.constant 0 : index
    %654 = vector.load %arg5[%c1_274, %c0_275, %c0_276] : memref<2x16x32xf32, #tpu.memory_space<vmem>>, vector<1x16x32xf32>
    %655 = vector.shape_cast %654 : vector<1x16x32xf32> to vector<16x32xf32>
    %cst_277 = arith.constant dense<0.000000e+00> : vector<2x32xf32>
    %656 = tpu.matmul %642, %655, %cst_277 {dimension_numbers = #tpu.dot_dimension_numbers<[1], [0], [0], [1], [0, 0, 1, 1], [], []>} : vector<2x16xf32>, vector<16x32xf32>, vector<2x32xf32> -> vector<2x32xf32>
    %657 = arith.addf %650, %656 : vector<2x32xf32>
    %658 = arith.negf %657 : vector<2x32xf32>
    %659 = math.exp %658 : vector<2x32xf32>
    %cst_278 = arith.constant 1.000000e+00 : f32
    %660 = vector.broadcast %cst_278 : f32 to vector<2x32xf32>
    %661 = arith.addf %660, %659 : vector<2x32xf32>
    %662 = arith.divf %660, %661 : vector<2x32xf32>
    %663 = vector.extract_strided_slice %662 {offsets = [0, 0], sizes = [2, 16], strides = [1, 1]} : vector<2x32xf32> to vector<2x16xf32>
    %cst_279 = arith.constant 8.750000e-01 : f32
    %664 = vector.broadcast %cst_279 : f32 to vector<2x16xf32>
    %665 = arith.mulf %664, %663 : vector<2x16xf32>
    %cst_280 = arith.constant 1.250000e-01 : f32
    %666 = vector.broadcast %cst_280 : f32 to vector<2x16xf32>
    %667 = arith.addf %665, %666 : vector<2x16xf32>
    %668 = vector.extract_strided_slice %662 {offsets = [0, 16], sizes = [2, 16], strides = [1, 1]} : vector<2x32xf32> to vector<2x16xf32>
    %669 = arith.mulf %668, %642 : vector<2x16xf32>
    %c1_281 = arith.constant 1 : index
    %c0_282 = arith.constant 0 : index
    %c0_283 = arith.constant 0 : index
    %670 = vector.load %arg6[%c1_281, %c0_282, %c0_283] : memref<2x16x16xf32, #tpu.memory_space<vmem>>, vector<1x16x16xf32>
    %671 = vector.shape_cast %670 : vector<1x16x16xf32> to vector<16x16xf32>
    %cst_284 = arith.constant dense<0.000000e+00> : vector<2x16xf32>
    %672 = tpu.matmul %669, %671, %cst_284 {dimension_numbers = #tpu.dot_dimension_numbers<[1], [0], [0], [1], [0, 0, 1, 1], [], []>} : vector<2x16xf32>, vector<16x16xf32>, vector<2x16xf32> -> vector<2x16xf32>
    %673 = arith.addf %652, %672 : vector<2x16xf32>
    %674 = math.tanh %673 : vector<2x16xf32>
    %cst_285 = arith.constant 1.024000e+03 : f32
    %675 = vector.broadcast %cst_285 : f32 to vector<2x16xf32>
    %676 = arith.mulf %667, %675 : vector<2x16xf32>
    %677 = arith.fptosi %676 : vector<2x16xf32> to vector<2x16xi32>
    %c10_i32_286 = arith.constant 10 : i32
    %678 = vector.broadcast %c10_i32_286 : i32 to vector<2x16xi32>
    %679 = arith.shrsi %638, %678 : vector<2x16xi32>
    %c1024_i32_287 = arith.constant 1024 : i32
    %680 = vector.broadcast %c1024_i32_287 : i32 to vector<2x16xi32>
    %681 = arith.muli %679, %680 : vector<2x16xi32>
    %682 = arith.subi %638, %681 : vector<2x16xi32>
    %683 = arith.muli %682, %677 : vector<2x16xi32>
    %684 = arith.muli %679, %677 : vector<2x16xi32>
    %c10_i32_288 = arith.constant 10 : i32
    %685 = vector.broadcast %c10_i32_288 : i32 to vector<2x16xi32>
    %686 = arith.shrsi %683, %685 : vector<2x16xi32>
    %687 = arith.addi %684, %686 : vector<2x16xi32>
    %c1023_i32_289 = arith.constant 1023 : i32
    %688 = vector.broadcast %c1023_i32_289 : i32 to vector<2x16xi32>
    %689 = arith.andi %683, %688 : vector<2x16xi32>
    %cst_290 = arith.constant 1.000000e+00 : f32
    %690 = vector.broadcast %cst_290 : f32 to vector<2x16xf32>
    %691 = arith.subf %690, %667 : vector<2x16xf32>
    %692 = arith.mulf %691, %674 : vector<2x16xf32>
    %cst_291 = arith.constant 0x4B000000 : f32
    %693 = vector.broadcast %cst_291 : f32 to vector<2x16xf32>
    %694 = arith.mulf %692, %693 : vector<2x16xf32>
    %695 = arith.fptosi %694 : vector<2x16xf32> to vector<2x16xi32>
    %696 = arith.addi %687, %695 : vector<2x16xi32>
    %697 = arith.sitofp %696 : vector<2x16xi32> to vector<2x16xf32>
    %cst_292 = arith.constant 1.1920929E-7 : f32
    %698 = vector.broadcast %cst_292 : f32 to vector<2x16xf32>
    %699 = arith.mulf %697, %698 : vector<2x16xf32>
    %c1_293 = arith.constant 1 : index
    %c0_294 = arith.constant 0 : index
    %c0_295 = arith.constant 0 : index
    %700 = vector.load %arg7[%c1_293, %c0_294, %c0_295] : memref<2x16x32xf32, #tpu.memory_space<vmem>>, vector<1x16x32xf32>
    %701 = vector.shape_cast %700 : vector<1x16x32xf32> to vector<16x32xf32>
    %cst_296 = arith.constant dense<0.000000e+00> : vector<2x32xf32>
    %702 = tpu.matmul %699, %701, %cst_296 {dimension_numbers = #tpu.dot_dimension_numbers<[1], [0], [0], [1], [0, 0, 1, 1], [], []>} : vector<2x16xf32>, vector<16x32xf32>, vector<2x32xf32> -> vector<2x32xf32>
    %703 = arith.addf %651, %702 : vector<2x32xf32>
    %704 = arith.negf %703 : vector<2x32xf32>
    %705 = math.exp %704 : vector<2x32xf32>
    %cst_297 = arith.constant 1.000000e+00 : f32
    %706 = vector.broadcast %cst_297 : f32 to vector<2x32xf32>
    %707 = arith.addf %706, %705 : vector<2x32xf32>
    %708 = arith.divf %706, %707 : vector<2x32xf32>
    %709 = vector.extract_strided_slice %708 {offsets = [0, 0], sizes = [2, 16], strides = [1, 1]} : vector<2x32xf32> to vector<2x16xf32>
    %cst_298 = arith.constant 8.750000e-01 : f32
    %710 = vector.broadcast %cst_298 : f32 to vector<2x16xf32>
    %711 = arith.mulf %710, %709 : vector<2x16xf32>
    %cst_299 = arith.constant 1.250000e-01 : f32
    %712 = vector.broadcast %cst_299 : f32 to vector<2x16xf32>
    %713 = arith.addf %711, %712 : vector<2x16xf32>
    %714 = vector.extract_strided_slice %708 {offsets = [0, 16], sizes = [2, 16], strides = [1, 1]} : vector<2x32xf32> to vector<2x16xf32>
    %715 = arith.mulf %714, %699 : vector<2x16xf32>
    %c1_300 = arith.constant 1 : index
    %c0_301 = arith.constant 0 : index
    %c0_302 = arith.constant 0 : index
    %716 = vector.load %arg8[%c1_300, %c0_301, %c0_302] : memref<2x16x16xf32, #tpu.memory_space<vmem>>, vector<1x16x16xf32>
    %717 = vector.shape_cast %716 : vector<1x16x16xf32> to vector<16x16xf32>
    %cst_303 = arith.constant dense<0.000000e+00> : vector<2x16xf32>
    %718 = tpu.matmul %715, %717, %cst_303 {dimension_numbers = #tpu.dot_dimension_numbers<[1], [0], [0], [1], [0, 0, 1, 1], [], []>} : vector<2x16xf32>, vector<16x16xf32>, vector<2x16xf32> -> vector<2x16xf32>
    %719 = arith.addf %653, %718 : vector<2x16xf32>
    %720 = math.tanh %719 : vector<2x16xf32>
    %cst_304 = arith.constant 1.024000e+03 : f32
    %721 = vector.broadcast %cst_304 : f32 to vector<2x16xf32>
    %722 = arith.mulf %713, %721 : vector<2x16xf32>
    %723 = arith.fptosi %722 : vector<2x16xf32> to vector<2x16xi32>
    %c10_i32_305 = arith.constant 10 : i32
    %724 = vector.broadcast %c10_i32_305 : i32 to vector<2x16xi32>
    %725 = arith.shrsi %639, %724 : vector<2x16xi32>
    %c1024_i32_306 = arith.constant 1024 : i32
    %726 = vector.broadcast %c1024_i32_306 : i32 to vector<2x16xi32>
    %727 = arith.muli %725, %726 : vector<2x16xi32>
    %728 = arith.subi %639, %727 : vector<2x16xi32>
    %729 = arith.muli %728, %723 : vector<2x16xi32>
    %730 = arith.muli %725, %723 : vector<2x16xi32>
    %c10_i32_307 = arith.constant 10 : i32
    %731 = vector.broadcast %c10_i32_307 : i32 to vector<2x16xi32>
    %732 = arith.shrsi %729, %731 : vector<2x16xi32>
    %733 = arith.addi %730, %732 : vector<2x16xi32>
    %c1023_i32_308 = arith.constant 1023 : i32
    %734 = vector.broadcast %c1023_i32_308 : i32 to vector<2x16xi32>
    %735 = arith.andi %729, %734 : vector<2x16xi32>
    %cst_309 = arith.constant 1.000000e+00 : f32
    %736 = vector.broadcast %cst_309 : f32 to vector<2x16xf32>
    %737 = arith.subf %736, %713 : vector<2x16xf32>
    %738 = arith.mulf %737, %720 : vector<2x16xf32>
    %cst_310 = arith.constant 0x4B000000 : f32
    %739 = vector.broadcast %cst_310 : f32 to vector<2x16xf32>
    %740 = arith.mulf %738, %739 : vector<2x16xf32>
    %741 = arith.fptosi %740 : vector<2x16xf32> to vector<2x16xi32>
    %742 = arith.addi %733, %741 : vector<2x16xi32>
    %743 = tpu.concatenate %696, %742 in 1 : vector<2x16xi32>, vector<2x16xi32> -> vector<2x32xi32>
    %744 = tpu.concatenate %689, %735 in 1 : vector<2x16xi32>, vector<2x16xi32> -> vector<2x32xi32>
    %c2_311 = arith.constant 2 : index
    %c1_312 = arith.constant 1 : index
    %c0_313 = arith.constant 0 : index
    %c0_314 = arith.constant 0 : index
    %745 = vector.load %arg11[%c2_311, %c1_312, %c0_313, %c0_314] : memref<8x2x2x32xi32, #tpu.memory_space<vmem>>, vector<1x1x2x32xi32>
    %746 = vector.shape_cast %745 : vector<1x1x2x32xi32> to vector<2x32xi32>
    %747 = vector.shape_cast %744 : vector<2x32xi32> to vector<1x1x2x32xi32>
    tpu.vector_store %arg11[%c2_311, %c1_312, %c0_313, %c0_314], %747 {strides = array<i32>} : memref<8x2x2x32xi32, #tpu.memory_space<vmem>>, vector<1x1x2x32xi32>,
    %748 = math.log %667 : vector<2x16xf32>
    %cst_315 = arith.constant 2.000000e+00 : f32
    %749 = math.log %cst_315 : f32
    %750 = vector.broadcast %749 : f32 to vector<2x16xf32>
    %751 = arith.divf %748, %750 : vector<2x16xf32>
    %cst_316 = arith.constant 0.000000e+00 : f32
    %752 = vector.broadcast %cst_316 : f32 to vector<2x16xf32>
    %753 = arith.subf %752, %751 : vector<2x16xf32>
    %754 = arith.mulf %753, %11 : vector<2x16xf32>
    %755 = arith.addf %634, %754 : vector<2x16xf32>
    %756 = math.log %713 : vector<2x16xf32>
    %cst_317 = arith.constant 2.000000e+00 : f32
    %757 = math.log %cst_317 : f32
    %758 = vector.broadcast %757 : f32 to vector<2x16xf32>
    %759 = arith.divf %756, %758 : vector<2x16xf32>
    %cst_318 = arith.constant 0.000000e+00 : f32
    %760 = vector.broadcast %cst_318 : f32 to vector<2x16xf32>
    %761 = arith.subf %760, %759 : vector<2x16xf32>
    %762 = arith.addf %755, %761 : vector<2x16xf32>
    %c3 = arith.constant 3 : index
    %c0_319 = arith.constant 0 : index
    %c0_320 = arith.constant 0 : index
    %763 = vector.load %arg10[%c3, %c0_319, %c0_320] : memref<8x2x32xi32, #tpu.memory_space<vmem>>, vector<1x2x32xi32>
    %764 = vector.shape_cast %763 : vector<1x2x32xi32> to vector<2x32xi32>
    %765 = vector.shape_cast %743 : vector<2x32xi32> to vector<1x2x32xi32>
    tpu.vector_store %arg10[%c3, %c0_319, %c0_320], %765 {strides = array<i32>} : memref<8x2x32xi32, #tpu.memory_space<vmem>>, vector<1x2x32xi32>,
    %766 = vector.extract_strided_slice %616 {offsets = [0, 0], sizes = [2, 16], strides = [1, 1]} : vector<2x32xi32> to vector<2x16xi32>
    %767 = vector.extract_strided_slice %616 {offsets = [0, 16], sizes = [2, 16], strides = [1, 1]} : vector<2x32xi32> to vector<2x16xi32>
    %768 = arith.sitofp %767 : vector<2x16xi32> to vector<2x16xf32>
    %cst_321 = arith.constant 1.1920929E-7 : f32
    %769 = vector.broadcast %cst_321 : f32 to vector<2x16xf32>
    %770 = arith.mulf %768, %769 : vector<2x16xf32>
    %c3_322 = arith.constant 3 : index
    %c0_323 = arith.constant 0 : index
    %c0_324 = arith.constant 0 : index
    %771 = vector.load %arg1[%c3_322, %c0_323, %c0_324] : memref<8x2x96xf32, #tpu.memory_space<vmem>>, vector<1x2x96xf32>
    %772 = vector.shape_cast %771 : vector<1x2x96xf32> to vector<2x96xf32>
    %773 = vector.extract_strided_slice %772 {offsets = [0, 0], sizes = [2, 32], strides = [1, 1]} : vector<2x96xf32> to vector<2x32xf32>
    %774 = vector.extract_strided_slice %772 {offsets = [0, 32], sizes = [2, 32], strides = [1, 1]} : vector<2x96xf32> to vector<2x32xf32>
    %775 = vector.extract_strided_slice %772 {offsets = [0, 64], sizes = [2, 16], strides = [1, 1]} : vector<2x96xf32> to vector<2x16xf32>
    %776 = vector.extract_strided_slice %772 {offsets = [0, 80], sizes = [2, 16], strides = [1, 1]} : vector<2x96xf32> to vector<2x16xf32>
    %c0_325 = arith.constant 0 : index
    %c0_326 = arith.constant 0 : index
    %c0_327 = arith.constant 0 : index
    %777 = vector.load %arg5[%c0_325, %c0_326, %c0_327] : memref<2x16x32xf32, #tpu.memory_space<vmem>>, vector<1x16x32xf32>
    %778 = vector.shape_cast %777 : vector<1x16x32xf32> to vector<16x32xf32>
    %cst_328 = arith.constant dense<0.000000e+00> : vector<2x32xf32>
    %779 = tpu.matmul %770, %778, %cst_328 {dimension_numbers = #tpu.dot_dimension_numbers<[1], [0], [0], [1], [0, 0, 1, 1], [], []>} : vector<2x16xf32>, vector<16x32xf32>, vector<2x32xf32> -> vector<2x32xf32>
    %780 = arith.addf %773, %779 : vector<2x32xf32>
    %781 = arith.negf %780 : vector<2x32xf32>
    %782 = math.exp %781 : vector<2x32xf32>
    %cst_329 = arith.constant 1.000000e+00 : f32
    %783 = vector.broadcast %cst_329 : f32 to vector<2x32xf32>
    %784 = arith.addf %783, %782 : vector<2x32xf32>
    %785 = arith.divf %783, %784 : vector<2x32xf32>
    %786 = vector.extract_strided_slice %785 {offsets = [0, 0], sizes = [2, 16], strides = [1, 1]} : vector<2x32xf32> to vector<2x16xf32>
    %cst_330 = arith.constant 8.750000e-01 : f32
    %787 = vector.broadcast %cst_330 : f32 to vector<2x16xf32>
    %788 = arith.mulf %787, %786 : vector<2x16xf32>
    %cst_331 = arith.constant 1.250000e-01 : f32
    %789 = vector.broadcast %cst_331 : f32 to vector<2x16xf32>
    %790 = arith.addf %788, %789 : vector<2x16xf32>
    %791 = vector.extract_strided_slice %785 {offsets = [0, 16], sizes = [2, 16], strides = [1, 1]} : vector<2x32xf32> to vector<2x16xf32>
    %792 = arith.mulf %791, %770 : vector<2x16xf32>
    %c0_332 = arith.constant 0 : index
    %c0_333 = arith.constant 0 : index
    %c0_334 = arith.constant 0 : index
    %793 = vector.load %arg6[%c0_332, %c0_333, %c0_334] : memref<2x16x16xf32, #tpu.memory_space<vmem>>, vector<1x16x16xf32>
    %794 = vector.shape_cast %793 : vector<1x16x16xf32> to vector<16x16xf32>
    %cst_335 = arith.constant dense<0.000000e+00> : vector<2x16xf32>
    %795 = tpu.matmul %792, %794, %cst_335 {dimension_numbers = #tpu.dot_dimension_numbers<[1], [0], [0], [1], [0, 0, 1, 1], [], []>} : vector<2x16xf32>, vector<16x16xf32>, vector<2x16xf32> -> vector<2x16xf32>
    %796 = arith.addf %775, %795 : vector<2x16xf32>
    %797 = math.tanh %796 : vector<2x16xf32>
    %cst_336 = arith.constant 1.024000e+03 : f32
    %798 = vector.broadcast %cst_336 : f32 to vector<2x16xf32>
    %799 = arith.mulf %790, %798 : vector<2x16xf32>
    %800 = arith.fptosi %799 : vector<2x16xf32> to vector<2x16xi32>
    %c10_i32_337 = arith.constant 10 : i32
    %801 = vector.broadcast %c10_i32_337 : i32 to vector<2x16xi32>
    %802 = arith.shrsi %766, %801 : vector<2x16xi32>
    %c1024_i32_338 = arith.constant 1024 : i32
    %803 = vector.broadcast %c1024_i32_338 : i32 to vector<2x16xi32>
    %804 = arith.muli %802, %803 : vector<2x16xi32>
    %805 = arith.subi %766, %804 : vector<2x16xi32>
    %806 = arith.muli %805, %800 : vector<2x16xi32>
    %807 = arith.muli %802, %800 : vector<2x16xi32>
    %c10_i32_339 = arith.constant 10 : i32
    %808 = vector.broadcast %c10_i32_339 : i32 to vector<2x16xi32>
    %809 = arith.shrsi %806, %808 : vector<2x16xi32>
    %810 = arith.addi %807, %809 : vector<2x16xi32>
    %c1023_i32_340 = arith.constant 1023 : i32
    %811 = vector.broadcast %c1023_i32_340 : i32 to vector<2x16xi32>
    %812 = arith.andi %806, %811 : vector<2x16xi32>
    %cst_341 = arith.constant 1.000000e+00 : f32
    %813 = vector.broadcast %cst_341 : f32 to vector<2x16xf32>
    %814 = arith.subf %813, %790 : vector<2x16xf32>
    %815 = arith.mulf %814, %797 : vector<2x16xf32>
    %cst_342 = arith.constant 0x4B000000 : f32
    %816 = vector.broadcast %cst_342 : f32 to vector<2x16xf32>
    %817 = arith.mulf %815, %816 : vector<2x16xf32>
    %818 = arith.fptosi %817 : vector<2x16xf32> to vector<2x16xi32>
    %819 = arith.addi %810, %818 : vector<2x16xi32>
    %820 = arith.sitofp %819 : vector<2x16xi32> to vector<2x16xf32>
    %cst_343 = arith.constant 1.1920929E-7 : f32
    %821 = vector.broadcast %cst_343 : f32 to vector<2x16xf32>
    %822 = arith.mulf %820, %821 : vector<2x16xf32>
    %c0_344 = arith.constant 0 : index
    %c0_345 = arith.constant 0 : index
    %c0_346 = arith.constant 0 : index
    %823 = vector.load %arg7[%c0_344, %c0_345, %c0_346] : memref<2x16x32xf32, #tpu.memory_space<vmem>>, vector<1x16x32xf32>
    %824 = vector.shape_cast %823 : vector<1x16x32xf32> to vector<16x32xf32>
    %cst_347 = arith.constant dense<0.000000e+00> : vector<2x32xf32>
    %825 = tpu.matmul %822, %824, %cst_347 {dimension_numbers = #tpu.dot_dimension_numbers<[1], [0], [0], [1], [0, 0, 1, 1], [], []>} : vector<2x16xf32>, vector<16x32xf32>, vector<2x32xf32> -> vector<2x32xf32>
    %826 = arith.addf %774, %825 : vector<2x32xf32>
    %827 = arith.negf %826 : vector<2x32xf32>
    %828 = math.exp %827 : vector<2x32xf32>
    %cst_348 = arith.constant 1.000000e+00 : f32
    %829 = vector.broadcast %cst_348 : f32 to vector<2x32xf32>
    %830 = arith.addf %829, %828 : vector<2x32xf32>
    %831 = arith.divf %829, %830 : vector<2x32xf32>
    %832 = vector.extract_strided_slice %831 {offsets = [0, 0], sizes = [2, 16], strides = [1, 1]} : vector<2x32xf32> to vector<2x16xf32>
    %cst_349 = arith.constant 8.750000e-01 : f32
    %833 = vector.broadcast %cst_349 : f32 to vector<2x16xf32>
    %834 = arith.mulf %833, %832 : vector<2x16xf32>
    %cst_350 = arith.constant 1.250000e-01 : f32
    %835 = vector.broadcast %cst_350 : f32 to vector<2x16xf32>
    %836 = arith.addf %834, %835 : vector<2x16xf32>
    %837 = vector.extract_strided_slice %831 {offsets = [0, 16], sizes = [2, 16], strides = [1, 1]} : vector<2x32xf32> to vector<2x16xf32>
    %838 = arith.mulf %837, %822 : vector<2x16xf32>
    %c0_351 = arith.constant 0 : index
    %c0_352 = arith.constant 0 : index
    %c0_353 = arith.constant 0 : index
    %839 = vector.load %arg8[%c0_351, %c0_352, %c0_353] : memref<2x16x16xf32, #tpu.memory_space<vmem>>, vector<1x16x16xf32>
    %840 = vector.shape_cast %839 : vector<1x16x16xf32> to vector<16x16xf32>
    %cst_354 = arith.constant dense<0.000000e+00> : vector<2x16xf32>
    %841 = tpu.matmul %838, %840, %cst_354 {dimension_numbers = #tpu.dot_dimension_numbers<[1], [0], [0], [1], [0, 0, 1, 1], [], []>} : vector<2x16xf32>, vector<16x16xf32>, vector<2x16xf32> -> vector<2x16xf32>
    %842 = arith.addf %776, %841 : vector<2x16xf32>
    %843 = math.tanh %842 : vector<2x16xf32>
    %cst_355 = arith.constant 1.024000e+03 : f32
    %844 = vector.broadcast %cst_355 : f32 to vector<2x16xf32>
    %845 = arith.mulf %836, %844 : vector<2x16xf32>
    %846 = arith.fptosi %845 : vector<2x16xf32> to vector<2x16xi32>
    %c10_i32_356 = arith.constant 10 : i32
    %847 = vector.broadcast %c10_i32_356 : i32 to vector<2x16xi32>
    %848 = arith.shrsi %767, %847 : vector<2x16xi32>
    %c1024_i32_357 = arith.constant 1024 : i32
    %849 = vector.broadcast %c1024_i32_357 : i32 to vector<2x16xi32>
    %850 = arith.muli %848, %849 : vector<2x16xi32>
    %851 = arith.subi %767, %850 : vector<2x16xi32>
    %852 = arith.muli %851, %846 : vector<2x16xi32>
    %853 = arith.muli %848, %846 : vector<2x16xi32>
    %c10_i32_358 = arith.constant 10 : i32
    %854 = vector.broadcast %c10_i32_358 : i32 to vector<2x16xi32>
    %855 = arith.shrsi %852, %854 : vector<2x16xi32>
    %856 = arith.addi %853, %855 : vector<2x16xi32>
    %c1023_i32_359 = arith.constant 1023 : i32
    %857 = vector.broadcast %c1023_i32_359 : i32 to vector<2x16xi32>
    %858 = arith.andi %852, %857 : vector<2x16xi32>
    %cst_360 = arith.constant 1.000000e+00 : f32
    %859 = vector.broadcast %cst_360 : f32 to vector<2x16xf32>
    %860 = arith.subf %859, %836 : vector<2x16xf32>
    %861 = arith.mulf %860, %843 : vector<2x16xf32>
    %cst_361 = arith.constant 0x4B000000 : f32
    %862 = vector.broadcast %cst_361 : f32 to vector<2x16xf32>
    %863 = arith.mulf %861, %862 : vector<2x16xf32>
    %864 = arith.fptosi %863 : vector<2x16xf32> to vector<2x16xi32>
    %865 = arith.addi %856, %864 : vector<2x16xi32>
    %866 = tpu.concatenate %819, %865 in 1 : vector<2x16xi32>, vector<2x16xi32> -> vector<2x32xi32>
    %867 = tpu.concatenate %812, %858 in 1 : vector<2x16xi32>, vector<2x16xi32> -> vector<2x32xi32>
    %c3_362 = arith.constant 3 : index
    %c0_363 = arith.constant 0 : index
    %c0_364 = arith.constant 0 : index
    %c0_365 = arith.constant 0 : index
    %868 = vector.load %arg11[%c3_362, %c0_363, %c0_364, %c0_365] : memref<8x2x2x32xi32, #tpu.memory_space<vmem>>, vector<1x1x2x32xi32>
    %869 = vector.shape_cast %868 : vector<1x1x2x32xi32> to vector<2x32xi32>
    %870 = vector.shape_cast %867 : vector<2x32xi32> to vector<1x1x2x32xi32>
    tpu.vector_store %arg11[%c3_362, %c0_363, %c0_364, %c0_365], %870 {strides = array<i32>} : memref<8x2x2x32xi32, #tpu.memory_space<vmem>>, vector<1x1x2x32xi32>,
    %871 = math.log %790 : vector<2x16xf32>
    %cst_366 = arith.constant 2.000000e+00 : f32
    %872 = math.log %cst_366 : f32
    %873 = vector.broadcast %872 : f32 to vector<2x16xf32>
    %874 = arith.divf %871, %873 : vector<2x16xf32>
    %cst_367 = arith.constant 0.000000e+00 : f32
    %875 = vector.broadcast %cst_367 : f32 to vector<2x16xf32>
    %876 = arith.subf %875, %874 : vector<2x16xf32>
    %877 = arith.addf %762, %876 : vector<2x16xf32>
    %878 = math.log %836 : vector<2x16xf32>
    %cst_368 = arith.constant 2.000000e+00 : f32
    %879 = math.log %cst_368 : f32
    %880 = vector.broadcast %879 : f32 to vector<2x16xf32>
    %881 = arith.divf %878, %880 : vector<2x16xf32>
    %cst_369 = arith.constant 0.000000e+00 : f32
    %882 = vector.broadcast %cst_369 : f32 to vector<2x16xf32>
    %883 = arith.subf %882, %881 : vector<2x16xf32>
    %884 = arith.addf %877, %883 : vector<2x16xf32>
    %885 = arith.sitofp %866 : vector<2x32xi32> to vector<2x32xf32>
    %cst_370 = arith.constant 1.1920929E-7 : f32
    %886 = vector.broadcast %cst_370 : f32 to vector<2x32xf32>
    %887 = arith.mulf %885, %886 : vector<2x32xf32>
    %888 = vector.extract_strided_slice %743 {offsets = [0, 0], sizes = [2, 16], strides = [1, 1]} : vector<2x32xi32> to vector<2x16xi32>
    %889 = vector.extract_strided_slice %743 {offsets = [0, 16], sizes = [2, 16], strides = [1, 1]} : vector<2x32xi32> to vector<2x16xi32>
    %890 = arith.sitofp %889 : vector<2x16xi32> to vector<2x16xf32>
    %cst_371 = arith.constant 1.1920929E-7 : f32
    %891 = vector.broadcast %cst_371 : f32 to vector<2x16xf32>
    %892 = arith.mulf %890, %891 : vector<2x16xf32>
    %c0_372 = arith.constant 0 : index
    %c0_373 = arith.constant 0 : index
    %c0_374 = arith.constant 0 : index
    %893 = vector.load %arg3[%c0_372, %c0_373, %c0_374] : memref<1x32x96xf32, #tpu.memory_space<vmem>>, vector<1x32x96xf32>
    %894 = vector.shape_cast %893 : vector<1x32x96xf32> to vector<32x96xf32>
    %cst_375 = arith.constant dense<0.000000e+00> : vector<2x96xf32>
    %895 = tpu.matmul %887, %894, %cst_375 {dimension_numbers = #tpu.dot_dimension_numbers<[1], [0], [0], [1], [0, 0, 1, 1], [], []>} : vector<2x32xf32>, vector<32x96xf32>, vector<2x96xf32> -> vector<2x96xf32>
    %c0_376 = arith.constant 0 : index
    %c0_377 = arith.constant 0 : index
    %c0_378 = arith.constant 0 : index
    %896 = vector.load %arg4[%c0_376, %c0_377, %c0_378] : memref<1x1x96xf32, #tpu.memory_space<vmem>>, vector<1x1x96xf32>
    %897 = vector.shape_cast %896 : vector<1x1x96xf32> to vector<1x96xf32>
    %898 = vector.broadcast %897 : vector<1x96xf32> to vector<2x96xf32>
    %899 = arith.addf %895, %898 : vector<2x96xf32>
    %900 = vector.extract_strided_slice %899 {offsets = [0, 0], sizes = [2, 32], strides = [1, 1]} : vector<2x96xf32> to vector<2x32xf32>
    %901 = vector.extract_strided_slice %899 {offsets = [0, 32], sizes = [2, 32], strides = [1, 1]} : vector<2x96xf32> to vector<2x32xf32>
    %902 = vector.extract_strided_slice %899 {offsets = [0, 64], sizes = [2, 16], strides = [1, 1]} : vector<2x96xf32> to vector<2x16xf32>
    %903 = vector.extract_strided_slice %899 {offsets = [0, 80], sizes = [2, 16], strides = [1, 1]} : vector<2x96xf32> to vector<2x16xf32>
    %c1_379 = arith.constant 1 : index
    %c0_380 = arith.constant 0 : index
    %c0_381 = arith.constant 0 : index
    %904 = vector.load %arg5[%c1_379, %c0_380, %c0_381] : memref<2x16x32xf32, #tpu.memory_space<vmem>>, vector<1x16x32xf32>
    %905 = vector.shape_cast %904 : vector<1x16x32xf32> to vector<16x32xf32>
    %cst_382 = arith.constant dense<0.000000e+00> : vector<2x32xf32>
    %906 = tpu.matmul %892, %905, %cst_382 {dimension_numbers = #tpu.dot_dimension_numbers<[1], [0], [0], [1], [0, 0, 1, 1], [], []>} : vector<2x16xf32>, vector<16x32xf32>, vector<2x32xf32> -> vector<2x32xf32>
    %907 = arith.addf %900, %906 : vector<2x32xf32>
    %908 = arith.negf %907 : vector<2x32xf32>
    %909 = math.exp %908 : vector<2x32xf32>
    %cst_383 = arith.constant 1.000000e+00 : f32
    %910 = vector.broadcast %cst_383 : f32 to vector<2x32xf32>
    %911 = arith.addf %910, %909 : vector<2x32xf32>
    %912 = arith.divf %910, %911 : vector<2x32xf32>
    %913 = vector.extract_strided_slice %912 {offsets = [0, 0], sizes = [2, 16], strides = [1, 1]} : vector<2x32xf32> to vector<2x16xf32>
    %cst_384 = arith.constant 8.750000e-01 : f32
    %914 = vector.broadcast %cst_384 : f32 to vector<2x16xf32>
    %915 = arith.mulf %914, %913 : vector<2x16xf32>
    %cst_385 = arith.constant 1.250000e-01 : f32
    %916 = vector.broadcast %cst_385 : f32 to vector<2x16xf32>
    %917 = arith.addf %915, %916 : vector<2x16xf32>
    %918 = vector.extract_strided_slice %912 {offsets = [0, 16], sizes = [2, 16], strides = [1, 1]} : vector<2x32xf32> to vector<2x16xf32>
    %919 = arith.mulf %918, %892 : vector<2x16xf32>
    %c1_386 = arith.constant 1 : index
    %c0_387 = arith.constant 0 : index
    %c0_388 = arith.constant 0 : index
    %920 = vector.load %arg6[%c1_386, %c0_387, %c0_388] : memref<2x16x16xf32, #tpu.memory_space<vmem>>, vector<1x16x16xf32>
    %921 = vector.shape_cast %920 : vector<1x16x16xf32> to vector<16x16xf32>
    %cst_389 = arith.constant dense<0.000000e+00> : vector<2x16xf32>
    %922 = tpu.matmul %919, %921, %cst_389 {dimension_numbers = #tpu.dot_dimension_numbers<[1], [0], [0], [1], [0, 0, 1, 1], [], []>} : vector<2x16xf32>, vector<16x16xf32>, vector<2x16xf32> -> vector<2x16xf32>
    %923 = arith.addf %902, %922 : vector<2x16xf32>
    %924 = math.tanh %923 : vector<2x16xf32>
    %cst_390 = arith.constant 1.024000e+03 : f32
    %925 = vector.broadcast %cst_390 : f32 to vector<2x16xf32>
    %926 = arith.mulf %917, %925 : vector<2x16xf32>
    %927 = arith.fptosi %926 : vector<2x16xf32> to vector<2x16xi32>
    %c10_i32_391 = arith.constant 10 : i32
    %928 = vector.broadcast %c10_i32_391 : i32 to vector<2x16xi32>
    %929 = arith.shrsi %888, %928 : vector<2x16xi32>
    %c1024_i32_392 = arith.constant 1024 : i32
    %930 = vector.broadcast %c1024_i32_392 : i32 to vector<2x16xi32>
    %931 = arith.muli %929, %930 : vector<2x16xi32>
    %932 = arith.subi %888, %931 : vector<2x16xi32>
    %933 = arith.muli %932, %927 : vector<2x16xi32>
    %934 = arith.muli %929, %927 : vector<2x16xi32>
    %c10_i32_393 = arith.constant 10 : i32
    %935 = vector.broadcast %c10_i32_393 : i32 to vector<2x16xi32>
    %936 = arith.shrsi %933, %935 : vector<2x16xi32>
    %937 = arith.addi %934, %936 : vector<2x16xi32>
    %c1023_i32_394 = arith.constant 1023 : i32
    %938 = vector.broadcast %c1023_i32_394 : i32 to vector<2x16xi32>
    %939 = arith.andi %933, %938 : vector<2x16xi32>
    %cst_395 = arith.constant 1.000000e+00 : f32
    %940 = vector.broadcast %cst_395 : f32 to vector<2x16xf32>
    %941 = arith.subf %940, %917 : vector<2x16xf32>
    %942 = arith.mulf %941, %924 : vector<2x16xf32>
    %cst_396 = arith.constant 0x4B000000 : f32
    %943 = vector.broadcast %cst_396 : f32 to vector<2x16xf32>
    %944 = arith.mulf %942, %943 : vector<2x16xf32>
    %945 = arith.fptosi %944 : vector<2x16xf32> to vector<2x16xi32>
    %946 = arith.addi %937, %945 : vector<2x16xi32>
    %947 = arith.sitofp %946 : vector<2x16xi32> to vector<2x16xf32>
    %cst_397 = arith.constant 1.1920929E-7 : f32
    %948 = vector.broadcast %cst_397 : f32 to vector<2x16xf32>
    %949 = arith.mulf %947, %948 : vector<2x16xf32>
    %c1_398 = arith.constant 1 : index
    %c0_399 = arith.constant 0 : index
    %c0_400 = arith.constant 0 : index
    %950 = vector.load %arg7[%c1_398, %c0_399, %c0_400] : memref<2x16x32xf32, #tpu.memory_space<vmem>>, vector<1x16x32xf32>
    %951 = vector.shape_cast %950 : vector<1x16x32xf32> to vector<16x32xf32>
    %cst_401 = arith.constant dense<0.000000e+00> : vector<2x32xf32>
    %952 = tpu.matmul %949, %951, %cst_401 {dimension_numbers = #tpu.dot_dimension_numbers<[1], [0], [0], [1], [0, 0, 1, 1], [], []>} : vector<2x16xf32>, vector<16x32xf32>, vector<2x32xf32> -> vector<2x32xf32>
    %953 = arith.addf %901, %952 : vector<2x32xf32>
    %954 = arith.negf %953 : vector<2x32xf32>
    %955 = math.exp %954 : vector<2x32xf32>
    %cst_402 = arith.constant 1.000000e+00 : f32
    %956 = vector.broadcast %cst_402 : f32 to vector<2x32xf32>
    %957 = arith.addf %956, %955 : vector<2x32xf32>
    %958 = arith.divf %956, %957 : vector<2x32xf32>
    %959 = vector.extract_strided_slice %958 {offsets = [0, 0], sizes = [2, 16], strides = [1, 1]} : vector<2x32xf32> to vector<2x16xf32>
    %cst_403 = arith.constant 8.750000e-01 : f32
    %960 = vector.broadcast %cst_403 : f32 to vector<2x16xf32>
    %961 = arith.mulf %960, %959 : vector<2x16xf32>
    %cst_404 = arith.constant 1.250000e-01 : f32
    %962 = vector.broadcast %cst_404 : f32 to vector<2x16xf32>
    %963 = arith.addf %961, %962 : vector<2x16xf32>
    %964 = vector.extract_strided_slice %958 {offsets = [0, 16], sizes = [2, 16], strides = [1, 1]} : vector<2x32xf32> to vector<2x16xf32>
    %965 = arith.mulf %964, %949 : vector<2x16xf32>
    %c1_405 = arith.constant 1 : index
    %c0_406 = arith.constant 0 : index
    %c0_407 = arith.constant 0 : index
    %966 = vector.load %arg8[%c1_405, %c0_406, %c0_407] : memref<2x16x16xf32, #tpu.memory_space<vmem>>, vector<1x16x16xf32>
    %967 = vector.shape_cast %966 : vector<1x16x16xf32> to vector<16x16xf32>
    %cst_408 = arith.constant dense<0.000000e+00> : vector<2x16xf32>
    %968 = tpu.matmul %965, %967, %cst_408 {dimension_numbers = #tpu.dot_dimension_numbers<[1], [0], [0], [1], [0, 0, 1, 1], [], []>} : vector<2x16xf32>, vector<16x16xf32>, vector<2x16xf32> -> vector<2x16xf32>
    %969 = arith.addf %903, %968 : vector<2x16xf32>
    %970 = math.tanh %969 : vector<2x16xf32>
    %cst_409 = arith.constant 1.024000e+03 : f32
    %971 = vector.broadcast %cst_409 : f32 to vector<2x16xf32>
    %972 = arith.mulf %963, %971 : vector<2x16xf32>
    %973 = arith.fptosi %972 : vector<2x16xf32> to vector<2x16xi32>
    %c10_i32_410 = arith.constant 10 : i32
    %974 = vector.broadcast %c10_i32_410 : i32 to vector<2x16xi32>
    %975 = arith.shrsi %889, %974 : vector<2x16xi32>
    %c1024_i32_411 = arith.constant 1024 : i32
    %976 = vector.broadcast %c1024_i32_411 : i32 to vector<2x16xi32>
    %977 = arith.muli %975, %976 : vector<2x16xi32>
    %978 = arith.subi %889, %977 : vector<2x16xi32>
    %979 = arith.muli %978, %973 : vector<2x16xi32>
    %980 = arith.muli %975, %973 : vector<2x16xi32>
    %c10_i32_412 = arith.constant 10 : i32
    %981 = vector.broadcast %c10_i32_412 : i32 to vector<2x16xi32>
    %982 = arith.shrsi %979, %981 : vector<2x16xi32>
    %983 = arith.addi %980, %982 : vector<2x16xi32>
    %c1023_i32_413 = arith.constant 1023 : i32
    %984 = vector.broadcast %c1023_i32_413 : i32 to vector<2x16xi32>
    %985 = arith.andi %979, %984 : vector<2x16xi32>
    %cst_414 = arith.constant 1.000000e+00 : f32
    %986 = vector.broadcast %cst_414 : f32 to vector<2x16xf32>
    %987 = arith.subf %986, %963 : vector<2x16xf32>
    %988 = arith.mulf %987, %970 : vector<2x16xf32>
    %cst_415 = arith.constant 0x4B000000 : f32
    %989 = vector.broadcast %cst_415 : f32 to vector<2x16xf32>
    %990 = arith.mulf %988, %989 : vector<2x16xf32>
    %991 = arith.fptosi %990 : vector<2x16xf32> to vector<2x16xi32>
    %992 = arith.addi %983, %991 : vector<2x16xi32>
    %993 = tpu.concatenate %946, %992 in 1 : vector<2x16xi32>, vector<2x16xi32> -> vector<2x32xi32>
    %994 = tpu.concatenate %939, %985 in 1 : vector<2x16xi32>, vector<2x16xi32> -> vector<2x32xi32>
    %c3_416 = arith.constant 3 : index
    %c1_417 = arith.constant 1 : index
    %c0_418 = arith.constant 0 : index
    %c0_419 = arith.constant 0 : index
    %995 = vector.load %arg11[%c3_416, %c1_417, %c0_418, %c0_419] : memref<8x2x2x32xi32, #tpu.memory_space<vmem>>, vector<1x1x2x32xi32>
    %996 = vector.shape_cast %995 : vector<1x1x2x32xi32> to vector<2x32xi32>
    %997 = vector.shape_cast %994 : vector<2x32xi32> to vector<1x1x2x32xi32>
    tpu.vector_store %arg11[%c3_416, %c1_417, %c0_418, %c0_419], %997 {strides = array<i32>} : memref<8x2x2x32xi32, #tpu.memory_space<vmem>>, vector<1x1x2x32xi32>,
    %998 = math.log %917 : vector<2x16xf32>
    %cst_420 = arith.constant 2.000000e+00 : f32
    %999 = math.log %cst_420 : f32
    %1000 = vector.broadcast %999 : f32 to vector<2x16xf32>
    %1001 = arith.divf %998, %1000 : vector<2x16xf32>
    %cst_421 = arith.constant 0.000000e+00 : f32
    %1002 = vector.broadcast %cst_421 : f32 to vector<2x16xf32>
    %1003 = arith.subf %1002, %1001 : vector<2x16xf32>
    %1004 = arith.mulf %1003, %11 : vector<2x16xf32>
    %1005 = arith.addf %884, %1004 : vector<2x16xf32>
    %1006 = math.log %963 : vector<2x16xf32>
    %cst_422 = arith.constant 2.000000e+00 : f32
    %1007 = math.log %cst_422 : f32
    %1008 = vector.broadcast %1007 : f32 to vector<2x16xf32>
    %1009 = arith.divf %1006, %1008 : vector<2x16xf32>
    %cst_423 = arith.constant 0.000000e+00 : f32
    %1010 = vector.broadcast %cst_423 : f32 to vector<2x16xf32>
    %1011 = arith.subf %1010, %1009 : vector<2x16xf32>
    %1012 = arith.addf %1005, %1011 : vector<2x16xf32>
    %c4 = arith.constant 4 : index
    %c0_424 = arith.constant 0 : index
    %c0_425 = arith.constant 0 : index
    %1013 = vector.load %arg10[%c4, %c0_424, %c0_425] : memref<8x2x32xi32, #tpu.memory_space<vmem>>, vector<1x2x32xi32>
    %1014 = vector.shape_cast %1013 : vector<1x2x32xi32> to vector<2x32xi32>
    %1015 = vector.shape_cast %993 : vector<2x32xi32> to vector<1x2x32xi32>
    tpu.vector_store %arg10[%c4, %c0_424, %c0_425], %1015 {strides = array<i32>} : memref<8x2x32xi32, #tpu.memory_space<vmem>>, vector<1x2x32xi32>,
    %1016 = vector.extract_strided_slice %866 {offsets = [0, 0], sizes = [2, 16], strides = [1, 1]} : vector<2x32xi32> to vector<2x16xi32>
    %1017 = vector.extract_strided_slice %866 {offsets = [0, 16], sizes = [2, 16], strides = [1, 1]} : vector<2x32xi32> to vector<2x16xi32>
    %1018 = arith.sitofp %1017 : vector<2x16xi32> to vector<2x16xf32>
    %cst_426 = arith.constant 1.1920929E-7 : f32
    %1019 = vector.broadcast %cst_426 : f32 to vector<2x16xf32>
    %1020 = arith.mulf %1018, %1019 : vector<2x16xf32>
    %c4_427 = arith.constant 4 : index
    %c0_428 = arith.constant 0 : index
    %c0_429 = arith.constant 0 : index
    %1021 = vector.load %arg1[%c4_427, %c0_428, %c0_429] : memref<8x2x96xf32, #tpu.memory_space<vmem>>, vector<1x2x96xf32>
    %1022 = vector.shape_cast %1021 : vector<1x2x96xf32> to vector<2x96xf32>
    %1023 = vector.extract_strided_slice %1022 {offsets = [0, 0], sizes = [2, 32], strides = [1, 1]} : vector<2x96xf32> to vector<2x32xf32>
    %1024 = vector.extract_strided_slice %1022 {offsets = [0, 32], sizes = [2, 32], strides = [1, 1]} : vector<2x96xf32> to vector<2x32xf32>
    %1025 = vector.extract_strided_slice %1022 {offsets = [0, 64], sizes = [2, 16], strides = [1, 1]} : vector<2x96xf32> to vector<2x16xf32>
    %1026 = vector.extract_strided_slice %1022 {offsets = [0, 80], sizes = [2, 16], strides = [1, 1]} : vector<2x96xf32> to vector<2x16xf32>
    %c0_430 = arith.constant 0 : index
    %c0_431 = arith.constant 0 : index
    %c0_432 = arith.constant 0 : index
    %1027 = vector.load %arg5[%c0_430, %c0_431, %c0_432] : memref<2x16x32xf32, #tpu.memory_space<vmem>>, vector<1x16x32xf32>
    %1028 = vector.shape_cast %1027 : vector<1x16x32xf32> to vector<16x32xf32>
    %cst_433 = arith.constant dense<0.000000e+00> : vector<2x32xf32>
    %1029 = tpu.matmul %1020, %1028, %cst_433 {dimension_numbers = #tpu.dot_dimension_numbers<[1], [0], [0], [1], [0, 0, 1, 1], [], []>} : vector<2x16xf32>, vector<16x32xf32>, vector<2x32xf32> -> vector<2x32xf32>
    %1030 = arith.addf %1023, %1029 : vector<2x32xf32>
    %1031 = arith.negf %1030 : vector<2x32xf32>
    %1032 = math.exp %1031 : vector<2x32xf32>
    %cst_434 = arith.constant 1.000000e+00 : f32
    %1033 = vector.broadcast %cst_434 : f32 to vector<2x32xf32>
    %1034 = arith.addf %1033, %1032 : vector<2x32xf32>
    %1035 = arith.divf %1033, %1034 : vector<2x32xf32>
    %1036 = vector.extract_strided_slice %1035 {offsets = [0, 0], sizes = [2, 16], strides = [1, 1]} : vector<2x32xf32> to vector<2x16xf32>
    %cst_435 = arith.constant 8.750000e-01 : f32
    %1037 = vector.broadcast %cst_435 : f32 to vector<2x16xf32>
    %1038 = arith.mulf %1037, %1036 : vector<2x16xf32>
    %cst_436 = arith.constant 1.250000e-01 : f32
    %1039 = vector.broadcast %cst_436 : f32 to vector<2x16xf32>
    %1040 = arith.addf %1038, %1039 : vector<2x16xf32>
    %1041 = vector.extract_strided_slice %1035 {offsets = [0, 16], sizes = [2, 16], strides = [1, 1]} : vector<2x32xf32> to vector<2x16xf32>
    %1042 = arith.mulf %1041, %1020 : vector<2x16xf32>
    %c0_437 = arith.constant 0 : index
    %c0_438 = arith.constant 0 : index
    %c0_439 = arith.constant 0 : index
    %1043 = vector.load %arg6[%c0_437, %c0_438, %c0_439] : memref<2x16x16xf32, #tpu.memory_space<vmem>>, vector<1x16x16xf32>
    %1044 = vector.shape_cast %1043 : vector<1x16x16xf32> to vector<16x16xf32>
    %cst_440 = arith.constant dense<0.000000e+00> : vector<2x16xf32>
    %1045 = tpu.matmul %1042, %1044, %cst_440 {dimension_numbers = #tpu.dot_dimension_numbers<[1], [0], [0], [1], [0, 0, 1, 1], [], []>} : vector<2x16xf32>, vector<16x16xf32>, vector<2x16xf32> -> vector<2x16xf32>
    %1046 = arith.addf %1025, %1045 : vector<2x16xf32>
    %1047 = math.tanh %1046 : vector<2x16xf32>
    %cst_441 = arith.constant 1.024000e+03 : f32
    %1048 = vector.broadcast %cst_441 : f32 to vector<2x16xf32>
    %1049 = arith.mulf %1040, %1048 : vector<2x16xf32>
    %1050 = arith.fptosi %1049 : vector<2x16xf32> to vector<2x16xi32>
    %c10_i32_442 = arith.constant 10 : i32
    %1051 = vector.broadcast %c10_i32_442 : i32 to vector<2x16xi32>
    %1052 = arith.shrsi %1016, %1051 : vector<2x16xi32>
    %c1024_i32_443 = arith.constant 1024 : i32
    %1053 = vector.broadcast %c1024_i32_443 : i32 to vector<2x16xi32>
    %1054 = arith.muli %1052, %1053 : vector<2x16xi32>
    %1055 = arith.subi %1016, %1054 : vector<2x16xi32>
    %1056 = arith.muli %1055, %1050 : vector<2x16xi32>
    %1057 = arith.muli %1052, %1050 : vector<2x16xi32>
    %c10_i32_444 = arith.constant 10 : i32
    %1058 = vector.broadcast %c10_i32_444 : i32 to vector<2x16xi32>
    %1059 = arith.shrsi %1056, %1058 : vector<2x16xi32>
    %1060 = arith.addi %1057, %1059 : vector<2x16xi32>
    %c1023_i32_445 = arith.constant 1023 : i32
    %1061 = vector.broadcast %c1023_i32_445 : i32 to vector<2x16xi32>
    %1062 = arith.andi %1056, %1061 : vector<2x16xi32>
    %cst_446 = arith.constant 1.000000e+00 : f32
    %1063 = vector.broadcast %cst_446 : f32 to vector<2x16xf32>
    %1064 = arith.subf %1063, %1040 : vector<2x16xf32>
    %1065 = arith.mulf %1064, %1047 : vector<2x16xf32>
    %cst_447 = arith.constant 0x4B000000 : f32
    %1066 = vector.broadcast %cst_447 : f32 to vector<2x16xf32>
    %1067 = arith.mulf %1065, %1066 : vector<2x16xf32>
    %1068 = arith.fptosi %1067 : vector<2x16xf32> to vector<2x16xi32>
    %1069 = arith.addi %1060, %1068 : vector<2x16xi32>
    %1070 = arith.sitofp %1069 : vector<2x16xi32> to vector<2x16xf32>
    %cst_448 = arith.constant 1.1920929E-7 : f32
    %1071 = vector.broadcast %cst_448 : f32 to vector<2x16xf32>
    %1072 = arith.mulf %1070, %1071 : vector<2x16xf32>
    %c0_449 = arith.constant 0 : index
    %c0_450 = arith.constant 0 : index
    %c0_451 = arith.constant 0 : index
    %1073 = vector.load %arg7[%c0_449, %c0_450, %c0_451] : memref<2x16x32xf32, #tpu.memory_space<vmem>>, vector<1x16x32xf32>
    %1074 = vector.shape_cast %1073 : vector<1x16x32xf32> to vector<16x32xf32>
    %cst_452 = arith.constant dense<0.000000e+00> : vector<2x32xf32>
    %1075 = tpu.matmul %1072, %1074, %cst_452 {dimension_numbers = #tpu.dot_dimension_numbers<[1], [0], [0], [1], [0, 0, 1, 1], [], []>} : vector<2x16xf32>, vector<16x32xf32>, vector<2x32xf32> -> vector<2x32xf32>
    %1076 = arith.addf %1024, %1075 : vector<2x32xf32>
    %1077 = arith.negf %1076 : vector<2x32xf32>
    %1078 = math.exp %1077 : vector<2x32xf32>
    %cst_453 = arith.constant 1.000000e+00 : f32
    %1079 = vector.broadcast %cst_453 : f32 to vector<2x32xf32>
    %1080 = arith.addf %1079, %1078 : vector<2x32xf32>
    %1081 = arith.divf %1079, %1080 : vector<2x32xf32>
    %1082 = vector.extract_strided_slice %1081 {offsets = [0, 0], sizes = [2, 16], strides = [1, 1]} : vector<2x32xf32> to vector<2x16xf32>
    %cst_454 = arith.constant 8.750000e-01 : f32
    %1083 = vector.broadcast %cst_454 : f32 to vector<2x16xf32>
    %1084 = arith.mulf %1083, %1082 : vector<2x16xf32>
    %cst_455 = arith.constant 1.250000e-01 : f32
    %1085 = vector.broadcast %cst_455 : f32 to vector<2x16xf32>
    %1086 = arith.addf %1084, %1085 : vector<2x16xf32>
    %1087 = vector.extract_strided_slice %1081 {offsets = [0, 16], sizes = [2, 16], strides = [1, 1]} : vector<2x32xf32> to vector<2x16xf32>
    %1088 = arith.mulf %1087, %1072 : vector<2x16xf32>
    %c0_456 = arith.constant 0 : index
    %c0_457 = arith.constant 0 : index
    %c0_458 = arith.constant 0 : index
    %1089 = vector.load %arg8[%c0_456, %c0_457, %c0_458] : memref<2x16x16xf32, #tpu.memory_space<vmem>>, vector<1x16x16xf32>
    %1090 = vector.shape_cast %1089 : vector<1x16x16xf32> to vector<16x16xf32>
    %cst_459 = arith.constant dense<0.000000e+00> : vector<2x16xf32>
    %1091 = tpu.matmul %1088, %1090, %cst_459 {dimension_numbers = #tpu.dot_dimension_numbers<[1], [0], [0], [1], [0, 0, 1, 1], [], []>} : vector<2x16xf32>, vector<16x16xf32>, vector<2x16xf32> -> vector<2x16xf32>
    %1092 = arith.addf %1026, %1091 : vector<2x16xf32>
    %1093 = math.tanh %1092 : vector<2x16xf32>
    %cst_460 = arith.constant 1.024000e+03 : f32
    %1094 = vector.broadcast %cst_460 : f32 to vector<2x16xf32>
    %1095 = arith.mulf %1086, %1094 : vector<2x16xf32>
    %1096 = arith.fptosi %1095 : vector<2x16xf32> to vector<2x16xi32>
    %c10_i32_461 = arith.constant 10 : i32
    %1097 = vector.broadcast %c10_i32_461 : i32 to vector<2x16xi32>
    %1098 = arith.shrsi %1017, %1097 : vector<2x16xi32>
    %c1024_i32_462 = arith.constant 1024 : i32
    %1099 = vector.broadcast %c1024_i32_462 : i32 to vector<2x16xi32>
    %1100 = arith.muli %1098, %1099 : vector<2x16xi32>
    %1101 = arith.subi %1017, %1100 : vector<2x16xi32>
    %1102 = arith.muli %1101, %1096 : vector<2x16xi32>
    %1103 = arith.muli %1098, %1096 : vector<2x16xi32>
    %c10_i32_463 = arith.constant 10 : i32
    %1104 = vector.broadcast %c10_i32_463 : i32 to vector<2x16xi32>
    %1105 = arith.shrsi %1102, %1104 : vector<2x16xi32>
    %1106 = arith.addi %1103, %1105 : vector<2x16xi32>
    %c1023_i32_464 = arith.constant 1023 : i32
    %1107 = vector.broadcast %c1023_i32_464 : i32 to vector<2x16xi32>
    %1108 = arith.andi %1102, %1107 : vector<2x16xi32>
    %cst_465 = arith.constant 1.000000e+00 : f32
    %1109 = vector.broadcast %cst_465 : f32 to vector<2x16xf32>
    %1110 = arith.subf %1109, %1086 : vector<2x16xf32>
    %1111 = arith.mulf %1110, %1093 : vector<2x16xf32>
    %cst_466 = arith.constant 0x4B000000 : f32
    %1112 = vector.broadcast %cst_466 : f32 to vector<2x16xf32>
    %1113 = arith.mulf %1111, %1112 : vector<2x16xf32>
    %1114 = arith.fptosi %1113 : vector<2x16xf32> to vector<2x16xi32>
    %1115 = arith.addi %1106, %1114 : vector<2x16xi32>
    %1116 = tpu.concatenate %1069, %1115 in 1 : vector<2x16xi32>, vector<2x16xi32> -> vector<2x32xi32>
    %1117 = tpu.concatenate %1062, %1108 in 1 : vector<2x16xi32>, vector<2x16xi32> -> vector<2x32xi32>
    %c4_467 = arith.constant 4 : index
    %c0_468 = arith.constant 0 : index
    %c0_469 = arith.constant 0 : index
    %c0_470 = arith.constant 0 : index
    %1118 = vector.load %arg11[%c4_467, %c0_468, %c0_469, %c0_470] : memref<8x2x2x32xi32, #tpu.memory_space<vmem>>, vector<1x1x2x32xi32>
    %1119 = vector.shape_cast %1118 : vector<1x1x2x32xi32> to vector<2x32xi32>
    %1120 = vector.shape_cast %1117 : vector<2x32xi32> to vector<1x1x2x32xi32>
    tpu.vector_store %arg11[%c4_467, %c0_468, %c0_469, %c0_470], %1120 {strides = array<i32>} : memref<8x2x2x32xi32, #tpu.memory_space<vmem>>, vector<1x1x2x32xi32>,
    %1121 = math.log %1040 : vector<2x16xf32>
    %cst_471 = arith.constant 2.000000e+00 : f32
    %1122 = math.log %cst_471 : f32
    %1123 = vector.broadcast %1122 : f32 to vector<2x16xf32>
    %1124 = arith.divf %1121, %1123 : vector<2x16xf32>
    %cst_472 = arith.constant 0.000000e+00 : f32
    %1125 = vector.broadcast %cst_472 : f32 to vector<2x16xf32>
    %1126 = arith.subf %1125, %1124 : vector<2x16xf32>
    %1127 = arith.addf %1012, %1126 : vector<2x16xf32>
    %1128 = math.log %1086 : vector<2x16xf32>
    %cst_473 = arith.constant 2.000000e+00 : f32
    %1129 = math.log %cst_473 : f32
    %1130 = vector.broadcast %1129 : f32 to vector<2x16xf32>
    %1131 = arith.divf %1128, %1130 : vector<2x16xf32>
    %cst_474 = arith.constant 0.000000e+00 : f32
    %1132 = vector.broadcast %cst_474 : f32 to vector<2x16xf32>
    %1133 = arith.subf %1132, %1131 : vector<2x16xf32>
    %1134 = arith.addf %1127, %1133 : vector<2x16xf32>
    %1135 = arith.sitofp %1116 : vector<2x32xi32> to vector<2x32xf32>
    %cst_475 = arith.constant 1.1920929E-7 : f32
    %1136 = vector.broadcast %cst_475 : f32 to vector<2x32xf32>
    %1137 = arith.mulf %1135, %1136 : vector<2x32xf32>
    %1138 = vector.extract_strided_slice %993 {offsets = [0, 0], sizes = [2, 16], strides = [1, 1]} : vector<2x32xi32> to vector<2x16xi32>
    %1139 = vector.extract_strided_slice %993 {offsets = [0, 16], sizes = [2, 16], strides = [1, 1]} : vector<2x32xi32> to vector<2x16xi32>
    %1140 = arith.sitofp %1139 : vector<2x16xi32> to vector<2x16xf32>
    %cst_476 = arith.constant 1.1920929E-7 : f32
    %1141 = vector.broadcast %cst_476 : f32 to vector<2x16xf32>
    %1142 = arith.mulf %1140, %1141 : vector<2x16xf32>
    %c0_477 = arith.constant 0 : index
    %c0_478 = arith.constant 0 : index
    %c0_479 = arith.constant 0 : index
    %1143 = vector.load %arg3[%c0_477, %c0_478, %c0_479] : memref<1x32x96xf32, #tpu.memory_space<vmem>>, vector<1x32x96xf32>
    %1144 = vector.shape_cast %1143 : vector<1x32x96xf32> to vector<32x96xf32>
    %cst_480 = arith.constant dense<0.000000e+00> : vector<2x96xf32>
    %1145 = tpu.matmul %1137, %1144, %cst_480 {dimension_numbers = #tpu.dot_dimension_numbers<[1], [0], [0], [1], [0, 0, 1, 1], [], []>} : vector<2x32xf32>, vector<32x96xf32>, vector<2x96xf32> -> vector<2x96xf32>
    %c0_481 = arith.constant 0 : index
    %c0_482 = arith.constant 0 : index
    %c0_483 = arith.constant 0 : index
    %1146 = vector.load %arg4[%c0_481, %c0_482, %c0_483] : memref<1x1x96xf32, #tpu.memory_space<vmem>>, vector<1x1x96xf32>
    %1147 = vector.shape_cast %1146 : vector<1x1x96xf32> to vector<1x96xf32>
    %1148 = vector.broadcast %1147 : vector<1x96xf32> to vector<2x96xf32>
    %1149 = arith.addf %1145, %1148 : vector<2x96xf32>
    %1150 = vector.extract_strided_slice %1149 {offsets = [0, 0], sizes = [2, 32], strides = [1, 1]} : vector<2x96xf32> to vector<2x32xf32>
    %1151 = vector.extract_strided_slice %1149 {offsets = [0, 32], sizes = [2, 32], strides = [1, 1]} : vector<2x96xf32> to vector<2x32xf32>
    %1152 = vector.extract_strided_slice %1149 {offsets = [0, 64], sizes = [2, 16], strides = [1, 1]} : vector<2x96xf32> to vector<2x16xf32>
    %1153 = vector.extract_strided_slice %1149 {offsets = [0, 80], sizes = [2, 16], strides = [1, 1]} : vector<2x96xf32> to vector<2x16xf32>
    %c1_484 = arith.constant 1 : index
    %c0_485 = arith.constant 0 : index
    %c0_486 = arith.constant 0 : index
    %1154 = vector.load %arg5[%c1_484, %c0_485, %c0_486] : memref<2x16x32xf32, #tpu.memory_space<vmem>>, vector<1x16x32xf32>
    %1155 = vector.shape_cast %1154 : vector<1x16x32xf32> to vector<16x32xf32>
    %cst_487 = arith.constant dense<0.000000e+00> : vector<2x32xf32>
    %1156 = tpu.matmul %1142, %1155, %cst_487 {dimension_numbers = #tpu.dot_dimension_numbers<[1], [0], [0], [1], [0, 0, 1, 1], [], []>} : vector<2x16xf32>, vector<16x32xf32>, vector<2x32xf32> -> vector<2x32xf32>
    %1157 = arith.addf %1150, %1156 : vector<2x32xf32>
    %1158 = arith.negf %1157 : vector<2x32xf32>
    %1159 = math.exp %1158 : vector<2x32xf32>
    %cst_488 = arith.constant 1.000000e+00 : f32
    %1160 = vector.broadcast %cst_488 : f32 to vector<2x32xf32>
    %1161 = arith.addf %1160, %1159 : vector<2x32xf32>
    %1162 = arith.divf %1160, %1161 : vector<2x32xf32>
    %1163 = vector.extract_strided_slice %1162 {offsets = [0, 0], sizes = [2, 16], strides = [1, 1]} : vector<2x32xf32> to vector<2x16xf32>
    %cst_489 = arith.constant 8.750000e-01 : f32
    %1164 = vector.broadcast %cst_489 : f32 to vector<2x16xf32>
    %1165 = arith.mulf %1164, %1163 : vector<2x16xf32>
    %cst_490 = arith.constant 1.250000e-01 : f32
    %1166 = vector.broadcast %cst_490 : f32 to vector<2x16xf32>
    %1167 = arith.addf %1165, %1166 : vector<2x16xf32>
    %1168 = vector.extract_strided_slice %1162 {offsets = [0, 16], sizes = [2, 16], strides = [1, 1]} : vector<2x32xf32> to vector<2x16xf32>
    %1169 = arith.mulf %1168, %1142 : vector<2x16xf32>
    %c1_491 = arith.constant 1 : index
    %c0_492 = arith.constant 0 : index
    %c0_493 = arith.constant 0 : index
    %1170 = vector.load %arg6[%c1_491, %c0_492, %c0_493] : memref<2x16x16xf32, #tpu.memory_space<vmem>>, vector<1x16x16xf32>
    %1171 = vector.shape_cast %1170 : vector<1x16x16xf32> to vector<16x16xf32>
    %cst_494 = arith.constant dense<0.000000e+00> : vector<2x16xf32>
    %1172 = tpu.matmul %1169, %1171, %cst_494 {dimension_numbers = #tpu.dot_dimension_numbers<[1], [0], [0], [1], [0, 0, 1, 1], [], []>} : vector<2x16xf32>, vector<16x16xf32>, vector<2x16xf32> -> vector<2x16xf32>
    %1173 = arith.addf %1152, %1172 : vector<2x16xf32>
    %1174 = math.tanh %1173 : vector<2x16xf32>
    %cst_495 = arith.constant 1.024000e+03 : f32
    %1175 = vector.broadcast %cst_495 : f32 to vector<2x16xf32>
    %1176 = arith.mulf %1167, %1175 : vector<2x16xf32>
    %1177 = arith.fptosi %1176 : vector<2x16xf32> to vector<2x16xi32>
    %c10_i32_496 = arith.constant 10 : i32
    %1178 = vector.broadcast %c10_i32_496 : i32 to vector<2x16xi32>
    %1179 = arith.shrsi %1138, %1178 : vector<2x16xi32>
    %c1024_i32_497 = arith.constant 1024 : i32
    %1180 = vector.broadcast %c1024_i32_497 : i32 to vector<2x16xi32>
    %1181 = arith.muli %1179, %1180 : vector<2x16xi32>
    %1182 = arith.subi %1138, %1181 : vector<2x16xi32>
    %1183 = arith.muli %1182, %1177 : vector<2x16xi32>
    %1184 = arith.muli %1179, %1177 : vector<2x16xi32>
    %c10_i32_498 = arith.constant 10 : i32
    %1185 = vector.broadcast %c10_i32_498 : i32 to vector<2x16xi32>
    %1186 = arith.shrsi %1183, %1185 : vector<2x16xi32>
    %1187 = arith.addi %1184, %1186 : vector<2x16xi32>
    %c1023_i32_499 = arith.constant 1023 : i32
    %1188 = vector.broadcast %c1023_i32_499 : i32 to vector<2x16xi32>
    %1189 = arith.andi %1183, %1188 : vector<2x16xi32>
    %cst_500 = arith.constant 1.000000e+00 : f32
    %1190 = vector.broadcast %cst_500 : f32 to vector<2x16xf32>
    %1191 = arith.subf %1190, %1167 : vector<2x16xf32>
    %1192 = arith.mulf %1191, %1174 : vector<2x16xf32>
    %cst_501 = arith.constant 0x4B000000 : f32
    %1193 = vector.broadcast %cst_501 : f32 to vector<2x16xf32>
    %1194 = arith.mulf %1192, %1193 : vector<2x16xf32>
    %1195 = arith.fptosi %1194 : vector<2x16xf32> to vector<2x16xi32>
    %1196 = arith.addi %1187, %1195 : vector<2x16xi32>
    %1197 = arith.sitofp %1196 : vector<2x16xi32> to vector<2x16xf32>
    %cst_502 = arith.constant 1.1920929E-7 : f32
    %1198 = vector.broadcast %cst_502 : f32 to vector<2x16xf32>
    %1199 = arith.mulf %1197, %1198 : vector<2x16xf32>
    %c1_503 = arith.constant 1 : index
    %c0_504 = arith.constant 0 : index
    %c0_505 = arith.constant 0 : index
    %1200 = vector.load %arg7[%c1_503, %c0_504, %c0_505] : memref<2x16x32xf32, #tpu.memory_space<vmem>>, vector<1x16x32xf32>
    %1201 = vector.shape_cast %1200 : vector<1x16x32xf32> to vector<16x32xf32>
    %cst_506 = arith.constant dense<0.000000e+00> : vector<2x32xf32>
    %1202 = tpu.matmul %1199, %1201, %cst_506 {dimension_numbers = #tpu.dot_dimension_numbers<[1], [0], [0], [1], [0, 0, 1, 1], [], []>} : vector<2x16xf32>, vector<16x32xf32>, vector<2x32xf32> -> vector<2x32xf32>
    %1203 = arith.addf %1151, %1202 : vector<2x32xf32>
    %1204 = arith.negf %1203 : vector<2x32xf32>
    %1205 = math.exp %1204 : vector<2x32xf32>
    %cst_507 = arith.constant 1.000000e+00 : f32
    %1206 = vector.broadcast %cst_507 : f32 to vector<2x32xf32>
    %1207 = arith.addf %1206, %1205 : vector<2x32xf32>
    %1208 = arith.divf %1206, %1207 : vector<2x32xf32>
    %1209 = vector.extract_strided_slice %1208 {offsets = [0, 0], sizes = [2, 16], strides = [1, 1]} : vector<2x32xf32> to vector<2x16xf32>
    %cst_508 = arith.constant 8.750000e-01 : f32
    %1210 = vector.broadcast %cst_508 : f32 to vector<2x16xf32>
    %1211 = arith.mulf %1210, %1209 : vector<2x16xf32>
    %cst_509 = arith.constant 1.250000e-01 : f32
    %1212 = vector.broadcast %cst_509 : f32 to vector<2x16xf32>
    %1213 = arith.addf %1211, %1212 : vector<2x16xf32>
    %1214 = vector.extract_strided_slice %1208 {offsets = [0, 16], sizes = [2, 16], strides = [1, 1]} : vector<2x32xf32> to vector<2x16xf32>
    %1215 = arith.mulf %1214, %1199 : vector<2x16xf32>
    %c1_510 = arith.constant 1 : index
    %c0_511 = arith.constant 0 : index
    %c0_512 = arith.constant 0 : index
    %1216 = vector.load %arg8[%c1_510, %c0_511, %c0_512] : memref<2x16x16xf32, #tpu.memory_space<vmem>>, vector<1x16x16xf32>
    %1217 = vector.shape_cast %1216 : vector<1x16x16xf32> to vector<16x16xf32>
    %cst_513 = arith.constant dense<0.000000e+00> : vector<2x16xf32>
    %1218 = tpu.matmul %1215, %1217, %cst_513 {dimension_numbers = #tpu.dot_dimension_numbers<[1], [0], [0], [1], [0, 0, 1, 1], [], []>} : vector<2x16xf32>, vector<16x16xf32>, vector<2x16xf32> -> vector<2x16xf32>
    %1219 = arith.addf %1153, %1218 : vector<2x16xf32>
    %1220 = math.tanh %1219 : vector<2x16xf32>
    %cst_514 = arith.constant 1.024000e+03 : f32
    %1221 = vector.broadcast %cst_514 : f32 to vector<2x16xf32>
    %1222 = arith.mulf %1213, %1221 : vector<2x16xf32>
    %1223 = arith.fptosi %1222 : vector<2x16xf32> to vector<2x16xi32>
    %c10_i32_515 = arith.constant 10 : i32
    %1224 = vector.broadcast %c10_i32_515 : i32 to vector<2x16xi32>
    %1225 = arith.shrsi %1139, %1224 : vector<2x16xi32>
    %c1024_i32_516 = arith.constant 1024 : i32
    %1226 = vector.broadcast %c1024_i32_516 : i32 to vector<2x16xi32>
    %1227 = arith.muli %1225, %1226 : vector<2x16xi32>
    %1228 = arith.subi %1139, %1227 : vector<2x16xi32>
    %1229 = arith.muli %1228, %1223 : vector<2x16xi32>
    %1230 = arith.muli %1225, %1223 : vector<2x16xi32>
    %c10_i32_517 = arith.constant 10 : i32
    %1231 = vector.broadcast %c10_i32_517 : i32 to vector<2x16xi32>
    %1232 = arith.shrsi %1229, %1231 : vector<2x16xi32>
    %1233 = arith.addi %1230, %1232 : vector<2x16xi32>
    %c1023_i32_518 = arith.constant 1023 : i32
    %1234 = vector.broadcast %c1023_i32_518 : i32 to vector<2x16xi32>
    %1235 = arith.andi %1229, %1234 : vector<2x16xi32>
    %cst_519 = arith.constant 1.000000e+00 : f32
    %1236 = vector.broadcast %cst_519 : f32 to vector<2x16xf32>
    %1237 = arith.subf %1236, %1213 : vector<2x16xf32>
    %1238 = arith.mulf %1237, %1220 : vector<2x16xf32>
    %cst_520 = arith.constant 0x4B000000 : f32
    %1239 = vector.broadcast %cst_520 : f32 to vector<2x16xf32>
    %1240 = arith.mulf %1238, %1239 : vector<2x16xf32>
    %1241 = arith.fptosi %1240 : vector<2x16xf32> to vector<2x16xi32>
    %1242 = arith.addi %1233, %1241 : vector<2x16xi32>
    %1243 = tpu.concatenate %1196, %1242 in 1 : vector<2x16xi32>, vector<2x16xi32> -> vector<2x32xi32>
    %1244 = tpu.concatenate %1189, %1235 in 1 : vector<2x16xi32>, vector<2x16xi32> -> vector<2x32xi32>
    %c4_521 = arith.constant 4 : index
    %c1_522 = arith.constant 1 : index
    %c0_523 = arith.constant 0 : index
    %c0_524 = arith.constant 0 : index
    %1245 = vector.load %arg11[%c4_521, %c1_522, %c0_523, %c0_524] : memref<8x2x2x32xi32, #tpu.memory_space<vmem>>, vector<1x1x2x32xi32>
    %1246 = vector.shape_cast %1245 : vector<1x1x2x32xi32> to vector<2x32xi32>
    %1247 = vector.shape_cast %1244 : vector<2x32xi32> to vector<1x1x2x32xi32>
    tpu.vector_store %arg11[%c4_521, %c1_522, %c0_523, %c0_524], %1247 {strides = array<i32>} : memref<8x2x2x32xi32, #tpu.memory_space<vmem>>, vector<1x1x2x32xi32>,
    %1248 = math.log %1167 : vector<2x16xf32>
    %cst_525 = arith.constant 2.000000e+00 : f32
    %1249 = math.log %cst_525 : f32
    %1250 = vector.broadcast %1249 : f32 to vector<2x16xf32>
    %1251 = arith.divf %1248, %1250 : vector<2x16xf32>
    %cst_526 = arith.constant 0.000000e+00 : f32
    %1252 = vector.broadcast %cst_526 : f32 to vector<2x16xf32>
    %1253 = arith.subf %1252, %1251 : vector<2x16xf32>
    %1254 = arith.mulf %1253, %11 : vector<2x16xf32>
    %1255 = arith.addf %1134, %1254 : vector<2x16xf32>
    %1256 = math.log %1213 : vector<2x16xf32>
    %cst_527 = arith.constant 2.000000e+00 : f32
    %1257 = math.log %cst_527 : f32
    %1258 = vector.broadcast %1257 : f32 to vector<2x16xf32>
    %1259 = arith.divf %1256, %1258 : vector<2x16xf32>
    %cst_528 = arith.constant 0.000000e+00 : f32
    %1260 = vector.broadcast %cst_528 : f32 to vector<2x16xf32>
    %1261 = arith.subf %1260, %1259 : vector<2x16xf32>
    %1262 = arith.addf %1255, %1261 : vector<2x16xf32>
    %c5 = arith.constant 5 : index
    %c0_529 = arith.constant 0 : index
    %c0_530 = arith.constant 0 : index
    %1263 = vector.load %arg10[%c5, %c0_529, %c0_530] : memref<8x2x32xi32, #tpu.memory_space<vmem>>, vector<1x2x32xi32>
    %1264 = vector.shape_cast %1263 : vector<1x2x32xi32> to vector<2x32xi32>
    %1265 = vector.shape_cast %1243 : vector<2x32xi32> to vector<1x2x32xi32>
    tpu.vector_store %arg10[%c5, %c0_529, %c0_530], %1265 {strides = array<i32>} : memref<8x2x32xi32, #tpu.memory_space<vmem>>, vector<1x2x32xi32>,
    %1266 = vector.extract_strided_slice %1116 {offsets = [0, 0], sizes = [2, 16], strides = [1, 1]} : vector<2x32xi32> to vector<2x16xi32>
    %1267 = vector.extract_strided_slice %1116 {offsets = [0, 16], sizes = [2, 16], strides = [1, 1]} : vector<2x32xi32> to vector<2x16xi32>
    %1268 = arith.sitofp %1267 : vector<2x16xi32> to vector<2x16xf32>
    %cst_531 = arith.constant 1.1920929E-7 : f32
    %1269 = vector.broadcast %cst_531 : f32 to vector<2x16xf32>
    %1270 = arith.mulf %1268, %1269 : vector<2x16xf32>
    %c5_532 = arith.constant 5 : index
    %c0_533 = arith.constant 0 : index
    %c0_534 = arith.constant 0 : index
    %1271 = vector.load %arg1[%c5_532, %c0_533, %c0_534] : memref<8x2x96xf32, #tpu.memory_space<vmem>>, vector<1x2x96xf32>
    %1272 = vector.shape_cast %1271 : vector<1x2x96xf32> to vector<2x96xf32>
    %1273 = vector.extract_strided_slice %1272 {offsets = [0, 0], sizes = [2, 32], strides = [1, 1]} : vector<2x96xf32> to vector<2x32xf32>
    %1274 = vector.extract_strided_slice %1272 {offsets = [0, 32], sizes = [2, 32], strides = [1, 1]} : vector<2x96xf32> to vector<2x32xf32>
    %1275 = vector.extract_strided_slice %1272 {offsets = [0, 64], sizes = [2, 16], strides = [1, 1]} : vector<2x96xf32> to vector<2x16xf32>
    %1276 = vector.extract_strided_slice %1272 {offsets = [0, 80], sizes = [2, 16], strides = [1, 1]} : vector<2x96xf32> to vector<2x16xf32>
    %c0_535 = arith.constant 0 : index
    %c0_536 = arith.constant 0 : index
    %c0_537 = arith.constant 0 : index
    %1277 = vector.load %arg5[%c0_535, %c0_536, %c0_537] : memref<2x16x32xf32, #tpu.memory_space<vmem>>, vector<1x16x32xf32>
    %1278 = vector.shape_cast %1277 : vector<1x16x32xf32> to vector<16x32xf32>
    %cst_538 = arith.constant dense<0.000000e+00> : vector<2x32xf32>
    %1279 = tpu.matmul %1270, %1278, %cst_538 {dimension_numbers = #tpu.dot_dimension_numbers<[1], [0], [0], [1], [0, 0, 1, 1], [], []>} : vector<2x16xf32>, vector<16x32xf32>, vector<2x32xf32> -> vector<2x32xf32>
    %1280 = arith.addf %1273, %1279 : vector<2x32xf32>
    %1281 = arith.negf %1280 : vector<2x32xf32>
    %1282 = math.exp %1281 : vector<2x32xf32>
    %cst_539 = arith.constant 1.000000e+00 : f32
    %1283 = vector.broadcast %cst_539 : f32 to vector<2x32xf32>
    %1284 = arith.addf %1283, %1282 : vector<2x32xf32>
    %1285 = arith.divf %1283, %1284 : vector<2x32xf32>
    %1286 = vector.extract_strided_slice %1285 {offsets = [0, 0], sizes = [2, 16], strides = [1, 1]} : vector<2x32xf32> to vector<2x16xf32>
    %cst_540 = arith.constant 8.750000e-01 : f32
    %1287 = vector.broadcast %cst_540 : f32 to vector<2x16xf32>
    %1288 = arith.mulf %1287, %1286 : vector<2x16xf32>
    %cst_541 = arith.constant 1.250000e-01 : f32
    %1289 = vector.broadcast %cst_541 : f32 to vector<2x16xf32>
    %1290 = arith.addf %1288, %1289 : vector<2x16xf32>
    %1291 = vector.extract_strided_slice %1285 {offsets = [0, 16], sizes = [2, 16], strides = [1, 1]} : vector<2x32xf32> to vector<2x16xf32>
    %1292 = arith.mulf %1291, %1270 : vector<2x16xf32>
    %c0_542 = arith.constant 0 : index
    %c0_543 = arith.constant 0 : index
    %c0_544 = arith.constant 0 : index
    %1293 = vector.load %arg6[%c0_542, %c0_543, %c0_544] : memref<2x16x16xf32, #tpu.memory_space<vmem>>, vector<1x16x16xf32>
    %1294 = vector.shape_cast %1293 : vector<1x16x16xf32> to vector<16x16xf32>
    %cst_545 = arith.constant dense<0.000000e+00> : vector<2x16xf32>
    %1295 = tpu.matmul %1292, %1294, %cst_545 {dimension_numbers = #tpu.dot_dimension_numbers<[1], [0], [0], [1], [0, 0, 1, 1], [], []>} : vector<2x16xf32>, vector<16x16xf32>, vector<2x16xf32> -> vector<2x16xf32>
    %1296 = arith.addf %1275, %1295 : vector<2x16xf32>
    %1297 = math.tanh %1296 : vector<2x16xf32>
    %cst_546 = arith.constant 1.024000e+03 : f32
    %1298 = vector.broadcast %cst_546 : f32 to vector<2x16xf32>
    %1299 = arith.mulf %1290, %1298 : vector<2x16xf32>
    %1300 = arith.fptosi %1299 : vector<2x16xf32> to vector<2x16xi32>
    %c10_i32_547 = arith.constant 10 : i32
    %1301 = vector.broadcast %c10_i32_547 : i32 to vector<2x16xi32>
    %1302 = arith.shrsi %1266, %1301 : vector<2x16xi32>
    %c1024_i32_548 = arith.constant 1024 : i32
    %1303 = vector.broadcast %c1024_i32_548 : i32 to vector<2x16xi32>
    %1304 = arith.muli %1302, %1303 : vector<2x16xi32>
    %1305 = arith.subi %1266, %1304 : vector<2x16xi32>
    %1306 = arith.muli %1305, %1300 : vector<2x16xi32>
    %1307 = arith.muli %1302, %1300 : vector<2x16xi32>
    %c10_i32_549 = arith.constant 10 : i32
    %1308 = vector.broadcast %c10_i32_549 : i32 to vector<2x16xi32>
    %1309 = arith.shrsi %1306, %1308 : vector<2x16xi32>
    %1310 = arith.addi %1307, %1309 : vector<2x16xi32>
    %c1023_i32_550 = arith.constant 1023 : i32
    %1311 = vector.broadcast %c1023_i32_550 : i32 to vector<2x16xi32>
    %1312 = arith.andi %1306, %1311 : vector<2x16xi32>
    %cst_551 = arith.constant 1.000000e+00 : f32
    %1313 = vector.broadcast %cst_551 : f32 to vector<2x16xf32>
    %1314 = arith.subf %1313, %1290 : vector<2x16xf32>
    %1315 = arith.mulf %1314, %1297 : vector<2x16xf32>
    %cst_552 = arith.constant 0x4B000000 : f32
    %1316 = vector.broadcast %cst_552 : f32 to vector<2x16xf32>
    %1317 = arith.mulf %1315, %1316 : vector<2x16xf32>
    %1318 = arith.fptosi %1317 : vector<2x16xf32> to vector<2x16xi32>
    %1319 = arith.addi %1310, %1318 : vector<2x16xi32>
    %1320 = arith.sitofp %1319 : vector<2x16xi32> to vector<2x16xf32>
    %cst_553 = arith.constant 1.1920929E-7 : f32
    %1321 = vector.broadcast %cst_553 : f32 to vector<2x16xf32>
    %1322 = arith.mulf %1320, %1321 : vector<2x16xf32>
    %c0_554 = arith.constant 0 : index
    %c0_555 = arith.constant 0 : index
    %c0_556 = arith.constant 0 : index
    %1323 = vector.load %arg7[%c0_554, %c0_555, %c0_556] : memref<2x16x32xf32, #tpu.memory_space<vmem>>, vector<1x16x32xf32>
    %1324 = vector.shape_cast %1323 : vector<1x16x32xf32> to vector<16x32xf32>
    %cst_557 = arith.constant dense<0.000000e+00> : vector<2x32xf32>
    %1325 = tpu.matmul %1322, %1324, %cst_557 {dimension_numbers = #tpu.dot_dimension_numbers<[1], [0], [0], [1], [0, 0, 1, 1], [], []>} : vector<2x16xf32>, vector<16x32xf32>, vector<2x32xf32> -> vector<2x32xf32>
    %1326 = arith.addf %1274, %1325 : vector<2x32xf32>
    %1327 = arith.negf %1326 : vector<2x32xf32>
    %1328 = math.exp %1327 : vector<2x32xf32>
    %cst_558 = arith.constant 1.000000e+00 : f32
    %1329 = vector.broadcast %cst_558 : f32 to vector<2x32xf32>
    %1330 = arith.addf %1329, %1328 : vector<2x32xf32>
    %1331 = arith.divf %1329, %1330 : vector<2x32xf32>
    %1332 = vector.extract_strided_slice %1331 {offsets = [0, 0], sizes = [2, 16], strides = [1, 1]} : vector<2x32xf32> to vector<2x16xf32>
    %cst_559 = arith.constant 8.750000e-01 : f32
    %1333 = vector.broadcast %cst_559 : f32 to vector<2x16xf32>
    %1334 = arith.mulf %1333, %1332 : vector<2x16xf32>
    %cst_560 = arith.constant 1.250000e-01 : f32
    %1335 = vector.broadcast %cst_560 : f32 to vector<2x16xf32>
    %1336 = arith.addf %1334, %1335 : vector<2x16xf32>
    %1337 = vector.extract_strided_slice %1331 {offsets = [0, 16], sizes = [2, 16], strides = [1, 1]} : vector<2x32xf32> to vector<2x16xf32>
    %1338 = arith.mulf %1337, %1322 : vector<2x16xf32>
    %c0_561 = arith.constant 0 : index
    %c0_562 = arith.constant 0 : index
    %c0_563 = arith.constant 0 : index
    %1339 = vector.load %arg8[%c0_561, %c0_562, %c0_563] : memref<2x16x16xf32, #tpu.memory_space<vmem>>, vector<1x16x16xf32>
    %1340 = vector.shape_cast %1339 : vector<1x16x16xf32> to vector<16x16xf32>
    %cst_564 = arith.constant dense<0.000000e+00> : vector<2x16xf32>
    %1341 = tpu.matmul %1338, %1340, %cst_564 {dimension_numbers = #tpu.dot_dimension_numbers<[1], [0], [0], [1], [0, 0, 1, 1], [], []>} : vector<2x16xf32>, vector<16x16xf32>, vector<2x16xf32> -> vector<2x16xf32>
    %1342 = arith.addf %1276, %1341 : vector<2x16xf32>
    %1343 = math.tanh %1342 : vector<2x16xf32>
    %cst_565 = arith.constant 1.024000e+03 : f32
    %1344 = vector.broadcast %cst_565 : f32 to vector<2x16xf32>
    %1345 = arith.mulf %1336, %1344 : vector<2x16xf32>
    %1346 = arith.fptosi %1345 : vector<2x16xf32> to vector<2x16xi32>
    %c10_i32_566 = arith.constant 10 : i32
    %1347 = vector.broadcast %c10_i32_566 : i32 to vector<2x16xi32>
    %1348 = arith.shrsi %1267, %1347 : vector<2x16xi32>
    %c1024_i32_567 = arith.constant 1024 : i32
    %1349 = vector.broadcast %c1024_i32_567 : i32 to vector<2x16xi32>
    %1350 = arith.muli %1348, %1349 : vector<2x16xi32>
    %1351 = arith.subi %1267, %1350 : vector<2x16xi32>
    %1352 = arith.muli %1351, %1346 : vector<2x16xi32>
    %1353 = arith.muli %1348, %1346 : vector<2x16xi32>
    %c10_i32_568 = arith.constant 10 : i32
    %1354 = vector.broadcast %c10_i32_568 : i32 to vector<2x16xi32>
    %1355 = arith.shrsi %1352, %1354 : vector<2x16xi32>
    %1356 = arith.addi %1353, %1355 : vector<2x16xi32>
    %c1023_i32_569 = arith.constant 1023 : i32
    %1357 = vector.broadcast %c1023_i32_569 : i32 to vector<2x16xi32>
    %1358 = arith.andi %1352, %1357 : vector<2x16xi32>
    %cst_570 = arith.constant 1.000000e+00 : f32
    %1359 = vector.broadcast %cst_570 : f32 to vector<2x16xf32>
    %1360 = arith.subf %1359, %1336 : vector<2x16xf32>
    %1361 = arith.mulf %1360, %1343 : vector<2x16xf32>
    %cst_571 = arith.constant 0x4B000000 : f32
    %1362 = vector.broadcast %cst_571 : f32 to vector<2x16xf32>
    %1363 = arith.mulf %1361, %1362 : vector<2x16xf32>
    %1364 = arith.fptosi %1363 : vector<2x16xf32> to vector<2x16xi32>
    %1365 = arith.addi %1356, %1364 : vector<2x16xi32>
    %1366 = tpu.concatenate %1319, %1365 in 1 : vector<2x16xi32>, vector<2x16xi32> -> vector<2x32xi32>
    %1367 = tpu.concatenate %1312, %1358 in 1 : vector<2x16xi32>, vector<2x16xi32> -> vector<2x32xi32>
    %c5_572 = arith.constant 5 : index
    %c0_573 = arith.constant 0 : index
    %c0_574 = arith.constant 0 : index
    %c0_575 = arith.constant 0 : index
    %1368 = vector.load %arg11[%c5_572, %c0_573, %c0_574, %c0_575] : memref<8x2x2x32xi32, #tpu.memory_space<vmem>>, vector<1x1x2x32xi32>
    %1369 = vector.shape_cast %1368 : vector<1x1x2x32xi32> to vector<2x32xi32>
    %1370 = vector.shape_cast %1367 : vector<2x32xi32> to vector<1x1x2x32xi32>
    tpu.vector_store %arg11[%c5_572, %c0_573, %c0_574, %c0_575], %1370 {strides = array<i32>} : memref<8x2x2x32xi32, #tpu.memory_space<vmem>>, vector<1x1x2x32xi32>,
    %1371 = math.log %1290 : vector<2x16xf32>
    %cst_576 = arith.constant 2.000000e+00 : f32
    %1372 = math.log %cst_576 : f32
    %1373 = vector.broadcast %1372 : f32 to vector<2x16xf32>
    %1374 = arith.divf %1371, %1373 : vector<2x16xf32>
    %cst_577 = arith.constant 0.000000e+00 : f32
    %1375 = vector.broadcast %cst_577 : f32 to vector<2x16xf32>
    %1376 = arith.subf %1375, %1374 : vector<2x16xf32>
    %1377 = arith.addf %1262, %1376 : vector<2x16xf32>
    %1378 = math.log %1336 : vector<2x16xf32>
    %cst_578 = arith.constant 2.000000e+00 : f32
    %1379 = math.log %cst_578 : f32
    %1380 = vector.broadcast %1379 : f32 to vector<2x16xf32>
    %1381 = arith.divf %1378, %1380 : vector<2x16xf32>
    %cst_579 = arith.constant 0.000000e+00 : f32
    %1382 = vector.broadcast %cst_579 : f32 to vector<2x16xf32>
    %1383 = arith.subf %1382, %1381 : vector<2x16xf32>
    %1384 = arith.addf %1377, %1383 : vector<2x16xf32>
    %1385 = arith.sitofp %1366 : vector<2x32xi32> to vector<2x32xf32>
    %cst_580 = arith.constant 1.1920929E-7 : f32
    %1386 = vector.broadcast %cst_580 : f32 to vector<2x32xf32>
    %1387 = arith.mulf %1385, %1386 : vector<2x32xf32>
    %1388 = vector.extract_strided_slice %1243 {offsets = [0, 0], sizes = [2, 16], strides = [1, 1]} : vector<2x32xi32> to vector<2x16xi32>
    %1389 = vector.extract_strided_slice %1243 {offsets = [0, 16], sizes = [2, 16], strides = [1, 1]} : vector<2x32xi32> to vector<2x16xi32>
    %1390 = arith.sitofp %1389 : vector<2x16xi32> to vector<2x16xf32>
    %cst_581 = arith.constant 1.1920929E-7 : f32
    %1391 = vector.broadcast %cst_581 : f32 to vector<2x16xf32>
    %1392 = arith.mulf %1390, %1391 : vector<2x16xf32>
    %c0_582 = arith.constant 0 : index
    %c0_583 = arith.constant 0 : index
    %c0_584 = arith.constant 0 : index
    %1393 = vector.load %arg3[%c0_582, %c0_583, %c0_584] : memref<1x32x96xf32, #tpu.memory_space<vmem>>, vector<1x32x96xf32>
    %1394 = vector.shape_cast %1393 : vector<1x32x96xf32> to vector<32x96xf32>
    %cst_585 = arith.constant dense<0.000000e+00> : vector<2x96xf32>
    %1395 = tpu.matmul %1387, %1394, %cst_585 {dimension_numbers = #tpu.dot_dimension_numbers<[1], [0], [0], [1], [0, 0, 1, 1], [], []>} : vector<2x32xf32>, vector<32x96xf32>, vector<2x96xf32> -> vector<2x96xf32>
    %c0_586 = arith.constant 0 : index
    %c0_587 = arith.constant 0 : index
    %c0_588 = arith.constant 0 : index
    %1396 = vector.load %arg4[%c0_586, %c0_587, %c0_588] : memref<1x1x96xf32, #tpu.memory_space<vmem>>, vector<1x1x96xf32>
    %1397 = vector.shape_cast %1396 : vector<1x1x96xf32> to vector<1x96xf32>
    %1398 = vector.broadcast %1397 : vector<1x96xf32> to vector<2x96xf32>
    %1399 = arith.addf %1395, %1398 : vector<2x96xf32>
    %1400 = vector.extract_strided_slice %1399 {offsets = [0, 0], sizes = [2, 32], strides = [1, 1]} : vector<2x96xf32> to vector<2x32xf32>
    %1401 = vector.extract_strided_slice %1399 {offsets = [0, 32], sizes = [2, 32], strides = [1, 1]} : vector<2x96xf32> to vector<2x32xf32>
    %1402 = vector.extract_strided_slice %1399 {offsets = [0, 64], sizes = [2, 16], strides = [1, 1]} : vector<2x96xf32> to vector<2x16xf32>
    %1403 = vector.extract_strided_slice %1399 {offsets = [0, 80], sizes = [2, 16], strides = [1, 1]} : vector<2x96xf32> to vector<2x16xf32>
    %c1_589 = arith.constant 1 : index
    %c0_590 = arith.constant 0 : index
    %c0_591 = arith.constant 0 : index
    %1404 = vector.load %arg5[%c1_589, %c0_590, %c0_591] : memref<2x16x32xf32, #tpu.memory_space<vmem>>, vector<1x16x32xf32>
    %1405 = vector.shape_cast %1404 : vector<1x16x32xf32> to vector<16x32xf32>
    %cst_592 = arith.constant dense<0.000000e+00> : vector<2x32xf32>
    %1406 = tpu.matmul %1392, %1405, %cst_592 {dimension_numbers = #tpu.dot_dimension_numbers<[1], [0], [0], [1], [0, 0, 1, 1], [], []>} : vector<2x16xf32>, vector<16x32xf32>, vector<2x32xf32> -> vector<2x32xf32>
    %1407 = arith.addf %1400, %1406 : vector<2x32xf32>
    %1408 = arith.negf %1407 : vector<2x32xf32>
    %1409 = math.exp %1408 : vector<2x32xf32>
    %cst_593 = arith.constant 1.000000e+00 : f32
    %1410 = vector.broadcast %cst_593 : f32 to vector<2x32xf32>
    %1411 = arith.addf %1410, %1409 : vector<2x32xf32>
    %1412 = arith.divf %1410, %1411 : vector<2x32xf32>
    %1413 = vector.extract_strided_slice %1412 {offsets = [0, 0], sizes = [2, 16], strides = [1, 1]} : vector<2x32xf32> to vector<2x16xf32>
    %cst_594 = arith.constant 8.750000e-01 : f32
    %1414 = vector.broadcast %cst_594 : f32 to vector<2x16xf32>
    %1415 = arith.mulf %1414, %1413 : vector<2x16xf32>
    %cst_595 = arith.constant 1.250000e-01 : f32
    %1416 = vector.broadcast %cst_595 : f32 to vector<2x16xf32>
    %1417 = arith.addf %1415, %1416 : vector<2x16xf32>
    %1418 = vector.extract_strided_slice %1412 {offsets = [0, 16], sizes = [2, 16], strides = [1, 1]} : vector<2x32xf32> to vector<2x16xf32>
    %1419 = arith.mulf %1418, %1392 : vector<2x16xf32>
    %c1_596 = arith.constant 1 : index
    %c0_597 = arith.constant 0 : index
    %c0_598 = arith.constant 0 : index
    %1420 = vector.load %arg6[%c1_596, %c0_597, %c0_598] : memref<2x16x16xf32, #tpu.memory_space<vmem>>, vector<1x16x16xf32>
    %1421 = vector.shape_cast %1420 : vector<1x16x16xf32> to vector<16x16xf32>
    %cst_599 = arith.constant dense<0.000000e+00> : vector<2x16xf32>
    %1422 = tpu.matmul %1419, %1421, %cst_599 {dimension_numbers = #tpu.dot_dimension_numbers<[1], [0], [0], [1], [0, 0, 1, 1], [], []>} : vector<2x16xf32>, vector<16x16xf32>, vector<2x16xf32> -> vector<2x16xf32>
    %1423 = arith.addf %1402, %1422 : vector<2x16xf32>
    %1424 = math.tanh %1423 : vector<2x16xf32>
    %cst_600 = arith.constant 1.024000e+03 : f32
    %1425 = vector.broadcast %cst_600 : f32 to vector<2x16xf32>
    %1426 = arith.mulf %1417, %1425 : vector<2x16xf32>
    %1427 = arith.fptosi %1426 : vector<2x16xf32> to vector<2x16xi32>
    %c10_i32_601 = arith.constant 10 : i32
    %1428 = vector.broadcast %c10_i32_601 : i32 to vector<2x16xi32>
    %1429 = arith.shrsi %1388, %1428 : vector<2x16xi32>
    %c1024_i32_602 = arith.constant 1024 : i32
    %1430 = vector.broadcast %c1024_i32_602 : i32 to vector<2x16xi32>
    %1431 = arith.muli %1429, %1430 : vector<2x16xi32>
    %1432 = arith.subi %1388, %1431 : vector<2x16xi32>
    %1433 = arith.muli %1432, %1427 : vector<2x16xi32>
    %1434 = arith.muli %1429, %1427 : vector<2x16xi32>
    %c10_i32_603 = arith.constant 10 : i32
    %1435 = vector.broadcast %c10_i32_603 : i32 to vector<2x16xi32>
    %1436 = arith.shrsi %1433, %1435 : vector<2x16xi32>
    %1437 = arith.addi %1434, %1436 : vector<2x16xi32>
    %c1023_i32_604 = arith.constant 1023 : i32
    %1438 = vector.broadcast %c1023_i32_604 : i32 to vector<2x16xi32>
    %1439 = arith.andi %1433, %1438 : vector<2x16xi32>
    %cst_605 = arith.constant 1.000000e+00 : f32
    %1440 = vector.broadcast %cst_605 : f32 to vector<2x16xf32>
    %1441 = arith.subf %1440, %1417 : vector<2x16xf32>
    %1442 = arith.mulf %1441, %1424 : vector<2x16xf32>
    %cst_606 = arith.constant 0x4B000000 : f32
    %1443 = vector.broadcast %cst_606 : f32 to vector<2x16xf32>
    %1444 = arith.mulf %1442, %1443 : vector<2x16xf32>
    %1445 = arith.fptosi %1444 : vector<2x16xf32> to vector<2x16xi32>
    %1446 = arith.addi %1437, %1445 : vector<2x16xi32>
    %1447 = arith.sitofp %1446 : vector<2x16xi32> to vector<2x16xf32>
    %cst_607 = arith.constant 1.1920929E-7 : f32
    %1448 = vector.broadcast %cst_607 : f32 to vector<2x16xf32>
    %1449 = arith.mulf %1447, %1448 : vector<2x16xf32>
    %c1_608 = arith.constant 1 : index
    %c0_609 = arith.constant 0 : index
    %c0_610 = arith.constant 0 : index
    %1450 = vector.load %arg7[%c1_608, %c0_609, %c0_610] : memref<2x16x32xf32, #tpu.memory_space<vmem>>, vector<1x16x32xf32>
    %1451 = vector.shape_cast %1450 : vector<1x16x32xf32> to vector<16x32xf32>
    %cst_611 = arith.constant dense<0.000000e+00> : vector<2x32xf32>
    %1452 = tpu.matmul %1449, %1451, %cst_611 {dimension_numbers = #tpu.dot_dimension_numbers<[1], [0], [0], [1], [0, 0, 1, 1], [], []>} : vector<2x16xf32>, vector<16x32xf32>, vector<2x32xf32> -> vector<2x32xf32>
    %1453 = arith.addf %1401, %1452 : vector<2x32xf32>
    %1454 = arith.negf %1453 : vector<2x32xf32>
    %1455 = math.exp %1454 : vector<2x32xf32>
    %cst_612 = arith.constant 1.000000e+00 : f32
    %1456 = vector.broadcast %cst_612 : f32 to vector<2x32xf32>
    %1457 = arith.addf %1456, %1455 : vector<2x32xf32>
    %1458 = arith.divf %1456, %1457 : vector<2x32xf32>
    %1459 = vector.extract_strided_slice %1458 {offsets = [0, 0], sizes = [2, 16], strides = [1, 1]} : vector<2x32xf32> to vector<2x16xf32>
    %cst_613 = arith.constant 8.750000e-01 : f32
    %1460 = vector.broadcast %cst_613 : f32 to vector<2x16xf32>
    %1461 = arith.mulf %1460, %1459 : vector<2x16xf32>
    %cst_614 = arith.constant 1.250000e-01 : f32
    %1462 = vector.broadcast %cst_614 : f32 to vector<2x16xf32>
    %1463 = arith.addf %1461, %1462 : vector<2x16xf32>
    %1464 = vector.extract_strided_slice %1458 {offsets = [0, 16], sizes = [2, 16], strides = [1, 1]} : vector<2x32xf32> to vector<2x16xf32>
    %1465 = arith.mulf %1464, %1449 : vector<2x16xf32>
    %c1_615 = arith.constant 1 : index
    %c0_616 = arith.constant 0 : index
    %c0_617 = arith.constant 0 : index
    %1466 = vector.load %arg8[%c1_615, %c0_616, %c0_617] : memref<2x16x16xf32, #tpu.memory_space<vmem>>, vector<1x16x16xf32>
    %1467 = vector.shape_cast %1466 : vector<1x16x16xf32> to vector<16x16xf32>
    %cst_618 = arith.constant dense<0.000000e+00> : vector<2x16xf32>
    %1468 = tpu.matmul %1465, %1467, %cst_618 {dimension_numbers = #tpu.dot_dimension_numbers<[1], [0], [0], [1], [0, 0, 1, 1], [], []>} : vector<2x16xf32>, vector<16x16xf32>, vector<2x16xf32> -> vector<2x16xf32>
    %1469 = arith.addf %1403, %1468 : vector<2x16xf32>
    %1470 = math.tanh %1469 : vector<2x16xf32>
    %cst_619 = arith.constant 1.024000e+03 : f32
    %1471 = vector.broadcast %cst_619 : f32 to vector<2x16xf32>
    %1472 = arith.mulf %1463, %1471 : vector<2x16xf32>
    %1473 = arith.fptosi %1472 : vector<2x16xf32> to vector<2x16xi32>
    %c10_i32_620 = arith.constant 10 : i32
    %1474 = vector.broadcast %c10_i32_620 : i32 to vector<2x16xi32>
    %1475 = arith.shrsi %1389, %1474 : vector<2x16xi32>
    %c1024_i32_621 = arith.constant 1024 : i32
    %1476 = vector.broadcast %c1024_i32_621 : i32 to vector<2x16xi32>
    %1477 = arith.muli %1475, %1476 : vector<2x16xi32>
    %1478 = arith.subi %1389, %1477 : vector<2x16xi32>
    %1479 = arith.muli %1478, %1473 : vector<2x16xi32>
    %1480 = arith.muli %1475, %1473 : vector<2x16xi32>
    %c10_i32_622 = arith.constant 10 : i32
    %1481 = vector.broadcast %c10_i32_622 : i32 to vector<2x16xi32>
    %1482 = arith.shrsi %1479, %1481 : vector<2x16xi32>
    %1483 = arith.addi %1480, %1482 : vector<2x16xi32>
    %c1023_i32_623 = arith.constant 1023 : i32
    %1484 = vector.broadcast %c1023_i32_623 : i32 to vector<2x16xi32>
    %1485 = arith.andi %1479, %1484 : vector<2x16xi32>
    %cst_624 = arith.constant 1.000000e+00 : f32
    %1486 = vector.broadcast %cst_624 : f32 to vector<2x16xf32>
    %1487 = arith.subf %1486, %1463 : vector<2x16xf32>
    %1488 = arith.mulf %1487, %1470 : vector<2x16xf32>
    %cst_625 = arith.constant 0x4B000000 : f32
    %1489 = vector.broadcast %cst_625 : f32 to vector<2x16xf32>
    %1490 = arith.mulf %1488, %1489 : vector<2x16xf32>
    %1491 = arith.fptosi %1490 : vector<2x16xf32> to vector<2x16xi32>
    %1492 = arith.addi %1483, %1491 : vector<2x16xi32>
    %1493 = tpu.concatenate %1446, %1492 in 1 : vector<2x16xi32>, vector<2x16xi32> -> vector<2x32xi32>
    %1494 = tpu.concatenate %1439, %1485 in 1 : vector<2x16xi32>, vector<2x16xi32> -> vector<2x32xi32>
    %c5_626 = arith.constant 5 : index
    %c1_627 = arith.constant 1 : index
    %c0_628 = arith.constant 0 : index
    %c0_629 = arith.constant 0 : index
    %1495 = vector.load %arg11[%c5_626, %c1_627, %c0_628, %c0_629] : memref<8x2x2x32xi32, #tpu.memory_space<vmem>>, vector<1x1x2x32xi32>
    %1496 = vector.shape_cast %1495 : vector<1x1x2x32xi32> to vector<2x32xi32>
    %1497 = vector.shape_cast %1494 : vector<2x32xi32> to vector<1x1x2x32xi32>
    tpu.vector_store %arg11[%c5_626, %c1_627, %c0_628, %c0_629], %1497 {strides = array<i32>} : memref<8x2x2x32xi32, #tpu.memory_space<vmem>>, vector<1x1x2x32xi32>,
    %1498 = math.log %1417 : vector<2x16xf32>
    %cst_630 = arith.constant 2.000000e+00 : f32
    %1499 = math.log %cst_630 : f32
    %1500 = vector.broadcast %1499 : f32 to vector<2x16xf32>
    %1501 = arith.divf %1498, %1500 : vector<2x16xf32>
    %cst_631 = arith.constant 0.000000e+00 : f32
    %1502 = vector.broadcast %cst_631 : f32 to vector<2x16xf32>
    %1503 = arith.subf %1502, %1501 : vector<2x16xf32>
    %1504 = arith.mulf %1503, %11 : vector<2x16xf32>
    %1505 = arith.addf %1384, %1504 : vector<2x16xf32>
    %1506 = math.log %1463 : vector<2x16xf32>
    %cst_632 = arith.constant 2.000000e+00 : f32
    %1507 = math.log %cst_632 : f32
    %1508 = vector.broadcast %1507 : f32 to vector<2x16xf32>
    %1509 = arith.divf %1506, %1508 : vector<2x16xf32>
    %cst_633 = arith.constant 0.000000e+00 : f32
    %1510 = vector.broadcast %cst_633 : f32 to vector<2x16xf32>
    %1511 = arith.subf %1510, %1509 : vector<2x16xf32>
    %1512 = arith.addf %1505, %1511 : vector<2x16xf32>
    %c6 = arith.constant 6 : index
    %c0_634 = arith.constant 0 : index
    %c0_635 = arith.constant 0 : index
    %1513 = vector.load %arg10[%c6, %c0_634, %c0_635] : memref<8x2x32xi32, #tpu.memory_space<vmem>>, vector<1x2x32xi32>
    %1514 = vector.shape_cast %1513 : vector<1x2x32xi32> to vector<2x32xi32>
    %1515 = vector.shape_cast %1493 : vector<2x32xi32> to vector<1x2x32xi32>
    tpu.vector_store %arg10[%c6, %c0_634, %c0_635], %1515 {strides = array<i32>} : memref<8x2x32xi32, #tpu.memory_space<vmem>>, vector<1x2x32xi32>,
    %1516 = vector.extract_strided_slice %1366 {offsets = [0, 0], sizes = [2, 16], strides = [1, 1]} : vector<2x32xi32> to vector<2x16xi32>
    %1517 = vector.extract_strided_slice %1366 {offsets = [0, 16], sizes = [2, 16], strides = [1, 1]} : vector<2x32xi32> to vector<2x16xi32>
    %1518 = arith.sitofp %1517 : vector<2x16xi32> to vector<2x16xf32>
    %cst_636 = arith.constant 1.1920929E-7 : f32
    %1519 = vector.broadcast %cst_636 : f32 to vector<2x16xf32>
    %1520 = arith.mulf %1518, %1519 : vector<2x16xf32>
    %c6_637 = arith.constant 6 : index
    %c0_638 = arith.constant 0 : index
    %c0_639 = arith.constant 0 : index
    %1521 = vector.load %arg1[%c6_637, %c0_638, %c0_639] : memref<8x2x96xf32, #tpu.memory_space<vmem>>, vector<1x2x96xf32>
    %1522 = vector.shape_cast %1521 : vector<1x2x96xf32> to vector<2x96xf32>
    %1523 = vector.extract_strided_slice %1522 {offsets = [0, 0], sizes = [2, 32], strides = [1, 1]} : vector<2x96xf32> to vector<2x32xf32>
    %1524 = vector.extract_strided_slice %1522 {offsets = [0, 32], sizes = [2, 32], strides = [1, 1]} : vector<2x96xf32> to vector<2x32xf32>
    %1525 = vector.extract_strided_slice %1522 {offsets = [0, 64], sizes = [2, 16], strides = [1, 1]} : vector<2x96xf32> to vector<2x16xf32>
    %1526 = vector.extract_strided_slice %1522 {offsets = [0, 80], sizes = [2, 16], strides = [1, 1]} : vector<2x96xf32> to vector<2x16xf32>
    %c0_640 = arith.constant 0 : index
    %c0_641 = arith.constant 0 : index
    %c0_642 = arith.constant 0 : index
    %1527 = vector.load %arg5[%c0_640, %c0_641, %c0_642] : memref<2x16x32xf32, #tpu.memory_space<vmem>>, vector<1x16x32xf32>
    %1528 = vector.shape_cast %1527 : vector<1x16x32xf32> to vector<16x32xf32>
    %cst_643 = arith.constant dense<0.000000e+00> : vector<2x32xf32>
    %1529 = tpu.matmul %1520, %1528, %cst_643 {dimension_numbers = #tpu.dot_dimension_numbers<[1], [0], [0], [1], [0, 0, 1, 1], [], []>} : vector<2x16xf32>, vector<16x32xf32>, vector<2x32xf32> -> vector<2x32xf32>
    %1530 = arith.addf %1523, %1529 : vector<2x32xf32>
    %1531 = arith.negf %1530 : vector<2x32xf32>
    %1532 = math.exp %1531 : vector<2x32xf32>
    %cst_644 = arith.constant 1.000000e+00 : f32
    %1533 = vector.broadcast %cst_644 : f32 to vector<2x32xf32>
    %1534 = arith.addf %1533, %1532 : vector<2x32xf32>
    %1535 = arith.divf %1533, %1534 : vector<2x32xf32>
    %1536 = vector.extract_strided_slice %1535 {offsets = [0, 0], sizes = [2, 16], strides = [1, 1]} : vector<2x32xf32> to vector<2x16xf32>
    %cst_645 = arith.constant 8.750000e-01 : f32
    %1537 = vector.broadcast %cst_645 : f32 to vector<2x16xf32>
    %1538 = arith.mulf %1537, %1536 : vector<2x16xf32>
    %cst_646 = arith.constant 1.250000e-01 : f32
    %1539 = vector.broadcast %cst_646 : f32 to vector<2x16xf32>
    %1540 = arith.addf %1538, %1539 : vector<2x16xf32>
    %1541 = vector.extract_strided_slice %1535 {offsets = [0, 16], sizes = [2, 16], strides = [1, 1]} : vector<2x32xf32> to vector<2x16xf32>
    %1542 = arith.mulf %1541, %1520 : vector<2x16xf32>
    %c0_647 = arith.constant 0 : index
    %c0_648 = arith.constant 0 : index
    %c0_649 = arith.constant 0 : index
    %1543 = vector.load %arg6[%c0_647, %c0_648, %c0_649] : memref<2x16x16xf32, #tpu.memory_space<vmem>>, vector<1x16x16xf32>
    %1544 = vector.shape_cast %1543 : vector<1x16x16xf32> to vector<16x16xf32>
    %cst_650 = arith.constant dense<0.000000e+00> : vector<2x16xf32>
    %1545 = tpu.matmul %1542, %1544, %cst_650 {dimension_numbers = #tpu.dot_dimension_numbers<[1], [0], [0], [1], [0, 0, 1, 1], [], []>} : vector<2x16xf32>, vector<16x16xf32>, vector<2x16xf32> -> vector<2x16xf32>
    %1546 = arith.addf %1525, %1545 : vector<2x16xf32>
    %1547 = math.tanh %1546 : vector<2x16xf32>
    %cst_651 = arith.constant 1.024000e+03 : f32
    %1548 = vector.broadcast %cst_651 : f32 to vector<2x16xf32>
    %1549 = arith.mulf %1540, %1548 : vector<2x16xf32>
    %1550 = arith.fptosi %1549 : vector<2x16xf32> to vector<2x16xi32>
    %c10_i32_652 = arith.constant 10 : i32
    %1551 = vector.broadcast %c10_i32_652 : i32 to vector<2x16xi32>
    %1552 = arith.shrsi %1516, %1551 : vector<2x16xi32>
    %c1024_i32_653 = arith.constant 1024 : i32
    %1553 = vector.broadcast %c1024_i32_653 : i32 to vector<2x16xi32>
    %1554 = arith.muli %1552, %1553 : vector<2x16xi32>
    %1555 = arith.subi %1516, %1554 : vector<2x16xi32>
    %1556 = arith.muli %1555, %1550 : vector<2x16xi32>
    %1557 = arith.muli %1552, %1550 : vector<2x16xi32>
    %c10_i32_654 = arith.constant 10 : i32
    %1558 = vector.broadcast %c10_i32_654 : i32 to vector<2x16xi32>
    %1559 = arith.shrsi %1556, %1558 : vector<2x16xi32>
    %1560 = arith.addi %1557, %1559 : vector<2x16xi32>
    %c1023_i32_655 = arith.constant 1023 : i32
    %1561 = vector.broadcast %c1023_i32_655 : i32 to vector<2x16xi32>
    %1562 = arith.andi %1556, %1561 : vector<2x16xi32>
    %cst_656 = arith.constant 1.000000e+00 : f32
    %1563 = vector.broadcast %cst_656 : f32 to vector<2x16xf32>
    %1564 = arith.subf %1563, %1540 : vector<2x16xf32>
    %1565 = arith.mulf %1564, %1547 : vector<2x16xf32>
    %cst_657 = arith.constant 0x4B000000 : f32
    %1566 = vector.broadcast %cst_657 : f32 to vector<2x16xf32>
    %1567 = arith.mulf %1565, %1566 : vector<2x16xf32>
    %1568 = arith.fptosi %1567 : vector<2x16xf32> to vector<2x16xi32>
    %1569 = arith.addi %1560, %1568 : vector<2x16xi32>
    %1570 = arith.sitofp %1569 : vector<2x16xi32> to vector<2x16xf32>
    %cst_658 = arith.constant 1.1920929E-7 : f32
    %1571 = vector.broadcast %cst_658 : f32 to vector<2x16xf32>
    %1572 = arith.mulf %1570, %1571 : vector<2x16xf32>
    %c0_659 = arith.constant 0 : index
    %c0_660 = arith.constant 0 : index
    %c0_661 = arith.constant 0 : index
    %1573 = vector.load %arg7[%c0_659, %c0_660, %c0_661] : memref<2x16x32xf32, #tpu.memory_space<vmem>>, vector<1x16x32xf32>
    %1574 = vector.shape_cast %1573 : vector<1x16x32xf32> to vector<16x32xf32>
    %cst_662 = arith.constant dense<0.000000e+00> : vector<2x32xf32>
    %1575 = tpu.matmul %1572, %1574, %cst_662 {dimension_numbers = #tpu.dot_dimension_numbers<[1], [0], [0], [1], [0, 0, 1, 1], [], []>} : vector<2x16xf32>, vector<16x32xf32>, vector<2x32xf32> -> vector<2x32xf32>
    %1576 = arith.addf %1524, %1575 : vector<2x32xf32>
    %1577 = arith.negf %1576 : vector<2x32xf32>
    %1578 = math.exp %1577 : vector<2x32xf32>
    %cst_663 = arith.constant 1.000000e+00 : f32
    %1579 = vector.broadcast %cst_663 : f32 to vector<2x32xf32>
    %1580 = arith.addf %1579, %1578 : vector<2x32xf32>
    %1581 = arith.divf %1579, %1580 : vector<2x32xf32>
    %1582 = vector.extract_strided_slice %1581 {offsets = [0, 0], sizes = [2, 16], strides = [1, 1]} : vector<2x32xf32> to vector<2x16xf32>
    %cst_664 = arith.constant 8.750000e-01 : f32
    %1583 = vector.broadcast %cst_664 : f32 to vector<2x16xf32>
    %1584 = arith.mulf %1583, %1582 : vector<2x16xf32>
    %cst_665 = arith.constant 1.250000e-01 : f32
    %1585 = vector.broadcast %cst_665 : f32 to vector<2x16xf32>
    %1586 = arith.addf %1584, %1585 : vector<2x16xf32>
    %1587 = vector.extract_strided_slice %1581 {offsets = [0, 16], sizes = [2, 16], strides = [1, 1]} : vector<2x32xf32> to vector<2x16xf32>
    %1588 = arith.mulf %1587, %1572 : vector<2x16xf32>
    %c0_666 = arith.constant 0 : index
    %c0_667 = arith.constant 0 : index
    %c0_668 = arith.constant 0 : index
    %1589 = vector.load %arg8[%c0_666, %c0_667, %c0_668] : memref<2x16x16xf32, #tpu.memory_space<vmem>>, vector<1x16x16xf32>
    %1590 = vector.shape_cast %1589 : vector<1x16x16xf32> to vector<16x16xf32>
    %cst_669 = arith.constant dense<0.000000e+00> : vector<2x16xf32>
    %1591 = tpu.matmul %1588, %1590, %cst_669 {dimension_numbers = #tpu.dot_dimension_numbers<[1], [0], [0], [1], [0, 0, 1, 1], [], []>} : vector<2x16xf32>, vector<16x16xf32>, vector<2x16xf32> -> vector<2x16xf32>
    %1592 = arith.addf %1526, %1591 : vector<2x16xf32>
    %1593 = math.tanh %1592 : vector<2x16xf32>
    %cst_670 = arith.constant 1.024000e+03 : f32
    %1594 = vector.broadcast %cst_670 : f32 to vector<2x16xf32>
    %1595 = arith.mulf %1586, %1594 : vector<2x16xf32>
    %1596 = arith.fptosi %1595 : vector<2x16xf32> to vector<2x16xi32>
    %c10_i32_671 = arith.constant 10 : i32
    %1597 = vector.broadcast %c10_i32_671 : i32 to vector<2x16xi32>
    %1598 = arith.shrsi %1517, %1597 : vector<2x16xi32>
    %c1024_i32_672 = arith.constant 1024 : i32
    %1599 = vector.broadcast %c1024_i32_672 : i32 to vector<2x16xi32>
    %1600 = arith.muli %1598, %1599 : vector<2x16xi32>
    %1601 = arith.subi %1517, %1600 : vector<2x16xi32>
    %1602 = arith.muli %1601, %1596 : vector<2x16xi32>
    %1603 = arith.muli %1598, %1596 : vector<2x16xi32>
    %c10_i32_673 = arith.constant 10 : i32
    %1604 = vector.broadcast %c10_i32_673 : i32 to vector<2x16xi32>
    %1605 = arith.shrsi %1602, %1604 : vector<2x16xi32>
    %1606 = arith.addi %1603, %1605 : vector<2x16xi32>
    %c1023_i32_674 = arith.constant 1023 : i32
    %1607 = vector.broadcast %c1023_i32_674 : i32 to vector<2x16xi32>
    %1608 = arith.andi %1602, %1607 : vector<2x16xi32>
    %cst_675 = arith.constant 1.000000e+00 : f32
    %1609 = vector.broadcast %cst_675 : f32 to vector<2x16xf32>
    %1610 = arith.subf %1609, %1586 : vector<2x16xf32>
    %1611 = arith.mulf %1610, %1593 : vector<2x16xf32>
    %cst_676 = arith.constant 0x4B000000 : f32
    %1612 = vector.broadcast %cst_676 : f32 to vector<2x16xf32>
    %1613 = arith.mulf %1611, %1612 : vector<2x16xf32>
    %1614 = arith.fptosi %1613 : vector<2x16xf32> to vector<2x16xi32>
    %1615 = arith.addi %1606, %1614 : vector<2x16xi32>
    %1616 = tpu.concatenate %1569, %1615 in 1 : vector<2x16xi32>, vector<2x16xi32> -> vector<2x32xi32>
    %1617 = tpu.concatenate %1562, %1608 in 1 : vector<2x16xi32>, vector<2x16xi32> -> vector<2x32xi32>
    %c6_677 = arith.constant 6 : index
    %c0_678 = arith.constant 0 : index
    %c0_679 = arith.constant 0 : index
    %c0_680 = arith.constant 0 : index
    %1618 = vector.load %arg11[%c6_677, %c0_678, %c0_679, %c0_680] : memref<8x2x2x32xi32, #tpu.memory_space<vmem>>, vector<1x1x2x32xi32>
    %1619 = vector.shape_cast %1618 : vector<1x1x2x32xi32> to vector<2x32xi32>
    %1620 = vector.shape_cast %1617 : vector<2x32xi32> to vector<1x1x2x32xi32>
    tpu.vector_store %arg11[%c6_677, %c0_678, %c0_679, %c0_680], %1620 {strides = array<i32>} : memref<8x2x2x32xi32, #tpu.memory_space<vmem>>, vector<1x1x2x32xi32>,
    %1621 = math.log %1540 : vector<2x16xf32>
    %cst_681 = arith.constant 2.000000e+00 : f32
    %1622 = math.log %cst_681 : f32
    %1623 = vector.broadcast %1622 : f32 to vector<2x16xf32>
    %1624 = arith.divf %1621, %1623 : vector<2x16xf32>
    %cst_682 = arith.constant 0.000000e+00 : f32
    %1625 = vector.broadcast %cst_682 : f32 to vector<2x16xf32>
    %1626 = arith.subf %1625, %1624 : vector<2x16xf32>
    %1627 = arith.addf %1512, %1626 : vector<2x16xf32>
    %1628 = math.log %1586 : vector<2x16xf32>
    %cst_683 = arith.constant 2.000000e+00 : f32
    %1629 = math.log %cst_683 : f32
    %1630 = vector.broadcast %1629 : f32 to vector<2x16xf32>
    %1631 = arith.divf %1628, %1630 : vector<2x16xf32>
    %cst_684 = arith.constant 0.000000e+00 : f32
    %1632 = vector.broadcast %cst_684 : f32 to vector<2x16xf32>
    %1633 = arith.subf %1632, %1631 : vector<2x16xf32>
    %1634 = arith.addf %1627, %1633 : vector<2x16xf32>
    %1635 = arith.sitofp %1616 : vector<2x32xi32> to vector<2x32xf32>
    %cst_685 = arith.constant 1.1920929E-7 : f32
    %1636 = vector.broadcast %cst_685 : f32 to vector<2x32xf32>
    %1637 = arith.mulf %1635, %1636 : vector<2x32xf32>
    %1638 = vector.extract_strided_slice %1493 {offsets = [0, 0], sizes = [2, 16], strides = [1, 1]} : vector<2x32xi32> to vector<2x16xi32>
    %1639 = vector.extract_strided_slice %1493 {offsets = [0, 16], sizes = [2, 16], strides = [1, 1]} : vector<2x32xi32> to vector<2x16xi32>
    %1640 = arith.sitofp %1639 : vector<2x16xi32> to vector<2x16xf32>
    %cst_686 = arith.constant 1.1920929E-7 : f32
    %1641 = vector.broadcast %cst_686 : f32 to vector<2x16xf32>
    %1642 = arith.mulf %1640, %1641 : vector<2x16xf32>
    %c0_687 = arith.constant 0 : index
    %c0_688 = arith.constant 0 : index
    %c0_689 = arith.constant 0 : index
    %1643 = vector.load %arg3[%c0_687, %c0_688, %c0_689] : memref<1x32x96xf32, #tpu.memory_space<vmem>>, vector<1x32x96xf32>
    %1644 = vector.shape_cast %1643 : vector<1x32x96xf32> to vector<32x96xf32>
    %cst_690 = arith.constant dense<0.000000e+00> : vector<2x96xf32>
    %1645 = tpu.matmul %1637, %1644, %cst_690 {dimension_numbers = #tpu.dot_dimension_numbers<[1], [0], [0], [1], [0, 0, 1, 1], [], []>} : vector<2x32xf32>, vector<32x96xf32>, vector<2x96xf32> -> vector<2x96xf32>
    %c0_691 = arith.constant 0 : index
    %c0_692 = arith.constant 0 : index
    %c0_693 = arith.constant 0 : index
    %1646 = vector.load %arg4[%c0_691, %c0_692, %c0_693] : memref<1x1x96xf32, #tpu.memory_space<vmem>>, vector<1x1x96xf32>
    %1647 = vector.shape_cast %1646 : vector<1x1x96xf32> to vector<1x96xf32>
    %1648 = vector.broadcast %1647 : vector<1x96xf32> to vector<2x96xf32>
    %1649 = arith.addf %1645, %1648 : vector<2x96xf32>
    %1650 = vector.extract_strided_slice %1649 {offsets = [0, 0], sizes = [2, 32], strides = [1, 1]} : vector<2x96xf32> to vector<2x32xf32>
    %1651 = vector.extract_strided_slice %1649 {offsets = [0, 32], sizes = [2, 32], strides = [1, 1]} : vector<2x96xf32> to vector<2x32xf32>
    %1652 = vector.extract_strided_slice %1649 {offsets = [0, 64], sizes = [2, 16], strides = [1, 1]} : vector<2x96xf32> to vector<2x16xf32>
    %1653 = vector.extract_strided_slice %1649 {offsets = [0, 80], sizes = [2, 16], strides = [1, 1]} : vector<2x96xf32> to vector<2x16xf32>
    %c1_694 = arith.constant 1 : index
    %c0_695 = arith.constant 0 : index
    %c0_696 = arith.constant 0 : index
    %1654 = vector.load %arg5[%c1_694, %c0_695, %c0_696] : memref<2x16x32xf32, #tpu.memory_space<vmem>>, vector<1x16x32xf32>
    %1655 = vector.shape_cast %1654 : vector<1x16x32xf32> to vector<16x32xf32>
    %cst_697 = arith.constant dense<0.000000e+00> : vector<2x32xf32>
    %1656 = tpu.matmul %1642, %1655, %cst_697 {dimension_numbers = #tpu.dot_dimension_numbers<[1], [0], [0], [1], [0, 0, 1, 1], [], []>} : vector<2x16xf32>, vector<16x32xf32>, vector<2x32xf32> -> vector<2x32xf32>
    %1657 = arith.addf %1650, %1656 : vector<2x32xf32>
    %1658 = arith.negf %1657 : vector<2x32xf32>
    %1659 = math.exp %1658 : vector<2x32xf32>
    %cst_698 = arith.constant 1.000000e+00 : f32
    %1660 = vector.broadcast %cst_698 : f32 to vector<2x32xf32>
    %1661 = arith.addf %1660, %1659 : vector<2x32xf32>
    %1662 = arith.divf %1660, %1661 : vector<2x32xf32>
    %1663 = vector.extract_strided_slice %1662 {offsets = [0, 0], sizes = [2, 16], strides = [1, 1]} : vector<2x32xf32> to vector<2x16xf32>
    %cst_699 = arith.constant 8.750000e-01 : f32
    %1664 = vector.broadcast %cst_699 : f32 to vector<2x16xf32>
    %1665 = arith.mulf %1664, %1663 : vector<2x16xf32>
    %cst_700 = arith.constant 1.250000e-01 : f32
    %1666 = vector.broadcast %cst_700 : f32 to vector<2x16xf32>
    %1667 = arith.addf %1665, %1666 : vector<2x16xf32>
    %1668 = vector.extract_strided_slice %1662 {offsets = [0, 16], sizes = [2, 16], strides = [1, 1]} : vector<2x32xf32> to vector<2x16xf32>
    %1669 = arith.mulf %1668, %1642 : vector<2x16xf32>
    %c1_701 = arith.constant 1 : index
    %c0_702 = arith.constant 0 : index
    %c0_703 = arith.constant 0 : index
    %1670 = vector.load %arg6[%c1_701, %c0_702, %c0_703] : memref<2x16x16xf32, #tpu.memory_space<vmem>>, vector<1x16x16xf32>
    %1671 = vector.shape_cast %1670 : vector<1x16x16xf32> to vector<16x16xf32>
    %cst_704 = arith.constant dense<0.000000e+00> : vector<2x16xf32>
    %1672 = tpu.matmul %1669, %1671, %cst_704 {dimension_numbers = #tpu.dot_dimension_numbers<[1], [0], [0], [1], [0, 0, 1, 1], [], []>} : vector<2x16xf32>, vector<16x16xf32>, vector<2x16xf32> -> vector<2x16xf32>
    %1673 = arith.addf %1652, %1672 : vector<2x16xf32>
    %1674 = math.tanh %1673 : vector<2x16xf32>
    %cst_705 = arith.constant 1.024000e+03 : f32
    %1675 = vector.broadcast %cst_705 : f32 to vector<2x16xf32>
    %1676 = arith.mulf %1667, %1675 : vector<2x16xf32>
    %1677 = arith.fptosi %1676 : vector<2x16xf32> to vector<2x16xi32>
    %c10_i32_706 = arith.constant 10 : i32
    %1678 = vector.broadcast %c10_i32_706 : i32 to vector<2x16xi32>
    %1679 = arith.shrsi %1638, %1678 : vector<2x16xi32>
    %c1024_i32_707 = arith.constant 1024 : i32
    %1680 = vector.broadcast %c1024_i32_707 : i32 to vector<2x16xi32>
    %1681 = arith.muli %1679, %1680 : vector<2x16xi32>
    %1682 = arith.subi %1638, %1681 : vector<2x16xi32>
    %1683 = arith.muli %1682, %1677 : vector<2x16xi32>
    %1684 = arith.muli %1679, %1677 : vector<2x16xi32>
    %c10_i32_708 = arith.constant 10 : i32
    %1685 = vector.broadcast %c10_i32_708 : i32 to vector<2x16xi32>
    %1686 = arith.shrsi %1683, %1685 : vector<2x16xi32>
    %1687 = arith.addi %1684, %1686 : vector<2x16xi32>
    %c1023_i32_709 = arith.constant 1023 : i32
    %1688 = vector.broadcast %c1023_i32_709 : i32 to vector<2x16xi32>
    %1689 = arith.andi %1683, %1688 : vector<2x16xi32>
    %cst_710 = arith.constant 1.000000e+00 : f32
    %1690 = vector.broadcast %cst_710 : f32 to vector<2x16xf32>
    %1691 = arith.subf %1690, %1667 : vector<2x16xf32>
    %1692 = arith.mulf %1691, %1674 : vector<2x16xf32>
    %cst_711 = arith.constant 0x4B000000 : f32
    %1693 = vector.broadcast %cst_711 : f32 to vector<2x16xf32>
    %1694 = arith.mulf %1692, %1693 : vector<2x16xf32>
    %1695 = arith.fptosi %1694 : vector<2x16xf32> to vector<2x16xi32>
    %1696 = arith.addi %1687, %1695 : vector<2x16xi32>
    %1697 = arith.sitofp %1696 : vector<2x16xi32> to vector<2x16xf32>
    %cst_712 = arith.constant 1.1920929E-7 : f32
    %1698 = vector.broadcast %cst_712 : f32 to vector<2x16xf32>
    %1699 = arith.mulf %1697, %1698 : vector<2x16xf32>
    %c1_713 = arith.constant 1 : index
    %c0_714 = arith.constant 0 : index
    %c0_715 = arith.constant 0 : index
    %1700 = vector.load %arg7[%c1_713, %c0_714, %c0_715] : memref<2x16x32xf32, #tpu.memory_space<vmem>>, vector<1x16x32xf32>
    %1701 = vector.shape_cast %1700 : vector<1x16x32xf32> to vector<16x32xf32>
    %cst_716 = arith.constant dense<0.000000e+00> : vector<2x32xf32>
    %1702 = tpu.matmul %1699, %1701, %cst_716 {dimension_numbers = #tpu.dot_dimension_numbers<[1], [0], [0], [1], [0, 0, 1, 1], [], []>} : vector<2x16xf32>, vector<16x32xf32>, vector<2x32xf32> -> vector<2x32xf32>
    %1703 = arith.addf %1651, %1702 : vector<2x32xf32>
    %1704 = arith.negf %1703 : vector<2x32xf32>
    %1705 = math.exp %1704 : vector<2x32xf32>
    %cst_717 = arith.constant 1.000000e+00 : f32
    %1706 = vector.broadcast %cst_717 : f32 to vector<2x32xf32>
    %1707 = arith.addf %1706, %1705 : vector<2x32xf32>
    %1708 = arith.divf %1706, %1707 : vector<2x32xf32>
    %1709 = vector.extract_strided_slice %1708 {offsets = [0, 0], sizes = [2, 16], strides = [1, 1]} : vector<2x32xf32> to vector<2x16xf32>
    %cst_718 = arith.constant 8.750000e-01 : f32
    %1710 = vector.broadcast %cst_718 : f32 to vector<2x16xf32>
    %1711 = arith.mulf %1710, %1709 : vector<2x16xf32>
    %cst_719 = arith.constant 1.250000e-01 : f32
    %1712 = vector.broadcast %cst_719 : f32 to vector<2x16xf32>
    %1713 = arith.addf %1711, %1712 : vector<2x16xf32>
    %1714 = vector.extract_strided_slice %1708 {offsets = [0, 16], sizes = [2, 16], strides = [1, 1]} : vector<2x32xf32> to vector<2x16xf32>
    %1715 = arith.mulf %1714, %1699 : vector<2x16xf32>
    %c1_720 = arith.constant 1 : index
    %c0_721 = arith.constant 0 : index
    %c0_722 = arith.constant 0 : index
    %1716 = vector.load %arg8[%c1_720, %c0_721, %c0_722] : memref<2x16x16xf32, #tpu.memory_space<vmem>>, vector<1x16x16xf32>
    %1717 = vector.shape_cast %1716 : vector<1x16x16xf32> to vector<16x16xf32>
    %cst_723 = arith.constant dense<0.000000e+00> : vector<2x16xf32>
    %1718 = tpu.matmul %1715, %1717, %cst_723 {dimension_numbers = #tpu.dot_dimension_numbers<[1], [0], [0], [1], [0, 0, 1, 1], [], []>} : vector<2x16xf32>, vector<16x16xf32>, vector<2x16xf32> -> vector<2x16xf32>
    %1719 = arith.addf %1653, %1718 : vector<2x16xf32>
    %1720 = math.tanh %1719 : vector<2x16xf32>
    %cst_724 = arith.constant 1.024000e+03 : f32
    %1721 = vector.broadcast %cst_724 : f32 to vector<2x16xf32>
    %1722 = arith.mulf %1713, %1721 : vector<2x16xf32>
    %1723 = arith.fptosi %1722 : vector<2x16xf32> to vector<2x16xi32>
    %c10_i32_725 = arith.constant 10 : i32
    %1724 = vector.broadcast %c10_i32_725 : i32 to vector<2x16xi32>
    %1725 = arith.shrsi %1639, %1724 : vector<2x16xi32>
    %c1024_i32_726 = arith.constant 1024 : i32
    %1726 = vector.broadcast %c1024_i32_726 : i32 to vector<2x16xi32>
    %1727 = arith.muli %1725, %1726 : vector<2x16xi32>
    %1728 = arith.subi %1639, %1727 : vector<2x16xi32>
    %1729 = arith.muli %1728, %1723 : vector<2x16xi32>
    %1730 = arith.muli %1725, %1723 : vector<2x16xi32>
    %c10_i32_727 = arith.constant 10 : i32
    %1731 = vector.broadcast %c10_i32_727 : i32 to vector<2x16xi32>
    %1732 = arith.shrsi %1729, %1731 : vector<2x16xi32>
    %1733 = arith.addi %1730, %1732 : vector<2x16xi32>
    %c1023_i32_728 = arith.constant 1023 : i32
    %1734 = vector.broadcast %c1023_i32_728 : i32 to vector<2x16xi32>
    %1735 = arith.andi %1729, %1734 : vector<2x16xi32>
    %cst_729 = arith.constant 1.000000e+00 : f32
    %1736 = vector.broadcast %cst_729 : f32 to vector<2x16xf32>
    %1737 = arith.subf %1736, %1713 : vector<2x16xf32>
    %1738 = arith.mulf %1737, %1720 : vector<2x16xf32>
    %cst_730 = arith.constant 0x4B000000 : f32
    %1739 = vector.broadcast %cst_730 : f32 to vector<2x16xf32>
    %1740 = arith.mulf %1738, %1739 : vector<2x16xf32>
    %1741 = arith.fptosi %1740 : vector<2x16xf32> to vector<2x16xi32>
    %1742 = arith.addi %1733, %1741 : vector<2x16xi32>
    %1743 = tpu.concatenate %1696, %1742 in 1 : vector<2x16xi32>, vector<2x16xi32> -> vector<2x32xi32>
    %1744 = tpu.concatenate %1689, %1735 in 1 : vector<2x16xi32>, vector<2x16xi32> -> vector<2x32xi32>
    %c6_731 = arith.constant 6 : index
    %c1_732 = arith.constant 1 : index
    %c0_733 = arith.constant 0 : index
    %c0_734 = arith.constant 0 : index
    %1745 = vector.load %arg11[%c6_731, %c1_732, %c0_733, %c0_734] : memref<8x2x2x32xi32, #tpu.memory_space<vmem>>, vector<1x1x2x32xi32>
    %1746 = vector.shape_cast %1745 : vector<1x1x2x32xi32> to vector<2x32xi32>
    %1747 = vector.shape_cast %1744 : vector<2x32xi32> to vector<1x1x2x32xi32>
    tpu.vector_store %arg11[%c6_731, %c1_732, %c0_733, %c0_734], %1747 {strides = array<i32>} : memref<8x2x2x32xi32, #tpu.memory_space<vmem>>, vector<1x1x2x32xi32>,
    %1748 = math.log %1667 : vector<2x16xf32>
    %cst_735 = arith.constant 2.000000e+00 : f32
    %1749 = math.log %cst_735 : f32
    %1750 = vector.broadcast %1749 : f32 to vector<2x16xf32>
    %1751 = arith.divf %1748, %1750 : vector<2x16xf32>
    %cst_736 = arith.constant 0.000000e+00 : f32
    %1752 = vector.broadcast %cst_736 : f32 to vector<2x16xf32>
    %1753 = arith.subf %1752, %1751 : vector<2x16xf32>
    %1754 = arith.mulf %1753, %11 : vector<2x16xf32>
    %1755 = arith.addf %1634, %1754 : vector<2x16xf32>
    %1756 = math.log %1713 : vector<2x16xf32>
    %cst_737 = arith.constant 2.000000e+00 : f32
    %1757 = math.log %cst_737 : f32
    %1758 = vector.broadcast %1757 : f32 to vector<2x16xf32>
    %1759 = arith.divf %1756, %1758 : vector<2x16xf32>
    %cst_738 = arith.constant 0.000000e+00 : f32
    %1760 = vector.broadcast %cst_738 : f32 to vector<2x16xf32>
    %1761 = arith.subf %1760, %1759 : vector<2x16xf32>
    %1762 = arith.addf %1755, %1761 : vector<2x16xf32>
    %c7 = arith.constant 7 : index
    %c0_739 = arith.constant 0 : index
    %c0_740 = arith.constant 0 : index
    %1763 = vector.load %arg10[%c7, %c0_739, %c0_740] : memref<8x2x32xi32, #tpu.memory_space<vmem>>, vector<1x2x32xi32>
    %1764 = vector.shape_cast %1763 : vector<1x2x32xi32> to vector<2x32xi32>
    %1765 = vector.shape_cast %1743 : vector<2x32xi32> to vector<1x2x32xi32>
    tpu.vector_store %arg10[%c7, %c0_739, %c0_740], %1765 {strides = array<i32>} : memref<8x2x32xi32, #tpu.memory_space<vmem>>, vector<1x2x32xi32>,
    %1766 = vector.extract_strided_slice %1616 {offsets = [0, 0], sizes = [2, 16], strides = [1, 1]} : vector<2x32xi32> to vector<2x16xi32>
    %1767 = vector.extract_strided_slice %1616 {offsets = [0, 16], sizes = [2, 16], strides = [1, 1]} : vector<2x32xi32> to vector<2x16xi32>
    %1768 = arith.sitofp %1767 : vector<2x16xi32> to vector<2x16xf32>
    %cst_741 = arith.constant 1.1920929E-7 : f32
    %1769 = vector.broadcast %cst_741 : f32 to vector<2x16xf32>
    %1770 = arith.mulf %1768, %1769 : vector<2x16xf32>
    %c7_742 = arith.constant 7 : index
    %c0_743 = arith.constant 0 : index
    %c0_744 = arith.constant 0 : index
    %1771 = vector.load %arg1[%c7_742, %c0_743, %c0_744] : memref<8x2x96xf32, #tpu.memory_space<vmem>>, vector<1x2x96xf32>
    %1772 = vector.shape_cast %1771 : vector<1x2x96xf32> to vector<2x96xf32>
    %1773 = vector.extract_strided_slice %1772 {offsets = [0, 0], sizes = [2, 32], strides = [1, 1]} : vector<2x96xf32> to vector<2x32xf32>
    %1774 = vector.extract_strided_slice %1772 {offsets = [0, 32], sizes = [2, 32], strides = [1, 1]} : vector<2x96xf32> to vector<2x32xf32>
    %1775 = vector.extract_strided_slice %1772 {offsets = [0, 64], sizes = [2, 16], strides = [1, 1]} : vector<2x96xf32> to vector<2x16xf32>
    %1776 = vector.extract_strided_slice %1772 {offsets = [0, 80], sizes = [2, 16], strides = [1, 1]} : vector<2x96xf32> to vector<2x16xf32>
    %c0_745 = arith.constant 0 : index
    %c0_746 = arith.constant 0 : index
    %c0_747 = arith.constant 0 : index
    %1777 = vector.load %arg5[%c0_745, %c0_746, %c0_747] : memref<2x16x32xf32, #tpu.memory_space<vmem>>, vector<1x16x32xf32>
    %1778 = vector.shape_cast %1777 : vector<1x16x32xf32> to vector<16x32xf32>
    %cst_748 = arith.constant dense<0.000000e+00> : vector<2x32xf32>
    %1779 = tpu.matmul %1770, %1778, %cst_748 {dimension_numbers = #tpu.dot_dimension_numbers<[1], [0], [0], [1], [0, 0, 1, 1], [], []>} : vector<2x16xf32>, vector<16x32xf32>, vector<2x32xf32> -> vector<2x32xf32>
    %1780 = arith.addf %1773, %1779 : vector<2x32xf32>
    %1781 = arith.negf %1780 : vector<2x32xf32>
    %1782 = math.exp %1781 : vector<2x32xf32>
    %cst_749 = arith.constant 1.000000e+00 : f32
    %1783 = vector.broadcast %cst_749 : f32 to vector<2x32xf32>
    %1784 = arith.addf %1783, %1782 : vector<2x32xf32>
    %1785 = arith.divf %1783, %1784 : vector<2x32xf32>
    %1786 = vector.extract_strided_slice %1785 {offsets = [0, 0], sizes = [2, 16], strides = [1, 1]} : vector<2x32xf32> to vector<2x16xf32>
    %cst_750 = arith.constant 8.750000e-01 : f32
    %1787 = vector.broadcast %cst_750 : f32 to vector<2x16xf32>
    %1788 = arith.mulf %1787, %1786 : vector<2x16xf32>
    %cst_751 = arith.constant 1.250000e-01 : f32
    %1789 = vector.broadcast %cst_751 : f32 to vector<2x16xf32>
    %1790 = arith.addf %1788, %1789 : vector<2x16xf32>
    %1791 = vector.extract_strided_slice %1785 {offsets = [0, 16], sizes = [2, 16], strides = [1, 1]} : vector<2x32xf32> to vector<2x16xf32>
    %1792 = arith.mulf %1791, %1770 : vector<2x16xf32>
    %c0_752 = arith.constant 0 : index
    %c0_753 = arith.constant 0 : index
    %c0_754 = arith.constant 0 : index
    %1793 = vector.load %arg6[%c0_752, %c0_753, %c0_754] : memref<2x16x16xf32, #tpu.memory_space<vmem>>, vector<1x16x16xf32>
    %1794 = vector.shape_cast %1793 : vector<1x16x16xf32> to vector<16x16xf32>
    %cst_755 = arith.constant dense<0.000000e+00> : vector<2x16xf32>
    %1795 = tpu.matmul %1792, %1794, %cst_755 {dimension_numbers = #tpu.dot_dimension_numbers<[1], [0], [0], [1], [0, 0, 1, 1], [], []>} : vector<2x16xf32>, vector<16x16xf32>, vector<2x16xf32> -> vector<2x16xf32>
    %1796 = arith.addf %1775, %1795 : vector<2x16xf32>
    %1797 = math.tanh %1796 : vector<2x16xf32>
    %cst_756 = arith.constant 1.024000e+03 : f32
    %1798 = vector.broadcast %cst_756 : f32 to vector<2x16xf32>
    %1799 = arith.mulf %1790, %1798 : vector<2x16xf32>
    %1800 = arith.fptosi %1799 : vector<2x16xf32> to vector<2x16xi32>
    %c10_i32_757 = arith.constant 10 : i32
    %1801 = vector.broadcast %c10_i32_757 : i32 to vector<2x16xi32>
    %1802 = arith.shrsi %1766, %1801 : vector<2x16xi32>
    %c1024_i32_758 = arith.constant 1024 : i32
    %1803 = vector.broadcast %c1024_i32_758 : i32 to vector<2x16xi32>
    %1804 = arith.muli %1802, %1803 : vector<2x16xi32>
    %1805 = arith.subi %1766, %1804 : vector<2x16xi32>
    %1806 = arith.muli %1805, %1800 : vector<2x16xi32>
    %1807 = arith.muli %1802, %1800 : vector<2x16xi32>
    %c10_i32_759 = arith.constant 10 : i32
    %1808 = vector.broadcast %c10_i32_759 : i32 to vector<2x16xi32>
    %1809 = arith.shrsi %1806, %1808 : vector<2x16xi32>
    %1810 = arith.addi %1807, %1809 : vector<2x16xi32>
    %c1023_i32_760 = arith.constant 1023 : i32
    %1811 = vector.broadcast %c1023_i32_760 : i32 to vector<2x16xi32>
    %1812 = arith.andi %1806, %1811 : vector<2x16xi32>
    %cst_761 = arith.constant 1.000000e+00 : f32
    %1813 = vector.broadcast %cst_761 : f32 to vector<2x16xf32>
    %1814 = arith.subf %1813, %1790 : vector<2x16xf32>
    %1815 = arith.mulf %1814, %1797 : vector<2x16xf32>
    %cst_762 = arith.constant 0x4B000000 : f32
    %1816 = vector.broadcast %cst_762 : f32 to vector<2x16xf32>
    %1817 = arith.mulf %1815, %1816 : vector<2x16xf32>
    %1818 = arith.fptosi %1817 : vector<2x16xf32> to vector<2x16xi32>
    %1819 = arith.addi %1810, %1818 : vector<2x16xi32>
    %1820 = arith.sitofp %1819 : vector<2x16xi32> to vector<2x16xf32>
    %cst_763 = arith.constant 1.1920929E-7 : f32
    %1821 = vector.broadcast %cst_763 : f32 to vector<2x16xf32>
    %1822 = arith.mulf %1820, %1821 : vector<2x16xf32>
    %c0_764 = arith.constant 0 : index
    %c0_765 = arith.constant 0 : index
    %c0_766 = arith.constant 0 : index
    %1823 = vector.load %arg7[%c0_764, %c0_765, %c0_766] : memref<2x16x32xf32, #tpu.memory_space<vmem>>, vector<1x16x32xf32>
    %1824 = vector.shape_cast %1823 : vector<1x16x32xf32> to vector<16x32xf32>
    %cst_767 = arith.constant dense<0.000000e+00> : vector<2x32xf32>
    %1825 = tpu.matmul %1822, %1824, %cst_767 {dimension_numbers = #tpu.dot_dimension_numbers<[1], [0], [0], [1], [0, 0, 1, 1], [], []>} : vector<2x16xf32>, vector<16x32xf32>, vector<2x32xf32> -> vector<2x32xf32>
    %1826 = arith.addf %1774, %1825 : vector<2x32xf32>
    %1827 = arith.negf %1826 : vector<2x32xf32>
    %1828 = math.exp %1827 : vector<2x32xf32>
    %cst_768 = arith.constant 1.000000e+00 : f32
    %1829 = vector.broadcast %cst_768 : f32 to vector<2x32xf32>
    %1830 = arith.addf %1829, %1828 : vector<2x32xf32>
    %1831 = arith.divf %1829, %1830 : vector<2x32xf32>
    %1832 = vector.extract_strided_slice %1831 {offsets = [0, 0], sizes = [2, 16], strides = [1, 1]} : vector<2x32xf32> to vector<2x16xf32>
    %cst_769 = arith.constant 8.750000e-01 : f32
    %1833 = vector.broadcast %cst_769 : f32 to vector<2x16xf32>
    %1834 = arith.mulf %1833, %1832 : vector<2x16xf32>
    %cst_770 = arith.constant 1.250000e-01 : f32
    %1835 = vector.broadcast %cst_770 : f32 to vector<2x16xf32>
    %1836 = arith.addf %1834, %1835 : vector<2x16xf32>
    %1837 = vector.extract_strided_slice %1831 {offsets = [0, 16], sizes = [2, 16], strides = [1, 1]} : vector<2x32xf32> to vector<2x16xf32>
    %1838 = arith.mulf %1837, %1822 : vector<2x16xf32>
    %c0_771 = arith.constant 0 : index
    %c0_772 = arith.constant 0 : index
    %c0_773 = arith.constant 0 : index
    %1839 = vector.load %arg8[%c0_771, %c0_772, %c0_773] : memref<2x16x16xf32, #tpu.memory_space<vmem>>, vector<1x16x16xf32>
    %1840 = vector.shape_cast %1839 : vector<1x16x16xf32> to vector<16x16xf32>
    %cst_774 = arith.constant dense<0.000000e+00> : vector<2x16xf32>
    %1841 = tpu.matmul %1838, %1840, %cst_774 {dimension_numbers = #tpu.dot_dimension_numbers<[1], [0], [0], [1], [0, 0, 1, 1], [], []>} : vector<2x16xf32>, vector<16x16xf32>, vector<2x16xf32> -> vector<2x16xf32>
    %1842 = arith.addf %1776, %1841 : vector<2x16xf32>
    %1843 = math.tanh %1842 : vector<2x16xf32>
    %cst_775 = arith.constant 1.024000e+03 : f32
    %1844 = vector.broadcast %cst_775 : f32 to vector<2x16xf32>
    %1845 = arith.mulf %1836, %1844 : vector<2x16xf32>
    %1846 = arith.fptosi %1845 : vector<2x16xf32> to vector<2x16xi32>
    %c10_i32_776 = arith.constant 10 : i32
    %1847 = vector.broadcast %c10_i32_776 : i32 to vector<2x16xi32>
    %1848 = arith.shrsi %1767, %1847 : vector<2x16xi32>
    %c1024_i32_777 = arith.constant 1024 : i32
    %1849 = vector.broadcast %c1024_i32_777 : i32 to vector<2x16xi32>
    %1850 = arith.muli %1848, %1849 : vector<2x16xi32>
    %1851 = arith.subi %1767, %1850 : vector<2x16xi32>
    %1852 = arith.muli %1851, %1846 : vector<2x16xi32>
    %1853 = arith.muli %1848, %1846 : vector<2x16xi32>
    %c10_i32_778 = arith.constant 10 : i32
    %1854 = vector.broadcast %c10_i32_778 : i32 to vector<2x16xi32>
    %1855 = arith.shrsi %1852, %1854 : vector<2x16xi32>
    %1856 = arith.addi %1853, %1855 : vector<2x16xi32>
    %c1023_i32_779 = arith.constant 1023 : i32
    %1857 = vector.broadcast %c1023_i32_779 : i32 to vector<2x16xi32>
    %1858 = arith.andi %1852, %1857 : vector<2x16xi32>
    %cst_780 = arith.constant 1.000000e+00 : f32
    %1859 = vector.broadcast %cst_780 : f32 to vector<2x16xf32>
    %1860 = arith.subf %1859, %1836 : vector<2x16xf32>
    %1861 = arith.mulf %1860, %1843 : vector<2x16xf32>
    %cst_781 = arith.constant 0x4B000000 : f32
    %1862 = vector.broadcast %cst_781 : f32 to vector<2x16xf32>
    %1863 = arith.mulf %1861, %1862 : vector<2x16xf32>
    %1864 = arith.fptosi %1863 : vector<2x16xf32> to vector<2x16xi32>
    %1865 = arith.addi %1856, %1864 : vector<2x16xi32>
    %1866 = tpu.concatenate %1819, %1865 in 1 : vector<2x16xi32>, vector<2x16xi32> -> vector<2x32xi32>
    %1867 = tpu.concatenate %1812, %1858 in 1 : vector<2x16xi32>, vector<2x16xi32> -> vector<2x32xi32>
    %c7_782 = arith.constant 7 : index
    %c0_783 = arith.constant 0 : index
    %c0_784 = arith.constant 0 : index
    %c0_785 = arith.constant 0 : index
    %1868 = vector.load %arg11[%c7_782, %c0_783, %c0_784, %c0_785] : memref<8x2x2x32xi32, #tpu.memory_space<vmem>>, vector<1x1x2x32xi32>
    %1869 = vector.shape_cast %1868 : vector<1x1x2x32xi32> to vector<2x32xi32>
    %1870 = vector.shape_cast %1867 : vector<2x32xi32> to vector<1x1x2x32xi32>
    tpu.vector_store %arg11[%c7_782, %c0_783, %c0_784, %c0_785], %1870 {strides = array<i32>} : memref<8x2x2x32xi32, #tpu.memory_space<vmem>>, vector<1x1x2x32xi32>,
    %1871 = math.log %1790 : vector<2x16xf32>
    %cst_786 = arith.constant 2.000000e+00 : f32
    %1872 = math.log %cst_786 : f32
    %1873 = vector.broadcast %1872 : f32 to vector<2x16xf32>
    %1874 = arith.divf %1871, %1873 : vector<2x16xf32>
    %cst_787 = arith.constant 0.000000e+00 : f32
    %1875 = vector.broadcast %cst_787 : f32 to vector<2x16xf32>
    %1876 = arith.subf %1875, %1874 : vector<2x16xf32>
    %1877 = arith.addf %1762, %1876 : vector<2x16xf32>
    %1878 = math.log %1836 : vector<2x16xf32>
    %cst_788 = arith.constant 2.000000e+00 : f32
    %1879 = math.log %cst_788 : f32
    %1880 = vector.broadcast %1879 : f32 to vector<2x16xf32>
    %1881 = arith.divf %1878, %1880 : vector<2x16xf32>
    %cst_789 = arith.constant 0.000000e+00 : f32
    %1882 = vector.broadcast %cst_789 : f32 to vector<2x16xf32>
    %1883 = arith.subf %1882, %1881 : vector<2x16xf32>
    %1884 = arith.addf %1877, %1883 : vector<2x16xf32>
    %1885 = arith.sitofp %1866 : vector<2x32xi32> to vector<2x32xf32>
    %cst_790 = arith.constant 1.1920929E-7 : f32
    %1886 = vector.broadcast %cst_790 : f32 to vector<2x32xf32>
    %1887 = arith.mulf %1885, %1886 : vector<2x32xf32>
    %1888 = vector.extract_strided_slice %1743 {offsets = [0, 0], sizes = [2, 16], strides = [1, 1]} : vector<2x32xi32> to vector<2x16xi32>
    %1889 = vector.extract_strided_slice %1743 {offsets = [0, 16], sizes = [2, 16], strides = [1, 1]} : vector<2x32xi32> to vector<2x16xi32>
    %1890 = arith.sitofp %1889 : vector<2x16xi32> to vector<2x16xf32>
    %cst_791 = arith.constant 1.1920929E-7 : f32
    %1891 = vector.broadcast %cst_791 : f32 to vector<2x16xf32>
    %1892 = arith.mulf %1890, %1891 : vector<2x16xf32>
    %c0_792 = arith.constant 0 : index
    %c0_793 = arith.constant 0 : index
    %c0_794 = arith.constant 0 : index
    %1893 = vector.load %arg3[%c0_792, %c0_793, %c0_794] : memref<1x32x96xf32, #tpu.memory_space<vmem>>, vector<1x32x96xf32>
    %1894 = vector.shape_cast %1893 : vector<1x32x96xf32> to vector<32x96xf32>
    %cst_795 = arith.constant dense<0.000000e+00> : vector<2x96xf32>
    %1895 = tpu.matmul %1887, %1894, %cst_795 {dimension_numbers = #tpu.dot_dimension_numbers<[1], [0], [0], [1], [0, 0, 1, 1], [], []>} : vector<2x32xf32>, vector<32x96xf32>, vector<2x96xf32> -> vector<2x96xf32>
    %c0_796 = arith.constant 0 : index
    %c0_797 = arith.constant 0 : index
    %c0_798 = arith.constant 0 : index
    %1896 = vector.load %arg4[%c0_796, %c0_797, %c0_798] : memref<1x1x96xf32, #tpu.memory_space<vmem>>, vector<1x1x96xf32>
    %1897 = vector.shape_cast %1896 : vector<1x1x96xf32> to vector<1x96xf32>
    %1898 = vector.broadcast %1897 : vector<1x96xf32> to vector<2x96xf32>
    %1899 = arith.addf %1895, %1898 : vector<2x96xf32>
    %1900 = vector.extract_strided_slice %1899 {offsets = [0, 0], sizes = [2, 32], strides = [1, 1]} : vector<2x96xf32> to vector<2x32xf32>
    %1901 = vector.extract_strided_slice %1899 {offsets = [0, 32], sizes = [2, 32], strides = [1, 1]} : vector<2x96xf32> to vector<2x32xf32>
    %1902 = vector.extract_strided_slice %1899 {offsets = [0, 64], sizes = [2, 16], strides = [1, 1]} : vector<2x96xf32> to vector<2x16xf32>
    %1903 = vector.extract_strided_slice %1899 {offsets = [0, 80], sizes = [2, 16], strides = [1, 1]} : vector<2x96xf32> to vector<2x16xf32>
    %c1_799 = arith.constant 1 : index
    %c0_800 = arith.constant 0 : index
    %c0_801 = arith.constant 0 : index
    %1904 = vector.load %arg5[%c1_799, %c0_800, %c0_801] : memref<2x16x32xf32, #tpu.memory_space<vmem>>, vector<1x16x32xf32>
    %1905 = vector.shape_cast %1904 : vector<1x16x32xf32> to vector<16x32xf32>
    %cst_802 = arith.constant dense<0.000000e+00> : vector<2x32xf32>
    %1906 = tpu.matmul %1892, %1905, %cst_802 {dimension_numbers = #tpu.dot_dimension_numbers<[1], [0], [0], [1], [0, 0, 1, 1], [], []>} : vector<2x16xf32>, vector<16x32xf32>, vector<2x32xf32> -> vector<2x32xf32>
    %1907 = arith.addf %1900, %1906 : vector<2x32xf32>
    %1908 = arith.negf %1907 : vector<2x32xf32>
    %1909 = math.exp %1908 : vector<2x32xf32>
    %cst_803 = arith.constant 1.000000e+00 : f32
    %1910 = vector.broadcast %cst_803 : f32 to vector<2x32xf32>
    %1911 = arith.addf %1910, %1909 : vector<2x32xf32>
    %1912 = arith.divf %1910, %1911 : vector<2x32xf32>
    %1913 = vector.extract_strided_slice %1912 {offsets = [0, 0], sizes = [2, 16], strides = [1, 1]} : vector<2x32xf32> to vector<2x16xf32>
    %cst_804 = arith.constant 8.750000e-01 : f32
    %1914 = vector.broadcast %cst_804 : f32 to vector<2x16xf32>
    %1915 = arith.mulf %1914, %1913 : vector<2x16xf32>
    %cst_805 = arith.constant 1.250000e-01 : f32
    %1916 = vector.broadcast %cst_805 : f32 to vector<2x16xf32>
    %1917 = arith.addf %1915, %1916 : vector<2x16xf32>
    %1918 = vector.extract_strided_slice %1912 {offsets = [0, 16], sizes = [2, 16], strides = [1, 1]} : vector<2x32xf32> to vector<2x16xf32>
    %1919 = arith.mulf %1918, %1892 : vector<2x16xf32>
    %c1_806 = arith.constant 1 : index
    %c0_807 = arith.constant 0 : index
    %c0_808 = arith.constant 0 : index
    %1920 = vector.load %arg6[%c1_806, %c0_807, %c0_808] : memref<2x16x16xf32, #tpu.memory_space<vmem>>, vector<1x16x16xf32>
    %1921 = vector.shape_cast %1920 : vector<1x16x16xf32> to vector<16x16xf32>
    %cst_809 = arith.constant dense<0.000000e+00> : vector<2x16xf32>
    %1922 = tpu.matmul %1919, %1921, %cst_809 {dimension_numbers = #tpu.dot_dimension_numbers<[1], [0], [0], [1], [0, 0, 1, 1], [], []>} : vector<2x16xf32>, vector<16x16xf32>, vector<2x16xf32> -> vector<2x16xf32>
    %1923 = arith.addf %1902, %1922 : vector<2x16xf32>
    %1924 = math.tanh %1923 : vector<2x16xf32>
    %cst_810 = arith.constant 1.024000e+03 : f32
    %1925 = vector.broadcast %cst_810 : f32 to vector<2x16xf32>
    %1926 = arith.mulf %1917, %1925 : vector<2x16xf32>
    %1927 = arith.fptosi %1926 : vector<2x16xf32> to vector<2x16xi32>
    %c10_i32_811 = arith.constant 10 : i32
    %1928 = vector.broadcast %c10_i32_811 : i32 to vector<2x16xi32>
    %1929 = arith.shrsi %1888, %1928 : vector<2x16xi32>
    %c1024_i32_812 = arith.constant 1024 : i32
    %1930 = vector.broadcast %c1024_i32_812 : i32 to vector<2x16xi32>
    %1931 = arith.muli %1929, %1930 : vector<2x16xi32>
    %1932 = arith.subi %1888, %1931 : vector<2x16xi32>
    %1933 = arith.muli %1932, %1927 : vector<2x16xi32>
    %1934 = arith.muli %1929, %1927 : vector<2x16xi32>
    %c10_i32_813 = arith.constant 10 : i32
    %1935 = vector.broadcast %c10_i32_813 : i32 to vector<2x16xi32>
    %1936 = arith.shrsi %1933, %1935 : vector<2x16xi32>
    %1937 = arith.addi %1934, %1936 : vector<2x16xi32>
    %c1023_i32_814 = arith.constant 1023 : i32
    %1938 = vector.broadcast %c1023_i32_814 : i32 to vector<2x16xi32>
    %1939 = arith.andi %1933, %1938 : vector<2x16xi32>
    %cst_815 = arith.constant 1.000000e+00 : f32
    %1940 = vector.broadcast %cst_815 : f32 to vector<2x16xf32>
    %1941 = arith.subf %1940, %1917 : vector<2x16xf32>
    %1942 = arith.mulf %1941, %1924 : vector<2x16xf32>
    %cst_816 = arith.constant 0x4B000000 : f32
    %1943 = vector.broadcast %cst_816 : f32 to vector<2x16xf32>
    %1944 = arith.mulf %1942, %1943 : vector<2x16xf32>
    %1945 = arith.fptosi %1944 : vector<2x16xf32> to vector<2x16xi32>
    %1946 = arith.addi %1937, %1945 : vector<2x16xi32>
    %1947 = arith.sitofp %1946 : vector<2x16xi32> to vector<2x16xf32>
    %cst_817 = arith.constant 1.1920929E-7 : f32
    %1948 = vector.broadcast %cst_817 : f32 to vector<2x16xf32>
    %1949 = arith.mulf %1947, %1948 : vector<2x16xf32>
    %c1_818 = arith.constant 1 : index
    %c0_819 = arith.constant 0 : index
    %c0_820 = arith.constant 0 : index
    %1950 = vector.load %arg7[%c1_818, %c0_819, %c0_820] : memref<2x16x32xf32, #tpu.memory_space<vmem>>, vector<1x16x32xf32>
    %1951 = vector.shape_cast %1950 : vector<1x16x32xf32> to vector<16x32xf32>
    %cst_821 = arith.constant dense<0.000000e+00> : vector<2x32xf32>
    %1952 = tpu.matmul %1949, %1951, %cst_821 {dimension_numbers = #tpu.dot_dimension_numbers<[1], [0], [0], [1], [0, 0, 1, 1], [], []>} : vector<2x16xf32>, vector<16x32xf32>, vector<2x32xf32> -> vector<2x32xf32>
    %1953 = arith.addf %1901, %1952 : vector<2x32xf32>
    %1954 = arith.negf %1953 : vector<2x32xf32>
    %1955 = math.exp %1954 : vector<2x32xf32>
    %cst_822 = arith.constant 1.000000e+00 : f32
    %1956 = vector.broadcast %cst_822 : f32 to vector<2x32xf32>
    %1957 = arith.addf %1956, %1955 : vector<2x32xf32>
    %1958 = arith.divf %1956, %1957 : vector<2x32xf32>
    %1959 = vector.extract_strided_slice %1958 {offsets = [0, 0], sizes = [2, 16], strides = [1, 1]} : vector<2x32xf32> to vector<2x16xf32>
    %cst_823 = arith.constant 8.750000e-01 : f32
    %1960 = vector.broadcast %cst_823 : f32 to vector<2x16xf32>
    %1961 = arith.mulf %1960, %1959 : vector<2x16xf32>
    %cst_824 = arith.constant 1.250000e-01 : f32
    %1962 = vector.broadcast %cst_824 : f32 to vector<2x16xf32>
    %1963 = arith.addf %1961, %1962 : vector<2x16xf32>
    %1964 = vector.extract_strided_slice %1958 {offsets = [0, 16], sizes = [2, 16], strides = [1, 1]} : vector<2x32xf32> to vector<2x16xf32>
    %1965 = arith.mulf %1964, %1949 : vector<2x16xf32>
    %c1_825 = arith.constant 1 : index
    %c0_826 = arith.constant 0 : index
    %c0_827 = arith.constant 0 : index
    %1966 = vector.load %arg8[%c1_825, %c0_826, %c0_827] : memref<2x16x16xf32, #tpu.memory_space<vmem>>, vector<1x16x16xf32>
    %1967 = vector.shape_cast %1966 : vector<1x16x16xf32> to vector<16x16xf32>
    %cst_828 = arith.constant dense<0.000000e+00> : vector<2x16xf32>
    %1968 = tpu.matmul %1965, %1967, %cst_828 {dimension_numbers = #tpu.dot_dimension_numbers<[1], [0], [0], [1], [0, 0, 1, 1], [], []>} : vector<2x16xf32>, vector<16x16xf32>, vector<2x16xf32> -> vector<2x16xf32>
    %1969 = arith.addf %1903, %1968 : vector<2x16xf32>
    %1970 = math.tanh %1969 : vector<2x16xf32>
    %cst_829 = arith.constant 1.024000e+03 : f32
    %1971 = vector.broadcast %cst_829 : f32 to vector<2x16xf32>
    %1972 = arith.mulf %1963, %1971 : vector<2x16xf32>
    %1973 = arith.fptosi %1972 : vector<2x16xf32> to vector<2x16xi32>
    %c10_i32_830 = arith.constant 10 : i32
    %1974 = vector.broadcast %c10_i32_830 : i32 to vector<2x16xi32>
    %1975 = arith.shrsi %1889, %1974 : vector<2x16xi32>
    %c1024_i32_831 = arith.constant 1024 : i32
    %1976 = vector.broadcast %c1024_i32_831 : i32 to vector<2x16xi32>
    %1977 = arith.muli %1975, %1976 : vector<2x16xi32>
    %1978 = arith.subi %1889, %1977 : vector<2x16xi32>
    %1979 = arith.muli %1978, %1973 : vector<2x16xi32>
    %1980 = arith.muli %1975, %1973 : vector<2x16xi32>
    %c10_i32_832 = arith.constant 10 : i32
    %1981 = vector.broadcast %c10_i32_832 : i32 to vector<2x16xi32>
    %1982 = arith.shrsi %1979, %1981 : vector<2x16xi32>
    %1983 = arith.addi %1980, %1982 : vector<2x16xi32>
    %c1023_i32_833 = arith.constant 1023 : i32
    %1984 = vector.broadcast %c1023_i32_833 : i32 to vector<2x16xi32>
    %1985 = arith.andi %1979, %1984 : vector<2x16xi32>
    %cst_834 = arith.constant 1.000000e+00 : f32
    %1986 = vector.broadcast %cst_834 : f32 to vector<2x16xf32>
    %1987 = arith.subf %1986, %1963 : vector<2x16xf32>
    %1988 = arith.mulf %1987, %1970 : vector<2x16xf32>
    %cst_835 = arith.constant 0x4B000000 : f32
    %1989 = vector.broadcast %cst_835 : f32 to vector<2x16xf32>
    %1990 = arith.mulf %1988, %1989 : vector<2x16xf32>
    %1991 = arith.fptosi %1990 : vector<2x16xf32> to vector<2x16xi32>
    %1992 = arith.addi %1983, %1991 : vector<2x16xi32>
    %1993 = tpu.concatenate %1946, %1992 in 1 : vector<2x16xi32>, vector<2x16xi32> -> vector<2x32xi32>
    %1994 = tpu.concatenate %1939, %1985 in 1 : vector<2x16xi32>, vector<2x16xi32> -> vector<2x32xi32>
    %c7_836 = arith.constant 7 : index
    %c1_837 = arith.constant 1 : index
    %c0_838 = arith.constant 0 : index
    %c0_839 = arith.constant 0 : index
    %1995 = vector.load %arg11[%c7_836, %c1_837, %c0_838, %c0_839] : memref<8x2x2x32xi32, #tpu.memory_space<vmem>>, vector<1x1x2x32xi32>
    %1996 = vector.shape_cast %1995 : vector<1x1x2x32xi32> to vector<2x32xi32>
    %1997 = vector.shape_cast %1994 : vector<2x32xi32> to vector<1x1x2x32xi32>
    tpu.vector_store %arg11[%c7_836, %c1_837, %c0_838, %c0_839], %1997 {strides = array<i32>} : memref<8x2x2x32xi32, #tpu.memory_space<vmem>>, vector<1x1x2x32xi32>,
    %1998 = math.log %1917 : vector<2x16xf32>
    %cst_840 = arith.constant 2.000000e+00 : f32
    %1999 = math.log %cst_840 : f32
    %2000 = vector.broadcast %1999 : f32 to vector<2x16xf32>
    %2001 = arith.divf %1998, %2000 : vector<2x16xf32>
    %cst_841 = arith.constant 0.000000e+00 : f32
    %2002 = vector.broadcast %cst_841 : f32 to vector<2x16xf32>
    %2003 = arith.subf %2002, %2001 : vector<2x16xf32>
    %2004 = arith.mulf %2003, %11 : vector<2x16xf32>
    %2005 = arith.addf %1884, %2004 : vector<2x16xf32>
    %2006 = math.log %1963 : vector<2x16xf32>
    %cst_842 = arith.constant 2.000000e+00 : f32
    %2007 = math.log %cst_842 : f32
    %2008 = vector.broadcast %2007 : f32 to vector<2x16xf32>
    %2009 = arith.divf %2006, %2008 : vector<2x16xf32>
    %cst_843 = arith.constant 0.000000e+00 : f32
    %2010 = vector.broadcast %cst_843 : f32 to vector<2x16xf32>
    %2011 = arith.subf %2010, %2009 : vector<2x16xf32>
    %2012 = arith.addf %2005, %2011 : vector<2x16xf32>
    %c0_844 = arith.constant 0 : index
    %c0_845 = arith.constant 0 : index
    %c0_846 = arith.constant 0 : index
    %2013 = vector.load %arg9[%c0_844, %c0_845, %c0_846] : memref<2x2x32xi32, #tpu.memory_space<vmem>>, vector<1x2x32xi32>
    %2014 = vector.shape_cast %2013 : vector<1x2x32xi32> to vector<2x32xi32>
    %2015 = vector.shape_cast %1866 : vector<2x32xi32> to vector<1x2x32xi32>
    tpu.vector_store %arg9[%c0_844, %c0_845, %c0_846], %2015 {strides = array<i32>} : memref<2x2x32xi32, #tpu.memory_space<vmem>>, vector<1x2x32xi32>,
    %c1_847 = arith.constant 1 : index
    %c0_848 = arith.constant 0 : index
    %c0_849 = arith.constant 0 : index
    %2016 = vector.load %arg9[%c1_847, %c0_848, %c0_849] : memref<2x2x32xi32, #tpu.memory_space<vmem>>, vector<1x2x32xi32>
    %2017 = vector.shape_cast %2016 : vector<1x2x32xi32> to vector<2x32xi32>
    %2018 = vector.shape_cast %1993 : vector<2x32xi32> to vector<1x2x32xi32>
    tpu.vector_store %arg9[%c1_847, %c0_848, %c0_849], %2018 {strides = array<i32>} : memref<2x2x32xi32, #tpu.memory_space<vmem>>, vector<1x2x32xi32>,
    %c0_850 = arith.constant 0 : index
    %c0_851 = arith.constant 0 : index
    %2019 = vector.load %arg12[%c0_850, %c0_851] : memref<1x1xf32, #tpu.memory_space<vmem>>, vector<1x1xf32>
    %2020 = vector.shape_cast %2012 : vector<2x16xf32> to vector<1x2x16xf32>
    %cst_852 = arith.constant dense<0.000000e+00> : vector<1xf32>
    %2021 = vector.multi_reduction <add>, %2020, %cst_852 [1, 2] : vector<1x2x16xf32> to vector<1xf32>
    %2022 = vector.shape_cast %2021 : vector<1xf32> to vector<1x1x1xf32>
    %2023 = vector.extract %2022[0, 0, 0] : f32 from vector<1x1x1xf32>
    %2024 = vector.broadcast %2023 : f32 to vector<1x1xf32>
    %2025 = arith.addf %2019, %2024 : vector<1x1xf32>
    %c0_853 = arith.constant 0 : index
    %c0_854 = arith.constant 0 : index
    %2026 = vector.load %arg12[%c0_853, %c0_854] : memref<1x1xf32, #tpu.memory_space<vmem>>, vector<1x1xf32>
    tpu.vector_store %arg12[%c0_853, %c0_854], %2025 {strides = array<i32>} : memref<1x1xf32, #tpu.memory_space<vmem>>, vector<1x1xf32>,
    return
  }
  func.func @transform_0(%arg0: i32) -> (i32, i32, i32) {
    %c0_i32 = arith.constant 0 : i32
    %c0_i32_0 = arith.constant 0 : i32
    %c0_i32_1 = arith.constant 0 : i32
    return %arg0, %c0_i32, %c0_i32_0 : i32, i32, i32
  }
  func.func @transform_1(%arg0: i32) -> (i32, i32, i32) {
    %c0_i32 = arith.constant 0 : i32
    %c0_i32_0 = arith.constant 0 : i32
    %c0_i32_1 = arith.constant 0 : i32
    %c0_i32_2 = arith.constant 0 : i32
    return %c0_i32, %c0_i32_0, %c0_i32_1 : i32, i32, i32
  }
  func.func @transform_2(%arg0: i32) -> (i32, i32, i32) {
    %c0_i32 = arith.constant 0 : i32
    %c0_i32_0 = arith.constant 0 : i32
    %c0_i32_1 = arith.constant 0 : i32
    %c0_i32_2 = arith.constant 0 : i32
    return %c0_i32, %c0_i32_0, %c0_i32_1 : i32, i32, i32
  }
  func.func @transform_3(%arg0: i32) -> (i32, i32, i32) {
    %c0_i32 = arith.constant 0 : i32
    %c0_i32_0 = arith.constant 0 : i32
    %c0_i32_1 = arith.constant 0 : i32
    %c0_i32_2 = arith.constant 0 : i32
    return %c0_i32, %c0_i32_0, %c0_i32_1 : i32, i32, i32
  }
  func.func @transform_4(%arg0: i32) -> (i32, i32, i32) {
    %c0_i32 = arith.constant 0 : i32
    %c0_i32_0 = arith.constant 0 : i32
    %c0_i32_1 = arith.constant 0 : i32
    %c0_i32_2 = arith.constant 0 : i32
    return %c0_i32, %c0_i32_0, %c0_i32_1 : i32, i32, i32
  }
  func.func @transform_5(%arg0: i32) -> (i32, i32, i32) {
    %c0_i32 = arith.constant 0 : i32
    %c0_i32_0 = arith.constant 0 : i32
    %c0_i32_1 = arith.constant 0 : i32
    %c0_i32_2 = arith.constant 0 : i32
    return %c0_i32, %c0_i32_0, %c0_i32_1 : i32, i32, i32
  }
  func.func @transform_6(%arg0: i32) -> (i32, i32, i32) {
    %c0_i32 = arith.constant 0 : i32
    %c0_i32_0 = arith.constant 0 : i32
    %c0_i32_1 = arith.constant 0 : i32
    %c0_i32_2 = arith.constant 0 : i32
    return %c0_i32, %c0_i32_0, %c0_i32_1 : i32, i32, i32
  }
  func.func @transform_7(%arg0: i32) -> (i32, i32, i32) {
    %c0_i32 = arith.constant 0 : i32
    %c0_i32_0 = arith.constant 0 : i32
    %c0_i32_1 = arith.constant 0 : i32
    %c0_i32_2 = arith.constant 0 : i32
    return %c0_i32, %c0_i32_0, %c0_i32_1 : i32, i32, i32
  }
  func.func @transform_8(%arg0: i32) -> (i32, i32, i32) {
    %c0_i32 = arith.constant 0 : i32
    %c0_i32_0 = arith.constant 0 : i32
    %c0_i32_1 = arith.constant 0 : i32
    %c0_i32_2 = arith.constant 0 : i32
    return %c0_i32, %c0_i32_0, %c0_i32_1 : i32, i32, i32
  }
  func.func @transform_9(%arg0: i32) -> (i32, i32, i32) {
    %c0_i32 = arith.constant 0 : i32
    %c0_i32_0 = arith.constant 0 : i32
    %c0_i32_1 = arith.constant 0 : i32
    return %arg0, %c0_i32, %c0_i32_0 : i32, i32, i32
  }
  func.func @transform_10(%arg0: i32) -> (i32, i32, i32, i32) {
    %c0_i32 = arith.constant 0 : i32
    %c0_i32_0 = arith.constant 0 : i32
    %c0_i32_1 = arith.constant 0 : i32
    %c0_i32_2 = arith.constant 0 : i32
    return %arg0, %c0_i32, %c0_i32_0, %c0_i32_1 : i32, i32, i32, i32
  }
  func.func @transform_11(%arg0: i32) -> (i32, i32) {
    %c0_i32 = arith.constant 0 : i32
    %c0_i32_0 = arith.constant 0 : i32
    %c0_i32_1 = arith.constant 0 : i32
    return %c0_i32, %c0_i32_0 : i32, i32
  }
}

</mosaic_0001>

<llo_original>
// kernel: _rev_encoder_core.1
$region0: #{_rev_encoder_core.1}
  #allocation0 [shape = 'u32[]', space=smem, size = 0x4, offset = 0x4, fixed_abs, tag = 'smem constant byte address 0x4 - core index']
  #allocation1 [shape = 'u32[72,128]{1,0:T(1,128)}', space=vmem, size = 0x9000, scoped, tag = 'internal scratch']
  %s0 = inlined_call_operand.vmem [shape: f32[8,2,96], index: 0, kind: input, shape index: {}]
  %s1 = inlined_call_operand.vmem [shape: s32[2,2,32], index: 1, kind: input, shape index: {}]
  %s2 = inlined_call_operand.vmem [shape: f32[1,32,96], index: 2, kind: input, shape index: {}]
  %s3 = inlined_call_operand.vmem [shape: f32[1,1,96], index: 3, kind: input, shape index: {}]
  %s4 = inlined_call_operand.vmem [shape: f32[2,16,32], index: 4, kind: input, shape index: {}]
  %s5 = inlined_call_operand.vmem [shape: f32[2,16,16], index: 5, kind: input, shape index: {}]
  %s6 = inlined_call_operand.vmem [shape: f32[2,16,32], index: 6, kind: input, shape index: {}]
  %s7 = inlined_call_operand.vmem [shape: f32[2,16,16], index: 7, kind: input, shape index: {}]
  %s8 = inlined_call_operand.hbm [shape: s32[2,2,32], index: 8, kind: output, shape index: {0}]
  %s9 = inlined_call_operand.hbm [shape: s32[8,2,32], index: 9, kind: output, shape index: {1}]
  %s10 = inlined_call_operand.hbm [shape: s32[8,2,2,32], index: 10, kind: output, shape index: {2}]
  %s11 = inlined_call_operand.hbm [shape: f32[1,1], index: 11, kind: output, shape index: {3}]
  %12 = xla_tuple %s8, %s9, %s10, %s11
  %s13 = sld [smem:[#allocation0]]
  $region70: #{_rev_encoder_core.1} parent=0
    _
  %s15 = ssub.s32 1, %s13
  %s16 = scalar_select 0, %s15, %s13
  $region1: #{_rev_encoder_core.1} parent=0
    #allocation2 [shape = 'u8[2048]{0}', space=vmem, size = 0x800, scoped, tag = 'output window, operand 0, single buffered']
    #allocation3 [shape = 's32[1]{0}', space=sflag, size = 0x4, scoped, tag = 'scoped memory for _rev_encoder_core.1']
    #allocation4 [shape = 'u8[8192]{0}', space=vmem, size = 0x2000, scoped, tag = 'output window, operand 1, single buffered']
    #allocation5 [shape = 's32[1]{0}', space=sflag, size = 0x4, scoped, tag = 'scoped memory for _rev_encoder_core.1']
    #allocation6 [shape = 'u8[16384]{0}', space=vmem, size = 0x4000, scoped, tag = 'output window, operand 2, single buffered']
    #allocation7 [shape = 'u8[512]{0}', space=vmem, size = 0x400, scoped, tag = 'output window, operand 3, single buffered']
    #allocation8 [shape = 's32[1]{0}', space=sflag, size = 0x4, scoped, tag = 'scoped memory for _rev_encoder_core.1']
    %17 = vsyncpa [#allocation3], 0
    %18 = vsyncpa [#allocation5], 0
    %19 = vsyncpa [#allocation8], 0
    // Predicated region
    $region2: #{_rev_encoder_core.1} parent=1 // pred_check
      _
    $region3: #{_rev_encoder_core.1} parent=1 // pred_check_branch
      %21 = sbr.rel (0) target = $region5
    $region4: #{_rev_encoder_core.1} parent=1 // pred_region
      _
    $region5: #{_rev_encoder_core.1} parent=1 // pred_fallthru
      _
    // Predicated region
    $region6: #{_rev_encoder_core.1} parent=1 // pred_check
      _
    $region7: #{_rev_encoder_core.1} parent=1 // pred_check_branch
      %23 = sbr.rel (0) target = $region9
    $region8: #{_rev_encoder_core.1} parent=1 // pred_region
      _
    $region9: #{_rev_encoder_core.1} parent=1 // pred_fallthru
      _
    // Predicated region
    $region10: #{_rev_encoder_core.1} parent=1 // pred_check
      _
    $region11: #{_rev_encoder_core.1} parent=1 // pred_check_branch
      %25 = sbr.rel (0) target = $region13
    $region12: #{_rev_encoder_core.1} parent=1 // pred_region
      _
    $region13: #{_rev_encoder_core.1} parent=1 // pred_fallthru
      _
    // Predicated region
    $region14: #{_rev_encoder_core.1} parent=1 // pred_check
      _
    $region15: #{_rev_encoder_core.1} parent=1 // pred_check_branch
      %27 = sbr.rel (0) target = $region17
    $region16: #{_rev_encoder_core.1} parent=1 // pred_region
      _
    $region17: #{_rev_encoder_core.1} parent=1 // pred_fallthru
      _
    // Predicated region
    $region18: #{_rev_encoder_core.1} parent=1 // pred_check
      _
    $region19: #{_rev_encoder_core.1} parent=1 // pred_check_branch
      %29 = sbr.rel (0) target = $region21
    $region20: #{_rev_encoder_core.1} parent=1 // pred_region
      _
    $region21: #{_rev_encoder_core.1} parent=1 // pred_fallthru
      _
    // Predicated region
    $region22: #{_rev_encoder_core.1} parent=1 // pred_check
      _
    $region23: #{_rev_encoder_core.1} parent=1 // pred_check_branch
      %31 = sbr.rel (0) target = $region25
    $region24: #{_rev_encoder_core.1} parent=1 // pred_region
      _
    $region25: #{_rev_encoder_core.1} parent=1 // pred_fallthru
      _
    // Predicated region
    $region26: #{_rev_encoder_core.1} parent=1 // pred_check
      _
    $region27: #{_rev_encoder_core.1} parent=1 // pred_check_branch
      %33 = sbr.rel (0) target = $region29
    $region28: #{_rev_encoder_core.1} parent=1 // pred_region
      _
    $region29: #{_rev_encoder_core.1} parent=1 // pred_fallthru
      _
    // Predicated region
    $region30: #{_rev_encoder_core.1} parent=1 // pred_check
      _
    $region31: #{_rev_encoder_core.1} parent=1 // pred_check_branch
      %35 = sbr.rel (0) target = $region33
    $region32: #{_rev_encoder_core.1} parent=1 // pred_region
      _
    $region33: #{_rev_encoder_core.1} parent=1 // pred_fallthru
      _
    %p36 = scmp.eq.s32.totalorder 0, 0
    // Predicated region
    $region34: #{_rev_encoder_core.1} parent=1 // pred_check
      %p37 = pneg %p36
    $region35: #{_rev_encoder_core.1} parent=1 // pred_check_branch
      %39 = sbr.rel (%p37) target = $region37
    $region36: #{_rev_encoder_core.1} parent=1 // pred_region
      %v40 = vld [vmem:[%s1] sm:$0x3]
      %v41 = vld [vmem:[%s1 + $0x2] sm:$0x3]
      %vm42 = vcmask 254976
      %43 = vst.msk [vmem:[#allocation2] sm:$0x3] %vm42, %v40
      %44 = vst.msk [vmem:[#allocation2 + $0x2] sm:$0x3] %vm42, %v41
      %vm45 = vcmask 0
      %46 = vst.msk [vmem:[#allocation7] sm:$0x1] %vm45, 0.0
    $region37: #{_rev_encoder_core.1} parent=1 // pred_fallthru
      _
    %v47 = vld [vmem:[#allocation2] sm:$0x3]
    %s48 = scalar_lea.vmem [#allocation2], 2
    %v49 = vld [vmem:[%s48] sm:$0x3]
    %v50 = vlaneseq
    %v51 = vand.u32 %v50, 127
    %vm52 = vcmp.ge.s32.totalorder %v51, 4
    %v53 = vsel %vm52, 1, 0
    %v54 = vcvt.s32.f32 %v53
    %vm55 = vcmask 254976
    %56 = vst.msk [vmem:[#allocation4] sm:$0x3] %vm55, %v49
    %v57 = vcvt.s32.f32 %v47
    %v58 = vmul.f32 %v57, 1.1920929e-07
    %v59 = vld [vmem:[%s0] sm:$0x3]
    %v60 = vld [vmem:[%s4] sm:$0xff]
    %v61 = vld [vmem:[%s4 + $0x8] sm:$0xff]
    %63 = vrot.lane.b32.xlu0 %v58, 112
    %v64 = vpop.permute.xlu0 %63
    %vm65 = vcmask 130048
    %v66 = vsel %vm65, %v64, 0
    %68 = vmatpush.msra.mxu0 0.0
    %69 = vmatpush.msra.mxu0 0.0
    %70 = vmatpush.msra.mxu0 0.0
    %71 = vmatpush.msra.mxu0 0.0
    %72 = vmatpush.msra.mxu0 0.0
    %73 = vmatpush.msra.mxu0 0.0
    %74 = vmatpush.msra.mxu0 0.0
    %75 = vmatpush.msra.mxu0 0.0
    %76 = vmatpush.msra.mxu0 0.0
    %77 = vmatpush.msra.mxu0 0.0
    %78 = vmatpush.msra.mxu0 0.0
    %79 = vmatpush.msra.mxu0 0.0
    %80 = vmatpush.msra.mxu0 0.0
    %81 = vmatpush.msra.mxu0 0.0
    %82 = vmatpush.msra.mxu0 %v61
    %83 = vmatpush.msra.mxu0 %v60
    %84 = vmatmul.f32.gmra.mxu0 %v66
    %v85 = vpop.f32.mrf.mxu0
    %v86 = vadd.f32 0.0, %v85
    %87 = vdwg.mxu0
    %v88 = vadd.f32 %v59, %v86
    %v89 = vxor.u32 %v88, 2147483648
    %v90 = vmul.f32 %v89, 1.442695
    %v91 = vpow.pop %v90
    %v92 = vadd.f32 %v91, 1.0
    %v93 = vrcp.pop %v92
    %v94 = vmul.f32 %v92, %v93
    %v95 = vsub.f32 1.0, %v94
    %v96 = vmul.f32 %v93, %v95
    %v97 = vadd.f32 %v93, %v96
    %vm98 = vweird.f32 %v92
    %vm99 = vweird.f32 %v93
    %vm100 = vmor %vm98, %vm99
    %v101 = vsel %vm100, %v93, %v97
    %v102 = vand.u32 2147483647, %v92
    %vm103 = vcmp.eq.f32.partialorder %v102, 8.507059e+37
    %v104 = vand.u32 %v92, 2147483648
    %v105 = vor.u32 1.1754944e-38, %v104
    %v106 = vsel %vm103, %v105, %v101
    %v107 = vmul.f32 1.0, %v106
    %v108 = vmul.f32 %v107, 0.875
    %v109 = vadd.f32 %v108, 0.125
    %v110 = vmul.f32 %v107, %v58
    %v111 = vld [vmem:[%s5] sm:$0xff]
    %v112 = vld [vmem:[%s5 + $0x8] sm:$0xff]
    %114 = vrot.lane.b32.xlu0 %v110, 112
    %v115 = vpop.permute.xlu0 %114
    %v116 = vsel %vm65, %v115, 0
    %118 = vmatpush.msra.mxu0 0.0
    %119 = vmatpush.msra.mxu0 0.0
    %120 = vmatpush.msra.mxu0 0.0
    %121 = vmatpush.msra.mxu0 0.0
    %122 = vmatpush.msra.mxu0 0.0
    %123 = vmatpush.msra.mxu0 0.0
    %124 = vmatpush.msra.mxu0 0.0
    %125 = vmatpush.msra.mxu0 0.0
    %126 = vmatpush.msra.mxu0 0.0
    %127 = vmatpush.msra.mxu0 0.0
    %128 = vmatpush.msra.mxu0 0.0
    %129 = vmatpush.msra.mxu0 0.0
    %130 = vmatpush.msra.mxu0 0.0
    %131 = vmatpush.msra.mxu0 0.0
    %132 = vmatpush.msra.mxu0 %v112
    %133 = vmatpush.msra.mxu0 %v111
    %134 = vmatmul.f32.gmra.mxu0 %v116
    %v135 = vpop.f32.mrf.mxu0
    %v136 = vadd.f32 0.0, %v135
    %137 = vdwg.mxu0
    %139 = vrot.lane.b32.xlu0 %v136, 64
    %v140 = vpop.permute.xlu0 %139
    %v142 = vadd.f32 %v59, %v140
    %v143 = vtanh.pop %v142
    %v144 = vmul.f32 %v109, 1024.0
    %v145 = vcvt.f32.s32.to.zero.pseudo %v144
    %v146 = vshra.s32 %v47, 10
    %v147 = vmul.u32 %v146, 1024
    %v148 = vsub.s32 %v47, %v147
    %v149 = vmul.u32 %v148, %v145
    %v150 = vmul.u32 %v146, %v145
    %v151 = vshra.s32 %v149, 10
    %v152 = vadd.s32 %v150, %v151
    %v153 = vand.u32 %v149, 1023
    %v154 = vsub.f32 1.0, %v109
    %156 = vrot.lane.b32.xlu0 %v143, 64
    %v157 = vpop.permute.xlu0 %156
    %v159 = vmul.f32 %v154, %v157
    %v160 = vmul.f32 %v159, 8388608.0
    %v161 = vcvt.f32.s32.to.zero.pseudo %v160
    %v162 = vadd.s32 %v152, %v161
    %v163 = vcvt.s32.f32 %v162
    %v164 = vmul.f32 %v163, 1.1920929e-07
    %v165 = vld [vmem:[%s6] sm:$0xff]
    %v166 = vld [vmem:[%s6 + $0x8] sm:$0xff]
    %v168 = vsel %vm65, %v164, 0
    %170 = vmatpush.msra.mxu0 0.0
    %171 = vmatpush.msra.mxu0 0.0
    %172 = vmatpush.msra.mxu0 0.0
    %173 = vmatpush.msra.mxu0 0.0
    %174 = vmatpush.msra.mxu0 0.0
    %175 = vmatpush.msra.mxu0 0.0
    %176 = vmatpush.msra.mxu0 0.0
    %177 = vmatpush.msra.mxu0 0.0
    %178 = vmatpush.msra.mxu0 0.0
    %179 = vmatpush.msra.mxu0 0.0
    %180 = vmatpush.msra.mxu0 0.0
    %181 = vmatpush.msra.mxu0 0.0
    %182 = vmatpush.msra.mxu0 0.0
    %183 = vmatpush.msra.mxu0 0.0
    %184 = vmatpush.msra.mxu0 %v166
    %185 = vmatpush.msra.mxu0 %v165
    %186 = vmatmul.f32.gmra.mxu0 %v168
    %v187 = vpop.f32.mrf.mxu0
    %v188 = vadd.f32 0.0, %v187
    %189 = vdwg.mxu0
    %191 = vrot.lane.b32.xlu0 %v188, 32
    %v192 = vpop.permute.xlu0 %191
    %v194 = vadd.f32 %v59, %v192
    %v195 = vxor.u32 %v194, 2147483648
    %v196 = vmul.f32 %v195, 1.442695
    %v197 = vpow.pop %v196
    %v198 = vadd.f32 %v197, 1.0
    %v199 = vrcp.pop %v198
    %v200 = vmul.f32 %v198, %v199
    %v201 = vsub.f32 1.0, %v200
    %v202 = vmul.f32 %v199, %v201
    %v203 = vadd.f32 %v199, %v202
    %vm204 = vweird.f32 %v198
    %vm205 = vweird.f32 %v199
    %vm206 = vmor %vm204, %vm205
    %v207 = vsel %vm206, %v199, %v203
    %v208 = vand.u32 2147483647, %v198
    %vm209 = vcmp.eq.f32.partialorder %v208, 8.507059e+37
    %v210 = vand.u32 %v198, 2147483648
    %v211 = vor.u32 1.1754944e-38, %v210
    %v212 = vsel %vm209, %v211, %v207
    %v213 = vmul.f32 1.0, %v212
    %v214 = vmul.f32 %v213, 0.875
    %v215 = vadd.f32 %v214, 0.125
    %216 = vrot.lane.b32.xlu0 %v164, 48
    %v217 = vpop.permute.xlu0 %216
    %v219 = vmul.f32 %v213, %v217
    %v220 = vld [vmem:[%s7] sm:$0xff]
    %v221 = vld [vmem:[%s7 + $0x8] sm:$0xff]
    %223 = vrot.lane.b32.xlu0 %v219, 80
    %v224 = vpop.permute.xlu0 %223
    %v225 = vsel %vm65, %v224, 0
    %227 = vmatpush.msra.mxu0 0.0
    %228 = vmatpush.msra.mxu0 0.0
    %229 = vmatpush.msra.mxu0 0.0
    %230 = vmatpush.msra.mxu0 0.0
    %231 = vmatpush.msra.mxu0 0.0
    %232 = vmatpush.msra.mxu0 0.0
    %233 = vmatpush.msra.mxu0 0.0
    %234 = vmatpush.msra.mxu0 0.0
    %235 = vmatpush.msra.mxu0 0.0
    %236 = vmatpush.msra.mxu0 0.0
    %237 = vmatpush.msra.mxu0 0.0
    %238 = vmatpush.msra.mxu0 0.0
    %239 = vmatpush.msra.mxu0 0.0
    %240 = vmatpush.msra.mxu0 0.0
    %241 = vmatpush.msra.mxu0 %v221
    %242 = vmatpush.msra.mxu0 %v220
    %243 = vmatmul.f32.gmra.mxu0 %v225
    %v244 = vpop.f32.mrf.mxu0
    %v245 = vadd.f32 0.0, %v244
    %246 = vdwg.mxu0
    %248 = vrot.lane.b32.xlu0 %v245, 80
    %v249 = vpop.permute.xlu0 %248
    %v251 = vadd.f32 %v59, %v249
    %v252 = vtanh.pop %v251
    %v253 = vmul.f32 %v215, 1024.0
    %v254 = vcvt.f32.s32.to.zero.pseudo %v253
    %255 = vrot.lane.b32.xlu0 %v254, 112
    %v256 = vpop.permute.xlu0 %255
    %v257 = vmul.u32 %v148, %v256
    %v258 = vmul.u32 %v146, %v256
    %v259 = vshra.s32 %v257, 10
    %v260 = vadd.s32 %v258, %v259
    %v261 = vand.u32 %v257, 1023
    %v262 = vsub.f32 1.0, %v215
    %264 = vrot.lane.b32.xlu0 %v252, 80
    %v265 = vpop.permute.xlu0 %264
    %v267 = vmul.f32 %v262, %v265
    %v268 = vmul.f32 %v267, 8388608.0
    %v269 = vcvt.f32.s32.to.zero.pseudo %v268
    %270 = vrot.lane.b32.xlu0 %v269, 112
    %v271 = vpop.permute.xlu0 %270
    %v272 = vadd.s32 %v260, %v271
    %v273 = vsel %vm65, %v162, %v272
    %v274 = vsel %vm65, %v153, %v261
    %275 = vst.msk [vmem:[#allocation6] sm:$0x3] %vm55, %v274
    %v276 = vlog2.pop %v109
    %v277 = vmul.f32 %v276, 0.6931472
    %v278 = vrcp.pop 0.6931472
    %v279 = vmul.f32 0.6931472, %v278
    %v280 = vsub.f32 1.0, %v279
    %v281 = vmul.f32 %v278, %v280
    %v282 = vadd.f32 %v278, %v281
    %vm283 = vweird.f32 %v278
    %v284 = vsel %vm283, %v278, %v282
    %v285 = vmul.f32 %v277, %v284
    %v286 = vsub.f32 0.0, %v285
    %v287 = vadd.f32 %v286, 0.0
    %v288 = vlog2.pop %v215
    %v289 = vmul.f32 %v288, 0.6931472
    %v290 = vmul.f32 %v289, %v284
    %v291 = vsub.f32 0.0, %v290
    %293 = vrot.lane.b32.xlu0 %v291, 96
    %v294 = vpop.permute.xlu0 %293
    %v296 = vadd.f32 %v287, %v294
    %v297 = vcvt.s32.f32 %v273
    %v298 = vmul.f32 %v297, 1.1920929e-07
    %v299 = vcvt.s32.f32 %v49
    %v300 = vmul.f32 %v299, 1.1920929e-07
    %v301 = vld [vmem:[%s2] sm:$0xff]
    %v302 = vld [vmem:[%s2 + $0x8] sm:$0xff]
    %v303 = vld [vmem:[%s2 + $0x10] sm:$0xff]
    %v304 = vld [vmem:[%s2 + $0x18] sm:$0xff]
    %v305 = vld [vmem:[%s3] sm:$0x1]
    %v307 = vperm.slane %v305, 0
    %vm309 = vcmask 261120
    %v311 = vsel %vm309, %v298, 0
    %313 = vmatpush.msra.mxu0 0.0
    %314 = vmatpush.msra.mxu0 0.0
    %315 = vmatpush.msra.mxu0 0.0
    %316 = vmatpush.msra.mxu0 0.0
    %317 = vmatpush.msra.mxu0 0.0
    %318 = vmatpush.msra.mxu0 0.0
    %319 = vmatpush.msra.mxu0 0.0
    %320 = vmatpush.msra.mxu0 0.0
    %321 = vmatpush.msra.mxu0 0.0
    %322 = vmatpush.msra.mxu0 0.0
    %323 = vmatpush.msra.mxu0 0.0
    %324 = vmatpush.msra.mxu0 0.0
    %325 = vmatpush.msra.mxu0 %v304
    %326 = vmatpush.msra.mxu0 %v303
    %327 = vmatpush.msra.mxu0 %v302
    %328 = vmatpush.msra.mxu0 %v301
    %329 = vmatmul.f32.gmra.mxu0 %v311
    %v330 = vpop.f32.mrf.mxu0
    %v331 = vadd.f32 %v307, %v330
    %332 = vdwg.mxu0
    %s333 = scalar_lea.vmem %s4, 16
    %v334 = vld [vmem:[%s333] sm:$0xff]
    %v335 = vld [vmem:[%s333 + $0x8] sm:$0xff]
    %337 = vrot.lane.b32.xlu0 %v300, 112
    %v338 = vpop.permute.xlu0 %337
    %v339 = vsel %vm65, %v338, 0
    %341 = vmatpush.msra.mxu0 0.0
    %342 = vmatpush.msra.mxu0 0.0
    %343 = vmatpush.msra.mxu0 0.0
    %344 = vmatpush.msra.mxu0 0.0
    %345 = vmatpush.msra.mxu0 0.0
    %346 = vmatpush.msra.mxu0 0.0
    %347 = vmatpush.msra.mxu0 0.0
    %348 = vmatpush.msra.mxu0 0.0
    %349 = vmatpush.msra.mxu0 0.0
    %350 = vmatpush.msra.mxu0 0.0
    %351 = vmatpush.msra.mxu0 0.0
    %352 = vmatpush.msra.mxu0 0.0
    %353 = vmatpush.msra.mxu0 0.0
    %354 = vmatpush.msra.mxu0 0.0
    %355 = vmatpush.msra.mxu0 %v335
    %356 = vmatpush.msra.mxu0 %v334
    %357 = vmatmul.f32.gmra.mxu0 %v339
    %v358 = vpop.f32.mrf.mxu0
    %v359 = vadd.f32 0.0, %v358
    %360 = vdwg.mxu0
    %v361 = vadd.f32 %v331, %v359
    %v362 = vxor.u32 %v361, 2147483648
    %v363 = vmul.f32 %v362, 1.442695
    %v364 = vpow.pop %v363
    %v365 = vadd.f32 %v364, 1.0
    %v366 = vrcp.pop %v365
    %v367 = vmul.f32 %v365, %v366
    %v368 = vsub.f32 1.0, %v367
    %v369 = vmul.f32 %v366, %v368
    %v370 = vadd.f32 %v366, %v369
    %vm371 = vweird.f32 %v365
    %vm372 = vweird.f32 %v366
    %vm373 = vmor %vm371, %vm372
    %v374 = vsel %vm373, %v366, %v370
    %v375 = vand.u32 2147483647, %v365
    %vm376 = vcmp.eq.f32.partialorder %v375, 8.507059e+37
    %v377 = vand.u32 %v365, 2147483648
    %v378 = vor.u32 1.1754944e-38, %v377
    %v379 = vsel %vm376, %v378, %v374
    %v380 = vmul.f32 1.0, %v379
    %v381 = vmul.f32 %v380, 0.875
    %v382 = vadd.f32 %v381, 0.125
    %v383 = vmul.f32 %v380, %v300
    %s384 = scalar_lea.vmem %s5, 16
    %v385 = vld [vmem:[%s384] sm:$0xff]
    %v386 = vld [vmem:[%s384 + $0x8] sm:$0xff]
    %388 = vrot.lane.b32.xlu0 %v383, 112
    %v389 = vpop.permute.xlu0 %388
    %v390 = vsel %vm65, %v389, 0
    %392 = vmatpush.msra.mxu0 0.0
    %393 = vmatpush.msra.mxu0 0.0
    %394 = vmatpush.msra.mxu0 0.0
    %395 = vmatpush.msra.mxu0 0.0
    %396 = vmatpush.msra.mxu0 0.0
    %397 = vmatpush.msra.mxu0 0.0
    %398 = vmatpush.msra.mxu0 0.0
    %399 = vmatpush.msra.mxu0 0.0
    %400 = vmatpush.msra.mxu0 0.0
    %401 = vmatpush.msra.mxu0 0.0
    %402 = vmatpush.msra.mxu0 0.0
    %403 = vmatpush.msra.mxu0 0.0
    %404 = vmatpush.msra.mxu0 0.0
    %405 = vmatpush.msra.mxu0 0.0
    %406 = vmatpush.msra.mxu0 %v386
    %407 = vmatpush.msra.mxu0 %v385
    %408 = vmatmul.f32.gmra.mxu0 %v390
    %v409 = vpop.f32.mrf.mxu0
    %v410 = vadd.f32 0.0, %v409
    %411 = vdwg.mxu0
    %413 = vrot.lane.b32.xlu0 %v410, 64
    %v414 = vpop.permute.xlu0 %413
    %v416 = vadd.f32 %v331, %v414
    %v417 = vtanh.pop %v416
    %v418 = vmul.f32 %v382, 1024.0
    %v419 = vcvt.f32.s32.to.zero.pseudo %v418
    %v420 = vshra.s32 %v49, 10
    %v421 = vmul.u32 %v420, 1024
    %v422 = vsub.s32 %v49, %v421
    %v423 = vmul.u32 %v422, %v419
    %v424 = vmul.u32 %v420, %v419
    %v425 = vshra.s32 %v423, 10
    %v426 = vadd.s32 %v424, %v425
    %v427 = vand.u32 %v423, 1023
    %v428 = vsub.f32 1.0, %v382
    %430 = vrot.lane.b32.xlu0 %v417, 64
    %v431 = vpop.permute.xlu0 %430
    %v433 = vmul.f32 %v428, %v431
    %v434 = vmul.f32 %v433, 8388608.0
    %v435 = vcvt.f32.s32.to.zero.pseudo %v434
    %v436 = vadd.s32 %v426, %v435
    %v437 = vcvt.s32.f32 %v436
    %v438 = vmul.f32 %v437, 1.1920929e-07
    %s439 = scalar_lea.vmem %s6, 16
    %v440 = vld [vmem:[%s439] sm:$0xff]
    %v441 = vld [vmem:[%s439 + $0x8] sm:$0xff]
    %v443 = vsel %vm65, %v438, 0
    %445 = vmatpush.msra.mxu0 0.0
    %446 = vmatpush.msra.mxu0 0.0
    %447 = vmatpush.msra.mxu0 0.0
    %448 = vmatpush.msra.mxu0 0.0
    %449 = vmatpush.msra.mxu0 0.0
    %450 = vmatpush.msra.mxu0 0.0
    %451 = vmatpush.msra.mxu0 0.0
    %452 = vmatpush.msra.mxu0 0.0
    %453 = vmatpush.msra.mxu0 0.0
    %454 = vmatpush.msra.mxu0 0.0
    %455 = vmatpush.msra.mxu0 0.0
    %456 = vmatpush.msra.mxu0 0.0
    %457 = vmatpush.msra.mxu0 0.0
    %458 = vmatpush.msra.mxu0 0.0
    %459 = vmatpush.msra.mxu0 %v441
    %460 = vmatpush.msra.mxu0 %v440
    %461 = vmatmul.f32.gmra.mxu0 %v443
    %v462 = vpop.f32.mrf.mxu0
    %v463 = vadd.f32 0.0, %v462
    %464 = vdwg.mxu0
    %466 = vrot.lane.b32.xlu0 %v463, 32
    %v467 = vpop.permute.xlu0 %466
    %v469 = vadd.f32 %v331, %v467
    %v470 = vxor.u32 %v469, 2147483648
    %v471 = vmul.f32 %v470, 1.442695
    %v472 = vpow.pop %v471
    %v473 = vadd.f32 %v472, 1.0
    %v474 = vrcp.pop %v473
    %v475 = vmul.f32 %v473, %v474
    %v476 = vsub.f32 1.0, %v475
    %v477 = vmul.f32 %v474, %v476
    %v478 = vadd.f32 %v474, %v477
    %vm479 = vweird.f32 %v473
    %vm480 = vweird.f32 %v474
    %vm481 = vmor %vm479, %vm480
    %v482 = vsel %vm481, %v474, %v478
    %v483 = vand.u32 2147483647, %v473
    %vm484 = vcmp.eq.f32.partialorder %v483, 8.507059e+37
    %v485 = vand.u32 %v473, 2147483648
    %v486 = vor.u32 1.1754944e-38, %v485
    %v487 = vsel %vm484, %v486, %v482
    %v488 = vmul.f32 1.0, %v487
    %v489 = vmul.f32 %v488, 0.875
    %v490 = vadd.f32 %v489, 0.125
    %491 = vrot.lane.b32.xlu0 %v438, 48
    %v492 = vpop.permute.xlu0 %491
    %v494 = vmul.f32 %v488, %v492
    %s495 = scalar_lea.vmem %s7, 16
    %v496 = vld [vmem:[%s495] sm:$0xff]
    %v497 = vld [vmem:[%s495 + $0x8] sm:$0xff]
    %499 = vrot.lane.b32.xlu0 %v494, 80
    %v500 = vpop.permute.xlu0 %499
    %v501 = vsel %vm65, %v500, 0
    %503 = vmatpush.msra.mxu0 0.0
    %504 = vmatpush.msra.mxu0 0.0
    %505 = vmatpush.msra.mxu0 0.0
    %506 = vmatpush.msra.mxu0 0.0
    %507 = vmatpush.msra.mxu0 0.0
    %508 = vmatpush.msra.mxu0 0.0
    %509 = vmatpush.msra.mxu0 0.0
    %510 = vmatpush.msra.mxu0 0.0
    %511 = vmatpush.msra.mxu0 0.0
    %512 = vmatpush.msra.mxu0 0.0
    %513 = vmatpush.msra.mxu0 0.0
    %514 = vmatpush.msra.mxu0 0.0
    %515 = vmatpush.msra.mxu0 0.0
    %516 = vmatpush.msra.mxu0 0.0
    %517 = vmatpush.msra.mxu0 %v497
    %518 = vmatpush.msra.mxu0 %v496
    %519 = vmatmul.f32.gmra.mxu0 %v501
    %v520 = vpop.f32.mrf.mxu0
    %v521 = vadd.f32 0.0, %v520
    %522 = vdwg.mxu0
    %524 = vrot.lane.b32.xlu0 %v521, 80
    %v525 = vpop.permute.xlu0 %524
    %v527 = vadd.f32 %v331, %v525
    %v528 = vtanh.pop %v527
    %v529 = vmul.f32 %v490, 1024.0
    %v530 = vcvt.f32.s32.to.zero.pseudo %v529
    %531 = vrot.lane.b32.xlu0 %v530, 112
    %v532 = vpop.permute.xlu0 %531
    %v533 = vmul.u32 %v422, %v532
    %v534 = vmul.u32 %v420, %v532
    %v535 = vshra.s32 %v533, 10
    %v536 = vadd.s32 %v534, %v535
    %v537 = vand.u32 %v533, 1023
    %v538 = vsub.f32 1.0, %v490
    %540 = vrot.lane.b32.xlu0 %v528, 80
    %v541 = vpop.permute.xlu0 %540
    %v543 = vmul.f32 %v538, %v541
    %v544 = vmul.f32 %v543, 8388608.0
    %v545 = vcvt.f32.s32.to.zero.pseudo %v544
    %546 = vrot.lane.b32.xlu0 %v545, 112
    %v547 = vpop.permute.xlu0 %546
    %v548 = vadd.s32 %v536, %v547
    %v549 = vsel %vm65, %v436, %v548
    %v550 = vsel %vm65, %v427, %v537
    %s551 = scalar_lea.vmem [#allocation6], 2
    %552 = vst.msk [vmem:[%s551] sm:$0x3] %vm55, %v550
    %v553 = vlog2.pop %v382
    %v554 = vmul.f32 %v553, 0.6931472
    %v555 = vmul.f32 %v554, %v284
    %v556 = vsub.f32 0.0, %v555
    %v557 = vmul.f32 %v556, %v54
    %v558 = vadd.f32 %v296, %v557
    %v559 = vlog2.pop %v490
    %v560 = vmul.f32 %v559, 0.6931472
    %v561 = vmul.f32 %v560, %v284
    %v562 = vsub.f32 0.0, %v561
    %564 = vrot.lane.b32.xlu0 %v562, 96
    %v565 = vpop.permute.xlu0 %564
    %v567 = vadd.f32 %v558, %v565
    %s568 = scalar_lea.vmem [#allocation4], 2
    %569 = vst.msk [vmem:[%s568] sm:$0x3] %vm55, %v549
    %s570 = scalar_lea.vmem %s0, 2
    %v571 = vld [vmem:[%s570] sm:$0x3]
    %v572 = vld [vmem:[%s4] sm:$0xff]
    %v573 = vld [vmem:[%s4 + $0x8] sm:$0xff]
    %574 = vrot.lane.b32.xlu0 %v298, 112
    %v575 = vpop.permute.xlu0 %574
    %v576 = vsel %vm65, %v575, 0
    %578 = vmatpush.msra.mxu0 0.0
    %579 = vmatpush.msra.mxu0 0.0
    %580 = vmatpush.msra.mxu0 0.0
    %581 = vmatpush.msra.mxu0 0.0
    %582 = vmatpush.msra.mxu0 0.0
    %583 = vmatpush.msra.mxu0 0.0
    %584 = vmatpush.msra.mxu0 0.0
    %585 = vmatpush.msra.mxu0 0.0
    %586 = vmatpush.msra.mxu0 0.0
    %587 = vmatpush.msra.mxu0 0.0
    %588 = vmatpush.msra.mxu0 0.0
    %589 = vmatpush.msra.mxu0 0.0
    %590 = vmatpush.msra.mxu0 0.0
    %591 = vmatpush.msra.mxu0 0.0
    %592 = vmatpush.msra.mxu0 %v573
    %593 = vmatpush.msra.mxu0 %v572
    %594 = vmatmul.f32.gmra.mxu0 %v576
    %v595 = vpop.f32.mrf.mxu0
    %v596 = vadd.f32 0.0, %v595
    %597 = vdwg.mxu0
    %v598 = vadd.f32 %v571, %v596
    %v599 = vxor.u32 %v598, 2147483648
    %v600 = vmul.f32 %v599, 1.442695
    %v601 = vpow.pop %v600
    %v602 = vadd.f32 %v601, 1.0
    %v603 = vrcp.pop %v602
    %v604 = vmul.f32 %v602, %v603
    %v605 = vsub.f32 1.0, %v604
    %v606 = vmul.f32 %v603, %v605
    %v607 = vadd.f32 %v603, %v606
    %vm608 = vweird.f32 %v602
    %vm609 = vweird.f32 %v603
    %vm610 = vmor %vm608, %vm609
    %v611 = vsel %vm610, %v603, %v607
    %v612 = vand.u32 2147483647, %v602
    %vm613 = vcmp.eq.f32.partialorder %v612, 8.507059e+37
    %v614 = vand.u32 %v602, 2147483648
    %v615 = vor.u32 1.1754944e-38, %v614
    %v616 = vsel %vm613, %v615, %v611
    %v617 = vmul.f32 1.0, %v616
    %v618 = vmul.f32 %v617, 0.875
    %v619 = vadd.f32 %v618, 0.125
    %v620 = vmul.f32 %v617, %v298
    %v621 = vld [vmem:[%s5] sm:$0xff]
    %v622 = vld [vmem:[%s5 + $0x8] sm:$0xff]
    %624 = vrot.lane.b32.xlu0 %v620, 112
    %v625 = vpop.permute.xlu0 %624
    %v626 = vsel %vm65, %v625, 0
    %628 = vmatpush.msra.mxu0 0.0
    %629 = vmatpush.msra.mxu0 0.0
    %630 = vmatpush.msra.mxu0 0.0
    %631 = vmatpush.msra.mxu0 0.0
    %632 = vmatpush.msra.mxu0 0.0
    %633 = vmatpush.msra.mxu0 0.0
    %634 = vmatpush.msra.mxu0 0.0
    %635 = vmatpush.msra.mxu0 0.0
    %636 = vmatpush.msra.mxu0 0.0
    %637 = vmatpush.msra.mxu0 0.0
    %638 = vmatpush.msra.mxu0 0.0
    %639 = vmatpush.msra.mxu0 0.0
    %640 = vmatpush.msra.mxu0 0.0
    %641 = vmatpush.msra.mxu0 0.0
    %642 = vmatpush.msra.mxu0 %v622
    %643 = vmatpush.msra.mxu0 %v621
    %644 = vmatmul.f32.gmra.mxu0 %v626
    %v645 = vpop.f32.mrf.mxu0
    %v646 = vadd.f32 0.0, %v645
    %647 = vdwg.mxu0
    %649 = vrot.lane.b32.xlu0 %v646, 64
    %v650 = vpop.permute.xlu0 %649
    %v652 = vadd.f32 %v571, %v650
    %v653 = vtanh.pop %v652
    %v654 = vmul.f32 %v619, 1024.0
    %v655 = vcvt.f32.s32.to.zero.pseudo %v654
    %v656 = vshra.s32 %v273, 10
    %v657 = vmul.u32 %v656, 1024
    %v658 = vsub.s32 %v273, %v657
    %v659 = vmul.u32 %v658, %v655
    %v660 = vmul.u32 %v656, %v655
    %v661 = vshra.s32 %v659, 10
    %v662 = vadd.s32 %v660, %v661
    %v663 = vand.u32 %v659, 1023
    %v664 = vsub.f32 1.0, %v619
    %666 = vrot.lane.b32.xlu0 %v653, 64
    %v667 = vpop.permute.xlu0 %666
    %v669 = vmul.f32 %v664, %v667
    %v670 = vmul.f32 %v669, 8388608.0
    %v671 = vcvt.f32.s32.to.zero.pseudo %v670
    %v672 = vadd.s32 %v662, %v671
    %v673 = vcvt.s32.f32 %v672
    %v674 = vmul.f32 %v673, 1.1920929e-07
    %v675 = vld [vmem:[%s6] sm:$0xff]
    %v676 = vld [vmem:[%s6 + $0x8] sm:$0xff]
    %v678 = vsel %vm65, %v674, 0
    %680 = vmatpush.msra.mxu0 0.0
    %681 = vmatpush.msra.mxu0 0.0
    %682 = vmatpush.msra.mxu0 0.0
    %683 = vmatpush.msra.mxu0 0.0
    %684 = vmatpush.msra.mxu0 0.0
    %685 = vmatpush.msra.mxu0 0.0
    %686 = vmatpush.msra.mxu0 0.0
    %687 = vmatpush.msra.mxu0 0.0
    %688 = vmatpush.msra.mxu0 0.0
    %689 = vmatpush.msra.mxu0 0.0
    %690 = vmatpush.msra.mxu0 0.0
    %691 = vmatpush.msra.mxu0 0.0
    %692 = vmatpush.msra.mxu0 0.0
    %693 = vmatpush.msra.mxu0 0.0
    %694 = vmatpush.msra.mxu0 %v676
    %695 = vmatpush.msra.mxu0 %v675
    %696 = vmatmul.f32.gmra.mxu0 %v678
    %v697 = vpop.f32.mrf.mxu0
    %v698 = vadd.f32 0.0, %v697
    %699 = vdwg.mxu0
    %701 = vrot.lane.b32.xlu0 %v698, 32
    %v702 = vpop.permute.xlu0 %701
    %v704 = vadd.f32 %v571, %v702
    %v705 = vxor.u32 %v704, 2147483648
    %v706 = vmul.f32 %v705, 1.442695
    %v707 = vpow.pop %v706
    %v708 = vadd.f32 %v707, 1.0
    %v709 = vrcp.pop %v708
    %v710 = vmul.f32 %v708, %v709
    %v711 = vsub.f32 1.0, %v710
    %v712 = vmul.f32 %v709, %v711
    %v713 = vadd.f32 %v709, %v712
    %vm714 = vweird.f32 %v708
    %vm715 = vweird.f32 %v709
    %vm716 = vmor %vm714, %vm715
    %v717 = vsel %vm716, %v709, %v713
    %v718 = vand.u32 2147483647, %v708
    %vm719 = vcmp.eq.f32.partialorder %v718, 8.507059e+37
    %v720 = vand.u32 %v708, 2147483648
    %v721 = vor.u32 1.1754944e-38, %v720
    %v722 = vsel %vm719, %v721, %v717
    %v723 = vmul.f32 1.0, %v722
    %v724 = vmul.f32 %v723, 0.875
    %v725 = vadd.f32 %v724, 0.125
    %726 = vrot.lane.b32.xlu0 %v674, 48
    %v727 = vpop.permute.xlu0 %726
    %v729 = vmul.f32 %v723, %v727
    %v730 = vld [vmem:[%s7] sm:$0xff]
    %v731 = vld [vmem:[%s7 + $0x8] sm:$0xff]
    %733 = vrot.lane.b32.xlu0 %v729, 80
    %v734 = vpop.permute.xlu0 %733
    %v735 = vsel %vm65, %v734, 0
    %737 = vmatpush.msra.mxu0 0.0
    %738 = vmatpush.msra.mxu0 0.0
    %739 = vmatpush.msra.mxu0 0.0
    %740 = vmatpush.msra.mxu0 0.0
    %741 = vmatpush.msra.mxu0 0.0
    %742 = vmatpush.msra.mxu0 0.0
    %743 = vmatpush.msra.mxu0 0.0
    %744 = vmatpush.msra.mxu0 0.0
    %745 = vmatpush.msra.mxu0 0.0
    %746 = vmatpush.msra.mxu0 0.0
    %747 = vmatpush.msra.mxu0 0.0
    %748 = vmatpush.msra.mxu0 0.0
    %749 = vmatpush.msra.mxu0 0.0
    %750 = vmatpush.msra.mxu0 0.0
    %751 = vmatpush.msra.mxu0 %v731
    %752 = vmatpush.msra.mxu0 %v730
    %753 = vmatmul.f32.gmra.mxu0 %v735
    %v754 = vpop.f32.mrf.mxu0
    %v755 = vadd.f32 0.0, %v754
    %756 = vdwg.mxu0
    %758 = vrot.lane.b32.xlu0 %v755, 80
    %v759 = vpop.permute.xlu0 %758
    %v761 = vadd.f32 %v571, %v759
    %v762 = vtanh.pop %v761
    %v763 = vmul.f32 %v725, 1024.0
    %v764 = vcvt.f32.s32.to.zero.pseudo %v763
    %765 = vrot.lane.b32.xlu0 %v764, 112
    %v766 = vpop.permute.xlu0 %765
    %v767 = vmul.u32 %v658, %v766
    %v768 = vmul.u32 %v656, %v766
    %v769 = vshra.s32 %v767, 10
    %v770 = vadd.s32 %v768, %v769
    %v771 = vand.u32 %v767, 1023
    %v772 = vsub.f32 1.0, %v725
    %774 = vrot.lane.b32.xlu0 %v762, 80
    %v775 = vpop.permute.xlu0 %774
    %v777 = vmul.f32 %v772, %v775
    %v778 = vmul.f32 %v777, 8388608.0
    %v779 = vcvt.f32.s32.to.zero.pseudo %v778
    %780 = vrot.lane.b32.xlu0 %v779, 112
    %v781 = vpop.permute.xlu0 %780
    %v782 = vadd.s32 %v770, %v781
    %v783 = vsel %vm65, %v672, %v782
    %v784 = vsel %vm65, %v663, %v771
    %s785 = scalar_lea.vmem [#allocation6], 4
    %786 = vst.msk [vmem:[%s785] sm:$0x3] %vm55, %v784
    %v787 = vlog2.pop %v619
    %v788 = vmul.f32 %v787, 0.6931472
    %v789 = vmul.f32 %v788, %v284
    %v790 = vsub.f32 0.0, %v789
    %v791 = vadd.f32 %v567, %v790
    %v792 = vlog2.pop %v725
    %v793 = vmul.f32 %v792, 0.6931472
    %v794 = vmul.f32 %v793, %v284
    %v795 = vsub.f32 0.0, %v794
    %797 = vrot.lane.b32.xlu0 %v795, 96
    %v798 = vpop.permute.xlu0 %797
    %v800 = vadd.f32 %v791, %v798
    %v801 = vcvt.s32.f32 %v783
    %v802 = vmul.f32 %v801, 1.1920929e-07
    %v803 = vcvt.s32.f32 %v549
    %v804 = vmul.f32 %v803, 1.1920929e-07
    %v805 = vld [vmem:[%s2] sm:$0xff]
    %v806 = vld [vmem:[%s2 + $0x8] sm:$0xff]
    %v807 = vld [vmem:[%s2 + $0x10] sm:$0xff]
    %v808 = vld [vmem:[%s2 + $0x18] sm:$0xff]
    %v809 = vld [vmem:[%s3] sm:$0x1]
    %v811 = vperm.slane %v809, 0
    %v814 = vsel %vm309, %v802, 0
    %816 = vmatpush.msra.mxu0 0.0
    %817 = vmatpush.msra.mxu0 0.0
    %818 = vmatpush.msra.mxu0 0.0
    %819 = vmatpush.msra.mxu0 0.0
    %820 = vmatpush.msra.mxu0 0.0
    %821 = vmatpush.msra.mxu0 0.0
    %822 = vmatpush.msra.mxu0 0.0
    %823 = vmatpush.msra.mxu0 0.0
    %824 = vmatpush.msra.mxu0 0.0
    %825 = vmatpush.msra.mxu0 0.0
    %826 = vmatpush.msra.mxu0 0.0
    %827 = vmatpush.msra.mxu0 0.0
    %828 = vmatpush.msra.mxu0 %v808
    %829 = vmatpush.msra.mxu0 %v807
    %830 = vmatpush.msra.mxu0 %v806
    %831 = vmatpush.msra.mxu0 %v805
    %832 = vmatmul.f32.gmra.mxu0 %v814
    %v833 = vpop.f32.mrf.mxu0
    %v834 = vadd.f32 %v811, %v833
    %835 = vdwg.mxu0
    %v836 = vld [vmem:[%s333] sm:$0xff]
    %v837 = vld [vmem:[%s333 + $0x8] sm:$0xff]
    %839 = vrot.lane.b32.xlu0 %v804, 112
    %v840 = vpop.permute.xlu0 %839
    %v841 = vsel %vm65, %v840, 0
    %843 = vmatpush.msra.mxu0 0.0
    %844 = vmatpush.msra.mxu0 0.0
    %845 = vmatpush.msra.mxu0 0.0
    %846 = vmatpush.msra.mxu0 0.0
    %847 = vmatpush.msra.mxu0 0.0
    %848 = vmatpush.msra.mxu0 0.0
    %849 = vmatpush.msra.mxu0 0.0
    %850 = vmatpush.msra.mxu0 0.0
    %851 = vmatpush.msra.mxu0 0.0
    %852 = vmatpush.msra.mxu0 0.0
    %853 = vmatpush.msra.mxu0 0.0
    %854 = vmatpush.msra.mxu0 0.0
    %855 = vmatpush.msra.mxu0 0.0
    %856 = vmatpush.msra.mxu0 0.0
    %857 = vmatpush.msra.mxu0 %v837
    %858 = vmatpush.msra.mxu0 %v836
    %859 = vmatmul.f32.gmra.mxu0 %v841
    %v860 = vpop.f32.mrf.mxu0
    %v861 = vadd.f32 0.0, %v860
    %862 = vdwg.mxu0
    %v863 = vadd.f32 %v834, %v861
    %v864 = vxor.u32 %v863, 2147483648
    %v865 = vmul.f32 %v864, 1.442695
    %v866 = vpow.pop %v865
    %v867 = vadd.f32 %v866, 1.0
    %v868 = vrcp.pop %v867
    %v869 = vmul.f32 %v867, %v868
    %v870 = vsub.f32 1.0, %v869
    %v871 = vmul.f32 %v868, %v870
    %v872 = vadd.f32 %v868, %v871
    %vm873 = vweird.f32 %v867
    %vm874 = vweird.f32 %v868
    %vm875 = vmor %vm873, %vm874
    %v876 = vsel %vm875, %v868, %v872
    %v877 = vand.u32 2147483647, %v867
    %vm878 = vcmp.eq.f32.partialorder %v877, 8.507059e+37
    %v879 = vand.u32 %v867, 2147483648
    %v880 = vor.u32 1.1754944e-38, %v879
    %v881 = vsel %vm878, %v880, %v876
    %v882 = vmul.f32 1.0, %v881
    %v883 = vmul.f32 %v882, 0.875
    %v884 = vadd.f32 %v883, 0.125
    %v885 = vmul.f32 %v882, %v804
    %v886 = vld [vmem:[%s384] sm:$0xff]
    %v887 = vld [vmem:[%s384 + $0x8] sm:$0xff]
    %889 = vrot.lane.b32.xlu0 %v885, 112
    %v890 = vpop.permute.xlu0 %889
    %v891 = vsel %vm65, %v890, 0
    %893 = vmatpush.msra.mxu0 0.0
    %894 = vmatpush.msra.mxu0 0.0
    %895 = vmatpush.msra.mxu0 0.0
    %896 = vmatpush.msra.mxu0 0.0
    %897 = vmatpush.msra.mxu0 0.0
    %898 = vmatpush.msra.mxu0 0.0
    %899 = vmatpush.msra.mxu0 0.0
    %900 = vmatpush.msra.mxu0 0.0
    %901 = vmatpush.msra.mxu0 0.0
    %902 = vmatpush.msra.mxu0 0.0
    %903 = vmatpush.msra.mxu0 0.0
    %904 = vmatpush.msra.mxu0 0.0
    %905 = vmatpush.msra.mxu0 0.0
    %906 = vmatpush.msra.mxu0 0.0
    %907 = vmatpush.msra.mxu0 %v887
    %908 = vmatpush.msra.mxu0 %v886
    %909 = vmatmul.f32.gmra.mxu0 %v891
    %v910 = vpop.f32.mrf.mxu0
    %v911 = vadd.f32 0.0, %v910
    %912 = vdwg.mxu0
    %914 = vrot.lane.b32.xlu0 %v911, 64
    %v915 = vpop.permute.xlu0 %914
    %v917 = vadd.f32 %v834, %v915
    %v918 = vtanh.pop %v917
    %v919 = vmul.f32 %v884, 1024.0
    %v920 = vcvt.f32.s32.to.zero.pseudo %v919
    %v921 = vshra.s32 %v549, 10
    %v922 = vmul.u32 %v921, 1024
    %v923 = vsub.s32 %v549, %v922
    %v924 = vmul.u32 %v923, %v920
    %v925 = vmul.u32 %v921, %v920
    %v926 = vshra.s32 %v924, 10
    %v927 = vadd.s32 %v925, %v926
    %v928 = vand.u32 %v924, 1023
    %v929 = vsub.f32 1.0, %v884
    %931 = vrot.lane.b32.xlu0 %v918, 64
    %v932 = vpop.permute.xlu0 %931
    %v934 = vmul.f32 %v929, %v932
    %v935 = vmul.f32 %v934, 8388608.0
    %v936 = vcvt.f32.s32.to.zero.pseudo %v935
    %v937 = vadd.s32 %v927, %v936
    %v938 = vcvt.s32.f32 %v937
    %v939 = vmul.f32 %v938, 1.1920929e-07
    %v940 = vld [vmem:[%s439] sm:$0xff]
    %v941 = vld [vmem:[%s439 + $0x8] sm:$0xff]
    %v943 = vsel %vm65, %v939, 0
    %945 = vmatpush.msra.mxu0 0.0
    %946 = vmatpush.msra.mxu0 0.0
    %947 = vmatpush.msra.mxu0 0.0
    %948 = vmatpush.msra.mxu0 0.0
    %949 = vmatpush.msra.mxu0 0.0
    %950 = vmatpush.msra.mxu0 0.0
    %951 = vmatpush.msra.mxu0 0.0
    %952 = vmatpush.msra.mxu0 0.0
    %953 = vmatpush.msra.mxu0 0.0
    %954 = vmatpush.msra.mxu0 0.0
    %955 = vmatpush.msra.mxu0 0.0
    %956 = vmatpush.msra.mxu0 0.0
    %957 = vmatpush.msra.mxu0 0.0
    %958 = vmatpush.msra.mxu0 0.0
    %959 = vmatpush.msra.mxu0 %v941
    %960 = vmatpush.msra.mxu0 %v940
    %961 = vmatmul.f32.gmra.mxu0 %v943
    %v962 = vpop.f32.mrf.mxu0
    %v963 = vadd.f32 0.0, %v962
    %964 = vdwg.mxu0
    %966 = vrot.lane.b32.xlu0 %v963, 32
    %v967 = vpop.permute.xlu0 %966
    %v969 = vadd.f32 %v834, %v967
    %v970 = vxor.u32 %v969, 2147483648
    %v971 = vmul.f32 %v970, 1.442695
    %v972 = vpow.pop %v971
    %v973 = vadd.f32 %v972, 1.0
    %v974 = vrcp.pop %v973
    %v975 = vmul.f32 %v973, %v974
    %v976 = vsub.f32 1.0, %v975
    %v977 = vmul.f32 %v974, %v976
    %v978 = vadd.f32 %v974, %v977
    %vm979 = vweird.f32 %v973
    %vm980 = vweird.f32 %v974
    %vm981 = vmor %vm979, %vm980
    %v982 = vsel %vm981, %v974, %v978
    %v983 = vand.u32 2147483647, %v973
    %vm984 = vcmp.eq.f32.partialorder %v983, 8.507059e+37
    %v985 = vand.u32 %v973, 2147483648
    %v986 = vor.u32 1.1754944e-38, %v985
    %v987 = vsel %vm984, %v986, %v982
    %v988 = vmul.f32 1.0, %v987
    %v989 = vmul.f32 %v988, 0.875
    %v990 = vadd.f32 %v989, 0.125
    %991 = vrot.lane.b32.xlu0 %v939, 48
    %v992 = vpop.permute.xlu0 %991
    %v994 = vmul.f32 %v988, %v992
    %v995 = vld [vmem:[%s495] sm:$0xff]
    %v996 = vld [vmem:[%s495 + $0x8] sm:$0xff]
    %998 = vrot.lane.b32.xlu0 %v994, 80
    %v999 = vpop.permute.xlu0 %998
    %v1000 = vsel %vm65, %v999, 0
    %1002 = vmatpush.msra.mxu0 0.0
    %1003 = vmatpush.msra.mxu0 0.0
    %1004 = vmatpush.msra.mxu0 0.0
    %1005 = vmatpush.msra.mxu0 0.0
    %1006 = vmatpush.msra.mxu0 0.0
    %1007 = vmatpush.msra.mxu0 0.0
    %1008 = vmatpush.msra.mxu0 0.0
    %1009 = vmatpush.msra.mxu0 0.0
    %1010 = vmatpush.msra.mxu0 0.0
    %1011 = vmatpush.msra.mxu0 0.0
    %1012 = vmatpush.msra.mxu0 0.0
    %1013 = vmatpush.msra.mxu0 0.0
    %1014 = vmatpush.msra.mxu0 0.0
    %1015 = vmatpush.msra.mxu0 0.0
    %1016 = vmatpush.msra.mxu0 %v996
    %1017 = vmatpush.msra.mxu0 %v995
    %1018 = vmatmul.f32.gmra.mxu0 %v1000
    %v1019 = vpop.f32.mrf.mxu0
    %v1020 = vadd.f32 0.0, %v1019
    %1021 = vdwg.mxu0
    %1023 = vrot.lane.b32.xlu0 %v1020, 80
    %v1024 = vpop.permute.xlu0 %1023
    %v1026 = vadd.f32 %v834, %v1024
    %v1027 = vtanh.pop %v1026
    %v1028 = vmul.f32 %v990, 1024.0
    %v1029 = vcvt.f32.s32.to.zero.pseudo %v1028
    %1030 = vrot.lane.b32.xlu0 %v1029, 112
    %v1031 = vpop.permute.xlu0 %1030
    %v1032 = vmul.u32 %v923, %v1031
    %v1033 = vmul.u32 %v921, %v1031
    %v1034 = vshra.s32 %v1032, 10
    %v1035 = vadd.s32 %v1033, %v1034
    %v1036 = vand.u32 %v1032, 1023
    %v1037 = vsub.f32 1.0, %v990
    %1039 = vrot.lane.b32.xlu0 %v1027, 80
    %v1040 = vpop.permute.xlu0 %1039
    %v1042 = vmul.f32 %v1037, %v1040
    %v1043 = vmul.f32 %v1042, 8388608.0
    %v1044 = vcvt.f32.s32.to.zero.pseudo %v1043
    %1045 = vrot.lane.b32.xlu0 %v1044, 112
    %v1046 = vpop.permute.xlu0 %1045
    %v1047 = vadd.s32 %v1035, %v1046
    %v1048 = vsel %vm65, %v937, %v1047
    %v1049 = vsel %vm65, %v928, %v1036
    %s1050 = scalar_lea.vmem [#allocation6], 6
    %1051 = vst.msk [vmem:[%s1050] sm:$0x3] %vm55, %v1049
    %v1052 = vlog2.pop %v884
    %v1053 = vmul.f32 %v1052, 0.6931472
    %v1054 = vmul.f32 %v1053, %v284
    %v1055 = vsub.f32 0.0, %v1054
    %v1056 = vmul.f32 %v1055, %v54
    %v1057 = vadd.f32 %v800, %v1056
    %v1058 = vlog2.pop %v990
    %v1059 = vmul.f32 %v1058, 0.6931472
    %v1060 = vmul.f32 %v1059, %v284
    %v1061 = vsub.f32 0.0, %v1060
    %1063 = vrot.lane.b32.xlu0 %v1061, 96
    %v1064 = vpop.permute.xlu0 %1063
    %v1066 = vadd.f32 %v1057, %v1064
    %s1067 = scalar_lea.vmem [#allocation4], 4
    %1068 = vst.msk [vmem:[%s1067] sm:$0x3] %vm55, %v1048
    %s1069 = scalar_lea.vmem %s0, 4
    %v1070 = vld [vmem:[%s1069] sm:$0x3]
    %v1071 = vld [vmem:[%s4] sm:$0xff]
    %v1072 = vld [vmem:[%s4 + $0x8] sm:$0xff]
    %1073 = vrot.lane.b32.xlu0 %v802, 112
    %v1074 = vpop.permute.xlu0 %1073
    %v1075 = vsel %vm65, %v1074, 0
    %1077 = vmatpush.msra.mxu0 0.0
    %1078 = vmatpush.msra.mxu0 0.0
    %1079 = vmatpush.msra.mxu0 0.0
    %1080 = vmatpush.msra.mxu0 0.0
    %1081 = vmatpush.msra.mxu0 0.0
    %1082 = vmatpush.msra.mxu0 0.0
    %1083 = vmatpush.msra.mxu0 0.0
    %1084 = vmatpush.msra.mxu0 0.0
    %1085 = vmatpush.msra.mxu0 0.0
    %1086 = vmatpush.msra.mxu0 0.0
    %1087 = vmatpush.msra.mxu0 0.0
    %1088 = vmatpush.msra.mxu0 0.0
    %1089 = vmatpush.msra.mxu0 0.0
    %1090 = vmatpush.msra.mxu0 0.0
    %1091 = vmatpush.msra.mxu0 %v1072
    %1092 = vmatpush.msra.mxu0 %v1071
    %1093 = vmatmul.f32.gmra.mxu0 %v1075
    %v1094 = vpop.f32.mrf.mxu0
    %v1095 = vadd.f32 0.0, %v1094
    %1096 = vdwg.mxu0
    %v1097 = vadd.f32 %v1070, %v1095
    %v1098 = vxor.u32 %v1097, 2147483648
    %v1099 = vmul.f32 %v1098, 1.442695
    %v1100 = vpow.pop %v1099
    %v1101 = vadd.f32 %v1100, 1.0
    %v1102 = vrcp.pop %v1101
    %v1103 = vmul.f32 %v1101, %v1102
    %v1104 = vsub.f32 1.0, %v1103
    %v1105 = vmul.f32 %v1102, %v1104
    %v1106 = vadd.f32 %v1102, %v1105
    %vm1107 = vweird.f32 %v1101
    %vm1108 = vweird.f32 %v1102
    %vm1109 = vmor %vm1107, %vm1108
    %v1110 = vsel %vm1109, %v1102, %v1106
    %v1111 = vand.u32 2147483647, %v1101
    %vm1112 = vcmp.eq.f32.partialorder %v1111, 8.507059e+37
    %v1113 = vand.u32 %v1101, 2147483648
    %v1114 = vor.u32 1.1754944e-38, %v1113
    %v1115 = vsel %vm1112, %v1114, %v1110
    %v1116 = vmul.f32 1.0, %v1115
    %v1117 = vmul.f32 %v1116, 0.875
    %v1118 = vadd.f32 %v1117, 0.125
    %v1119 = vmul.f32 %v1116, %v802
    %v1120 = vld [vmem:[%s5] sm:$0xff]
    %v1121 = vld [vmem:[%s5 + $0x8] sm:$0xff]
    %1123 = vrot.lane.b32.xlu0 %v1119, 112
    %v1124 = vpop.permute.xlu0 %1123
    %v1125 = vsel %vm65, %v1124, 0
    %1127 = vmatpush.msra.mxu0 0.0
    %1128 = vmatpush.msra.mxu0 0.0
    %1129 = vmatpush.msra.mxu0 0.0
    %1130 = vmatpush.msra.mxu0 0.0
    %1131 = vmatpush.msra.mxu0 0.0
    %1132 = vmatpush.msra.mxu0 0.0
    %1133 = vmatpush.msra.mxu0 0.0
    %1134 = vmatpush.msra.mxu0 0.0
    %1135 = vmatpush.msra.mxu0 0.0
    %1136 = vmatpush.msra.mxu0 0.0
    %1137 = vmatpush.msra.mxu0 0.0
    %1138 = vmatpush.msra.mxu0 0.0
    %1139 = vmatpush.msra.mxu0 0.0
    %1140 = vmatpush.msra.mxu0 0.0
    %1141 = vmatpush.msra.mxu0 %v1121
    %1142 = vmatpush.msra.mxu0 %v1120
    %1143 = vmatmul.f32.gmra.mxu0 %v1125
    %v1144 = vpop.f32.mrf.mxu0
    %v1145 = vadd.f32 0.0, %v1144
    %1146 = vdwg.mxu0
    %1148 = vrot.lane.b32.xlu0 %v1145, 64
    %v1149 = vpop.permute.xlu0 %1148
    %v1151 = vadd.f32 %v1070, %v1149
    %v1152 = vtanh.pop %v1151
    %v1153 = vmul.f32 %v1118, 1024.0
    %v1154 = vcvt.f32.s32.to.zero.pseudo %v1153
    %v1155 = vshra.s32 %v783, 10
    %v1156 = vmul.u32 %v1155, 1024
    %v1157 = vsub.s32 %v783, %v1156
    %v1158 = vmul.u32 %v1157, %v1154
    %v1159 = vmul.u32 %v1155, %v1154
    %v1160 = vshra.s32 %v1158, 10
    %v1161 = vadd.s32 %v1159, %v1160
    %v1162 = vand.u32 %v1158, 1023
    %v1163 = vsub.f32 1.0, %v1118
    %1165 = vrot.lane.b32.xlu0 %v1152, 64
    %v1166 = vpop.permute.xlu0 %1165
    %v1168 = vmul.f32 %v1163, %v1166
    %v1169 = vmul.f32 %v1168, 8388608.0
    %v1170 = vcvt.f32.s32.to.zero.pseudo %v1169
    %v1171 = vadd.s32 %v1161, %v1170
    %v1172 = vcvt.s32.f32 %v1171
    %v1173 = vmul.f32 %v1172, 1.1920929e-07
    %v1174 = vld [vmem:[%s6] sm:$0xff]
    %v1175 = vld [vmem:[%s6 + $0x8] sm:$0xff]
    %v1177 = vsel %vm65, %v1173, 0
    %1179 = vmatpush.msra.mxu0 0.0
    %1180 = vmatpush.msra.mxu0 0.0
    %1181 = vmatpush.msra.mxu0 0.0
    %1182 = vmatpush.msra.mxu0 0.0
    %1183 = vmatpush.msra.mxu0 0.0
    %1184 = vmatpush.msra.mxu0 0.0
    %1185 = vmatpush.msra.mxu0 0.0
    %1186 = vmatpush.msra.mxu0 0.0
    %1187 = vmatpush.msra.mxu0 0.0
    %1188 = vmatpush.msra.mxu0 0.0
    %1189 = vmatpush.msra.mxu0 0.0
    %1190 = vmatpush.msra.mxu0 0.0
    %1191 = vmatpush.msra.mxu0 0.0
    %1192 = vmatpush.msra.mxu0 0.0
    %1193 = vmatpush.msra.mxu0 %v1175
    %1194 = vmatpush.msra.mxu0 %v1174
    %1195 = vmatmul.f32.gmra.mxu0 %v1177
    %v1196 = vpop.f32.mrf.mxu0
    %v1197 = vadd.f32 0.0, %v1196
    %1198 = vdwg.mxu0
    %1200 = vrot.lane.b32.xlu0 %v1197, 32
    %v1201 = vpop.permute.xlu0 %1200
    %v1203 = vadd.f32 %v1070, %v1201
    %v1204 = vxor.u32 %v1203, 2147483648
    %v1205 = vmul.f32 %v1204, 1.442695
    %v1206 = vpow.pop %v1205
    %v1207 = vadd.f32 %v1206, 1.0
    %v1208 = vrcp.pop %v1207
    %v1209 = vmul.f32 %v1207, %v1208
    %v1210 = vsub.f32 1.0, %v1209
    %v1211 = vmul.f32 %v1208, %v1210
    %v1212 = vadd.f32 %v1208, %v1211
    %vm1213 = vweird.f32 %v1207
    %vm1214 = vweird.f32 %v1208
    %vm1215 = vmor %vm1213, %vm1214
    %v1216 = vsel %vm1215, %v1208, %v1212
    %v1217 = vand.u32 2147483647, %v1207
    %vm1218 = vcmp.eq.f32.partialorder %v1217, 8.507059e+37
    %v1219 = vand.u32 %v1207, 2147483648
    %v1220 = vor.u32 1.1754944e-38, %v1219
    %v1221 = vsel %vm1218, %v1220, %v1216
    %v1222 = vmul.f32 1.0, %v1221
    %v1223 = vmul.f32 %v1222, 0.875
    %v1224 = vadd.f32 %v1223, 0.125
    %1225 = vrot.lane.b32.xlu0 %v1173, 48
    %v1226 = vpop.permute.xlu0 %1225
    %v1228 = vmul.f32 %v1222, %v1226
    %v1229 = vld [vmem:[%s7] sm:$0xff]
    %v1230 = vld [vmem:[%s7 + $0x8] sm:$0xff]
    %1232 = vrot.lane.b32.xlu0 %v1228, 80
    %v1233 = vpop.permute.xlu0 %1232
    %v1234 = vsel %vm65, %v1233, 0
    %1236 = vmatpush.msra.mxu0 0.0
    %1237 = vmatpush.msra.mxu0 0.0
    %1238 = vmatpush.msra.mxu0 0.0
    %1239 = vmatpush.msra.mxu0 0.0
    %1240 = vmatpush.msra.mxu0 0.0
    %1241 = vmatpush.msra.mxu0 0.0
    %1242 = vmatpush.msra.mxu0 0.0
    %1243 = vmatpush.msra.mxu0 0.0
    %1244 = vmatpush.msra.mxu0 0.0
    %1245 = vmatpush.msra.mxu0 0.0
    %1246 = vmatpush.msra.mxu0 0.0
    %1247 = vmatpush.msra.mxu0 0.0
    %1248 = vmatpush.msra.mxu0 0.0
    %1249 = vmatpush.msra.mxu0 0.0
    %1250 = vmatpush.msra.mxu0 %v1230
    %1251 = vmatpush.msra.mxu0 %v1229
    %1252 = vmatmul.f32.gmra.mxu0 %v1234
    %v1253 = vpop.f32.mrf.mxu0
    %v1254 = vadd.f32 0.0, %v1253
    %1255 = vdwg.mxu0
    %1257 = vrot.lane.b32.xlu0 %v1254, 80
    %v1258 = vpop.permute.xlu0 %1257
    %v1260 = vadd.f32 %v1070, %v1258
    %v1261 = vtanh.pop %v1260
    %v1262 = vmul.f32 %v1224, 1024.0
    %v1263 = vcvt.f32.s32.to.zero.pseudo %v1262
    %1264 = vrot.lane.b32.xlu0 %v1263, 112
    %v1265 = vpop.permute.xlu0 %1264
    %v1266 = vmul.u32 %v1157, %v1265
    %v1267 = vmul.u32 %v1155, %v1265
    %v1268 = vshra.s32 %v1266, 10
    %v1269 = vadd.s32 %v1267, %v1268
    %v1270 = vand.u32 %v1266, 1023
    %v1271 = vsub.f32 1.0, %v1224
    %1273 = vrot.lane.b32.xlu0 %v1261, 80
    %v1274 = vpop.permute.xlu0 %1273
    %v1276 = vmul.f32 %v1271, %v1274
    %v1277 = vmul.f32 %v1276, 8388608.0
    %v1278 = vcvt.f32.s32.to.zero.pseudo %v1277
    %1279 = vrot.lane.b32.xlu0 %v1278, 112
    %v1280 = vpop.permute.xlu0 %1279
    %v1281 = vadd.s32 %v1269, %v1280
    %v1282 = vsel %vm65, %v1171, %v1281
    %v1283 = vsel %vm65, %v1162, %v1270
    %s1284 = scalar_lea.vmem [#allocation6], 8
    %1285 = vst.msk [vmem:[%s1284] sm:$0x3] %vm55, %v1283
    %v1286 = vlog2.pop %v1118
    %v1287 = vmul.f32 %v1286, 0.6931472
    %v1288 = vmul.f32 %v1287, %v284
    %v1289 = vsub.f32 0.0, %v1288
    %v1290 = vadd.f32 %v1066, %v1289
    %v1291 = vlog2.pop %v1224
    %v1292 = vmul.f32 %v1291, 0.6931472
    %v1293 = vmul.f32 %v1292, %v284
    %v1294 = vsub.f32 0.0, %v1293
    %1296 = vrot.lane.b32.xlu0 %v1294, 96
    %v1297 = vpop.permute.xlu0 %1296
    %v1299 = vadd.f32 %v1290, %v1297
    %v1300 = vcvt.s32.f32 %v1282
    %v1301 = vmul.f32 %v1300, 1.1920929e-07
    %v1302 = vcvt.s32.f32 %v1048
    %v1303 = vmul.f32 %v1302, 1.1920929e-07
    %v1304 = vld [vmem:[%s2] sm:$0xff]
    %v1305 = vld [vmem:[%s2 + $0x8] sm:$0xff]
    %v1306 = vld [vmem:[%s2 + $0x10] sm:$0xff]
    %v1307 = vld [vmem:[%s2 + $0x18] sm:$0xff]
    %v1308 = vld [vmem:[%s3] sm:$0x1]
    %v1310 = vperm.slane %v1308, 0
    %v1313 = vsel %vm309, %v1301, 0
    %1315 = vmatpush.msra.mxu0 0.0
    %1316 = vmatpush.msra.mxu0 0.0
    %1317 = vmatpush.msra.mxu0 0.0
    %1318 = vmatpush.msra.mxu0 0.0
    %1319 = vmatpush.msra.mxu0 0.0
    %1320 = vmatpush.msra.mxu0 0.0
    %1321 = vmatpush.msra.mxu0 0.0
    %1322 = vmatpush.msra.mxu0 0.0
    %1323 = vmatpush.msra.mxu0 0.0
    %1324 = vmatpush.msra.mxu0 0.0
    %1325 = vmatpush.msra.mxu0 0.0
    %1326 = vmatpush.msra.mxu0 0.0
    %1327 = vmatpush.msra.mxu0 %v1307
    %1328 = vmatpush.msra.mxu0 %v1306
    %1329 = vmatpush.msra.mxu0 %v1305
    %1330 = vmatpush.msra.mxu0 %v1304
    %1331 = vmatmul.f32.gmra.mxu0 %v1313
    %v1332 = vpop.f32.mrf.mxu0
    %v1333 = vadd.f32 %v1310, %v1332
    %1334 = vdwg.mxu0
    %v1335 = vld [vmem:[%s333] sm:$0xff]
    %v1336 = vld [vmem:[%s333 + $0x8] sm:$0xff]
    %1338 = vrot.lane.b32.xlu0 %v1303, 112
    %v1339 = vpop.permute.xlu0 %1338
    %v1340 = vsel %vm65, %v1339, 0
    %1342 = vmatpush.msra.mxu0 0.0
    %1343 = vmatpush.msra.mxu0 0.0
    %1344 = vmatpush.msra.mxu0 0.0
    %1345 = vmatpush.msra.mxu0 0.0
    %1346 = vmatpush.msra.mxu0 0.0
    %1347 = vmatpush.msra.mxu0 0.0
    %1348 = vmatpush.msra.mxu0 0.0
    %1349 = vmatpush.msra.mxu0 0.0
    %1350 = vmatpush.msra.mxu0 0.0
    %1351 = vmatpush.msra.mxu0 0.0
    %1352 = vmatpush.msra.mxu0 0.0
    %1353 = vmatpush.msra.mxu0 0.0
    %1354 = vmatpush.msra.mxu0 0.0
    %1355 = vmatpush.msra.mxu0 0.0
    %1356 = vmatpush.msra.mxu0 %v1336
    %1357 = vmatpush.msra.mxu0 %v1335
    %1358 = vmatmul.f32.gmra.mxu0 %v1340
    %v1359 = vpop.f32.mrf.mxu0
    %v1360 = vadd.f32 0.0, %v1359
    %1361 = vdwg.mxu0
    %v1362 = vadd.f32 %v1333, %v1360
    %v1363 = vxor.u32 %v1362, 2147483648
    %v1364 = vmul.f32 %v1363, 1.442695
    %v1365 = vpow.pop %v1364
    %v1366 = vadd.f32 %v1365, 1.0
    %v1367 = vrcp.pop %v1366
    %v1368 = vmul.f32 %v1366, %v1367
    %v1369 = vsub.f32 1.0, %v1368
    %v1370 = vmul.f32 %v1367, %v1369
    %v1371 = vadd.f32 %v1367, %v1370
    %vm1372 = vweird.f32 %v1366
    %vm1373 = vweird.f32 %v1367
    %vm1374 = vmor %vm1372, %vm1373
    %v1375 = vsel %vm1374, %v1367, %v1371
    %v1376 = vand.u32 2147483647, %v1366
    %vm1377 = vcmp.eq.f32.partialorder %v1376, 8.507059e+37
    %v1378 = vand.u32 %v1366, 2147483648
    %v1379 = vor.u32 1.1754944e-38, %v1378
    %v1380 = vsel %vm1377, %v1379, %v1375
    %v1381 = vmul.f32 1.0, %v1380
    %v1382 = vmul.f32 %v1381, 0.875
    %v1383 = vadd.f32 %v1382, 0.125
    %v1384 = vmul.f32 %v1381, %v1303
    %v1385 = vld [vmem:[%s384] sm:$0xff]
    %v1386 = vld [vmem:[%s384 + $0x8] sm:$0xff]
    %1388 = vrot.lane.b32.xlu0 %v1384, 112
    %v1389 = vpop.permute.xlu0 %1388
    %v1390 = vsel %vm65, %v1389, 0
    %1392 = vmatpush.msra.mxu0 0.0
    %1393 = vmatpush.msra.mxu0 0.0
    %1394 = vmatpush.msra.mxu0 0.0
    %1395 = vmatpush.msra.mxu0 0.0
    %1396 = vmatpush.msra.mxu0 0.0
    %1397 = vmatpush.msra.mxu0 0.0
    %1398 = vmatpush.msra.mxu0 0.0
    %1399 = vmatpush.msra.mxu0 0.0
    %1400 = vmatpush.msra.mxu0 0.0
    %1401 = vmatpush.msra.mxu0 0.0
    %1402 = vmatpush.msra.mxu0 0.0
    %1403 = vmatpush.msra.mxu0 0.0
    %1404 = vmatpush.msra.mxu0 0.0
    %1405 = vmatpush.msra.mxu0 0.0
    %1406 = vmatpush.msra.mxu0 %v1386
    %1407 = vmatpush.msra.mxu0 %v1385
    %1408 = vmatmul.f32.gmra.mxu0 %v1390
    %v1409 = vpop.f32.mrf.mxu0
    %v1410 = vadd.f32 0.0, %v1409
    %1411 = vdwg.mxu0
    %1413 = vrot.lane.b32.xlu0 %v1410, 64
    %v1414 = vpop.permute.xlu0 %1413
    %v1416 = vadd.f32 %v1333, %v1414
    %v1417 = vtanh.pop %v1416
    %v1418 = vmul.f32 %v1383, 1024.0
    %v1419 = vcvt.f32.s32.to.zero.pseudo %v1418
    %v1420 = vshra.s32 %v1048, 10
    %v1421 = vmul.u32 %v1420, 1024
    %v1422 = vsub.s32 %v1048, %v1421
    %v1423 = vmul.u32 %v1422, %v1419
    %v1424 = vmul.u32 %v1420, %v1419
    %v1425 = vshra.s32 %v1423, 10
    %v1426 = vadd.s32 %v1424, %v1425
    %v1427 = vand.u32 %v1423, 1023
    %v1428 = vsub.f32 1.0, %v1383
    %1430 = vrot.lane.b32.xlu0 %v1417, 64
    %v1431 = vpop.permute.xlu0 %1430
    %v1433 = vmul.f32 %v1428, %v1431
    %v1434 = vmul.f32 %v1433, 8388608.0
    %v1435 = vcvt.f32.s32.to.zero.pseudo %v1434
    %v1436 = vadd.s32 %v1426, %v1435
    %v1437 = vcvt.s32.f32 %v1436
    %v1438 = vmul.f32 %v1437, 1.1920929e-07
    %v1439 = vld [vmem:[%s439] sm:$0xff]
    %v1440 = vld [vmem:[%s439 + $0x8] sm:$0xff]
    %v1442 = vsel %vm65, %v1438, 0
    %1444 = vmatpush.msra.mxu0 0.0
    %1445 = vmatpush.msra.mxu0 0.0
    %1446 = vmatpush.msra.mxu0 0.0
    %1447 = vmatpush.msra.mxu0 0.0
    %1448 = vmatpush.msra.mxu0 0.0
    %1449 = vmatpush.msra.mxu0 0.0
    %1450 = vmatpush.msra.mxu0 0.0
    %1451 = vmatpush.msra.mxu0 0.0
    %1452 = vmatpush.msra.mxu0 0.0
    %1453 = vmatpush.msra.mxu0 0.0
    %1454 = vmatpush.msra.mxu0 0.0
    %1455 = vmatpush.msra.mxu0 0.0
    %1456 = vmatpush.msra.mxu0 0.0
    %1457 = vmatpush.msra.mxu0 0.0
    %1458 = vmatpush.msra.mxu0 %v1440
    %1459 = vmatpush.msra.mxu0 %v1439
    %1460 = vmatmul.f32.gmra.mxu0 %v1442
    %v1461 = vpop.f32.mrf.mxu0
    %v1462 = vadd.f32 0.0, %v1461
    %1463 = vdwg.mxu0
    %1465 = vrot.lane.b32.xlu0 %v1462, 32
    %v1466 = vpop.permute.xlu0 %1465
    %v1468 = vadd.f32 %v1333, %v1466
    %v1469 = vxor.u32 %v1468, 2147483648
    %v1470 = vmul.f32 %v1469, 1.442695
    %v1471 = vpow.pop %v1470
    %v1472 = vadd.f32 %v1471, 1.0
    %v1473 = vrcp.pop %v1472
    %v1474 = vmul.f32 %v1472, %v1473
    %v1475 = vsub.f32 1.0, %v1474
    %v1476 = vmul.f32 %v1473, %v1475
    %v1477 = vadd.f32 %v1473, %v1476
    %vm1478 = vweird.f32 %v1472
    %vm1479 = vweird.f32 %v1473
    %vm1480 = vmor %vm1478, %vm1479
    %v1481 = vsel %vm1480, %v1473, %v1477
    %v1482 = vand.u32 2147483647, %v1472
    %vm1483 = vcmp.eq.f32.partialorder %v1482, 8.507059e+37
    %v1484 = vand.u32 %v1472, 2147483648
    %v1485 = vor.u32 1.1754944e-38, %v1484
    %v1486 = vsel %vm1483, %v1485, %v1481
    %v1487 = vmul.f32 1.0, %v1486
    %v1488 = vmul.f32 %v1487, 0.875
    %v1489 = vadd.f32 %v1488, 0.125
    %1490 = vrot.lane.b32.xlu0 %v1438, 48
    %v1491 = vpop.permute.xlu0 %1490
    %v1493 = vmul.f32 %v1487, %v1491
    %v1494 = vld [vmem:[%s495] sm:$0xff]
    %v1495 = vld [vmem:[%s495 + $0x8] sm:$0xff]
    %1497 = vrot.lane.b32.xlu0 %v1493, 80
    %v1498 = vpop.permute.xlu0 %1497
    %v1499 = vsel %vm65, %v1498, 0
    %1501 = vmatpush.msra.mxu0 0.0
    %1502 = vmatpush.msra.mxu0 0.0
    %1503 = vmatpush.msra.mxu0 0.0
    %1504 = vmatpush.msra.mxu0 0.0
    %1505 = vmatpush.msra.mxu0 0.0
    %1506 = vmatpush.msra.mxu0 0.0
    %1507 = vmatpush.msra.mxu0 0.0
    %1508 = vmatpush.msra.mxu0 0.0
    %1509 = vmatpush.msra.mxu0 0.0
    %1510 = vmatpush.msra.mxu0 0.0
    %1511 = vmatpush.msra.mxu0 0.0
    %1512 = vmatpush.msra.mxu0 0.0
    %1513 = vmatpush.msra.mxu0 0.0
    %1514 = vmatpush.msra.mxu0 0.0
    %1515 = vmatpush.msra.mxu0 %v1495
    %1516 = vmatpush.msra.mxu0 %v1494
    %1517 = vmatmul.f32.gmra.mxu0 %v1499
    %v1518 = vpop.f32.mrf.mxu0
    %v1519 = vadd.f32 0.0, %v1518
    %1520 = vdwg.mxu0
    %1522 = vrot.lane.b32.xlu0 %v1519, 80
    %v1523 = vpop.permute.xlu0 %1522
    %v1525 = vadd.f32 %v1333, %v1523
    %v1526 = vtanh.pop %v1525
    %v1527 = vmul.f32 %v1489, 1024.0
    %v1528 = vcvt.f32.s32.to.zero.pseudo %v1527
    %1529 = vrot.lane.b32.xlu0 %v1528, 112
    %v1530 = vpop.permute.xlu0 %1529
    %v1531 = vmul.u32 %v1422, %v1530
    %v1532 = vmul.u32 %v1420, %v1530
    %v1533 = vshra.s32 %v1531, 10
    %v1534 = vadd.s32 %v1532, %v1533
    %v1535 = vand.u32 %v1531, 1023
    %v1536 = vsub.f32 1.0, %v1489
    %1538 = vrot.lane.b32.xlu0 %v1526, 80
    %v1539 = vpop.permute.xlu0 %1538
    %v1541 = vmul.f32 %v1536, %v1539
    %v1542 = vmul.f32 %v1541, 8388608.0
    %v1543 = vcvt.f32.s32.to.zero.pseudo %v1542
    %1544 = vrot.lane.b32.xlu0 %v1543, 112
    %v1545 = vpop.permute.xlu0 %1544
    %v1546 = vadd.s32 %v1534, %v1545
    %v1547 = vsel %vm65, %v1436, %v1546
    %v1548 = vsel %vm65, %v1427, %v1535
    %s1549 = scalar_lea.vmem [#allocation6], 10
    %1550 = vst.msk [vmem:[%s1549] sm:$0x3] %vm55, %v1548
    %v1551 = vlog2.pop %v1383
    %v1552 = vmul.f32 %v1551, 0.6931472
    %v1553 = vmul.f32 %v1552, %v284
    %v1554 = vsub.f32 0.0, %v1553
    %v1555 = vmul.f32 %v1554, %v54
    %v1556 = vadd.f32 %v1299, %v1555
    %v1557 = vlog2.pop %v1489
    %v1558 = vmul.f32 %v1557, 0.6931472
    %v1559 = vmul.f32 %v1558, %v284
    %v1560 = vsub.f32 0.0, %v1559
    %1562 = vrot.lane.b32.xlu0 %v1560, 96
    %v1563 = vpop.permute.xlu0 %1562
    %v1565 = vadd.f32 %v1556, %v1563
    %s1566 = scalar_lea.vmem [#allocation4], 6
    %1567 = vst.msk [vmem:[%s1566] sm:$0x3] %vm55, %v1547
    %s1568 = scalar_lea.vmem %s0, 6
    %v1569 = vld [vmem:[%s1568] sm:$0x3]
    %v1570 = vld [vmem:[%s4] sm:$0xff]
    %v1571 = vld [vmem:[%s4 + $0x8] sm:$0xff]
    %1572 = vrot.lane.b32.xlu0 %v1301, 112
    %v1573 = vpop.permute.xlu0 %1572
    %v1574 = vsel %vm65, %v1573, 0
    %1576 = vmatpush.msra.mxu0 0.0
    %1577 = vmatpush.msra.mxu0 0.0
    %1578 = vmatpush.msra.mxu0 0.0
    %1579 = vmatpush.msra.mxu0 0.0
    %1580 = vmatpush.msra.mxu0 0.0
    %1581 = vmatpush.msra.mxu0 0.0
    %1582 = vmatpush.msra.mxu0 0.0
    %1583 = vmatpush.msra.mxu0 0.0
    %1584 = vmatpush.msra.mxu0 0.0
    %1585 = vmatpush.msra.mxu0 0.0
    %1586 = vmatpush.msra.mxu0 0.0
    %1587 = vmatpush.msra.mxu0 0.0
    %1588 = vmatpush.msra.mxu0 0.0
    %1589 = vmatpush.msra.mxu0 0.0
    %1590 = vmatpush.msra.mxu0 %v1571
    %1591 = vmatpush.msra.mxu0 %v1570
    %1592 = vmatmul.f32.gmra.mxu0 %v1574
    %v1593 = vpop.f32.mrf.mxu0
    %v1594 = vadd.f32 0.0, %v1593
    %1595 = vdwg.mxu0
    %v1596 = vadd.f32 %v1569, %v1594
    %v1597 = vxor.u32 %v1596, 2147483648
    %v1598 = vmul.f32 %v1597, 1.442695
    %v1599 = vpow.pop %v1598
    %v1600 = vadd.f32 %v1599, 1.0
    %v1601 = vrcp.pop %v1600
    %v1602 = vmul.f32 %v1600, %v1601
    %v1603 = vsub.f32 1.0, %v1602
    %v1604 = vmul.f32 %v1601, %v1603
    %v1605 = vadd.f32 %v1601, %v1604
    %vm1606 = vweird.f32 %v1600
    %vm1607 = vweird.f32 %v1601
    %vm1608 = vmor %vm1606, %vm1607
    %v1609 = vsel %vm1608, %v1601, %v1605
    %v1610 = vand.u32 2147483647, %v1600
    %vm1611 = vcmp.eq.f32.partialorder %v1610, 8.507059e+37
    %v1612 = vand.u32 %v1600, 2147483648
    %v1613 = vor.u32 1.1754944e-38, %v1612
    %v1614 = vsel %vm1611, %v1613, %v1609
    %v1615 = vmul.f32 1.0, %v1614
    %v1616 = vmul.f32 %v1615, 0.875
    %v1617 = vadd.f32 %v1616, 0.125
    %v1618 = vmul.f32 %v1615, %v1301
    %v1619 = vld [vmem:[%s5] sm:$0xff]
    %v1620 = vld [vmem:[%s5 + $0x8] sm:$0xff]
    %1622 = vrot.lane.b32.xlu0 %v1618, 112
    %v1623 = vpop.permute.xlu0 %1622
    %v1624 = vsel %vm65, %v1623, 0
    %1626 = vmatpush.msra.mxu0 0.0
    %1627 = vmatpush.msra.mxu0 0.0
    %1628 = vmatpush.msra.mxu0 0.0
    %1629 = vmatpush.msra.mxu0 0.0
    %1630 = vmatpush.msra.mxu0 0.0
    %1631 = vmatpush.msra.mxu0 0.0
    %1632 = vmatpush.msra.mxu0 0.0
    %1633 = vmatpush.msra.mxu0 0.0
    %1634 = vmatpush.msra.mxu0 0.0
    %1635 = vmatpush.msra.mxu0 0.0
    %1636 = vmatpush.msra.mxu0 0.0
    %1637 = vmatpush.msra.mxu0 0.0
    %1638 = vmatpush.msra.mxu0 0.0
    %1639 = vmatpush.msra.mxu0 0.0
    %1640 = vmatpush.msra.mxu0 %v1620
    %1641 = vmatpush.msra.mxu0 %v1619
    %1642 = vmatmul.f32.gmra.mxu0 %v1624
    %v1643 = vpop.f32.mrf.mxu0
    %v1644 = vadd.f32 0.0, %v1643
    %1645 = vdwg.mxu0
    %1647 = vrot.lane.b32.xlu0 %v1644, 64
    %v1648 = vpop.permute.xlu0 %1647
    %v1650 = vadd.f32 %v1569, %v1648
    %v1651 = vtanh.pop %v1650
    %v1652 = vmul.f32 %v1617, 1024.0
    %v1653 = vcvt.f32.s32.to.zero.pseudo %v1652
    %v1654 = vshra.s32 %v1282, 10
    %v1655 = vmul.u32 %v1654, 1024
    %v1656 = vsub.s32 %v1282, %v1655
    %v1657 = vmul.u32 %v1656, %v1653
    %v1658 = vmul.u32 %v1654, %v1653
    %v1659 = vshra.s32 %v1657, 10
    %v1660 = vadd.s32 %v1658, %v1659
    %v1661 = vand.u32 %v1657, 1023
    %v1662 = vsub.f32 1.0, %v1617
    %1664 = vrot.lane.b32.xlu0 %v1651, 64
    %v1665 = vpop.permute.xlu0 %1664
    %v1667 = vmul.f32 %v1662, %v1665
    %v1668 = vmul.f32 %v1667, 8388608.0
    %v1669 = vcvt.f32.s32.to.zero.pseudo %v1668
    %v1670 = vadd.s32 %v1660, %v1669
    %v1671 = vcvt.s32.f32 %v1670
    %v1672 = vmul.f32 %v1671, 1.1920929e-07
    %v1673 = vld [vmem:[%s6] sm:$0xff]
    %v1674 = vld [vmem:[%s6 + $0x8] sm:$0xff]
    %v1676 = vsel %vm65, %v1672, 0
    %1678 = vmatpush.msra.mxu0 0.0
    %1679 = vmatpush.msra.mxu0 0.0
    %1680 = vmatpush.msra.mxu0 0.0
    %1681 = vmatpush.msra.mxu0 0.0
    %1682 = vmatpush.msra.mxu0 0.0
    %1683 = vmatpush.msra.mxu0 0.0
    %1684 = vmatpush.msra.mxu0 0.0
    %1685 = vmatpush.msra.mxu0 0.0
    %1686 = vmatpush.msra.mxu0 0.0
    %1687 = vmatpush.msra.mxu0 0.0
    %1688 = vmatpush.msra.mxu0 0.0
    %1689 = vmatpush.msra.mxu0 0.0
    %1690 = vmatpush.msra.mxu0 0.0
    %1691 = vmatpush.msra.mxu0 0.0
    %1692 = vmatpush.msra.mxu0 %v1674
    %1693 = vmatpush.msra.mxu0 %v1673
    %1694 = vmatmul.f32.gmra.mxu0 %v1676
    %v1695 = vpop.f32.mrf.mxu0
    %v1696 = vadd.f32 0.0, %v1695
    %1697 = vdwg.mxu0
    %1699 = vrot.lane.b32.xlu0 %v1696, 32
    %v1700 = vpop.permute.xlu0 %1699
    %v1702 = vadd.f32 %v1569, %v1700
    %v1703 = vxor.u32 %v1702, 2147483648
    %v1704 = vmul.f32 %v1703, 1.442695
    %v1705 = vpow.pop %v1704
    %v1706 = vadd.f32 %v1705, 1.0
    %v1707 = vrcp.pop %v1706
    %v1708 = vmul.f32 %v1706, %v1707
    %v1709 = vsub.f32 1.0, %v1708
    %v1710 = vmul.f32 %v1707, %v1709
    %v1711 = vadd.f32 %v1707, %v1710
    %vm1712 = vweird.f32 %v1706
    %vm1713 = vweird.f32 %v1707
    %vm1714 = vmor %vm1712, %vm1713
    %v1715 = vsel %vm1714, %v1707, %v1711
    %v1716 = vand.u32 2147483647, %v1706
    %vm1717 = vcmp.eq.f32.partialorder %v1716, 8.507059e+37
    %v1718 = vand.u32 %v1706, 2147483648
    %v1719 = vor.u32 1.1754944e-38, %v1718
    %v1720 = vsel %vm1717, %v1719, %v1715
    %v1721 = vmul.f32 1.0, %v1720
    %v1722 = vmul.f32 %v1721, 0.875
    %v1723 = vadd.f32 %v1722, 0.125
    %1724 = vrot.lane.b32.xlu0 %v1672, 48
    %v1725 = vpop.permute.xlu0 %1724
    %v1727 = vmul.f32 %v1721, %v1725
    %v1728 = vld [vmem:[%s7] sm:$0xff]
    %v1729 = vld [vmem:[%s7 + $0x8] sm:$0xff]
    %1731 = vrot.lane.b32.xlu0 %v1727, 80
    %v1732 = vpop.permute.xlu0 %1731
    %v1733 = vsel %vm65, %v1732, 0
    %1735 = vmatpush.msra.mxu0 0.0
    %1736 = vmatpush.msra.mxu0 0.0
    %1737 = vmatpush.msra.mxu0 0.0
    %1738 = vmatpush.msra.mxu0 0.0
    %1739 = vmatpush.msra.mxu0 0.0
    %1740 = vmatpush.msra.mxu0 0.0
    %1741 = vmatpush.msra.mxu0 0.0
    %1742 = vmatpush.msra.mxu0 0.0
    %1743 = vmatpush.msra.mxu0 0.0
    %1744 = vmatpush.msra.mxu0 0.0
    %1745 = vmatpush.msra.mxu0 0.0
    %1746 = vmatpush.msra.mxu0 0.0
    %1747 = vmatpush.msra.mxu0 0.0
    %1748 = vmatpush.msra.mxu0 0.0
    %1749 = vmatpush.msra.mxu0 %v1729
    %1750 = vmatpush.msra.mxu0 %v1728
    %1751 = vmatmul.f32.gmra.mxu0 %v1733
    %v1752 = vpop.f32.mrf.mxu0
    %v1753 = vadd.f32 0.0, %v1752
    %1754 = vdwg.mxu0
    %1756 = vrot.lane.b32.xlu0 %v1753, 80
    %v1757 = vpop.permute.xlu0 %1756
    %v1759 = vadd.f32 %v1569, %v1757
    %v1760 = vtanh.pop %v1759
    %v1761 = vmul.f32 %v1723, 1024.0
    %v1762 = vcvt.f32.s32.to.zero.pseudo %v1761
    %1763 = vrot.lane.b32.xlu0 %v1762, 112
    %v1764 = vpop.permute.xlu0 %1763
    %v1765 = vmul.u32 %v1656, %v1764
    %v1766 = vmul.u32 %v1654, %v1764
    %v1767 = vshra.s32 %v1765, 10
    %v1768 = vadd.s32 %v1766, %v1767
    %v1769 = vand.u32 %v1765, 1023
    %v1770 = vsub.f32 1.0, %v1723
    %1772 = vrot.lane.b32.xlu0 %v1760, 80
    %v1773 = vpop.permute.xlu0 %1772
    %v1775 = vmul.f32 %v1770, %v1773
    %v1776 = vmul.f32 %v1775, 8388608.0
    %v1777 = vcvt.f32.s32.to.zero.pseudo %v1776
    %1778 = vrot.lane.b32.xlu0 %v1777, 112
    %v1779 = vpop.permute.xlu0 %1778
    %v1780 = vadd.s32 %v1768, %v1779
    %v1781 = vsel %vm65, %v1670, %v1780
    %v1782 = vsel %vm65, %v1661, %v1769
    %s1783 = scalar_lea.vmem [#allocation6], 12
    %1784 = vst.msk [vmem:[%s1783] sm:$0x3] %vm55, %v1782
    %v1785 = vlog2.pop %v1617
    %v1786 = vmul.f32 %v1785, 0.6931472
    %v1787 = vmul.f32 %v1786, %v284
    %v1788 = vsub.f32 0.0, %v1787
    %v1789 = vadd.f32 %v1565, %v1788
    %v1790 = vlog2.pop %v1723
    %v1791 = vmul.f32 %v1790, 0.6931472
    %v1792 = vmul.f32 %v1791, %v284
    %v1793 = vsub.f32 0.0, %v1792
    %1795 = vrot.lane.b32.xlu0 %v1793, 96
    %v1796 = vpop.permute.xlu0 %1795
    %v1798 = vadd.f32 %v1789, %v1796
    %v1799 = vcvt.s32.f32 %v1781
    %v1800 = vmul.f32 %v1799, 1.1920929e-07
    %v1801 = vcvt.s32.f32 %v1547
    %v1802 = vmul.f32 %v1801, 1.1920929e-07
    %v1803 = vld [vmem:[%s2] sm:$0xff]
    %v1804 = vld [vmem:[%s2 + $0x8] sm:$0xff]
    %v1805 = vld [vmem:[%s2 + $0x10] sm:$0xff]
    %v1806 = vld [vmem:[%s2 + $0x18] sm:$0xff]
    %v1807 = vld [vmem:[%s3] sm:$0x1]
    %v1809 = vperm.slane %v1807, 0
    %v1812 = vsel %vm309, %v1800, 0
    %1814 = vmatpush.msra.mxu0 0.0
    %1815 = vmatpush.msra.mxu0 0.0
    %1816 = vmatpush.msra.mxu0 0.0
    %1817 = vmatpush.msra.mxu0 0.0
    %1818 = vmatpush.msra.mxu0 0.0
    %1819 = vmatpush.msra.mxu0 0.0
    %1820 = vmatpush.msra.mxu0 0.0
    %1821 = vmatpush.msra.mxu0 0.0
    %1822 = vmatpush.msra.mxu0 0.0
    %1823 = vmatpush.msra.mxu0 0.0
    %1824 = vmatpush.msra.mxu0 0.0
    %1825 = vmatpush.msra.mxu0 0.0
    %1826 = vmatpush.msra.mxu0 %v1806
    %1827 = vmatpush.msra.mxu0 %v1805
    %1828 = vmatpush.msra.mxu0 %v1804
    %1829 = vmatpush.msra.mxu0 %v1803
    %1830 = vmatmul.f32.gmra.mxu0 %v1812
    %v1831 = vpop.f32.mrf.mxu0
    %v1832 = vadd.f32 %v1809, %v1831
    %1833 = vdwg.mxu0
    %v1834 = vld [vmem:[%s333] sm:$0xff]
    %v1835 = vld [vmem:[%s333 + $0x8] sm:$0xff]
    %1837 = vrot.lane.b32.xlu0 %v1802, 112
    %v1838 = vpop.permute.xlu0 %1837
    %v1839 = vsel %vm65, %v1838, 0
    %1841 = vmatpush.msra.mxu0 0.0
    %1842 = vmatpush.msra.mxu0 0.0
    %1843 = vmatpush.msra.mxu0 0.0
    %1844 = vmatpush.msra.mxu0 0.0
    %1845 = vmatpush.msra.mxu0 0.0
    %1846 = vmatpush.msra.mxu0 0.0
    %1847 = vmatpush.msra.mxu0 0.0
    %1848 = vmatpush.msra.mxu0 0.0
    %1849 = vmatpush.msra.mxu0 0.0
    %1850 = vmatpush.msra.mxu0 0.0
    %1851 = vmatpush.msra.mxu0 0.0
    %1852 = vmatpush.msra.mxu0 0.0
    %1853 = vmatpush.msra.mxu0 0.0
    %1854 = vmatpush.msra.mxu0 0.0
    %1855 = vmatpush.msra.mxu0 %v1835
    %1856 = vmatpush.msra.mxu0 %v1834
    %1857 = vmatmul.f32.gmra.mxu0 %v1839
    %v1858 = vpop.f32.mrf.mxu0
    %v1859 = vadd.f32 0.0, %v1858
    %1860 = vdwg.mxu0
    %v1861 = vadd.f32 %v1832, %v1859
    %v1862 = vxor.u32 %v1861, 2147483648
    %v1863 = vmul.f32 %v1862, 1.442695
    %v1864 = vpow.pop %v1863
    %v1865 = vadd.f32 %v1864, 1.0
    %v1866 = vrcp.pop %v1865
    %v1867 = vmul.f32 %v1865, %v1866
    %v1868 = vsub.f32 1.0, %v1867
    %v1869 = vmul.f32 %v1866, %v1868
    %v1870 = vadd.f32 %v1866, %v1869
    %vm1871 = vweird.f32 %v1865
    %vm1872 = vweird.f32 %v1866
    %vm1873 = vmor %vm1871, %vm1872
    %v1874 = vsel %vm1873, %v1866, %v1870
    %v1875 = vand.u32 2147483647, %v1865
    %vm1876 = vcmp.eq.f32.partialorder %v1875, 8.507059e+37
    %v1877 = vand.u32 %v1865, 2147483648
    %v1878 = vor.u32 1.1754944e-38, %v1877
    %v1879 = vsel %vm1876, %v1878, %v1874
    %v1880 = vmul.f32 1.0, %v1879
    %v1881 = vmul.f32 %v1880, 0.875
    %v1882 = vadd.f32 %v1881, 0.125
    %v1883 = vmul.f32 %v1880, %v1802
    %v1884 = vld [vmem:[%s384] sm:$0xff]
    %v1885 = vld [vmem:[%s384 + $0x8] sm:$0xff]
    %1887 = vrot.lane.b32.xlu0 %v1883, 112
    %v1888 = vpop.permute.xlu0 %1887
    %v1889 = vsel %vm65, %v1888, 0
    %1891 = vmatpush.msra.mxu0 0.0
    %1892 = vmatpush.msra.mxu0 0.0
    %1893 = vmatpush.msra.mxu0 0.0
    %1894 = vmatpush.msra.mxu0 0.0
    %1895 = vmatpush.msra.mxu0 0.0
    %1896 = vmatpush.msra.mxu0 0.0
    %1897 = vmatpush.msra.mxu0 0.0
    %1898 = vmatpush.msra.mxu0 0.0
    %1899 = vmatpush.msra.mxu0 0.0
    %1900 = vmatpush.msra.mxu0 0.0
    %1901 = vmatpush.msra.mxu0 0.0
    %1902 = vmatpush.msra.mxu0 0.0
    %1903 = vmatpush.msra.mxu0 0.0
    %1904 = vmatpush.msra.mxu0 0.0
    %1905 = vmatpush.msra.mxu0 %v1885
    %1906 = vmatpush.msra.mxu0 %v1884
    %1907 = vmatmul.f32.gmra.mxu0 %v1889
    %v1908 = vpop.f32.mrf.mxu0
    %v1909 = vadd.f32 0.0, %v1908
    %1910 = vdwg.mxu0
    %1912 = vrot.lane.b32.xlu0 %v1909, 64
    %v1913 = vpop.permute.xlu0 %1912
    %v1915 = vadd.f32 %v1832, %v1913
    %v1916 = vtanh.pop %v1915
    %v1917 = vmul.f32 %v1882, 1024.0
    %v1918 = vcvt.f32.s32.to.zero.pseudo %v1917
    %v1919 = vshra.s32 %v1547, 10
    %v1920 = vmul.u32 %v1919, 1024
    %v1921 = vsub.s32 %v1547, %v1920
    %v1922 = vmul.u32 %v1921, %v1918
    %v1923 = vmul.u32 %v1919, %v1918
    %v1924 = vshra.s32 %v1922, 10
    %v1925 = vadd.s32 %v1923, %v1924
    %v1926 = vand.u32 %v1922, 1023
    %v1927 = vsub.f32 1.0, %v1882
    %1929 = vrot.lane.b32.xlu0 %v1916, 64
    %v1930 = vpop.permute.xlu0 %1929
    %v1932 = vmul.f32 %v1927, %v1930
    %v1933 = vmul.f32 %v1932, 8388608.0
    %v1934 = vcvt.f32.s32.to.zero.pseudo %v1933
    %v1935 = vadd.s32 %v1925, %v1934
    %v1936 = vcvt.s32.f32 %v1935
    %v1937 = vmul.f32 %v1936, 1.1920929e-07
    %v1938 = vld [vmem:[%s439] sm:$0xff]
    %v1939 = vld [vmem:[%s439 + $0x8] sm:$0xff]
    %v1941 = vsel %vm65, %v1937, 0
    %1943 = vmatpush.msra.mxu0 0.0
    %1944 = vmatpush.msra.mxu0 0.0
    %1945 = vmatpush.msra.mxu0 0.0
    %1946 = vmatpush.msra.mxu0 0.0
    %1947 = vmatpush.msra.mxu0 0.0
    %1948 = vmatpush.msra.mxu0 0.0
    %1949 = vmatpush.msra.mxu0 0.0
    %1950 = vmatpush.msra.mxu0 0.0
    %1951 = vmatpush.msra.mxu0 0.0
    %1952 = vmatpush.msra.mxu0 0.0
    %1953 = vmatpush.msra.mxu0 0.0
    %1954 = vmatpush.msra.mxu0 0.0
    %1955 = vmatpush.msra.mxu0 0.0
    %1956 = vmatpush.msra.mxu0 0.0
    %1957 = vmatpush.msra.mxu0 %v1939
    %1958 = vmatpush.msra.mxu0 %v1938
    %1959 = vmatmul.f32.gmra.mxu0 %v1941
    %v1960 = vpop.f32.mrf.mxu0
    %v1961 = vadd.f32 0.0, %v1960
    %1962 = vdwg.mxu0
    %1964 = vrot.lane.b32.xlu0 %v1961, 32
    %v1965 = vpop.permute.xlu0 %1964
    %v1967 = vadd.f32 %v1832, %v1965
    %v1968 = vxor.u32 %v1967, 2147483648
    %v1969 = vmul.f32 %v1968, 1.442695
    %v1970 = vpow.pop %v1969
    %v1971 = vadd.f32 %v1970, 1.0
    %v1972 = vrcp.pop %v1971
    %v1973 = vmul.f32 %v1971, %v1972
    %v1974 = vsub.f32 1.0, %v1973
    %v1975 = vmul.f32 %v1972, %v1974
    %v1976 = vadd.f32 %v1972, %v1975
    %vm1977 = vweird.f32 %v1971
    %vm1978 = vweird.f32 %v1972
    %vm1979 = vmor %vm1977, %vm1978
    %v1980 = vsel %vm1979, %v1972, %v1976
    %v1981 = vand.u32 2147483647, %v1971
    %vm1982 = vcmp.eq.f32.partialorder %v1981, 8.507059e+37
    %v1983 = vand.u32 %v1971, 2147483648
    %v1984 = vor.u32 1.1754944e-38, %v1983
    %v1985 = vsel %vm1982, %v1984, %v1980
    %v1986 = vmul.f32 1.0, %v1985
    %v1987 = vmul.f32 %v1986, 0.875
    %v1988 = vadd.f32 %v1987, 0.125
    %1989 = vrot.lane.b32.xlu0 %v1937, 48
    %v1990 = vpop.permute.xlu0 %1989
    %v1992 = vmul.f32 %v1986, %v1990
    %v1993 = vld [vmem:[%s495] sm:$0xff]
    %v1994 = vld [vmem:[%s495 + $0x8] sm:$0xff]
    %1996 = vrot.lane.b32.xlu0 %v1992, 80
    %v1997 = vpop.permute.xlu0 %1996
    %v1998 = vsel %vm65, %v1997, 0
    %2000 = vmatpush.msra.mxu0 0.0
    %2001 = vmatpush.msra.mxu0 0.0
    %2002 = vmatpush.msra.mxu0 0.0
    %2003 = vmatpush.msra.mxu0 0.0
    %2004 = vmatpush.msra.mxu0 0.0
    %2005 = vmatpush.msra.mxu0 0.0
    %2006 = vmatpush.msra.mxu0 0.0
    %2007 = vmatpush.msra.mxu0 0.0
    %2008 = vmatpush.msra.mxu0 0.0
    %2009 = vmatpush.msra.mxu0 0.0
    %2010 = vmatpush.msra.mxu0 0.0
    %2011 = vmatpush.msra.mxu0 0.0
    %2012 = vmatpush.msra.mxu0 0.0
    %2013 = vmatpush.msra.mxu0 0.0
    %2014 = vmatpush.msra.mxu0 %v1994
    %2015 = vmatpush.msra.mxu0 %v1993
    %2016 = vmatmul.f32.gmra.mxu0 %v1998
    %v2017 = vpop.f32.mrf.mxu0
    %v2018 = vadd.f32 0.0, %v2017
    %2019 = vdwg.mxu0
    %2021 = vrot.lane.b32.xlu0 %v2018, 80
    %v2022 = vpop.permute.xlu0 %2021
    %v2024 = vadd.f32 %v1832, %v2022
    %v2025 = vtanh.pop %v2024
    %v2026 = vmul.f32 %v1988, 1024.0
    %v2027 = vcvt.f32.s32.to.zero.pseudo %v2026
    %2028 = vrot.lane.b32.xlu0 %v2027, 112
    %v2029 = vpop.permute.xlu0 %2028
    %v2030 = vmul.u32 %v1921, %v2029
    %v2031 = vmul.u32 %v1919, %v2029
    %v2032 = vshra.s32 %v2030, 10
    %v2033 = vadd.s32 %v2031, %v2032
    %v2034 = vand.u32 %v2030, 1023
    %v2035 = vsub.f32 1.0, %v1988
    %2037 = vrot.lane.b32.xlu0 %v2025, 80
    %v2038 = vpop.permute.xlu0 %2037
    %v2040 = vmul.f32 %v2035, %v2038
    %v2041 = vmul.f32 %v2040, 8388608.0
    %v2042 = vcvt.f32.s32.to.zero.pseudo %v2041
    %2043 = vrot.lane.b32.xlu0 %v2042, 112
    %v2044 = vpop.permute.xlu0 %2043
    %v2045 = vadd.s32 %v2033, %v2044
    %v2046 = vsel %vm65, %v1935, %v2045
    %v2047 = vsel %vm65, %v1926, %v2034
    %s2048 = scalar_lea.vmem [#allocation6], 14
    %2049 = vst.msk [vmem:[%s2048] sm:$0x3] %vm55, %v2047
    %v2050 = vlog2.pop %v1882
    %v2051 = vmul.f32 %v2050, 0.6931472
    %v2052 = vmul.f32 %v2051, %v284
    %v2053 = vsub.f32 0.0, %v2052
    %v2054 = vmul.f32 %v2053, %v54
    %v2055 = vadd.f32 %v1798, %v2054
    %v2056 = vlog2.pop %v1988
    %v2057 = vmul.f32 %v2056, 0.6931472
    %v2058 = vmul.f32 %v2057, %v284
    %v2059 = vsub.f32 0.0, %v2058
    %2061 = vrot.lane.b32.xlu0 %v2059, 96
    %v2062 = vpop.permute.xlu0 %2061
    %v2064 = vadd.f32 %v2055, %v2062
    %s2065 = scalar_lea.vmem [#allocation4], 8
    %2066 = vst.msk [vmem:[%s2065] sm:$0x3] %vm55, %v2046
    %s2067 = scalar_lea.vmem %s0, 8
    %v2068 = vld [vmem:[%s2067] sm:$0x3]
    %v2069 = vld [vmem:[%s4] sm:$0xff]
    %v2070 = vld [vmem:[%s4 + $0x8] sm:$0xff]
    %2071 = vrot.lane.b32.xlu0 %v1800, 112
    %v2072 = vpop.permute.xlu0 %2071
    %v2073 = vsel %vm65, %v2072, 0
    %2075 = vmatpush.msra.mxu0 0.0
    %2076 = vmatpush.msra.mxu0 0.0
    %2077 = vmatpush.msra.mxu0 0.0
    %2078 = vmatpush.msra.mxu0 0.0
    %2079 = vmatpush.msra.mxu0 0.0
    %2080 = vmatpush.msra.mxu0 0.0
    %2081 = vmatpush.msra.mxu0 0.0
    %2082 = vmatpush.msra.mxu0 0.0
    %2083 = vmatpush.msra.mxu0 0.0
    %2084 = vmatpush.msra.mxu0 0.0
    %2085 = vmatpush.msra.mxu0 0.0
    %2086 = vmatpush.msra.mxu0 0.0
    %2087 = vmatpush.msra.mxu0 0.0
    %2088 = vmatpush.msra.mxu0 0.0
    %2089 = vmatpush.msra.mxu0 %v2070
    %2090 = vmatpush.msra.mxu0 %v2069
    %2091 = vmatmul.f32.gmra.mxu0 %v2073
    %v2092 = vpop.f32.mrf.mxu0
    %v2093 = vadd.f32 0.0, %v2092
    %2094 = vdwg.mxu0
    %v2095 = vadd.f32 %v2068, %v2093
    %v2096 = vxor.u32 %v2095, 2147483648
    %v2097 = vmul.f32 %v2096, 1.442695
    %v2098 = vpow.pop %v2097
    %v2099 = vadd.f32 %v2098, 1.0
    %v2100 = vrcp.pop %v2099
    %v2101 = vmul.f32 %v2099, %v2100
    %v2102 = vsub.f32 1.0, %v2101
    %v2103 = vmul.f32 %v2100, %v2102
    %v2104 = vadd.f32 %v2100, %v2103
    %vm2105 = vweird.f32 %v2099
    %vm2106 = vweird.f32 %v2100
    %vm2107 = vmor %vm2105, %vm2106
    %v2108 = vsel %vm2107, %v2100, %v2104
    %v2109 = vand.u32 2147483647, %v2099
    %vm2110 = vcmp.eq.f32.partialorder %v2109, 8.507059e+37
    %v2111 = vand.u32 %v2099, 2147483648
    %v2112 = vor.u32 1.1754944e-38, %v2111
    %v2113 = vsel %vm2110, %v2112, %v2108
    %v2114 = vmul.f32 1.0, %v2113
    %v2115 = vmul.f32 %v2114, 0.875
    %v2116 = vadd.f32 %v2115, 0.125
    %v2117 = vmul.f32 %v2114, %v1800
    %v2118 = vld [vmem:[%s5] sm:$0xff]
    %v2119 = vld [vmem:[%s5 + $0x8] sm:$0xff]
    %2121 = vrot.lane.b32.xlu0 %v2117, 112
    %v2122 = vpop.permute.xlu0 %2121
    %v2123 = vsel %vm65, %v2122, 0
    %2125 = vmatpush.msra.mxu0 0.0
    %2126 = vmatpush.msra.mxu0 0.0
    %2127 = vmatpush.msra.mxu0 0.0
    %2128 = vmatpush.msra.mxu0 0.0
    %2129 = vmatpush.msra.mxu0 0.0
    %2130 = vmatpush.msra.mxu0 0.0
    %2131 = vmatpush.msra.mxu0 0.0
    %2132 = vmatpush.msra.mxu0 0.0
    %2133 = vmatpush.msra.mxu0 0.0
    %2134 = vmatpush.msra.mxu0 0.0
    %2135 = vmatpush.msra.mxu0 0.0
    %2136 = vmatpush.msra.mxu0 0.0
    %2137 = vmatpush.msra.mxu0 0.0
    %2138 = vmatpush.msra.mxu0 0.0
    %2139 = vmatpush.msra.mxu0 %v2119
    %2140 = vmatpush.msra.mxu0 %v2118
    %2141 = vmatmul.f32.gmra.mxu0 %v2123
    %v2142 = vpop.f32.mrf.mxu0
    %v2143 = vadd.f32 0.0, %v2142
    %2144 = vdwg.mxu0
    %2146 = vrot.lane.b32.xlu0 %v2143, 64
    %v2147 = vpop.permute.xlu0 %2146
    %v2149 = vadd.f32 %v2068, %v2147
    %v2150 = vtanh.pop %v2149
    %v2151 = vmul.f32 %v2116, 1024.0
    %v2152 = vcvt.f32.s32.to.zero.pseudo %v2151
    %v2153 = vshra.s32 %v1781, 10
    %v2154 = vmul.u32 %v2153, 1024
    %v2155 = vsub.s32 %v1781, %v2154
    %v2156 = vmul.u32 %v2155, %v2152
    %v2157 = vmul.u32 %v2153, %v2152
    %v2158 = vshra.s32 %v2156, 10
    %v2159 = vadd.s32 %v2157, %v2158
    %v2160 = vand.u32 %v2156, 1023
    %v2161 = vsub.f32 1.0, %v2116
    %2163 = vrot.lane.b32.xlu0 %v2150, 64
    %v2164 = vpop.permute.xlu0 %2163
    %v2166 = vmul.f32 %v2161, %v2164
    %v2167 = vmul.f32 %v2166, 8388608.0
    %v2168 = vcvt.f32.s32.to.zero.pseudo %v2167
    %v2169 = vadd.s32 %v2159, %v2168
    %v2170 = vcvt.s32.f32 %v2169
    %v2171 = vmul.f32 %v2170, 1.1920929e-07
    %v2172 = vld [vmem:[%s6] sm:$0xff]
    %v2173 = vld [vmem:[%s6 + $0x8] sm:$0xff]
    %v2175 = vsel %vm65, %v2171, 0
    %2177 = vmatpush.msra.mxu0 0.0
    %2178 = vmatpush.msra.mxu0 0.0
    %2179 = vmatpush.msra.mxu0 0.0
    %2180 = vmatpush.msra.mxu0 0.0
    %2181 = vmatpush.msra.mxu0 0.0
    %2182 = vmatpush.msra.mxu0 0.0
    %2183 = vmatpush.msra.mxu0 0.0
    %2184 = vmatpush.msra.mxu0 0.0
    %2185 = vmatpush.msra.mxu0 0.0
    %2186 = vmatpush.msra.mxu0 0.0
    %2187 = vmatpush.msra.mxu0 0.0
    %2188 = vmatpush.msra.mxu0 0.0
    %2189 = vmatpush.msra.mxu0 0.0
    %2190 = vmatpush.msra.mxu0 0.0
    %2191 = vmatpush.msra.mxu0 %v2173
    %2192 = vmatpush.msra.mxu0 %v2172
    %2193 = vmatmul.f32.gmra.mxu0 %v2175
    %v2194 = vpop.f32.mrf.mxu0
    %v2195 = vadd.f32 0.0, %v2194
    %2196 = vdwg.mxu0
    %2198 = vrot.lane.b32.xlu0 %v2195, 32
    %v2199 = vpop.permute.xlu0 %2198
    %v2201 = vadd.f32 %v2068, %v2199
    %v2202 = vxor.u32 %v2201, 2147483648
    %v2203 = vmul.f32 %v2202, 1.442695
    %v2204 = vpow.pop %v2203
    %v2205 = vadd.f32 %v2204, 1.0
    %v2206 = vrcp.pop %v2205
    %v2207 = vmul.f32 %v2205, %v2206
    %v2208 = vsub.f32 1.0, %v2207
    %v2209 = vmul.f32 %v2206, %v2208
    %v2210 = vadd.f32 %v2206, %v2209
    %vm2211 = vweird.f32 %v2205
    %vm2212 = vweird.f32 %v2206
    %vm2213 = vmor %vm2211, %vm2212
    %v2214 = vsel %vm2213, %v2206, %v2210
    %v2215 = vand.u32 2147483647, %v2205
    %vm2216 = vcmp.eq.f32.partialorder %v2215, 8.507059e+37
    %v2217 = vand.u32 %v2205, 2147483648
    %v2218 = vor.u32 1.1754944e-38, %v2217
    %v2219 = vsel %vm2216, %v2218, %v2214
    %v2220 = vmul.f32 1.0, %v2219
    %v2221 = vmul.f32 %v2220, 0.875
    %v2222 = vadd.f32 %v2221, 0.125
    %2223 = vrot.lane.b32.xlu0 %v2171, 48
    %v2224 = vpop.permute.xlu0 %2223
    %v2226 = vmul.f32 %v2220, %v2224
    %v2227 = vld [vmem:[%s7] sm:$0xff]
    %v2228 = vld [vmem:[%s7 + $0x8] sm:$0xff]
    %2230 = vrot.lane.b32.xlu0 %v2226, 80
    %v2231 = vpop.permute.xlu0 %2230
    %v2232 = vsel %vm65, %v2231, 0
    %2234 = vmatpush.msra.mxu0 0.0
    %2235 = vmatpush.msra.mxu0 0.0
    %2236 = vmatpush.msra.mxu0 0.0
    %2237 = vmatpush.msra.mxu0 0.0
    %2238 = vmatpush.msra.mxu0 0.0
    %2239 = vmatpush.msra.mxu0 0.0
    %2240 = vmatpush.msra.mxu0 0.0
    %2241 = vmatpush.msra.mxu0 0.0
    %2242 = vmatpush.msra.mxu0 0.0
    %2243 = vmatpush.msra.mxu0 0.0
    %2244 = vmatpush.msra.mxu0 0.0
    %2245 = vmatpush.msra.mxu0 0.0
    %2246 = vmatpush.msra.mxu0 0.0
    %2247 = vmatpush.msra.mxu0 0.0
    %2248 = vmatpush.msra.mxu0 %v2228
    %2249 = vmatpush.msra.mxu0 %v2227
    %2250 = vmatmul.f32.gmra.mxu0 %v2232
    %v2251 = vpop.f32.mrf.mxu0
    %v2252 = vadd.f32 0.0, %v2251
    %2253 = vdwg.mxu0
    %2255 = vrot.lane.b32.xlu0 %v2252, 80
    %v2256 = vpop.permute.xlu0 %2255
    %v2258 = vadd.f32 %v2068, %v2256
    %v2259 = vtanh.pop %v2258
    %v2260 = vmul.f32 %v2222, 1024.0
    %v2261 = vcvt.f32.s32.to.zero.pseudo %v2260
    %2262 = vrot.lane.b32.xlu0 %v2261, 112
    %v2263 = vpop.permute.xlu0 %2262
    %v2264 = vmul.u32 %v2155, %v2263
    %v2265 = vmul.u32 %v2153, %v2263
    %v2266 = vshra.s32 %v2264, 10
    %v2267 = vadd.s32 %v2265, %v2266
    %v2268 = vand.u32 %v2264, 1023
    %v2269 = vsub.f32 1.0, %v2222
    %2271 = vrot.lane.b32.xlu0 %v2259, 80
    %v2272 = vpop.permute.xlu0 %2271
    %v2274 = vmul.f32 %v2269, %v2272
    %v2275 = vmul.f32 %v2274, 8388608.0
    %v2276 = vcvt.f32.s32.to.zero.pseudo %v2275
    %2277 = vrot.lane.b32.xlu0 %v2276, 112
    %v2278 = vpop.permute.xlu0 %2277
    %v2279 = vadd.s32 %v2267, %v2278
    %v2280 = vsel %vm65, %v2169, %v2279
    %v2281 = vsel %vm65, %v2160, %v2268
    %s2282 = scalar_lea.vmem [#allocation6], 16
    %2283 = vst.msk [vmem:[%s2282] sm:$0x3] %vm55, %v2281
    %v2284 = vlog2.pop %v2116
    %v2285 = vmul.f32 %v2284, 0.6931472
    %v2286 = vmul.f32 %v2285, %v284
    %v2287 = vsub.f32 0.0, %v2286
    %v2288 = vadd.f32 %v2064, %v2287
    %v2289 = vlog2.pop %v2222
    %v2290 = vmul.f32 %v2289, 0.6931472
    %v2291 = vmul.f32 %v2290, %v284
    %v2292 = vsub.f32 0.0, %v2291
    %2294 = vrot.lane.b32.xlu0 %v2292, 96
    %v2295 = vpop.permute.xlu0 %2294
    %v2297 = vadd.f32 %v2288, %v2295
    %v2298 = vcvt.s32.f32 %v2280
    %v2299 = vmul.f32 %v2298, 1.1920929e-07
    %v2300 = vcvt.s32.f32 %v2046
    %v2301 = vmul.f32 %v2300, 1.1920929e-07
    %v2302 = vld [vmem:[%s2] sm:$0xff]
    %v2303 = vld [vmem:[%s2 + $0x8] sm:$0xff]
    %v2304 = vld [vmem:[%s2 + $0x10] sm:$0xff]
    %v2305 = vld [vmem:[%s2 + $0x18] sm:$0xff]
    %v2306 = vld [vmem:[%s3] sm:$0x1]
    %v2308 = vperm.slane %v2306, 0
    %v2311 = vsel %vm309, %v2299, 0
    %2313 = vmatpush.msra.mxu0 0.0
    %2314 = vmatpush.msra.mxu0 0.0
    %2315 = vmatpush.msra.mxu0 0.0
    %2316 = vmatpush.msra.mxu0 0.0
    %2317 = vmatpush.msra.mxu0 0.0
    %2318 = vmatpush.msra.mxu0 0.0
    %2319 = vmatpush.msra.mxu0 0.0
    %2320 = vmatpush.msra.mxu0 0.0
    %2321 = vmatpush.msra.mxu0 0.0
    %2322 = vmatpush.msra.mxu0 0.0
    %2323 = vmatpush.msra.mxu0 0.0
    %2324 = vmatpush.msra.mxu0 0.0
    %2325 = vmatpush.msra.mxu0 %v2305
    %2326 = vmatpush.msra.mxu0 %v2304
    %2327 = vmatpush.msra.mxu0 %v2303
    %2328 = vmatpush.msra.mxu0 %v2302
    %2329 = vmatmul.f32.gmra.mxu0 %v2311
    %v2330 = vpop.f32.mrf.mxu0
    %v2331 = vadd.f32 %v2308, %v2330
    %2332 = vdwg.mxu0
    %v2333 = vld [vmem:[%s333] sm:$0xff]
    %v2334 = vld [vmem:[%s333 + $0x8] sm:$0xff]
    %2336 = vrot.lane.b32.xlu0 %v2301, 112
    %v2337 = vpop.permute.xlu0 %2336
    %v2338 = vsel %vm65, %v2337, 0
    %2340 = vmatpush.msra.mxu0 0.0
    %2341 = vmatpush.msra.mxu0 0.0
    %2342 = vmatpush.msra.mxu0 0.0
    %2343 = vmatpush.msra.mxu0 0.0
    %2344 = vmatpush.msra.mxu0 0.0
    %2345 = vmatpush.msra.mxu0 0.0
    %2346 = vmatpush.msra.mxu0 0.0
    %2347 = vmatpush.msra.mxu0 0.0
    %2348 = vmatpush.msra.mxu0 0.0
    %2349 = vmatpush.msra.mxu0 0.0
    %2350 = vmatpush.msra.mxu0 0.0
    %2351 = vmatpush.msra.mxu0 0.0
    %2352 = vmatpush.msra.mxu0 0.0
    %2353 = vmatpush.msra.mxu0 0.0
    %2354 = vmatpush.msra.mxu0 %v2334
    %2355 = vmatpush.msra.mxu0 %v2333
    %2356 = vmatmul.f32.gmra.mxu0 %v2338
    %v2357 = vpop.f32.mrf.mxu0
    %v2358 = vadd.f32 0.0, %v2357
    %2359 = vdwg.mxu0
    %v2360 = vadd.f32 %v2331, %v2358
    %v2361 = vxor.u32 %v2360, 2147483648
    %v2362 = vmul.f32 %v2361, 1.442695
    %v2363 = vpow.pop %v2362
    %v2364 = vadd.f32 %v2363, 1.0
    %v2365 = vrcp.pop %v2364
    %v2366 = vmul.f32 %v2364, %v2365
    %v2367 = vsub.f32 1.0, %v2366
    %v2368 = vmul.f32 %v2365, %v2367
    %v2369 = vadd.f32 %v2365, %v2368
    %vm2370 = vweird.f32 %v2364
    %vm2371 = vweird.f32 %v2365
    %vm2372 = vmor %vm2370, %vm2371
    %v2373 = vsel %vm2372, %v2365, %v2369
    %v2374 = vand.u32 2147483647, %v2364
    %vm2375 = vcmp.eq.f32.partialorder %v2374, 8.507059e+37
    %v2376 = vand.u32 %v2364, 2147483648
    %v2377 = vor.u32 1.1754944e-38, %v2376
    %v2378 = vsel %vm2375, %v2377, %v2373
    %v2379 = vmul.f32 1.0, %v2378
    %v2380 = vmul.f32 %v2379, 0.875
    %v2381 = vadd.f32 %v2380, 0.125
    %v2382 = vmul.f32 %v2379, %v2301
    %v2383 = vld [vmem:[%s384] sm:$0xff]
    %v2384 = vld [vmem:[%s384 + $0x8] sm:$0xff]
    %2386 = vrot.lane.b32.xlu0 %v2382, 112
    %v2387 = vpop.permute.xlu0 %2386
    %v2388 = vsel %vm65, %v2387, 0
    %2390 = vmatpush.msra.mxu0 0.0
    %2391 = vmatpush.msra.mxu0 0.0
    %2392 = vmatpush.msra.mxu0 0.0
    %2393 = vmatpush.msra.mxu0 0.0
    %2394 = vmatpush.msra.mxu0 0.0
    %2395 = vmatpush.msra.mxu0 0.0
    %2396 = vmatpush.msra.mxu0 0.0
    %2397 = vmatpush.msra.mxu0 0.0
    %2398 = vmatpush.msra.mxu0 0.0
    %2399 = vmatpush.msra.mxu0 0.0
    %2400 = vmatpush.msra.mxu0 0.0
    %2401 = vmatpush.msra.mxu0 0.0
    %2402 = vmatpush.msra.mxu0 0.0
    %2403 = vmatpush.msra.mxu0 0.0
    %2404 = vmatpush.msra.mxu0 %v2384
    %2405 = vmatpush.msra.mxu0 %v2383
    %2406 = vmatmul.f32.gmra.mxu0 %v2388
    %v2407 = vpop.f32.mrf.mxu0
    %v2408 = vadd.f32 0.0, %v2407
    %2409 = vdwg.mxu0
    %2411 = vrot.lane.b32.xlu0 %v2408, 64
    %v2412 = vpop.permute.xlu0 %2411
    %v2414 = vadd.f32 %v2331, %v2412
    %v2415 = vtanh.pop %v2414
    %v2416 = vmul.f32 %v2381, 1024.0
    %v2417 = vcvt.f32.s32.to.zero.pseudo %v2416
    %v2418 = vshra.s32 %v2046, 10
    %v2419 = vmul.u32 %v2418, 1024
    %v2420 = vsub.s32 %v2046, %v2419
    %v2421 = vmul.u32 %v2420, %v2417
    %v2422 = vmul.u32 %v2418, %v2417
    %v2423 = vshra.s32 %v2421, 10
    %v2424 = vadd.s32 %v2422, %v2423
    %v2425 = vand.u32 %v2421, 1023
    %v2426 = vsub.f32 1.0, %v2381
    %2428 = vrot.lane.b32.xlu0 %v2415, 64
    %v2429 = vpop.permute.xlu0 %2428
    %v2431 = vmul.f32 %v2426, %v2429
    %v2432 = vmul.f32 %v2431, 8388608.0
    %v2433 = vcvt.f32.s32.to.zero.pseudo %v2432
    %v2434 = vadd.s32 %v2424, %v2433
    %v2435 = vcvt.s32.f32 %v2434
    %v2436 = vmul.f32 %v2435, 1.1920929e-07
    %v2437 = vld [vmem:[%s439] sm:$0xff]
    %v2438 = vld [vmem:[%s439 + $0x8] sm:$0xff]
    %v2440 = vsel %vm65, %v2436, 0
    %2442 = vmatpush.msra.mxu0 0.0
    %2443 = vmatpush.msra.mxu0 0.0
    %2444 = vmatpush.msra.mxu0 0.0
    %2445 = vmatpush.msra.mxu0 0.0
    %2446 = vmatpush.msra.mxu0 0.0
    %2447 = vmatpush.msra.mxu0 0.0
    %2448 = vmatpush.msra.mxu0 0.0
    %2449 = vmatpush.msra.mxu0 0.0
    %2450 = vmatpush.msra.mxu0 0.0
    %2451 = vmatpush.msra.mxu0 0.0
    %2452 = vmatpush.msra.mxu0 0.0
    %2453 = vmatpush.msra.mxu0 0.0
    %2454 = vmatpush.msra.mxu0 0.0
    %2455 = vmatpush.msra.mxu0 0.0
    %2456 = vmatpush.msra.mxu0 %v2438
    %2457 = vmatpush.msra.mxu0 %v2437
    %2458 = vmatmul.f32.gmra.mxu0 %v2440
    %v2459 = vpop.f32.mrf.mxu0
    %v2460 = vadd.f32 0.0, %v2459
    %2461 = vdwg.mxu0
    %2463 = vrot.lane.b32.xlu0 %v2460, 32
    %v2464 = vpop.permute.xlu0 %2463
    %v2466 = vadd.f32 %v2331, %v2464
    %v2467 = vxor.u32 %v2466, 2147483648
    %v2468 = vmul.f32 %v2467, 1.442695
    %v2469 = vpow.pop %v2468
    %v2470 = vadd.f32 %v2469, 1.0
    %v2471 = vrcp.pop %v2470
    %v2472 = vmul.f32 %v2470, %v2471
    %v2473 = vsub.f32 1.0, %v2472
    %v2474 = vmul.f32 %v2471, %v2473
    %v2475 = vadd.f32 %v2471, %v2474
    %vm2476 = vweird.f32 %v2470
    %vm2477 = vweird.f32 %v2471
    %vm2478 = vmor %vm2476, %vm2477
    %v2479 = vsel %vm2478, %v2471, %v2475
    %v2480 = vand.u32 2147483647, %v2470
    %vm2481 = vcmp.eq.f32.partialorder %v2480, 8.507059e+37
    %v2482 = vand.u32 %v2470, 2147483648
    %v2483 = vor.u32 1.1754944e-38, %v2482
    %v2484 = vsel %vm2481, %v2483, %v2479
    %v2485 = vmul.f32 1.0, %v2484
    %v2486 = vmul.f32 %v2485, 0.875
    %v2487 = vadd.f32 %v2486, 0.125
    %2488 = vrot.lane.b32.xlu0 %v2436, 48
    %v2489 = vpop.permute.xlu0 %2488
    %v2491 = vmul.f32 %v2485, %v2489
    %v2492 = vld [vmem:[%s495] sm:$0xff]
    %v2493 = vld [vmem:[%s495 + $0x8] sm:$0xff]
    %2495 = vrot.lane.b32.xlu0 %v2491, 80
    %v2496 = vpop.permute.xlu0 %2495
    %v2497 = vsel %vm65, %v2496, 0
    %2499 = vmatpush.msra.mxu0 0.0
    %2500 = vmatpush.msra.mxu0 0.0
    %2501 = vmatpush.msra.mxu0 0.0
    %2502 = vmatpush.msra.mxu0 0.0
    %2503 = vmatpush.msra.mxu0 0.0
    %2504 = vmatpush.msra.mxu0 0.0
    %2505 = vmatpush.msra.mxu0 0.0
    %2506 = vmatpush.msra.mxu0 0.0
    %2507 = vmatpush.msra.mxu0 0.0
    %2508 = vmatpush.msra.mxu0 0.0
    %2509 = vmatpush.msra.mxu0 0.0
    %2510 = vmatpush.msra.mxu0 0.0
    %2511 = vmatpush.msra.mxu0 0.0
    %2512 = vmatpush.msra.mxu0 0.0
    %2513 = vmatpush.msra.mxu0 %v2493
    %2514 = vmatpush.msra.mxu0 %v2492
    %2515 = vmatmul.f32.gmra.mxu0 %v2497
    %v2516 = vpop.f32.mrf.mxu0
    %v2517 = vadd.f32 0.0, %v2516
    %2518 = vdwg.mxu0
    %2520 = vrot.lane.b32.xlu0 %v2517, 80
    %v2521 = vpop.permute.xlu0 %2520
    %v2523 = vadd.f32 %v2331, %v2521
    %v2524 = vtanh.pop %v2523
    %v2525 = vmul.f32 %v2487, 1024.0
    %v2526 = vcvt.f32.s32.to.zero.pseudo %v2525
    %2527 = vrot.lane.b32.xlu0 %v2526, 112
    %v2528 = vpop.permute.xlu0 %2527
    %v2529 = vmul.u32 %v2420, %v2528
    %v2530 = vmul.u32 %v2418, %v2528
    %v2531 = vshra.s32 %v2529, 10
    %v2532 = vadd.s32 %v2530, %v2531
    %v2533 = vand.u32 %v2529, 1023
    %v2534 = vsub.f32 1.0, %v2487
    %2536 = vrot.lane.b32.xlu0 %v2524, 80
    %v2537 = vpop.permute.xlu0 %2536
    %v2539 = vmul.f32 %v2534, %v2537
    %v2540 = vmul.f32 %v2539, 8388608.0
    %v2541 = vcvt.f32.s32.to.zero.pseudo %v2540
    %2542 = vrot.lane.b32.xlu0 %v2541, 112
    %v2543 = vpop.permute.xlu0 %2542
    %v2544 = vadd.s32 %v2532, %v2543
    %v2545 = vsel %vm65, %v2434, %v2544
    %v2546 = vsel %vm65, %v2425, %v2533
    %s2547 = scalar_lea.vmem [#allocation6], 18
    %2548 = vst.msk [vmem:[%s2547] sm:$0x3] %vm55, %v2546
    %v2549 = vlog2.pop %v2381
    %v2550 = vmul.f32 %v2549, 0.6931472
    %v2551 = vmul.f32 %v2550, %v284
    %v2552 = vsub.f32 0.0, %v2551
    %v2553 = vmul.f32 %v2552, %v54
    %v2554 = vadd.f32 %v2297, %v2553
    %v2555 = vlog2.pop %v2487
    %v2556 = vmul.f32 %v2555, 0.6931472
    %v2557 = vmul.f32 %v2556, %v284
    %v2558 = vsub.f32 0.0, %v2557
    %2560 = vrot.lane.b32.xlu0 %v2558, 96
    %v2561 = vpop.permute.xlu0 %2560
    %v2563 = vadd.f32 %v2554, %v2561
    %s2564 = scalar_lea.vmem [#allocation4], 10
    %2565 = vst.msk [vmem:[%s2564] sm:$0x3] %vm55, %v2545
    %s2566 = scalar_lea.vmem %s0, 10
    %v2567 = vld [vmem:[%s2566] sm:$0x3]
    %v2568 = vld [vmem:[%s4] sm:$0xff]
    %v2569 = vld [vmem:[%s4 + $0x8] sm:$0xff]
    %2570 = vrot.lane.b32.xlu0 %v2299, 112
    %v2571 = vpop.permute.xlu0 %2570
    %v2572 = vsel %vm65, %v2571, 0
    %2574 = vmatpush.msra.mxu0 0.0
    %2575 = vmatpush.msra.mxu0 0.0
    %2576 = vmatpush.msra.mxu0 0.0
    %2577 = vmatpush.msra.mxu0 0.0
    %2578 = vmatpush.msra.mxu0 0.0
    %2579 = vmatpush.msra.mxu0 0.0
    %2580 = vmatpush.msra.mxu0 0.0
    %2581 = vmatpush.msra.mxu0 0.0
    %2582 = vmatpush.msra.mxu0 0.0
    %2583 = vmatpush.msra.mxu0 0.0
    %2584 = vmatpush.msra.mxu0 0.0
    %2585 = vmatpush.msra.mxu0 0.0
    %2586 = vmatpush.msra.mxu0 0.0
    %2587 = vmatpush.msra.mxu0 0.0
    %2588 = vmatpush.msra.mxu0 %v2569
    %2589 = vmatpush.msra.mxu0 %v2568
    %2590 = vmatmul.f32.gmra.mxu0 %v2572
    %v2591 = vpop.f32.mrf.mxu0
    %v2592 = vadd.f32 0.0, %v2591
    %2593 = vdwg.mxu0
    %v2594 = vadd.f32 %v2567, %v2592
    %v2595 = vxor.u32 %v2594, 2147483648
    %v2596 = vmul.f32 %v2595, 1.442695
    %v2597 = vpow.pop %v2596
    %v2598 = vadd.f32 %v2597, 1.0
    %v2599 = vrcp.pop %v2598
    %v2600 = vmul.f32 %v2598, %v2599
    %v2601 = vsub.f32 1.0, %v2600
    %v2602 = vmul.f32 %v2599, %v2601
    %v2603 = vadd.f32 %v2599, %v2602
    %vm2604 = vweird.f32 %v2598
    %vm2605 = vweird.f32 %v2599
    %vm2606 = vmor %vm2604, %vm2605
    %v2607 = vsel %vm2606, %v2599, %v2603
    %v2608 = vand.u32 2147483647, %v2598
    %vm2609 = vcmp.eq.f32.partialorder %v2608, 8.507059e+37
    %v2610 = vand.u32 %v2598, 2147483648
    %v2611 = vor.u32 1.1754944e-38, %v2610
    %v2612 = vsel %vm2609, %v2611, %v2607
    %v2613 = vmul.f32 1.0, %v2612
    %v2614 = vmul.f32 %v2613, 0.875
    %v2615 = vadd.f32 %v2614, 0.125
    %v2616 = vmul.f32 %v2613, %v2299
    %v2617 = vld [vmem:[%s5] sm:$0xff]
    %v2618 = vld [vmem:[%s5 + $0x8] sm:$0xff]
    %2620 = vrot.lane.b32.xlu0 %v2616, 112
    %v2621 = vpop.permute.xlu0 %2620
    %v2622 = vsel %vm65, %v2621, 0
    %2624 = vmatpush.msra.mxu0 0.0
    %2625 = vmatpush.msra.mxu0 0.0
    %2626 = vmatpush.msra.mxu0 0.0
    %2627 = vmatpush.msra.mxu0 0.0
    %2628 = vmatpush.msra.mxu0 0.0
    %2629 = vmatpush.msra.mxu0 0.0
    %2630 = vmatpush.msra.mxu0 0.0
    %2631 = vmatpush.msra.mxu0 0.0
    %2632 = vmatpush.msra.mxu0 0.0
    %2633 = vmatpush.msra.mxu0 0.0
    %2634 = vmatpush.msra.mxu0 0.0
    %2635 = vmatpush.msra.mxu0 0.0
    %2636 = vmatpush.msra.mxu0 0.0
    %2637 = vmatpush.msra.mxu0 0.0
    %2638 = vmatpush.msra.mxu0 %v2618
    %2639 = vmatpush.msra.mxu0 %v2617
    %2640 = vmatmul.f32.gmra.mxu0 %v2622
    %v2641 = vpop.f32.mrf.mxu0
    %v2642 = vadd.f32 0.0, %v2641
    %2643 = vdwg.mxu0
    %2645 = vrot.lane.b32.xlu0 %v2642, 64
    %v2646 = vpop.permute.xlu0 %2645
    %v2648 = vadd.f32 %v2567, %v2646
    %v2649 = vtanh.pop %v2648
    %v2650 = vmul.f32 %v2615, 1024.0
    %v2651 = vcvt.f32.s32.to.zero.pseudo %v2650
    %v2652 = vshra.s32 %v2280, 10
    %v2653 = vmul.u32 %v2652, 1024
    %v2654 = vsub.s32 %v2280, %v2653
    %v2655 = vmul.u32 %v2654, %v2651
    %v2656 = vmul.u32 %v2652, %v2651
    %v2657 = vshra.s32 %v2655, 10
    %v2658 = vadd.s32 %v2656, %v2657
    %v2659 = vand.u32 %v2655, 1023
    %v2660 = vsub.f32 1.0, %v2615
    %2662 = vrot.lane.b32.xlu0 %v2649, 64
    %v2663 = vpop.permute.xlu0 %2662
    %v2665 = vmul.f32 %v2660, %v2663
    %v2666 = vmul.f32 %v2665, 8388608.0
    %v2667 = vcvt.f32.s32.to.zero.pseudo %v2666
    %v2668 = vadd.s32 %v2658, %v2667
    %v2669 = vcvt.s32.f32 %v2668
    %v2670 = vmul.f32 %v2669, 1.1920929e-07
    %v2671 = vld [vmem:[%s6] sm:$0xff]
    %v2672 = vld [vmem:[%s6 + $0x8] sm:$0xff]
    %v2674 = vsel %vm65, %v2670, 0
    %2676 = vmatpush.msra.mxu0 0.0
    %2677 = vmatpush.msra.mxu0 0.0
    %2678 = vmatpush.msra.mxu0 0.0
    %2679 = vmatpush.msra.mxu0 0.0
    %2680 = vmatpush.msra.mxu0 0.0
    %2681 = vmatpush.msra.mxu0 0.0
    %2682 = vmatpush.msra.mxu0 0.0
    %2683 = vmatpush.msra.mxu0 0.0
    %2684 = vmatpush.msra.mxu0 0.0
    %2685 = vmatpush.msra.mxu0 0.0
    %2686 = vmatpush.msra.mxu0 0.0
    %2687 = vmatpush.msra.mxu0 0.0
    %2688 = vmatpush.msra.mxu0 0.0
    %2689 = vmatpush.msra.mxu0 0.0
    %2690 = vmatpush.msra.mxu0 %v2672
    %2691 = vmatpush.msra.mxu0 %v2671
    %2692 = vmatmul.f32.gmra.mxu0 %v2674
    %v2693 = vpop.f32.mrf.mxu0
    %v2694 = vadd.f32 0.0, %v2693
    %2695 = vdwg.mxu0
    %2697 = vrot.lane.b32.xlu0 %v2694, 32
    %v2698 = vpop.permute.xlu0 %2697
    %v2700 = vadd.f32 %v2567, %v2698
    %v2701 = vxor.u32 %v2700, 2147483648
    %v2702 = vmul.f32 %v2701, 1.442695
    %v2703 = vpow.pop %v2702
    %v2704 = vadd.f32 %v2703, 1.0
    %v2705 = vrcp.pop %v2704
    %v2706 = vmul.f32 %v2704, %v2705
    %v2707 = vsub.f32 1.0, %v2706
    %v2708 = vmul.f32 %v2705, %v2707
    %v2709 = vadd.f32 %v2705, %v2708
    %vm2710 = vweird.f32 %v2704
    %vm2711 = vweird.f32 %v2705
    %vm2712 = vmor %vm2710, %vm2711
    %v2713 = vsel %vm2712, %v2705, %v2709
    %v2714 = vand.u32 2147483647, %v2704
    %vm2715 = vcmp.eq.f32.partialorder %v2714, 8.507059e+37
    %v2716 = vand.u32 %v2704, 2147483648
    %v2717 = vor.u32 1.1754944e-38, %v2716
    %v2718 = vsel %vm2715, %v2717, %v2713
    %v2719 = vmul.f32 1.0, %v2718
    %v2720 = vmul.f32 %v2719, 0.875
    %v2721 = vadd.f32 %v2720, 0.125
    %2722 = vrot.lane.b32.xlu0 %v2670, 48
    %v2723 = vpop.permute.xlu0 %2722
    %v2725 = vmul.f32 %v2719, %v2723
    %v2726 = vld [vmem:[%s7] sm:$0xff]
    %v2727 = vld [vmem:[%s7 + $0x8] sm:$0xff]
    %2729 = vrot.lane.b32.xlu0 %v2725, 80
    %v2730 = vpop.permute.xlu0 %2729
    %v2731 = vsel %vm65, %v2730, 0
    %2733 = vmatpush.msra.mxu0 0.0
    %2734 = vmatpush.msra.mxu0 0.0
    %2735 = vmatpush.msra.mxu0 0.0
    %2736 = vmatpush.msra.mxu0 0.0
    %2737 = vmatpush.msra.mxu0 0.0
    %2738 = vmatpush.msra.mxu0 0.0
    %2739 = vmatpush.msra.mxu0 0.0
    %2740 = vmatpush.msra.mxu0 0.0
    %2741 = vmatpush.msra.mxu0 0.0
    %2742 = vmatpush.msra.mxu0 0.0
    %2743 = vmatpush.msra.mxu0 0.0
    %2744 = vmatpush.msra.mxu0 0.0
    %2745 = vmatpush.msra.mxu0 0.0
    %2746 = vmatpush.msra.mxu0 0.0
    %2747 = vmatpush.msra.mxu0 %v2727
    %2748 = vmatpush.msra.mxu0 %v2726
    %2749 = vmatmul.f32.gmra.mxu0 %v2731
    %v2750 = vpop.f32.mrf.mxu0
    %v2751 = vadd.f32 0.0, %v2750
    %2752 = vdwg.mxu0
    %2754 = vrot.lane.b32.xlu0 %v2751, 80
    %v2755 = vpop.permute.xlu0 %2754
    %v2757 = vadd.f32 %v2567, %v2755
    %v2758 = vtanh.pop %v2757
    %v2759 = vmul.f32 %v2721, 1024.0
    %v2760 = vcvt.f32.s32.to.zero.pseudo %v2759
    %2761 = vrot.lane.b32.xlu0 %v2760, 112
    %v2762 = vpop.permute.xlu0 %2761
    %v2763 = vmul.u32 %v2654, %v2762
    %v2764 = vmul.u32 %v2652, %v2762
    %v2765 = vshra.s32 %v2763, 10
    %v2766 = vadd.s32 %v2764, %v2765
    %v2767 = vand.u32 %v2763, 1023
    %v2768 = vsub.f32 1.0, %v2721
    %2770 = vrot.lane.b32.xlu0 %v2758, 80
    %v2771 = vpop.permute.xlu0 %2770
    %v2773 = vmul.f32 %v2768, %v2771
    %v2774 = vmul.f32 %v2773, 8388608.0
    %v2775 = vcvt.f32.s32.to.zero.pseudo %v2774
    %2776 = vrot.lane.b32.xlu0 %v2775, 112
    %v2777 = vpop.permute.xlu0 %2776
    %v2778 = vadd.s32 %v2766, %v2777
    %v2779 = vsel %vm65, %v2668, %v2778
    %v2780 = vsel %vm65, %v2659, %v2767
    %s2781 = scalar_lea.vmem [#allocation6], 20
    %2782 = vst.msk [vmem:[%s2781] sm:$0x3] %vm55, %v2780
    %v2783 = vlog2.pop %v2615
    %v2784 = vmul.f32 %v2783, 0.6931472
    %v2785 = vmul.f32 %v2784, %v284
    %v2786 = vsub.f32 0.0, %v2785
    %v2787 = vadd.f32 %v2563, %v2786
    %v2788 = vlog2.pop %v2721
    %v2789 = vmul.f32 %v2788, 0.6931472
    %v2790 = vmul.f32 %v2789, %v284
    %v2791 = vsub.f32 0.0, %v2790
    %2793 = vrot.lane.b32.xlu0 %v2791, 96
    %v2794 = vpop.permute.xlu0 %2793
    %v2796 = vadd.f32 %v2787, %v2794
    %v2797 = vcvt.s32.f32 %v2779
    %v2798 = vmul.f32 %v2797, 1.1920929e-07
    %v2799 = vcvt.s32.f32 %v2545
    %v2800 = vmul.f32 %v2799, 1.1920929e-07
    %v2801 = vld [vmem:[%s2] sm:$0xff]
    %v2802 = vld [vmem:[%s2 + $0x8] sm:$0xff]
    %v2803 = vld [vmem:[%s2 + $0x10] sm:$0xff]
    %v2804 = vld [vmem:[%s2 + $0x18] sm:$0xff]
    %v2805 = vld [vmem:[%s3] sm:$0x1]
    %v2807 = vperm.slane %v2805, 0
    %v2810 = vsel %vm309, %v2798, 0
    %2812 = vmatpush.msra.mxu0 0.0
    %2813 = vmatpush.msra.mxu0 0.0
    %2814 = vmatpush.msra.mxu0 0.0
    %2815 = vmatpush.msra.mxu0 0.0
    %2816 = vmatpush.msra.mxu0 0.0
    %2817 = vmatpush.msra.mxu0 0.0
    %2818 = vmatpush.msra.mxu0 0.0
    %2819 = vmatpush.msra.mxu0 0.0
    %2820 = vmatpush.msra.mxu0 0.0
    %2821 = vmatpush.msra.mxu0 0.0
    %2822 = vmatpush.msra.mxu0 0.0
    %2823 = vmatpush.msra.mxu0 0.0
    %2824 = vmatpush.msra.mxu0 %v2804
    %2825 = vmatpush.msra.mxu0 %v2803
    %2826 = vmatpush.msra.mxu0 %v2802
    %2827 = vmatpush.msra.mxu0 %v2801
    %2828 = vmatmul.f32.gmra.mxu0 %v2810
    %v2829 = vpop.f32.mrf.mxu0
    %v2830 = vadd.f32 %v2807, %v2829
    %2831 = vdwg.mxu0
    %v2832 = vld [vmem:[%s333] sm:$0xff]
    %v2833 = vld [vmem:[%s333 + $0x8] sm:$0xff]
    %2835 = vrot.lane.b32.xlu0 %v2800, 112
    %v2836 = vpop.permute.xlu0 %2835
    %v2837 = vsel %vm65, %v2836, 0
    %2839 = vmatpush.msra.mxu0 0.0
    %2840 = vmatpush.msra.mxu0 0.0
    %2841 = vmatpush.msra.mxu0 0.0
    %2842 = vmatpush.msra.mxu0 0.0
    %2843 = vmatpush.msra.mxu0 0.0
    %2844 = vmatpush.msra.mxu0 0.0
    %2845 = vmatpush.msra.mxu0 0.0
    %2846 = vmatpush.msra.mxu0 0.0
    %2847 = vmatpush.msra.mxu0 0.0
    %2848 = vmatpush.msra.mxu0 0.0
    %2849 = vmatpush.msra.mxu0 0.0
    %2850 = vmatpush.msra.mxu0 0.0
    %2851 = vmatpush.msra.mxu0 0.0
    %2852 = vmatpush.msra.mxu0 0.0
    %2853 = vmatpush.msra.mxu0 %v2833
    %2854 = vmatpush.msra.mxu0 %v2832
    %2855 = vmatmul.f32.gmra.mxu0 %v2837
    %v2856 = vpop.f32.mrf.mxu0
    %v2857 = vadd.f32 0.0, %v2856
    %2858 = vdwg.mxu0
    %v2859 = vadd.f32 %v2830, %v2857
    %v2860 = vxor.u32 %v2859, 2147483648
    %v2861 = vmul.f32 %v2860, 1.442695
    %v2862 = vpow.pop %v2861
    %v2863 = vadd.f32 %v2862, 1.0
    %v2864 = vrcp.pop %v2863
    %v2865 = vmul.f32 %v2863, %v2864
    %v2866 = vsub.f32 1.0, %v2865
    %v2867 = vmul.f32 %v2864, %v2866
    %v2868 = vadd.f32 %v2864, %v2867
    %vm2869 = vweird.f32 %v2863
    %vm2870 = vweird.f32 %v2864
    %vm2871 = vmor %vm2869, %vm2870
    %v2872 = vsel %vm2871, %v2864, %v2868
    %v2873 = vand.u32 2147483647, %v2863
    %vm2874 = vcmp.eq.f32.partialorder %v2873, 8.507059e+37
    %v2875 = vand.u32 %v2863, 2147483648
    %v2876 = vor.u32 1.1754944e-38, %v2875
    %v2877 = vsel %vm2874, %v2876, %v2872
    %v2878 = vmul.f32 1.0, %v2877
    %v2879 = vmul.f32 %v2878, 0.875
    %v2880 = vadd.f32 %v2879, 0.125
    %v2881 = vmul.f32 %v2878, %v2800
    %v2882 = vld [vmem:[%s384] sm:$0xff]
    %v2883 = vld [vmem:[%s384 + $0x8] sm:$0xff]
    %2885 = vrot.lane.b32.xlu0 %v2881, 112
    %v2886 = vpop.permute.xlu0 %2885
    %v2887 = vsel %vm65, %v2886, 0
    %2889 = vmatpush.msra.mxu0 0.0
    %2890 = vmatpush.msra.mxu0 0.0
    %2891 = vmatpush.msra.mxu0 0.0
    %2892 = vmatpush.msra.mxu0 0.0
    %2893 = vmatpush.msra.mxu0 0.0
    %2894 = vmatpush.msra.mxu0 0.0
    %2895 = vmatpush.msra.mxu0 0.0
    %2896 = vmatpush.msra.mxu0 0.0
    %2897 = vmatpush.msra.mxu0 0.0
    %2898 = vmatpush.msra.mxu0 0.0
    %2899 = vmatpush.msra.mxu0 0.0
    %2900 = vmatpush.msra.mxu0 0.0
    %2901 = vmatpush.msra.mxu0 0.0
    %2902 = vmatpush.msra.mxu0 0.0
    %2903 = vmatpush.msra.mxu0 %v2883
    %2904 = vmatpush.msra.mxu0 %v2882
    %2905 = vmatmul.f32.gmra.mxu0 %v2887
    %v2906 = vpop.f32.mrf.mxu0
    %v2907 = vadd.f32 0.0, %v2906
    %2908 = vdwg.mxu0
    %2910 = vrot.lane.b32.xlu0 %v2907, 64
    %v2911 = vpop.permute.xlu0 %2910
    %v2913 = vadd.f32 %v2830, %v2911
    %v2914 = vtanh.pop %v2913
    %v2915 = vmul.f32 %v2880, 1024.0
    %v2916 = vcvt.f32.s32.to.zero.pseudo %v2915
    %v2917 = vshra.s32 %v2545, 10
    %v2918 = vmul.u32 %v2917, 1024
    %v2919 = vsub.s32 %v2545, %v2918
    %v2920 = vmul.u32 %v2919, %v2916
    %v2921 = vmul.u32 %v2917, %v2916
    %v2922 = vshra.s32 %v2920, 10
    %v2923 = vadd.s32 %v2921, %v2922
    %v2924 = vand.u32 %v2920, 1023
    %v2925 = vsub.f32 1.0, %v2880
    %2927 = vrot.lane.b32.xlu0 %v2914, 64
    %v2928 = vpop.permute.xlu0 %2927
    %v2930 = vmul.f32 %v2925, %v2928
    %v2931 = vmul.f32 %v2930, 8388608.0
    %v2932 = vcvt.f32.s32.to.zero.pseudo %v2931
    %v2933 = vadd.s32 %v2923, %v2932
    %v2934 = vcvt.s32.f32 %v2933
    %v2935 = vmul.f32 %v2934, 1.1920929e-07
    %v2936 = vld [vmem:[%s439] sm:$0xff]
    %v2937 = vld [vmem:[%s439 + $0x8] sm:$0xff]
    %v2939 = vsel %vm65, %v2935, 0
    %2941 = vmatpush.msra.mxu0 0.0
    %2942 = vmatpush.msra.mxu0 0.0
    %2943 = vmatpush.msra.mxu0 0.0
    %2944 = vmatpush.msra.mxu0 0.0
    %2945 = vmatpush.msra.mxu0 0.0
    %2946 = vmatpush.msra.mxu0 0.0
    %2947 = vmatpush.msra.mxu0 0.0
    %2948 = vmatpush.msra.mxu0 0.0
    %2949 = vmatpush.msra.mxu0 0.0
    %2950 = vmatpush.msra.mxu0 0.0
    %2951 = vmatpush.msra.mxu0 0.0
    %2952 = vmatpush.msra.mxu0 0.0
    %2953 = vmatpush.msra.mxu0 0.0
    %2954 = vmatpush.msra.mxu0 0.0
    %2955 = vmatpush.msra.mxu0 %v2937
    %2956 = vmatpush.msra.mxu0 %v2936
    %2957 = vmatmul.f32.gmra.mxu0 %v2939
    %v2958 = vpop.f32.mrf.mxu0
    %v2959 = vadd.f32 0.0, %v2958
    %2960 = vdwg.mxu0
    %2962 = vrot.lane.b32.xlu0 %v2959, 32
    %v2963 = vpop.permute.xlu0 %2962
    %v2965 = vadd.f32 %v2830, %v2963
    %v2966 = vxor.u32 %v2965, 2147483648
    %v2967 = vmul.f32 %v2966, 1.442695
    %v2968 = vpow.pop %v2967
    %v2969 = vadd.f32 %v2968, 1.0
    %v2970 = vrcp.pop %v2969
    %v2971 = vmul.f32 %v2969, %v2970
    %v2972 = vsub.f32 1.0, %v2971
    %v2973 = vmul.f32 %v2970, %v2972
    %v2974 = vadd.f32 %v2970, %v2973
    %vm2975 = vweird.f32 %v2969
    %vm2976 = vweird.f32 %v2970
    %vm2977 = vmor %vm2975, %vm2976
    %v2978 = vsel %vm2977, %v2970, %v2974
    %v2979 = vand.u32 2147483647, %v2969
    %vm2980 = vcmp.eq.f32.partialorder %v2979, 8.507059e+37
    %v2981 = vand.u32 %v2969, 2147483648
    %v2982 = vor.u32 1.1754944e-38, %v2981
    %v2983 = vsel %vm2980, %v2982, %v2978
    %v2984 = vmul.f32 1.0, %v2983
    %v2985 = vmul.f32 %v2984, 0.875
    %v2986 = vadd.f32 %v2985, 0.125
    %2987 = vrot.lane.b32.xlu0 %v2935, 48
    %v2988 = vpop.permute.xlu0 %2987
    %v2990 = vmul.f32 %v2984, %v2988
    %v2991 = vld [vmem:[%s495] sm:$0xff]
    %v2992 = vld [vmem:[%s495 + $0x8] sm:$0xff]
    %2994 = vrot.lane.b32.xlu0 %v2990, 80
    %v2995 = vpop.permute.xlu0 %2994
    %v2996 = vsel %vm65, %v2995, 0
    %2998 = vmatpush.msra.mxu0 0.0
    %2999 = vmatpush.msra.mxu0 0.0
    %3000 = vmatpush.msra.mxu0 0.0
    %3001 = vmatpush.msra.mxu0 0.0
    %3002 = vmatpush.msra.mxu0 0.0
    %3003 = vmatpush.msra.mxu0 0.0
    %3004 = vmatpush.msra.mxu0 0.0
    %3005 = vmatpush.msra.mxu0 0.0
    %3006 = vmatpush.msra.mxu0 0.0
    %3007 = vmatpush.msra.mxu0 0.0
    %3008 = vmatpush.msra.mxu0 0.0
    %3009 = vmatpush.msra.mxu0 0.0
    %3010 = vmatpush.msra.mxu0 0.0
    %3011 = vmatpush.msra.mxu0 0.0
    %3012 = vmatpush.msra.mxu0 %v2992
    %3013 = vmatpush.msra.mxu0 %v2991
    %3014 = vmatmul.f32.gmra.mxu0 %v2996
    %v3015 = vpop.f32.mrf.mxu0
    %v3016 = vadd.f32 0.0, %v3015
    %3017 = vdwg.mxu0
    %3019 = vrot.lane.b32.xlu0 %v3016, 80
    %v3020 = vpop.permute.xlu0 %3019
    %v3022 = vadd.f32 %v2830, %v3020
    %v3023 = vtanh.pop %v3022
    %v3024 = vmul.f32 %v2986, 1024.0
    %v3025 = vcvt.f32.s32.to.zero.pseudo %v3024
    %3026 = vrot.lane.b32.xlu0 %v3025, 112
    %v3027 = vpop.permute.xlu0 %3026
    %v3028 = vmul.u32 %v2919, %v3027
    %v3029 = vmul.u32 %v2917, %v3027
    %v3030 = vshra.s32 %v3028, 10
    %v3031 = vadd.s32 %v3029, %v3030
    %v3032 = vand.u32 %v3028, 1023
    %v3033 = vsub.f32 1.0, %v2986
    %3035 = vrot.lane.b32.xlu0 %v3023, 80
    %v3036 = vpop.permute.xlu0 %3035
    %v3038 = vmul.f32 %v3033, %v3036
    %v3039 = vmul.f32 %v3038, 8388608.0
    %v3040 = vcvt.f32.s32.to.zero.pseudo %v3039
    %3041 = vrot.lane.b32.xlu0 %v3040, 112
    %v3042 = vpop.permute.xlu0 %3041
    %v3043 = vadd.s32 %v3031, %v3042
    %v3044 = vsel %vm65, %v2933, %v3043
    %v3045 = vsel %vm65, %v2924, %v3032
    %s3046 = scalar_lea.vmem [#allocation6], 22
    %3047 = vst.msk [vmem:[%s3046] sm:$0x3] %vm55, %v3045
    %v3048 = vlog2.pop %v2880
    %v3049 = vmul.f32 %v3048, 0.6931472
    %v3050 = vmul.f32 %v3049, %v284
    %v3051 = vsub.f32 0.0, %v3050
    %v3052 = vmul.f32 %v3051, %v54
    %v3053 = vadd.f32 %v2796, %v3052
    %v3054 = vlog2.pop %v2986
    %v3055 = vmul.f32 %v3054, 0.6931472
    %v3056 = vmul.f32 %v3055, %v284
    %v3057 = vsub.f32 0.0, %v3056
    %3059 = vrot.lane.b32.xlu0 %v3057, 96
    %v3060 = vpop.permute.xlu0 %3059
    %v3062 = vadd.f32 %v3053, %v3060
    %s3063 = scalar_lea.vmem [#allocation4], 12
    %3064 = vst.msk [vmem:[%s3063] sm:$0x3] %vm55, %v3044
    %s3065 = scalar_lea.vmem %s0, 12
    %v3066 = vld [vmem:[%s3065] sm:$0x3]
    %v3067 = vld [vmem:[%s4] sm:$0xff]
    %v3068 = vld [vmem:[%s4 + $0x8] sm:$0xff]
    %3069 = vrot.lane.b32.xlu0 %v2798, 112
    %v3070 = vpop.permute.xlu0 %3069
    %v3071 = vsel %vm65, %v3070, 0
    %3073 = vmatpush.msra.mxu0 0.0
    %3074 = vmatpush.msra.mxu0 0.0
    %3075 = vmatpush.msra.mxu0 0.0
    %3076 = vmatpush.msra.mxu0 0.0
    %3077 = vmatpush.msra.mxu0 0.0
    %3078 = vmatpush.msra.mxu0 0.0
    %3079 = vmatpush.msra.mxu0 0.0
    %3080 = vmatpush.msra.mxu0 0.0
    %3081 = vmatpush.msra.mxu0 0.0
    %3082 = vmatpush.msra.mxu0 0.0
    %3083 = vmatpush.msra.mxu0 0.0
    %3084 = vmatpush.msra.mxu0 0.0
    %3085 = vmatpush.msra.mxu0 0.0
    %3086 = vmatpush.msra.mxu0 0.0
    %3087 = vmatpush.msra.mxu0 %v3068
    %3088 = vmatpush.msra.mxu0 %v3067
    %3089 = vmatmul.f32.gmra.mxu0 %v3071
    %v3090 = vpop.f32.mrf.mxu0
    %v3091 = vadd.f32 0.0, %v3090
    %3092 = vdwg.mxu0
    %v3093 = vadd.f32 %v3066, %v3091
    %v3094 = vxor.u32 %v3093, 2147483648
    %v3095 = vmul.f32 %v3094, 1.442695
    %v3096 = vpow.pop %v3095
    %v3097 = vadd.f32 %v3096, 1.0
    %v3098 = vrcp.pop %v3097
    %v3099 = vmul.f32 %v3097, %v3098
    %v3100 = vsub.f32 1.0, %v3099
    %v3101 = vmul.f32 %v3098, %v3100
    %v3102 = vadd.f32 %v3098, %v3101
    %vm3103 = vweird.f32 %v3097
    %vm3104 = vweird.f32 %v3098
    %vm3105 = vmor %vm3103, %vm3104
    %v3106 = vsel %vm3105, %v3098, %v3102
    %v3107 = vand.u32 2147483647, %v3097
    %vm3108 = vcmp.eq.f32.partialorder %v3107, 8.507059e+37
    %v3109 = vand.u32 %v3097, 2147483648
    %v3110 = vor.u32 1.1754944e-38, %v3109
    %v3111 = vsel %vm3108, %v3110, %v3106
    %v3112 = vmul.f32 1.0, %v3111
    %v3113 = vmul.f32 %v3112, 0.875
    %v3114 = vadd.f32 %v3113, 0.125
    %v3115 = vmul.f32 %v3112, %v2798
    %v3116 = vld [vmem:[%s5] sm:$0xff]
    %v3117 = vld [vmem:[%s5 + $0x8] sm:$0xff]
    %3119 = vrot.lane.b32.xlu0 %v3115, 112
    %v3120 = vpop.permute.xlu0 %3119
    %v3121 = vsel %vm65, %v3120, 0
    %3123 = vmatpush.msra.mxu0 0.0
    %3124 = vmatpush.msra.mxu0 0.0
    %3125 = vmatpush.msra.mxu0 0.0
    %3126 = vmatpush.msra.mxu0 0.0
    %3127 = vmatpush.msra.mxu0 0.0
    %3128 = vmatpush.msra.mxu0 0.0
    %3129 = vmatpush.msra.mxu0 0.0
    %3130 = vmatpush.msra.mxu0 0.0
    %3131 = vmatpush.msra.mxu0 0.0
    %3132 = vmatpush.msra.mxu0 0.0
    %3133 = vmatpush.msra.mxu0 0.0
    %3134 = vmatpush.msra.mxu0 0.0
    %3135 = vmatpush.msra.mxu0 0.0
    %3136 = vmatpush.msra.mxu0 0.0
    %3137 = vmatpush.msra.mxu0 %v3117
    %3138 = vmatpush.msra.mxu0 %v3116
    %3139 = vmatmul.f32.gmra.mxu0 %v3121
    %v3140 = vpop.f32.mrf.mxu0
    %v3141 = vadd.f32 0.0, %v3140
    %3142 = vdwg.mxu0
    %3144 = vrot.lane.b32.xlu0 %v3141, 64
    %v3145 = vpop.permute.xlu0 %3144
    %v3147 = vadd.f32 %v3066, %v3145
    %v3148 = vtanh.pop %v3147
    %v3149 = vmul.f32 %v3114, 1024.0
    %v3150 = vcvt.f32.s32.to.zero.pseudo %v3149
    %v3151 = vshra.s32 %v2779, 10
    %v3152 = vmul.u32 %v3151, 1024
    %v3153 = vsub.s32 %v2779, %v3152
    %v3154 = vmul.u32 %v3153, %v3150
    %v3155 = vmul.u32 %v3151, %v3150
    %v3156 = vshra.s32 %v3154, 10
    %v3157 = vadd.s32 %v3155, %v3156
    %v3158 = vand.u32 %v3154, 1023
    %v3159 = vsub.f32 1.0, %v3114
    %3161 = vrot.lane.b32.xlu0 %v3148, 64
    %v3162 = vpop.permute.xlu0 %3161
    %v3164 = vmul.f32 %v3159, %v3162
    %v3165 = vmul.f32 %v3164, 8388608.0
    %v3166 = vcvt.f32.s32.to.zero.pseudo %v3165
    %v3167 = vadd.s32 %v3157, %v3166
    %v3168 = vcvt.s32.f32 %v3167
    %v3169 = vmul.f32 %v3168, 1.1920929e-07
    %v3170 = vld [vmem:[%s6] sm:$0xff]
    %v3171 = vld [vmem:[%s6 + $0x8] sm:$0xff]
    %v3173 = vsel %vm65, %v3169, 0
    %3175 = vmatpush.msra.mxu0 0.0
    %3176 = vmatpush.msra.mxu0 0.0
    %3177 = vmatpush.msra.mxu0 0.0
    %3178 = vmatpush.msra.mxu0 0.0
    %3179 = vmatpush.msra.mxu0 0.0
    %3180 = vmatpush.msra.mxu0 0.0
    %3181 = vmatpush.msra.mxu0 0.0
    %3182 = vmatpush.msra.mxu0 0.0
    %3183 = vmatpush.msra.mxu0 0.0
    %3184 = vmatpush.msra.mxu0 0.0
    %3185 = vmatpush.msra.mxu0 0.0
    %3186 = vmatpush.msra.mxu0 0.0
    %3187 = vmatpush.msra.mxu0 0.0
    %3188 = vmatpush.msra.mxu0 0.0
    %3189 = vmatpush.msra.mxu0 %v3171
    %3190 = vmatpush.msra.mxu0 %v3170
    %3191 = vmatmul.f32.gmra.mxu0 %v3173
    %v3192 = vpop.f32.mrf.mxu0
    %v3193 = vadd.f32 0.0, %v3192
    %3194 = vdwg.mxu0
    %3196 = vrot.lane.b32.xlu0 %v3193, 32
    %v3197 = vpop.permute.xlu0 %3196
    %v3199 = vadd.f32 %v3066, %v3197
    %v3200 = vxor.u32 %v3199, 2147483648
    %v3201 = vmul.f32 %v3200, 1.442695
    %v3202 = vpow.pop %v3201
    %v3203 = vadd.f32 %v3202, 1.0
    %v3204 = vrcp.pop %v3203
    %v3205 = vmul.f32 %v3203, %v3204
    %v3206 = vsub.f32 1.0, %v3205
    %v3207 = vmul.f32 %v3204, %v3206
    %v3208 = vadd.f32 %v3204, %v3207
    %vm3209 = vweird.f32 %v3203
    %vm3210 = vweird.f32 %v3204
    %vm3211 = vmor %vm3209, %vm3210
    %v3212 = vsel %vm3211, %v3204, %v3208
    %v3213 = vand.u32 2147483647, %v3203
    %vm3214 = vcmp.eq.f32.partialorder %v3213, 8.507059e+37
    %v3215 = vand.u32 %v3203, 2147483648
    %v3216 = vor.u32 1.1754944e-38, %v3215
    %v3217 = vsel %vm3214, %v3216, %v3212
    %v3218 = vmul.f32 1.0, %v3217
    %v3219 = vmul.f32 %v3218, 0.875
    %v3220 = vadd.f32 %v3219, 0.125
    %3221 = vrot.lane.b32.xlu0 %v3169, 48
    %v3222 = vpop.permute.xlu0 %3221
    %v3224 = vmul.f32 %v3218, %v3222
    %v3225 = vld [vmem:[%s7] sm:$0xff]
    %v3226 = vld [vmem:[%s7 + $0x8] sm:$0xff]
    %3228 = vrot.lane.b32.xlu0 %v3224, 80
    %v3229 = vpop.permute.xlu0 %3228
    %v3230 = vsel %vm65, %v3229, 0
    %3232 = vmatpush.msra.mxu0 0.0
    %3233 = vmatpush.msra.mxu0 0.0
    %3234 = vmatpush.msra.mxu0 0.0
    %3235 = vmatpush.msra.mxu0 0.0
    %3236 = vmatpush.msra.mxu0 0.0
    %3237 = vmatpush.msra.mxu0 0.0
    %3238 = vmatpush.msra.mxu0 0.0
    %3239 = vmatpush.msra.mxu0 0.0
    %3240 = vmatpush.msra.mxu0 0.0
    %3241 = vmatpush.msra.mxu0 0.0
    %3242 = vmatpush.msra.mxu0 0.0
    %3243 = vmatpush.msra.mxu0 0.0
    %3244 = vmatpush.msra.mxu0 0.0
    %3245 = vmatpush.msra.mxu0 0.0
    %3246 = vmatpush.msra.mxu0 %v3226
    %3247 = vmatpush.msra.mxu0 %v3225
    %3248 = vmatmul.f32.gmra.mxu0 %v3230
    %v3249 = vpop.f32.mrf.mxu0
    %v3250 = vadd.f32 0.0, %v3249
    %3251 = vdwg.mxu0
    %3253 = vrot.lane.b32.xlu0 %v3250, 80
    %v3254 = vpop.permute.xlu0 %3253
    %v3256 = vadd.f32 %v3066, %v3254
    %v3257 = vtanh.pop %v3256
    %v3258 = vmul.f32 %v3220, 1024.0
    %v3259 = vcvt.f32.s32.to.zero.pseudo %v3258
    %3260 = vrot.lane.b32.xlu0 %v3259, 112
    %v3261 = vpop.permute.xlu0 %3260
    %v3262 = vmul.u32 %v3153, %v3261
    %v3263 = vmul.u32 %v3151, %v3261
    %v3264 = vshra.s32 %v3262, 10
    %v3265 = vadd.s32 %v3263, %v3264
    %v3266 = vand.u32 %v3262, 1023
    %v3267 = vsub.f32 1.0, %v3220
    %3269 = vrot.lane.b32.xlu0 %v3257, 80
    %v3270 = vpop.permute.xlu0 %3269
    %v3272 = vmul.f32 %v3267, %v3270
    %v3273 = vmul.f32 %v3272, 8388608.0
    %v3274 = vcvt.f32.s32.to.zero.pseudo %v3273
    %3275 = vrot.lane.b32.xlu0 %v3274, 112
    %v3276 = vpop.permute.xlu0 %3275
    %v3277 = vadd.s32 %v3265, %v3276
    %v3278 = vsel %vm65, %v3167, %v3277
    %v3279 = vsel %vm65, %v3158, %v3266
    %s3280 = scalar_lea.vmem [#allocation6], 24
    %3281 = vst.msk [vmem:[%s3280] sm:$0x3] %vm55, %v3279
    %v3282 = vlog2.pop %v3114
    %v3283 = vmul.f32 %v3282, 0.6931472
    %v3284 = vmul.f32 %v3283, %v284
    %v3285 = vsub.f32 0.0, %v3284
    %v3286 = vadd.f32 %v3062, %v3285
    %v3287 = vlog2.pop %v3220
    %v3288 = vmul.f32 %v3287, 0.6931472
    %v3289 = vmul.f32 %v3288, %v284
    %v3290 = vsub.f32 0.0, %v3289
    %3292 = vrot.lane.b32.xlu0 %v3290, 96
    %v3293 = vpop.permute.xlu0 %3292
    %v3295 = vadd.f32 %v3286, %v3293
    %v3296 = vcvt.s32.f32 %v3278
    %v3297 = vmul.f32 %v3296, 1.1920929e-07
    %v3298 = vcvt.s32.f32 %v3044
    %v3299 = vmul.f32 %v3298, 1.1920929e-07
    %v3300 = vld [vmem:[%s2] sm:$0xff]
    %v3301 = vld [vmem:[%s2 + $0x8] sm:$0xff]
    %v3302 = vld [vmem:[%s2 + $0x10] sm:$0xff]
    %v3303 = vld [vmem:[%s2 + $0x18] sm:$0xff]
    %v3304 = vld [vmem:[%s3] sm:$0x1]
    %v3306 = vperm.slane %v3304, 0
    %v3309 = vsel %vm309, %v3297, 0
    %3311 = vmatpush.msra.mxu0 0.0
    %3312 = vmatpush.msra.mxu0 0.0
    %3313 = vmatpush.msra.mxu0 0.0
    %3314 = vmatpush.msra.mxu0 0.0
    %3315 = vmatpush.msra.mxu0 0.0
    %3316 = vmatpush.msra.mxu0 0.0
    %3317 = vmatpush.msra.mxu0 0.0
    %3318 = vmatpush.msra.mxu0 0.0
    %3319 = vmatpush.msra.mxu0 0.0
    %3320 = vmatpush.msra.mxu0 0.0
    %3321 = vmatpush.msra.mxu0 0.0
    %3322 = vmatpush.msra.mxu0 0.0
    %3323 = vmatpush.msra.mxu0 %v3303
    %3324 = vmatpush.msra.mxu0 %v3302
    %3325 = vmatpush.msra.mxu0 %v3301
    %3326 = vmatpush.msra.mxu0 %v3300
    %3327 = vmatmul.f32.gmra.mxu0 %v3309
    %v3328 = vpop.f32.mrf.mxu0
    %v3329 = vadd.f32 %v3306, %v3328
    %3330 = vdwg.mxu0
    %v3331 = vld [vmem:[%s333] sm:$0xff]
    %v3332 = vld [vmem:[%s333 + $0x8] sm:$0xff]
    %3334 = vrot.lane.b32.xlu0 %v3299, 112
    %v3335 = vpop.permute.xlu0 %3334
    %v3336 = vsel %vm65, %v3335, 0
    %3338 = vmatpush.msra.mxu0 0.0
    %3339 = vmatpush.msra.mxu0 0.0
    %3340 = vmatpush.msra.mxu0 0.0
    %3341 = vmatpush.msra.mxu0 0.0
    %3342 = vmatpush.msra.mxu0 0.0
    %3343 = vmatpush.msra.mxu0 0.0
    %3344 = vmatpush.msra.mxu0 0.0
    %3345 = vmatpush.msra.mxu0 0.0
    %3346 = vmatpush.msra.mxu0 0.0
    %3347 = vmatpush.msra.mxu0 0.0
    %3348 = vmatpush.msra.mxu0 0.0
    %3349 = vmatpush.msra.mxu0 0.0
    %3350 = vmatpush.msra.mxu0 0.0
    %3351 = vmatpush.msra.mxu0 0.0
    %3352 = vmatpush.msra.mxu0 %v3332
    %3353 = vmatpush.msra.mxu0 %v3331
    %3354 = vmatmul.f32.gmra.mxu0 %v3336
    %v3355 = vpop.f32.mrf.mxu0
    %v3356 = vadd.f32 0.0, %v3355
    %3357 = vdwg.mxu0
    %v3358 = vadd.f32 %v3329, %v3356
    %v3359 = vxor.u32 %v3358, 2147483648
    %v3360 = vmul.f32 %v3359, 1.442695
    %v3361 = vpow.pop %v3360
    %v3362 = vadd.f32 %v3361, 1.0
    %v3363 = vrcp.pop %v3362
    %v3364 = vmul.f32 %v3362, %v3363
    %v3365 = vsub.f32 1.0, %v3364
    %v3366 = vmul.f32 %v3363, %v3365
    %v3367 = vadd.f32 %v3363, %v3366
    %vm3368 = vweird.f32 %v3362
    %vm3369 = vweird.f32 %v3363
    %vm3370 = vmor %vm3368, %vm3369
    %v3371 = vsel %vm3370, %v3363, %v3367
    %v3372 = vand.u32 2147483647, %v3362
    %vm3373 = vcmp.eq.f32.partialorder %v3372, 8.507059e+37
    %v3374 = vand.u32 %v3362, 2147483648
    %v3375 = vor.u32 1.1754944e-38, %v3374
    %v3376 = vsel %vm3373, %v3375, %v3371
    %v3377 = vmul.f32 1.0, %v3376
    %v3378 = vmul.f32 %v3377, 0.875
    %v3379 = vadd.f32 %v3378, 0.125
    %v3380 = vmul.f32 %v3377, %v3299
    %v3381 = vld [vmem:[%s384] sm:$0xff]
    %v3382 = vld [vmem:[%s384 + $0x8] sm:$0xff]
    %3384 = vrot.lane.b32.xlu0 %v3380, 112
    %v3385 = vpop.permute.xlu0 %3384
    %v3386 = vsel %vm65, %v3385, 0
    %3388 = vmatpush.msra.mxu0 0.0
    %3389 = vmatpush.msra.mxu0 0.0
    %3390 = vmatpush.msra.mxu0 0.0
    %3391 = vmatpush.msra.mxu0 0.0
    %3392 = vmatpush.msra.mxu0 0.0
    %3393 = vmatpush.msra.mxu0 0.0
    %3394 = vmatpush.msra.mxu0 0.0
    %3395 = vmatpush.msra.mxu0 0.0
    %3396 = vmatpush.msra.mxu0 0.0
    %3397 = vmatpush.msra.mxu0 0.0
    %3398 = vmatpush.msra.mxu0 0.0
    %3399 = vmatpush.msra.mxu0 0.0
    %3400 = vmatpush.msra.mxu0 0.0
    %3401 = vmatpush.msra.mxu0 0.0
    %3402 = vmatpush.msra.mxu0 %v3382
    %3403 = vmatpush.msra.mxu0 %v3381
    %3404 = vmatmul.f32.gmra.mxu0 %v3386
    %v3405 = vpop.f32.mrf.mxu0
    %v3406 = vadd.f32 0.0, %v3405
    %3407 = vdwg.mxu0
    %3409 = vrot.lane.b32.xlu0 %v3406, 64
    %v3410 = vpop.permute.xlu0 %3409
    %v3412 = vadd.f32 %v3329, %v3410
    %v3413 = vtanh.pop %v3412
    %v3414 = vmul.f32 %v3379, 1024.0
    %v3415 = vcvt.f32.s32.to.zero.pseudo %v3414
    %v3416 = vshra.s32 %v3044, 10
    %v3417 = vmul.u32 %v3416, 1024
    %v3418 = vsub.s32 %v3044, %v3417
    %v3419 = vmul.u32 %v3418, %v3415
    %v3420 = vmul.u32 %v3416, %v3415
    %v3421 = vshra.s32 %v3419, 10
    %v3422 = vadd.s32 %v3420, %v3421
    %v3423 = vand.u32 %v3419, 1023
    %v3424 = vsub.f32 1.0, %v3379
    %3426 = vrot.lane.b32.xlu0 %v3413, 64
    %v3427 = vpop.permute.xlu0 %3426
    %v3429 = vmul.f32 %v3424, %v3427
    %v3430 = vmul.f32 %v3429, 8388608.0
    %v3431 = vcvt.f32.s32.to.zero.pseudo %v3430
    %v3432 = vadd.s32 %v3422, %v3431
    %v3433 = vcvt.s32.f32 %v3432
    %v3434 = vmul.f32 %v3433, 1.1920929e-07
    %v3435 = vld [vmem:[%s439] sm:$0xff]
    %v3436 = vld [vmem:[%s439 + $0x8] sm:$0xff]
    %v3438 = vsel %vm65, %v3434, 0
    %3440 = vmatpush.msra.mxu0 0.0
    %3441 = vmatpush.msra.mxu0 0.0
    %3442 = vmatpush.msra.mxu0 0.0
    %3443 = vmatpush.msra.mxu0 0.0
    %3444 = vmatpush.msra.mxu0 0.0
    %3445 = vmatpush.msra.mxu0 0.0
    %3446 = vmatpush.msra.mxu0 0.0
    %3447 = vmatpush.msra.mxu0 0.0
    %3448 = vmatpush.msra.mxu0 0.0
    %3449 = vmatpush.msra.mxu0 0.0
    %3450 = vmatpush.msra.mxu0 0.0
    %3451 = vmatpush.msra.mxu0 0.0
    %3452 = vmatpush.msra.mxu0 0.0
    %3453 = vmatpush.msra.mxu0 0.0
    %3454 = vmatpush.msra.mxu0 %v3436
    %3455 = vmatpush.msra.mxu0 %v3435
    %3456 = vmatmul.f32.gmra.mxu0 %v3438
    %v3457 = vpop.f32.mrf.mxu0
    %v3458 = vadd.f32 0.0, %v3457
    %3459 = vdwg.mxu0
    %3461 = vrot.lane.b32.xlu0 %v3458, 32
    %v3462 = vpop.permute.xlu0 %3461
    %v3464 = vadd.f32 %v3329, %v3462
    %v3465 = vxor.u32 %v3464, 2147483648
    %v3466 = vmul.f32 %v3465, 1.442695
    %v3467 = vpow.pop %v3466
    %v3468 = vadd.f32 %v3467, 1.0
    %v3469 = vrcp.pop %v3468
    %v3470 = vmul.f32 %v3468, %v3469
    %v3471 = vsub.f32 1.0, %v3470
    %v3472 = vmul.f32 %v3469, %v3471
    %v3473 = vadd.f32 %v3469, %v3472
    %vm3474 = vweird.f32 %v3468
    %vm3475 = vweird.f32 %v3469
    %vm3476 = vmor %vm3474, %vm3475
    %v3477 = vsel %vm3476, %v3469, %v3473
    %v3478 = vand.u32 2147483647, %v3468
    %vm3479 = vcmp.eq.f32.partialorder %v3478, 8.507059e+37
    %v3480 = vand.u32 %v3468, 2147483648
    %v3481 = vor.u32 1.1754944e-38, %v3480
    %v3482 = vsel %vm3479, %v3481, %v3477
    %v3483 = vmul.f32 1.0, %v3482
    %v3484 = vmul.f32 %v3483, 0.875
    %v3485 = vadd.f32 %v3484, 0.125
    %3486 = vrot.lane.b32.xlu0 %v3434, 48
    %v3487 = vpop.permute.xlu0 %3486
    %v3489 = vmul.f32 %v3483, %v3487
    %v3490 = vld [vmem:[%s495] sm:$0xff]
    %v3491 = vld [vmem:[%s495 + $0x8] sm:$0xff]
    %3493 = vrot.lane.b32.xlu0 %v3489, 80
    %v3494 = vpop.permute.xlu0 %3493
    %v3495 = vsel %vm65, %v3494, 0
    %3497 = vmatpush.msra.mxu0 0.0
    %3498 = vmatpush.msra.mxu0 0.0
    %3499 = vmatpush.msra.mxu0 0.0
    %3500 = vmatpush.msra.mxu0 0.0
    %3501 = vmatpush.msra.mxu0 0.0
    %3502 = vmatpush.msra.mxu0 0.0
    %3503 = vmatpush.msra.mxu0 0.0
    %3504 = vmatpush.msra.mxu0 0.0
    %3505 = vmatpush.msra.mxu0 0.0
    %3506 = vmatpush.msra.mxu0 0.0
    %3507 = vmatpush.msra.mxu0 0.0
    %3508 = vmatpush.msra.mxu0 0.0
    %3509 = vmatpush.msra.mxu0 0.0
    %3510 = vmatpush.msra.mxu0 0.0
    %3511 = vmatpush.msra.mxu0 %v3491
    %3512 = vmatpush.msra.mxu0 %v3490
    %3513 = vmatmul.f32.gmra.mxu0 %v3495
    %v3514 = vpop.f32.mrf.mxu0
    %v3515 = vadd.f32 0.0, %v3514
    %3516 = vdwg.mxu0
    %3518 = vrot.lane.b32.xlu0 %v3515, 80
    %v3519 = vpop.permute.xlu0 %3518
    %v3521 = vadd.f32 %v3329, %v3519
    %v3522 = vtanh.pop %v3521
    %v3523 = vmul.f32 %v3485, 1024.0
    %v3524 = vcvt.f32.s32.to.zero.pseudo %v3523
    %3525 = vrot.lane.b32.xlu0 %v3524, 112
    %v3526 = vpop.permute.xlu0 %3525
    %v3527 = vmul.u32 %v3418, %v3526
    %v3528 = vmul.u32 %v3416, %v3526
    %v3529 = vshra.s32 %v3527, 10
    %v3530 = vadd.s32 %v3528, %v3529
    %v3531 = vand.u32 %v3527, 1023
    %v3532 = vsub.f32 1.0, %v3485
    %3534 = vrot.lane.b32.xlu0 %v3522, 80
    %v3535 = vpop.permute.xlu0 %3534
    %v3537 = vmul.f32 %v3532, %v3535
    %v3538 = vmul.f32 %v3537, 8388608.0
    %v3539 = vcvt.f32.s32.to.zero.pseudo %v3538
    %3540 = vrot.lane.b32.xlu0 %v3539, 112
    %v3541 = vpop.permute.xlu0 %3540
    %v3542 = vadd.s32 %v3530, %v3541
    %v3543 = vsel %vm65, %v3432, %v3542
    %v3544 = vsel %vm65, %v3423, %v3531
    %s3545 = scalar_lea.vmem [#allocation6], 26
    %3546 = vst.msk [vmem:[%s3545] sm:$0x3] %vm55, %v3544
    %v3547 = vlog2.pop %v3379
    %v3548 = vmul.f32 %v3547, 0.6931472
    %v3549 = vmul.f32 %v3548, %v284
    %v3550 = vsub.f32 0.0, %v3549
    %v3551 = vmul.f32 %v3550, %v54
    %v3552 = vadd.f32 %v3295, %v3551
    %v3553 = vlog2.pop %v3485
    %v3554 = vmul.f32 %v3553, 0.6931472
    %v3555 = vmul.f32 %v3554, %v284
    %v3556 = vsub.f32 0.0, %v3555
    %3558 = vrot.lane.b32.xlu0 %v3556, 96
    %v3559 = vpop.permute.xlu0 %3558
    %v3561 = vadd.f32 %v3552, %v3559
    %s3562 = scalar_lea.vmem [#allocation4], 14
    %3563 = vst.msk [vmem:[%s3562] sm:$0x3] %vm55, %v3543
    %s3564 = scalar_lea.vmem %s0, 14
    %v3565 = vld [vmem:[%s3564] sm:$0x3]
    %v3566 = vld [vmem:[%s4] sm:$0xff]
    %v3567 = vld [vmem:[%s4 + $0x8] sm:$0xff]
    %3568 = vrot.lane.b32.xlu0 %v3297, 112
    %v3569 = vpop.permute.xlu0 %3568
    %v3570 = vsel %vm65, %v3569, 0
    %3572 = vmatpush.msra.mxu0 0.0
    %3573 = vmatpush.msra.mxu0 0.0
    %3574 = vmatpush.msra.mxu0 0.0
    %3575 = vmatpush.msra.mxu0 0.0
    %3576 = vmatpush.msra.mxu0 0.0
    %3577 = vmatpush.msra.mxu0 0.0
    %3578 = vmatpush.msra.mxu0 0.0
    %3579 = vmatpush.msra.mxu0 0.0
    %3580 = vmatpush.msra.mxu0 0.0
    %3581 = vmatpush.msra.mxu0 0.0
    %3582 = vmatpush.msra.mxu0 0.0
    %3583 = vmatpush.msra.mxu0 0.0
    %3584 = vmatpush.msra.mxu0 0.0
    %3585 = vmatpush.msra.mxu0 0.0
    %3586 = vmatpush.msra.mxu0 %v3567
    %3587 = vmatpush.msra.mxu0 %v3566
    %3588 = vmatmul.f32.gmra.mxu0 %v3570
    %v3589 = vpop.f32.mrf.mxu0
    %v3590 = vadd.f32 0.0, %v3589
    %3591 = vdwg.mxu0
    %v3592 = vadd.f32 %v3565, %v3590
    %v3593 = vxor.u32 %v3592, 2147483648
    %v3594 = vmul.f32 %v3593, 1.442695
    %v3595 = vpow.pop %v3594
    %v3596 = vadd.f32 %v3595, 1.0
    %v3597 = vrcp.pop %v3596
    %v3598 = vmul.f32 %v3596, %v3597
    %v3599 = vsub.f32 1.0, %v3598
    %v3600 = vmul.f32 %v3597, %v3599
    %v3601 = vadd.f32 %v3597, %v3600
    %vm3602 = vweird.f32 %v3596
    %vm3603 = vweird.f32 %v3597
    %vm3604 = vmor %vm3602, %vm3603
    %v3605 = vsel %vm3604, %v3597, %v3601
    %v3606 = vand.u32 2147483647, %v3596
    %vm3607 = vcmp.eq.f32.partialorder %v3606, 8.507059e+37
    %v3608 = vand.u32 %v3596, 2147483648
    %v3609 = vor.u32 1.1754944e-38, %v3608
    %v3610 = vsel %vm3607, %v3609, %v3605
    %v3611 = vmul.f32 1.0, %v3610
    %v3612 = vmul.f32 %v3611, 0.875
    %v3613 = vadd.f32 %v3612, 0.125
    %v3614 = vmul.f32 %v3611, %v3297
    %v3615 = vld [vmem:[%s5] sm:$0xff]
    %v3616 = vld [vmem:[%s5 + $0x8] sm:$0xff]
    %3618 = vrot.lane.b32.xlu0 %v3614, 112
    %v3619 = vpop.permute.xlu0 %3618
    %v3620 = vsel %vm65, %v3619, 0
    %3622 = vmatpush.msra.mxu0 0.0
    %3623 = vmatpush.msra.mxu0 0.0
    %3624 = vmatpush.msra.mxu0 0.0
    %3625 = vmatpush.msra.mxu0 0.0
    %3626 = vmatpush.msra.mxu0 0.0
    %3627 = vmatpush.msra.mxu0 0.0
    %3628 = vmatpush.msra.mxu0 0.0
    %3629 = vmatpush.msra.mxu0 0.0
    %3630 = vmatpush.msra.mxu0 0.0
    %3631 = vmatpush.msra.mxu0 0.0
    %3632 = vmatpush.msra.mxu0 0.0
    %3633 = vmatpush.msra.mxu0 0.0
    %3634 = vmatpush.msra.mxu0 0.0
    %3635 = vmatpush.msra.mxu0 0.0
    %3636 = vmatpush.msra.mxu0 %v3616
    %3637 = vmatpush.msra.mxu0 %v3615
    %3638 = vmatmul.f32.gmra.mxu0 %v3620
    %v3639 = vpop.f32.mrf.mxu0
    %v3640 = vadd.f32 0.0, %v3639
    %3641 = vdwg.mxu0
    %3643 = vrot.lane.b32.xlu0 %v3640, 64
    %v3644 = vpop.permute.xlu0 %3643
    %v3646 = vadd.f32 %v3565, %v3644
    %v3647 = vtanh.pop %v3646
    %v3648 = vmul.f32 %v3613, 1024.0
    %v3649 = vcvt.f32.s32.to.zero.pseudo %v3648
    %v3650 = vshra.s32 %v3278, 10
    %v3651 = vmul.u32 %v3650, 1024
    %v3652 = vsub.s32 %v3278, %v3651
    %v3653 = vmul.u32 %v3652, %v3649
    %v3654 = vmul.u32 %v3650, %v3649
    %v3655 = vshra.s32 %v3653, 10
    %v3656 = vadd.s32 %v3654, %v3655
    %v3657 = vand.u32 %v3653, 1023
    %v3658 = vsub.f32 1.0, %v3613
    %3660 = vrot.lane.b32.xlu0 %v3647, 64
    %v3661 = vpop.permute.xlu0 %3660
    %v3663 = vmul.f32 %v3658, %v3661
    %v3664 = vmul.f32 %v3663, 8388608.0
    %v3665 = vcvt.f32.s32.to.zero.pseudo %v3664
    %v3666 = vadd.s32 %v3656, %v3665
    %v3667 = vcvt.s32.f32 %v3666
    %v3668 = vmul.f32 %v3667, 1.1920929e-07
    %v3669 = vld [vmem:[%s6] sm:$0xff]
    %v3670 = vld [vmem:[%s6 + $0x8] sm:$0xff]
    %v3672 = vsel %vm65, %v3668, 0
    %3674 = vmatpush.msra.mxu0 0.0
    %3675 = vmatpush.msra.mxu0 0.0
    %3676 = vmatpush.msra.mxu0 0.0
    %3677 = vmatpush.msra.mxu0 0.0
    %3678 = vmatpush.msra.mxu0 0.0
    %3679 = vmatpush.msra.mxu0 0.0
    %3680 = vmatpush.msra.mxu0 0.0
    %3681 = vmatpush.msra.mxu0 0.0
    %3682 = vmatpush.msra.mxu0 0.0
    %3683 = vmatpush.msra.mxu0 0.0
    %3684 = vmatpush.msra.mxu0 0.0
    %3685 = vmatpush.msra.mxu0 0.0
    %3686 = vmatpush.msra.mxu0 0.0
    %3687 = vmatpush.msra.mxu0 0.0
    %3688 = vmatpush.msra.mxu0 %v3670
    %3689 = vmatpush.msra.mxu0 %v3669
    %3690 = vmatmul.f32.gmra.mxu0 %v3672
    %v3691 = vpop.f32.mrf.mxu0
    %v3692 = vadd.f32 0.0, %v3691
    %3693 = vdwg.mxu0
    %3695 = vrot.lane.b32.xlu0 %v3692, 32
    %v3696 = vpop.permute.xlu0 %3695
    %v3698 = vadd.f32 %v3565, %v3696
    %v3699 = vxor.u32 %v3698, 2147483648
    %v3700 = vmul.f32 %v3699, 1.442695
    %v3701 = vpow.pop %v3700
    %v3702 = vadd.f32 %v3701, 1.0
    %v3703 = vrcp.pop %v3702
    %v3704 = vmul.f32 %v3702, %v3703
    %v3705 = vsub.f32 1.0, %v3704
    %v3706 = vmul.f32 %v3703, %v3705
    %v3707 = vadd.f32 %v3703, %v3706
    %vm3708 = vweird.f32 %v3702
    %vm3709 = vweird.f32 %v3703
    %vm3710 = vmor %vm3708, %vm3709
    %v3711 = vsel %vm3710, %v3703, %v3707
    %v3712 = vand.u32 2147483647, %v3702
    %vm3713 = vcmp.eq.f32.partialorder %v3712, 8.507059e+37
    %v3714 = vand.u32 %v3702, 2147483648
    %v3715 = vor.u32 1.1754944e-38, %v3714
    %v3716 = vsel %vm3713, %v3715, %v3711
    %v3717 = vmul.f32 1.0, %v3716
    %v3718 = vmul.f32 %v3717, 0.875
    %v3719 = vadd.f32 %v3718, 0.125
    %3720 = vrot.lane.b32.xlu0 %v3668, 48
    %v3721 = vpop.permute.xlu0 %3720
    %v3723 = vmul.f32 %v3717, %v3721
    %v3724 = vld [vmem:[%s7] sm:$0xff]
    %v3725 = vld [vmem:[%s7 + $0x8] sm:$0xff]
    %3727 = vrot.lane.b32.xlu0 %v3723, 80
    %v3728 = vpop.permute.xlu0 %3727
    %v3729 = vsel %vm65, %v3728, 0
    %3731 = vmatpush.msra.mxu0 0.0
    %3732 = vmatpush.msra.mxu0 0.0
    %3733 = vmatpush.msra.mxu0 0.0
    %3734 = vmatpush.msra.mxu0 0.0
    %3735 = vmatpush.msra.mxu0 0.0
    %3736 = vmatpush.msra.mxu0 0.0
    %3737 = vmatpush.msra.mxu0 0.0
    %3738 = vmatpush.msra.mxu0 0.0
    %3739 = vmatpush.msra.mxu0 0.0
    %3740 = vmatpush.msra.mxu0 0.0
    %3741 = vmatpush.msra.mxu0 0.0
    %3742 = vmatpush.msra.mxu0 0.0
    %3743 = vmatpush.msra.mxu0 0.0
    %3744 = vmatpush.msra.mxu0 0.0
    %3745 = vmatpush.msra.mxu0 %v3725
    %3746 = vmatpush.msra.mxu0 %v3724
    %3747 = vmatmul.f32.gmra.mxu0 %v3729
    %v3748 = vpop.f32.mrf.mxu0
    %v3749 = vadd.f32 0.0, %v3748
    %3750 = vdwg.mxu0
    %3752 = vrot.lane.b32.xlu0 %v3749, 80
    %v3753 = vpop.permute.xlu0 %3752
    %v3755 = vadd.f32 %v3565, %v3753
    %v3756 = vtanh.pop %v3755
    %v3757 = vmul.f32 %v3719, 1024.0
    %v3758 = vcvt.f32.s32.to.zero.pseudo %v3757
    %3759 = vrot.lane.b32.xlu0 %v3758, 112
    %v3760 = vpop.permute.xlu0 %3759
    %v3761 = vmul.u32 %v3652, %v3760
    %v3762 = vmul.u32 %v3650, %v3760
    %v3763 = vshra.s32 %v3761, 10
    %v3764 = vadd.s32 %v3762, %v3763
    %v3765 = vand.u32 %v3761, 1023
    %v3766 = vsub.f32 1.0, %v3719
    %3768 = vrot.lane.b32.xlu0 %v3756, 80
    %v3769 = vpop.permute.xlu0 %3768
    %v3771 = vmul.f32 %v3766, %v3769
    %v3772 = vmul.f32 %v3771, 8388608.0
    %v3773 = vcvt.f32.s32.to.zero.pseudo %v3772
    %3774 = vrot.lane.b32.xlu0 %v3773, 112
    %v3775 = vpop.permute.xlu0 %3774
    %v3776 = vadd.s32 %v3764, %v3775
    %v3777 = vsel %vm65, %v3666, %v3776
    %v3778 = vsel %vm65, %v3657, %v3765
    %s3779 = scalar_lea.vmem [#allocation6], 28
    %3780 = vst.msk [vmem:[%s3779] sm:$0x3] %vm55, %v3778
    %v3781 = vlog2.pop %v3613
    %v3782 = vmul.f32 %v3781, 0.6931472
    %v3783 = vmul.f32 %v3782, %v284
    %v3784 = vsub.f32 0.0, %v3783
    %v3785 = vadd.f32 %v3561, %v3784
    %v3786 = vlog2.pop %v3719
    %v3787 = vmul.f32 %v3786, 0.6931472
    %v3788 = vmul.f32 %v3787, %v284
    %v3789 = vsub.f32 0.0, %v3788
    %3791 = vrot.lane.b32.xlu0 %v3789, 96
    %v3792 = vpop.permute.xlu0 %3791
    %v3794 = vadd.f32 %v3785, %v3792
    %v3795 = vcvt.s32.f32 %v3777
    %v3796 = vmul.f32 %v3795, 1.1920929e-07
    %v3797 = vcvt.s32.f32 %v3543
    %v3798 = vmul.f32 %v3797, 1.1920929e-07
    %v3799 = vld [vmem:[%s2] sm:$0xff]
    %v3800 = vld [vmem:[%s2 + $0x8] sm:$0xff]
    %v3801 = vld [vmem:[%s2 + $0x10] sm:$0xff]
    %v3802 = vld [vmem:[%s2 + $0x18] sm:$0xff]
    %v3803 = vld [vmem:[%s3] sm:$0x1]
    %v3805 = vperm.slane %v3803, 0
    %v3808 = vsel %vm309, %v3796, 0
    %3810 = vmatpush.msra.mxu0 0.0
    %3811 = vmatpush.msra.mxu0 0.0
    %3812 = vmatpush.msra.mxu0 0.0
    %3813 = vmatpush.msra.mxu0 0.0
    %3814 = vmatpush.msra.mxu0 0.0
    %3815 = vmatpush.msra.mxu0 0.0
    %3816 = vmatpush.msra.mxu0 0.0
    %3817 = vmatpush.msra.mxu0 0.0
    %3818 = vmatpush.msra.mxu0 0.0
    %3819 = vmatpush.msra.mxu0 0.0
    %3820 = vmatpush.msra.mxu0 0.0
    %3821 = vmatpush.msra.mxu0 0.0
    %3822 = vmatpush.msra.mxu0 %v3802
    %3823 = vmatpush.msra.mxu0 %v3801
    %3824 = vmatpush.msra.mxu0 %v3800
    %3825 = vmatpush.msra.mxu0 %v3799
    %3826 = vmatmul.f32.gmra.mxu0 %v3808
    %v3827 = vpop.f32.mrf.mxu0
    %v3828 = vadd.f32 %v3805, %v3827
    %3829 = vdwg.mxu0
    %v3830 = vld [vmem:[%s333] sm:$0xff]
    %v3831 = vld [vmem:[%s333 + $0x8] sm:$0xff]
    %3833 = vrot.lane.b32.xlu0 %v3798, 112
    %v3834 = vpop.permute.xlu0 %3833
    %v3835 = vsel %vm65, %v3834, 0
    %3837 = vmatpush.msra.mxu0 0.0
    %3838 = vmatpush.msra.mxu0 0.0
    %3839 = vmatpush.msra.mxu0 0.0
    %3840 = vmatpush.msra.mxu0 0.0
    %3841 = vmatpush.msra.mxu0 0.0
    %3842 = vmatpush.msra.mxu0 0.0
    %3843 = vmatpush.msra.mxu0 0.0
    %3844 = vmatpush.msra.mxu0 0.0
    %3845 = vmatpush.msra.mxu0 0.0
    %3846 = vmatpush.msra.mxu0 0.0
    %3847 = vmatpush.msra.mxu0 0.0
    %3848 = vmatpush.msra.mxu0 0.0
    %3849 = vmatpush.msra.mxu0 0.0
    %3850 = vmatpush.msra.mxu0 0.0
    %3851 = vmatpush.msra.mxu0 %v3831
    %3852 = vmatpush.msra.mxu0 %v3830
    %3853 = vmatmul.f32.gmra.mxu0 %v3835
    %v3854 = vpop.f32.mrf.mxu0
    %v3855 = vadd.f32 0.0, %v3854
    %3856 = vdwg.mxu0
    %v3857 = vadd.f32 %v3828, %v3855
    %v3858 = vxor.u32 %v3857, 2147483648
    %v3859 = vmul.f32 %v3858, 1.442695
    %v3860 = vpow.pop %v3859
    %v3861 = vadd.f32 %v3860, 1.0
    %v3862 = vrcp.pop %v3861
    %v3863 = vmul.f32 %v3861, %v3862
    %v3864 = vsub.f32 1.0, %v3863
    %v3865 = vmul.f32 %v3862, %v3864
    %v3866 = vadd.f32 %v3862, %v3865
    %vm3867 = vweird.f32 %v3861
    %vm3868 = vweird.f32 %v3862
    %vm3869 = vmor %vm3867, %vm3868
    %v3870 = vsel %vm3869, %v3862, %v3866
    %v3871 = vand.u32 2147483647, %v3861
    %vm3872 = vcmp.eq.f32.partialorder %v3871, 8.507059e+37
    %v3873 = vand.u32 %v3861, 2147483648
    %v3874 = vor.u32 1.1754944e-38, %v3873
    %v3875 = vsel %vm3872, %v3874, %v3870
    %v3876 = vmul.f32 1.0, %v3875
    %v3877 = vmul.f32 %v3876, 0.875
    %v3878 = vadd.f32 %v3877, 0.125
    %v3879 = vmul.f32 %v3876, %v3798
    %v3880 = vld [vmem:[%s384] sm:$0xff]
    %v3881 = vld [vmem:[%s384 + $0x8] sm:$0xff]
    %3883 = vrot.lane.b32.xlu0 %v3879, 112
    %v3884 = vpop.permute.xlu0 %3883
    %v3885 = vsel %vm65, %v3884, 0
    %3887 = vmatpush.msra.mxu0 0.0
    %3888 = vmatpush.msra.mxu0 0.0
    %3889 = vmatpush.msra.mxu0 0.0
    %3890 = vmatpush.msra.mxu0 0.0
    %3891 = vmatpush.msra.mxu0 0.0
    %3892 = vmatpush.msra.mxu0 0.0
    %3893 = vmatpush.msra.mxu0 0.0
    %3894 = vmatpush.msra.mxu0 0.0
    %3895 = vmatpush.msra.mxu0 0.0
    %3896 = vmatpush.msra.mxu0 0.0
    %3897 = vmatpush.msra.mxu0 0.0
    %3898 = vmatpush.msra.mxu0 0.0
    %3899 = vmatpush.msra.mxu0 0.0
    %3900 = vmatpush.msra.mxu0 0.0
    %3901 = vmatpush.msra.mxu0 %v3881
    %3902 = vmatpush.msra.mxu0 %v3880
    %3903 = vmatmul.f32.gmra.mxu0 %v3885
    %v3904 = vpop.f32.mrf.mxu0
    %v3905 = vadd.f32 0.0, %v3904
    %3906 = vdwg.mxu0
    %3908 = vrot.lane.b32.xlu0 %v3905, 64
    %v3909 = vpop.permute.xlu0 %3908
    %v3911 = vadd.f32 %v3828, %v3909
    %v3912 = vtanh.pop %v3911
    %v3913 = vmul.f32 %v3878, 1024.0
    %v3914 = vcvt.f32.s32.to.zero.pseudo %v3913
    %v3915 = vshra.s32 %v3543, 10
    %v3916 = vmul.u32 %v3915, 1024
    %v3917 = vsub.s32 %v3543, %v3916
    %v3918 = vmul.u32 %v3917, %v3914
    %v3919 = vmul.u32 %v3915, %v3914
    %v3920 = vshra.s32 %v3918, 10
    %v3921 = vadd.s32 %v3919, %v3920
    %v3922 = vand.u32 %v3918, 1023
    %v3923 = vsub.f32 1.0, %v3878
    %3925 = vrot.lane.b32.xlu0 %v3912, 64
    %v3926 = vpop.permute.xlu0 %3925
    %v3928 = vmul.f32 %v3923, %v3926
    %v3929 = vmul.f32 %v3928, 8388608.0
    %v3930 = vcvt.f32.s32.to.zero.pseudo %v3929
    %v3931 = vadd.s32 %v3921, %v3930
    %v3932 = vcvt.s32.f32 %v3931
    %v3933 = vmul.f32 %v3932, 1.1920929e-07
    %v3934 = vld [vmem:[%s439] sm:$0xff]
    %v3935 = vld [vmem:[%s439 + $0x8] sm:$0xff]
    %v3937 = vsel %vm65, %v3933, 0
    %3939 = vmatpush.msra.mxu0 0.0
    %3940 = vmatpush.msra.mxu0 0.0
    %3941 = vmatpush.msra.mxu0 0.0
    %3942 = vmatpush.msra.mxu0 0.0
    %3943 = vmatpush.msra.mxu0 0.0
    %3944 = vmatpush.msra.mxu0 0.0
    %3945 = vmatpush.msra.mxu0 0.0
    %3946 = vmatpush.msra.mxu0 0.0
    %3947 = vmatpush.msra.mxu0 0.0
    %3948 = vmatpush.msra.mxu0 0.0
    %3949 = vmatpush.msra.mxu0 0.0
    %3950 = vmatpush.msra.mxu0 0.0
    %3951 = vmatpush.msra.mxu0 0.0
    %3952 = vmatpush.msra.mxu0 0.0
    %3953 = vmatpush.msra.mxu0 %v3935
    %3954 = vmatpush.msra.mxu0 %v3934
    %3955 = vmatmul.f32.gmra.mxu0 %v3937
    %v3956 = vpop.f32.mrf.mxu0
    %v3957 = vadd.f32 0.0, %v3956
    %3958 = vdwg.mxu0
    %3960 = vrot.lane.b32.xlu0 %v3957, 32
    %v3961 = vpop.permute.xlu0 %3960
    %v3963 = vadd.f32 %v3828, %v3961
    %v3964 = vxor.u32 %v3963, 2147483648
    %v3965 = vmul.f32 %v3964, 1.442695
    %v3966 = vpow.pop %v3965
    %v3967 = vadd.f32 %v3966, 1.0
    %v3968 = vrcp.pop %v3967
    %v3969 = vmul.f32 %v3967, %v3968
    %v3970 = vsub.f32 1.0, %v3969
    %v3971 = vmul.f32 %v3968, %v3970
    %v3972 = vadd.f32 %v3968, %v3971
    %vm3973 = vweird.f32 %v3967
    %vm3974 = vweird.f32 %v3968
    %vm3975 = vmor %vm3973, %vm3974
    %v3976 = vsel %vm3975, %v3968, %v3972
    %v3977 = vand.u32 2147483647, %v3967
    %vm3978 = vcmp.eq.f32.partialorder %v3977, 8.507059e+37
    %v3979 = vand.u32 %v3967, 2147483648
    %v3980 = vor.u32 1.1754944e-38, %v3979
    %v3981 = vsel %vm3978, %v3980, %v3976
    %v3982 = vmul.f32 1.0, %v3981
    %v3983 = vmul.f32 %v3982, 0.875
    %v3984 = vadd.f32 %v3983, 0.125
    %3985 = vrot.lane.b32.xlu0 %v3933, 48
    %v3986 = vpop.permute.xlu0 %3985
    %v3988 = vmul.f32 %v3982, %v3986
    %v3989 = vld [vmem:[%s495] sm:$0xff]
    %v3990 = vld [vmem:[%s495 + $0x8] sm:$0xff]
    %3992 = vrot.lane.b32.xlu0 %v3988, 80
    %v3993 = vpop.permute.xlu0 %3992
    %v3994 = vsel %vm65, %v3993, 0
    %3996 = vmatpush.msra.mxu0 0.0
    %3997 = vmatpush.msra.mxu0 0.0
    %3998 = vmatpush.msra.mxu0 0.0
    %3999 = vmatpush.msra.mxu0 0.0
    %4000 = vmatpush.msra.mxu0 0.0
    %4001 = vmatpush.msra.mxu0 0.0
    %4002 = vmatpush.msra.mxu0 0.0
    %4003 = vmatpush.msra.mxu0 0.0
    %4004 = vmatpush.msra.mxu0 0.0
    %4005 = vmatpush.msra.mxu0 0.0
    %4006 = vmatpush.msra.mxu0 0.0
    %4007 = vmatpush.msra.mxu0 0.0
    %4008 = vmatpush.msra.mxu0 0.0
    %4009 = vmatpush.msra.mxu0 0.0
    %4010 = vmatpush.msra.mxu0 %v3990
    %4011 = vmatpush.msra.mxu0 %v3989
    %4012 = vmatmul.f32.gmra.mxu0 %v3994
    %v4013 = vpop.f32.mrf.mxu0
    %v4014 = vadd.f32 0.0, %v4013
    %4015 = vdwg.mxu0
    %4017 = vrot.lane.b32.xlu0 %v4014, 80
    %v4018 = vpop.permute.xlu0 %4017
    %v4020 = vadd.f32 %v3828, %v4018
    %v4021 = vtanh.pop %v4020
    %v4022 = vmul.f32 %v3984, 1024.0
    %v4023 = vcvt.f32.s32.to.zero.pseudo %v4022
    %4024 = vrot.lane.b32.xlu0 %v4023, 112
    %v4025 = vpop.permute.xlu0 %4024
    %v4026 = vmul.u32 %v3917, %v4025
    %v4027 = vmul.u32 %v3915, %v4025
    %v4028 = vshra.s32 %v4026, 10
    %v4029 = vadd.s32 %v4027, %v4028
    %v4030 = vand.u32 %v4026, 1023
    %v4031 = vsub.f32 1.0, %v3984
    %4033 = vrot.lane.b32.xlu0 %v4021, 80
    %v4034 = vpop.permute.xlu0 %4033
    %v4036 = vmul.f32 %v4031, %v4034
    %v4037 = vmul.f32 %v4036, 8388608.0
    %v4038 = vcvt.f32.s32.to.zero.pseudo %v4037
    %4039 = vrot.lane.b32.xlu0 %v4038, 112
    %v4040 = vpop.permute.xlu0 %4039
    %v4041 = vadd.s32 %v4029, %v4040
    %v4042 = vsel %vm65, %v3931, %v4041
    %v4043 = vsel %vm65, %v3922, %v4030
    %s4044 = scalar_lea.vmem [#allocation6], 30
    %4045 = vst.msk [vmem:[%s4044] sm:$0x3] %vm55, %v4043
    %v4046 = vlog2.pop %v3878
    %v4047 = vmul.f32 %v4046, 0.6931472
    %v4048 = vmul.f32 %v4047, %v284
    %v4049 = vsub.f32 0.0, %v4048
    %v4050 = vmul.f32 %v4049, %v54
    %v4051 = vadd.f32 %v3794, %v4050
    %v4052 = vlog2.pop %v3984
    %v4053 = vmul.f32 %v4052, 0.6931472
    %v4054 = vmul.f32 %v4053, %v284
    %v4055 = vsub.f32 0.0, %v4054
    %4057 = vrot.lane.b32.xlu0 %v4055, 96
    %v4058 = vpop.permute.xlu0 %4057
    %v4060 = vadd.f32 %v4051, %v4058
    %4061 = vst.msk [vmem:[#allocation2] sm:$0x3] %vm55, %v3777
    %4062 = vst.msk [vmem:[%s48] sm:$0x3] %vm55, %v4042
    %v4063 = vld [vmem:[#allocation7] sm:$0x1]
    %vm4064 = vcmask 123904
    %v4065 = vsel %vm4064, %v4060, 0.0
    %4066 = vadd.xlane.f32.xlu0 %v4065
    %v4067 = vpop.xlane.xlu0 %4066
    %v4068 = vrot.slane %v4067, 4
    %v4069 = vadd.f32 %v4067, %v4068
    %v4070 = vrot.slane %v4069, 2
    %v4071 = vadd.f32 %v4069, %v4070
    %v4072 = vrot.slane %v4071, 1
    %v4073 = vadd.f32 %v4071, %v4072
    %s4074 = vtos %v4073
    %v4075 = vstv %s4074
    %v4076 = vadd.f32 %v4063, %v4075
    %vm4077 = vcmask 0
    %4078 = vst.msk [vmem:[#allocation7] sm:$0x1] %vm4077, %v4076
    // Predicated region
    $region38: #{_rev_encoder_core.1} parent=1 // pred_check
      _
    $region39: #{_rev_encoder_core.1} parent=1 // pred_check_branch
      %4080 = sbr.rel (0) target = $region41
    $region40: #{_rev_encoder_core.1} parent=1 // pred_region
      %4082 = vsyncadd [#allocation3], 0
      %s4083 = sshll.u32 [#allocation2], 4
      %s4084 = int_to_ptr.vmem [resolvable:$true] %s4083
      %s4085 = sshll.u32 %s8, 4
      %s4086 = int_to_ptr.hbm [resolvable:$true] %s4085
      %4091 = dma.vmem_to_hbm [thread:$0]  %s4084, 64, %s4086, [#allocation3], 32, 32, 2
    $region41: #{_rev_encoder_core.1} parent=1 // pred_fallthru
      _
    // Predicated region
    $region42: #{_rev_encoder_core.1} parent=1 // pred_check
      _
    $region43: #{_rev_encoder_core.1} parent=1 // pred_check_branch
      %4093 = sbr.rel (0) target = $region45
    $region44: #{_rev_encoder_core.1} parent=1 // pred_region
      %4095 = vsyncadd [#allocation5], 0
      %s4096 = sshll.u32 [#allocation4], 4
      %s4097 = int_to_ptr.vmem [resolvable:$true] %s4096
      %s4098 = sshll.u32 %s9, 4
      %s4099 = int_to_ptr.hbm [resolvable:$true] %s4098
      %4104 = dma.vmem_to_hbm [thread:$0]  %s4097, 256, %s4099, [#allocation5], 32, 32, 2
    $region45: #{_rev_encoder_core.1} parent=1 // pred_fallthru
      _
    // Predicated region
    $region46: #{_rev_encoder_core.1} parent=1 // pred_check
      _
    $region47: #{_rev_encoder_core.1} parent=1 // pred_check_branch
      %4106 = sbr.rel (0) target = $region49
    $region48: #{_rev_encoder_core.1} parent=1 // pred_region
      %4108 = vsyncadd [#allocation5], 0
      %s4109 = sshll.u32 [#allocation6], 4
      %s4110 = int_to_ptr.vmem [resolvable:$true] %s4109
      %s4111 = sshll.u32 %s10, 4
      %s4112 = int_to_ptr.hbm [resolvable:$true] %s4111
      %4117 = dma.vmem_to_hbm [thread:$0]  %s4110, 512, %s4112, [#allocation5], 32, 32, 2
    $region49: #{_rev_encoder_core.1} parent=1 // pred_fallthru
      _
    // Predicated region
    $region50: #{_rev_encoder_core.1} parent=1 // pred_check
      _
    $region51: #{_rev_encoder_core.1} parent=1 // pred_check_branch
      %4119 = sbr.rel (0) target = $region53
    $region52: #{_rev_encoder_core.1} parent=1 // pred_region
      %4121 = vsyncadd [#allocation8], 0
      %s4123 = sshll.u32 [#allocation7], 4
      %s4124 = int_to_ptr.vmem [resolvable:$true] %s4123
      %s4125 = sshll.u32 %s11, 4
      %s4126 = int_to_ptr.hbm [resolvable:$true] %s4125
      %4128 = dma.vmem_to_hbm [thread:$0]  %s4124, 16, %s4126, [#allocation8]
    $region53: #{_rev_encoder_core.1} parent=1 // pred_fallthru
      _
    // Predicated region
    $region54: #{_rev_encoder_core.1} parent=1 // pred_check
      _
    $region55: #{_rev_encoder_core.1} parent=1 // pred_check_branch
      %4130 = sbr.rel (0) target = $region57
    $region56: #{_rev_encoder_core.1} parent=1 // pred_region
      %4132 = dma.done [#allocation3], 64
    $region57: #{_rev_encoder_core.1} parent=1 // pred_fallthru
      _
    // Predicated region
    $region58: #{_rev_encoder_core.1} parent=1 // pred_check
      _
    $region59: #{_rev_encoder_core.1} parent=1 // pred_check_branch
      %4134 = sbr.rel (0) target = $region61
    $region60: #{_rev_encoder_core.1} parent=1 // pred_region
      %4136 = dma.done [#allocation5], 256
    $region61: #{_rev_encoder_core.1} parent=1 // pred_fallthru
      _
    // Predicated region
    $region62: #{_rev_encoder_core.1} parent=1 // pred_check
      _
    $region63: #{_rev_encoder_core.1} parent=1 // pred_check_branch
      %4138 = sbr.rel (0) target = $region65
    $region64: #{_rev_encoder_core.1} parent=1 // pred_region
      %4140 = dma.done [#allocation5], 512
    $region65: #{_rev_encoder_core.1} parent=1 // pred_fallthru
      _
    // Predicated region
    $region66: #{_rev_encoder_core.1} parent=1 // pred_check
      _
    $region67: #{_rev_encoder_core.1} parent=1 // pred_check_branch
      %4142 = sbr.rel (0) target = $region69
    $region68: #{_rev_encoder_core.1} parent=1 // pred_region
      %4144 = dma.done [#allocation8], 16
    $region69: #{_rev_encoder_core.1} parent=1 // pred_fallthru
      _
    %4145 = vsyncpa [#allocation3], 1
    %4146 = vsyncpa [#allocation5], 1
    %4147 = vsyncpa [#allocation8], 1

</llo_original>
